<compile_context>
chip_gen: v5e
topology: v5e:2x2
jax: 0.10.0
libtpu: 0.0.40
codegen_flags: <defaults>
</compile_context>

<pallas_src>
import jax
import jax.numpy as jnp
from jax.experimental import pallas as pl
from jax.experimental.pallas import tpu as pltpu

LANES = 128  # FC widths (120, 84, 10) are zero-padded to this lane width


# ----------------------------------------------------------------------------
# Fused conv1(+bias+ReLU+pool) + conv2(+bias+ReLU+pool) kernel (one image/step)
# ----------------------------------------------------------------------------
def _conv_stack_kernel(patch_ref, w1_ref, b1_ref, w2_ref, b2_ref, o_ref,
                       s1_ref, p1_ref, s2_ref):
    """
    patch_ref: (1, 784, 75) bf16  conv1 im2col patch, row = oh*28+ow, col = tap*3+ci
    w1_ref   : (75, 6)     bf16   conv1 weight, rows = (ki*5+kj)*3+ci
    b1_ref   : (1, 6)      f32
    w2_ref   : (25, 6, 16) bf16   conv2 per-tap weights (real channels only)
    b2_ref   : (1, 16)     f32
    o_ref    : (1, 25, 16) bf16   pooled conv2 features, row = oh2*5+ow2, col = c
    s1_ref   : (784, 6)    f32    scratch: relu(conv1), row = oh*28+ow
    p1_ref   : (208, 6)    f32    scratch: pooled conv1, row = oh1*14+ow1 (+pad rows)
    s2_ref   : (140, 16)   f32    scratch: relu(conv2), row = oh*14+ow (ow>=10 garbage)
    """
    # ---- conv1: one K=75 dot per 112-row M-chunk, bias+ReLU fused, single
    #      store per chunk (no accumulator read-modify-write) ----------------
    w1 = w1_ref[...]
    b1 = b1_ref[...]
    for mc in range(7):                       # 7 * 112 = 784 output positions
        rows = patch_ref[0, pl.ds(mc * 112, 112), :]               # bf16 (112,75)
        y = jnp.dot(rows, w1, preferred_element_type=jnp.float32)  # (112, 6)
        s1_ref[pl.ds(mc * 112, 112), :] = jnp.maximum(y + b1, 0.0)

    # ---- 2x2/2 max-pool of conv1 via stride-2 reads of s1 -------------------
    for oh2 in range(14):
        base = 2 * oh2 * 28
        p00 = s1_ref[pl.ds(base,      14, stride=2), :]
        p01 = s1_ref[pl.ds(base + 1,  14, stride=2), :]
        p10 = s1_ref[pl.ds(base + 28, 14, stride=2), :]
        p11 = s1_ref[pl.ds(base + 29, 14, stride=2), :]
        p1_ref[pl.ds(oh2 * 14, 14), :] = jnp.maximum(
            jnp.maximum(p00, p01), jnp.maximum(p10, p11))
    # Rows 196..207 are only read by garbage output columns (never pooled);
    # zero them anyway so every value stays finite/deterministic.
    p1_ref[pl.ds(196, 12), :] = jnp.zeros((12, 6), jnp.float32)

    # ---- conv2: 25 tap dots with the 6 REAL channels, accumulated in vregs --
    b2 = b2_ref[...]
    acc = jnp.zeros((140, 16), jnp.float32)
    for t in range(25):
        ki, kj = divmod(t, 5)
        tap = p1_ref[pl.ds(ki * 14 + kj, 140), :].astype(jnp.bfloat16)  # (140,6)
        acc = acc + jnp.dot(tap, w2_ref[t], preferred_element_type=jnp.float32)
    s2_ref[...] = jnp.maximum(acc + b2, 0.0)

    # ---- 2x2/2 max-pool of conv2 -> compact (25, 16) bf16 features ----------
    for oh2 in range(5):
        base = 2 * oh2 * 14
        p00 = s2_ref[pl.ds(base,      5, stride=2), :]
        p01 = s2_ref[pl.ds(base + 1,  5, stride=2), :]
        p10 = s2_ref[pl.ds(base + 14, 5, stride=2), :]
        p11 = s2_ref[pl.ds(base + 15, 5, stride=2), :]
        pooled = jnp.maximum(jnp.maximum(p00, p01), jnp.maximum(p10, p11))
        o_ref[0, pl.ds(oh2 * 5, 5), :] = pooled.astype(o_ref.dtype)


def conv_stack(patch1, w1, b1, w2, b2):
    """patch1: (N, 784, 75) bf16  ->  (N, 25, 16) bf16 pooled conv2 features."""
    N = patch1.shape[0]
    return pl.pallas_call(
        _conv_stack_kernel,
        out_shape=jax.ShapeDtypeStruct((N, 25, 16), jnp.bfloat16),
        grid=(N,),
        in_specs=[
            pl.BlockSpec((1, 784, 75), lambda n: (n, 0, 0)),
            pl.BlockSpec((75, 6), lambda n: (0, 0)),
            pl.BlockSpec((1, 6), lambda n: (0, 0)),
            pl.BlockSpec((25, 6, 16), lambda n: (0, 0, 0)),
            pl.BlockSpec((1, 16), lambda n: (0, 0)),
        ],
        out_specs=pl.BlockSpec((1, 25, 16), lambda n: (n, 0, 0)),
        scratch_shapes=[
            pltpu.VMEM((784, 6), jnp.float32),   # relu(conv1)
            pltpu.VMEM((208, 6), jnp.float32),   # pooled conv1 (+4 pad rows)
            pltpu.VMEM((140, 16), jnp.float32),  # relu(conv2)
        ],
        compiler_params=pltpu.CompilerParams(
            dimension_semantics=("parallel",)),
    )(patch1, w1, b1, w2, b2)


# ----------------------------------------------------------------------------
# Fused fc1 -> relu -> fc2 -> relu -> fc3 kernel (K=400 real, widths pad->128)
# ----------------------------------------------------------------------------
def _fc_kernel(x_ref, w1_ref, b1_ref, w2_ref, b2_ref, w3_ref, b3_ref, o_ref):
    x = x_ref[...]                                                   # bf16 (TB, 400)
    h = jnp.dot(x, w1_ref[...], preferred_element_type=jnp.float32) + b1_ref[...]
    h = jnp.maximum(h, 0.0).astype(jnp.bfloat16)
    h = jnp.dot(h, w2_ref[...], preferred_element_type=jnp.float32) + b2_ref[...]
    h = jnp.maximum(h, 0.0).astype(jnp.bfloat16)
    out = jnp.dot(h, w3_ref[...], preferred_element_type=jnp.float32) + b3_ref[...]
    o_ref[...] = out


def fc_stack(x, w1, b1, w2, b2, w3, b3):
    N, K = x.shape
    TB = N if N <= 128 else 128           # batch-tiled: bounded VMEM, multi-core
    return pl.pallas_call(
        _fc_kernel,
        out_shape=jax.ShapeDtypeStruct((N, LANES), jnp.float32),
        grid=(pl.cdiv(N, TB),),
        in_specs=[
            pl.BlockSpec((TB, K), lambda i: (i, 0)),
            pl.BlockSpec((K, LANES), lambda i: (0, 0)),
            pl.BlockSpec((1, LANES), lambda i: (0, 0)),
            pl.BlockSpec((LANES, LANES), lambda i: (0, 0)),
            pl.BlockSpec((1, LANES), lambda i: (0, 0)),
            pl.BlockSpec((LANES, LANES), lambda i: (0, 0)),
            pl.BlockSpec((1, LANES), lambda i: (0, 0)),
        ],
        out_specs=pl.BlockSpec((TB, LANES), lambda i: (i, 0)),
        compiler_params=pltpu.CompilerParams(
            dimension_semantics=("parallel",)),
    )(x, w1, b1, w2, b2, w3, b3)


# ----------------------------------------------------------------------------
# Parameters (PyTorch layout) + one-time kernel-ready packing
# ----------------------------------------------------------------------------
def init_params(key):
    def unif(k, shape, fan_in):
        bound = 1.0 / jnp.sqrt(fan_in)
        return jax.random.uniform(k, shape, jnp.float32, -bound, bound)

    ks = jax.random.split(key, 10)
    p = {}
    p["conv1_w"] = unif(ks[0], (6, 3, 5, 5), 3 * 5 * 5)
    p["conv1_b"] = unif(ks[1], (6,), 3 * 5 * 5)
    p["conv2_w"] = unif(ks[2], (16, 6, 5, 5), 6 * 5 * 5)
    p["conv2_b"] = unif(ks[3], (16,), 6 * 5 * 5)
    p["fc1_w"] = unif(ks[4], (120, 400), 400)
    p["fc1_b"] = unif(ks[5], (120,), 400)
    p["fc2_w"] = unif(ks[6], (84, 120), 120)
    p["fc2_b"] = unif(ks[7], (84,), 120)
    p["fc3_w"] = unif(ks[8], (10, 84), 84)
    p["fc3_b"] = unif(ks[9], (10,), 84)
    return p


def prepare_params(p):
    """One-time packing: tap-major conv weights with ONLY real channels, bf16
    weights / f32 biases, FC widths zero-padded to 128, and the torch
    NCHW-flatten permutation folded into fc1."""
    out = {}
    # conv1: (6,3,5,5) -> (75, 6), row index = (ki*5+kj)*3 + ci
    out["conv1_w"] = jnp.transpose(p["conv1_w"], (2, 3, 1, 0)).reshape(
        75, 6).astype(jnp.bfloat16)
    out["conv1_b"] = p["conv1_b"].reshape(1, 6).astype(jnp.float32)
    # conv2: (16,6,5,5) -> (25, 6, 16)
    out["conv2_w"] = jnp.transpose(p["conv2_w"], (2, 3, 1, 0)).reshape(
        25, 6, 16).astype(jnp.bfloat16)
    out["conv2_b"] = p["conv2_b"].reshape(1, 16).astype(jnp.float32)
    # fc1: (120,400); torch flat index = c*25 + oh*5 + ow; kernel feature flat
    # index = (oh*5+ow)*16 + c  ->  pack as (400, 128)
    w = p["fc1_w"].reshape(120, 16, 5, 5)            # (o, c, oh, ow)
    w = jnp.transpose(w, (2, 3, 1, 0)).reshape(400, 120)
    out["fc1_w"] = jnp.pad(w, ((0, 0), (0, LANES - 120))).astype(jnp.bfloat16)
    out["fc1_b"] = jnp.pad(p["fc1_b"], (0, LANES - 120)).reshape(
        1, LANES).astype(jnp.float32)
    # fc2: (84,120) -> (128,128)
    out["fc2_w"] = jnp.pad(
        p["fc2_w"].T, ((0, LANES - 120), (0, LANES - 84))).astype(jnp.bfloat16)
    out["fc2_b"] = jnp.pad(p["fc2_b"], (0, LANES - 84)).reshape(
        1, LANES).astype(jnp.float32)
    # fc3: (10,84) -> (128,128)
    out["fc3_w"] = jnp.pad(
        p["fc3_w"].T, ((0, LANES - 84), (0, LANES - 10))).astype(jnp.bfloat16)
    out["fc3_b"] = jnp.pad(p["fc3_b"], (0, LANES - 10)).reshape(
        1, LANES).astype(jnp.float32)
    return out


# ----------------------------------------------------------------------------
# Forward pass
# ----------------------------------------------------------------------------
@jax.jit
def net_forward(pp, x_nchw):
    N = x_nchw.shape[0]
    # Host-side (XLA) im2col for conv1 only: merges the 25 taps into the
    # matmul K dimension (K = 25*3 = 75) so the kernel does ONE dot per chunk.
    # bf16 patch is ~118 KiB per image — tiny, and removes the in-kernel
    # per-tap accumulator traffic entirely.
    x = jnp.transpose(x_nchw, (0, 2, 3, 1)).astype(jnp.float32)      # (N,32,32,3)
    cols = [x[:, ki:ki + 28, kj:kj + 28, :] for ki in range(5) for kj in range(5)]
    patch1 = jnp.concatenate(cols, axis=-1).reshape(N, 784, 75).astype(jnp.bfloat16)

    # conv1+ReLU+pool+conv2+ReLU+pool fused -> compact (N, 25, 16) bf16 feats
    feats = conv_stack(patch1, pp["conv1_w"], pp["conv1_b"],
                       pp["conv2_w"], pp["conv2_b"])
    feats = feats.reshape(N, 400)                 # fc1 K = 400 real values

    logits = fc_stack(feats, pp["fc1_w"], pp["fc1_b"], pp["fc2_w"], pp["fc2_b"],
                      pp["fc3_w"], pp["fc3_b"])
    return logits[:, :10]


# ----------------------------------------------------------------------------
# Pure-XLA reference (same math as the PyTorch module) for a sanity check
# ----------------------------------------------------------------------------
def reference_forward(params, x_nchw):
    x = x_nchw.astype(jnp.float32)

    def conv(x, w, b):
        y = jax.lax.conv_general_dilated(
            x, w, window_strides=(1, 1), padding="VALID",
            dimension_numbers=("NCHW", "OIHW", "NCHW"))
        return jax.nn.relu(y + b[None, :, None, None])

    def pool(x):
        return jax.lax.reduce_window(x, -jnp.inf, jax.lax.max,
                                     (1, 1, 2, 2), (1, 1, 2, 2), "VALID")

    x = pool(conv(x, params["conv1_w"], params["conv1_b"]))
    x = pool(conv(x, params["conv2_w"], params["conv2_b"]))
    x = x.reshape(x.shape[0], -1)
    x = jax.nn.relu(x @ params["fc1_w"].T + params["fc1_b"])
    x = jax.nn.relu(x @ params["fc2_w"].T + params["fc2_b"])
    return x @ params["fc3_w"].T + params["fc3_b"]


if __name__ == "__main__":
    key = jax.random.PRNGKey(0)
    k_params, k_x = jax.random.split(key)
    params = init_params(k_params)
    packed = prepare_params(params)

    # CIFAR-shaped input implied by the 16*5*5 flatten: (N, 3, 32, 32), N=2.
    x = jax.random.normal(k_x, (2, 3, 32, 32), jnp.float32)

    out = net_forward(packed, x)
    out = jax.block_until_ready(out)
    assert out.shape == (2, 10), out.shape
    assert bool(jnp.all(jnp.isfinite(out)))

    # sanity check vs plain XLA (loose tol: bf16 MXU operands / bf16 features,
    # f32 accumulation)
    ref = reference_forward(params, x)
    max_err = float(jnp.max(jnp.abs(out - ref)))
    assert max_err < 1.5e-1, f"max abs error vs reference: {max_err}"

    print("KERNEL_OK")
</pallas_src>

<mosaic_0001>
module attributes {stable_mosaic.version = 11 : i64} {
  func.func @_conv_stack_kernel(%arg0: i32, %arg1: memref<1x784x75xbf16, #tpu.memory_space<vmem>>, %arg2: memref<75x6xbf16, #tpu.memory_space<vmem>>, %arg3: memref<1x6xf32, #tpu.memory_space<vmem>>, %arg4: memref<25x6x16xbf16, #tpu.memory_space<vmem>>, %arg5: memref<1x16xf32, #tpu.memory_space<vmem>>, %arg6: memref<1x25x16xbf16, #tpu.memory_space<vmem>>, %arg7: memref<784x6xf32, #tpu.memory_space<vmem>>, %arg8: memref<208x6xf32, #tpu.memory_space<vmem>>, %arg9: memref<140x16xf32, #tpu.memory_space<vmem>>) attributes {dimension_semantics = [#tpu.dimension_semantics<parallel>], iteration_bounds = array<i64: 2>, scalar_prefetch = 0 : i64, scratch_operands = 3 : i64, tpu.core_type = #tpu.core_type<tc>, window_params = [{transform_indices = @transform_0, window_bounds = array<i64: 1, 784, 75>}, {pipeline_mode = #tpu.pipeline_mode<synchronous>, transform_indices = @transform_1, window_bounds = array<i64: 75, 6>}, {pipeline_mode = #tpu.pipeline_mode<synchronous>, transform_indices = @transform_2, window_bounds = array<i64: 1, 6>}, {pipeline_mode = #tpu.pipeline_mode<synchronous>, transform_indices = @transform_3, window_bounds = array<i64: 25, 6, 16>}, {pipeline_mode = #tpu.pipeline_mode<synchronous>, transform_indices = @transform_4, window_bounds = array<i64: 1, 16>}, {transform_indices = @transform_5, window_bounds = array<i64: 1, 25, 16>}]} {
    %c0 = arith.constant 0 : index
    %c0_0 = arith.constant 0 : index
    %0 = vector.load %arg2[%c0, %c0_0] : memref<75x6xbf16, #tpu.memory_space<vmem>>, vector<75x6xbf16>
    %c0_1 = arith.constant 0 : index
    %c0_2 = arith.constant 0 : index
    %1 = vector.load %arg3[%c0_1, %c0_2] : memref<1x6xf32, #tpu.memory_space<vmem>>, vector<1x6xf32>
    %c0_3 = arith.constant 0 : index
    %c0_4 = arith.constant 0 : index
    %c0_5 = arith.constant 0 : index
    %2 = vector.load %arg1[%c0_3, %c0_4, %c0_5] : memref<1x784x75xbf16, #tpu.memory_space<vmem>>, vector<1x112x75xbf16>
    %3 = vector.shape_cast %2 : vector<1x112x75xbf16> to vector<112x75xbf16>
    %cst = arith.constant dense<0.000000e+00> : vector<112x6xf32>
    %4 = tpu.matmul %3, %0, %cst {dimension_numbers = #tpu.dot_dimension_numbers<[1], [0], [0], [1], [0, 0, 1, 1], [], []>} : vector<112x75xbf16>, vector<75x6xbf16>, vector<112x6xf32> -> vector<112x6xf32>
    %5 = vector.broadcast %1 : vector<1x6xf32> to vector<112x6xf32>
    %6 = arith.addf %4, %5 : vector<112x6xf32>
    %cst_6 = arith.constant 0.000000e+00 : f32
    %7 = vector.broadcast %cst_6 : f32 to vector<112x6xf32>
    %8 = arith.maximumf %6, %7 : vector<112x6xf32>
    %c0_7 = arith.constant 0 : index
    %c0_8 = arith.constant 0 : index
    %9 = vector.load %arg7[%c0_7, %c0_8] : memref<784x6xf32, #tpu.memory_space<vmem>>, vector<112x6xf32>
    tpu.vector_store %arg7[%c0_7, %c0_8], %8 {strides = array<i32>} : memref<784x6xf32, #tpu.memory_space<vmem>>, vector<112x6xf32>,
    %c0_9 = arith.constant 0 : index
    %c112 = arith.constant 112 : index
    %c0_10 = arith.constant 0 : index
    %10 = vector.load %arg1[%c0_9, %c112, %c0_10] : memref<1x784x75xbf16, #tpu.memory_space<vmem>>, vector<1x112x75xbf16>
    %11 = vector.shape_cast %10 : vector<1x112x75xbf16> to vector<112x75xbf16>
    %cst_11 = arith.constant dense<0.000000e+00> : vector<112x6xf32>
    %12 = tpu.matmul %11, %0, %cst_11 {dimension_numbers = #tpu.dot_dimension_numbers<[1], [0], [0], [1], [0, 0, 1, 1], [], []>} : vector<112x75xbf16>, vector<75x6xbf16>, vector<112x6xf32> -> vector<112x6xf32>
    %13 = vector.broadcast %1 : vector<1x6xf32> to vector<112x6xf32>
    %14 = arith.addf %12, %13 : vector<112x6xf32>
    %cst_12 = arith.constant 0.000000e+00 : f32
    %15 = vector.broadcast %cst_12 : f32 to vector<112x6xf32>
    %16 = arith.maximumf %14, %15 : vector<112x6xf32>
    %c112_13 = arith.constant 112 : index
    %c0_14 = arith.constant 0 : index
    %17 = vector.load %arg7[%c112_13, %c0_14] : memref<784x6xf32, #tpu.memory_space<vmem>>, vector<112x6xf32>
    tpu.vector_store %arg7[%c112_13, %c0_14], %16 {strides = array<i32>} : memref<784x6xf32, #tpu.memory_space<vmem>>, vector<112x6xf32>,
    %c0_15 = arith.constant 0 : index
    %c224 = arith.constant 224 : index
    %c0_16 = arith.constant 0 : index
    %18 = vector.load %arg1[%c0_15, %c224, %c0_16] : memref<1x784x75xbf16, #tpu.memory_space<vmem>>, vector<1x112x75xbf16>
    %19 = vector.shape_cast %18 : vector<1x112x75xbf16> to vector<112x75xbf16>
    %cst_17 = arith.constant dense<0.000000e+00> : vector<112x6xf32>
    %20 = tpu.matmul %19, %0, %cst_17 {dimension_numbers = #tpu.dot_dimension_numbers<[1], [0], [0], [1], [0, 0, 1, 1], [], []>} : vector<112x75xbf16>, vector<75x6xbf16>, vector<112x6xf32> -> vector<112x6xf32>
    %21 = vector.broadcast %1 : vector<1x6xf32> to vector<112x6xf32>
    %22 = arith.addf %20, %21 : vector<112x6xf32>
    %cst_18 = arith.constant 0.000000e+00 : f32
    %23 = vector.broadcast %cst_18 : f32 to vector<112x6xf32>
    %24 = arith.maximumf %22, %23 : vector<112x6xf32>
    %c224_19 = arith.constant 224 : index
    %c0_20 = arith.constant 0 : index
    %25 = vector.load %arg7[%c224_19, %c0_20] : memref<784x6xf32, #tpu.memory_space<vmem>>, vector<112x6xf32>
    tpu.vector_store %arg7[%c224_19, %c0_20], %24 {strides = array<i32>} : memref<784x6xf32, #tpu.memory_space<vmem>>, vector<112x6xf32>,
    %c0_21 = arith.constant 0 : index
    %c336 = arith.constant 336 : index
    %c0_22 = arith.constant 0 : index
    %26 = vector.load %arg1[%c0_21, %c336, %c0_22] : memref<1x784x75xbf16, #tpu.memory_space<vmem>>, vector<1x112x75xbf16>
    %27 = vector.shape_cast %26 : vector<1x112x75xbf16> to vector<112x75xbf16>
    %cst_23 = arith.constant dense<0.000000e+00> : vector<112x6xf32>
    %28 = tpu.matmul %27, %0, %cst_23 {dimension_numbers = #tpu.dot_dimension_numbers<[1], [0], [0], [1], [0, 0, 1, 1], [], []>} : vector<112x75xbf16>, vector<75x6xbf16>, vector<112x6xf32> -> vector<112x6xf32>
    %29 = vector.broadcast %1 : vector<1x6xf32> to vector<112x6xf32>
    %30 = arith.addf %28, %29 : vector<112x6xf32>
    %cst_24 = arith.constant 0.000000e+00 : f32
    %31 = vector.broadcast %cst_24 : f32 to vector<112x6xf32>
    %32 = arith.maximumf %30, %31 : vector<112x6xf32>
    %c336_25 = arith.constant 336 : index
    %c0_26 = arith.constant 0 : index
    %33 = vector.load %arg7[%c336_25, %c0_26] : memref<784x6xf32, #tpu.memory_space<vmem>>, vector<112x6xf32>
    tpu.vector_store %arg7[%c336_25, %c0_26], %32 {strides = array<i32>} : memref<784x6xf32, #tpu.memory_space<vmem>>, vector<112x6xf32>,
    %c0_27 = arith.constant 0 : index
    %c448 = arith.constant 448 : index
    %c0_28 = arith.constant 0 : index
    %34 = vector.load %arg1[%c0_27, %c448, %c0_28] : memref<1x784x75xbf16, #tpu.memory_space<vmem>>, vector<1x112x75xbf16>
    %35 = vector.shape_cast %34 : vector<1x112x75xbf16> to vector<112x75xbf16>
    %cst_29 = arith.constant dense<0.000000e+00> : vector<112x6xf32>
    %36 = tpu.matmul %35, %0, %cst_29 {dimension_numbers = #tpu.dot_dimension_numbers<[1], [0], [0], [1], [0, 0, 1, 1], [], []>} : vector<112x75xbf16>, vector<75x6xbf16>, vector<112x6xf32> -> vector<112x6xf32>
    %37 = vector.broadcast %1 : vector<1x6xf32> to vector<112x6xf32>
    %38 = arith.addf %36, %37 : vector<112x6xf32>
    %cst_30 = arith.constant 0.000000e+00 : f32
    %39 = vector.broadcast %cst_30 : f32 to vector<112x6xf32>
    %40 = arith.maximumf %38, %39 : vector<112x6xf32>
    %c448_31 = arith.constant 448 : index
    %c0_32 = arith.constant 0 : index
    %41 = vector.load %arg7[%c448_31, %c0_32] : memref<784x6xf32, #tpu.memory_space<vmem>>, vector<112x6xf32>
    tpu.vector_store %arg7[%c448_31, %c0_32], %40 {strides = array<i32>} : memref<784x6xf32, #tpu.memory_space<vmem>>, vector<112x6xf32>,
    %c0_33 = arith.constant 0 : index
    %c560 = arith.constant 560 : index
    %c0_34 = arith.constant 0 : index
    %42 = vector.load %arg1[%c0_33, %c560, %c0_34] : memref<1x784x75xbf16, #tpu.memory_space<vmem>>, vector<1x112x75xbf16>
    %43 = vector.shape_cast %42 : vector<1x112x75xbf16> to vector<112x75xbf16>
    %cst_35 = arith.constant dense<0.000000e+00> : vector<112x6xf32>
    %44 = tpu.matmul %43, %0, %cst_35 {dimension_numbers = #tpu.dot_dimension_numbers<[1], [0], [0], [1], [0, 0, 1, 1], [], []>} : vector<112x75xbf16>, vector<75x6xbf16>, vector<112x6xf32> -> vector<112x6xf32>
    %45 = vector.broadcast %1 : vector<1x6xf32> to vector<112x6xf32>
    %46 = arith.addf %44, %45 : vector<112x6xf32>
    %cst_36 = arith.constant 0.000000e+00 : f32
    %47 = vector.broadcast %cst_36 : f32 to vector<112x6xf32>
    %48 = arith.maximumf %46, %47 : vector<112x6xf32>
    %c560_37 = arith.constant 560 : index
    %c0_38 = arith.constant 0 : index
    %49 = vector.load %arg7[%c560_37, %c0_38] : memref<784x6xf32, #tpu.memory_space<vmem>>, vector<112x6xf32>
    tpu.vector_store %arg7[%c560_37, %c0_38], %48 {strides = array<i32>} : memref<784x6xf32, #tpu.memory_space<vmem>>, vector<112x6xf32>,
    %c0_39 = arith.constant 0 : index
    %c672 = arith.constant 672 : index
    %c0_40 = arith.constant 0 : index
    %50 = vector.load %arg1[%c0_39, %c672, %c0_40] : memref<1x784x75xbf16, #tpu.memory_space<vmem>>, vector<1x112x75xbf16>
    %51 = vector.shape_cast %50 : vector<1x112x75xbf16> to vector<112x75xbf16>
    %cst_41 = arith.constant dense<0.000000e+00> : vector<112x6xf32>
    %52 = tpu.matmul %51, %0, %cst_41 {dimension_numbers = #tpu.dot_dimension_numbers<[1], [0], [0], [1], [0, 0, 1, 1], [], []>} : vector<112x75xbf16>, vector<75x6xbf16>, vector<112x6xf32> -> vector<112x6xf32>
    %53 = vector.broadcast %1 : vector<1x6xf32> to vector<112x6xf32>
    %54 = arith.addf %52, %53 : vector<112x6xf32>
    %cst_42 = arith.constant 0.000000e+00 : f32
    %55 = vector.broadcast %cst_42 : f32 to vector<112x6xf32>
    %56 = arith.maximumf %54, %55 : vector<112x6xf32>
    %c672_43 = arith.constant 672 : index
    %c0_44 = arith.constant 0 : index
    %57 = vector.load %arg7[%c672_43, %c0_44] : memref<784x6xf32, #tpu.memory_space<vmem>>, vector<112x6xf32>
    tpu.vector_store %arg7[%c672_43, %c0_44], %56 {strides = array<i32>} : memref<784x6xf32, #tpu.memory_space<vmem>>, vector<112x6xf32>,
    %c0_45 = arith.constant 0 : index
    %c0_46 = arith.constant 0 : index
    %58 = tpu.strided_load %arg7[%c0_45, %c0_46] {strides = array<i32: 2, 1>} : memref<784x6xf32, #tpu.memory_space<vmem>>, vector<14x6xf32>
    %c1 = arith.constant 1 : index
    %c0_47 = arith.constant 0 : index
    %59 = tpu.strided_load %arg7[%c1, %c0_47] {strides = array<i32: 2, 1>} : memref<784x6xf32, #tpu.memory_space<vmem>>, vector<14x6xf32>
    %c28 = arith.constant 28 : index
    %c0_48 = arith.constant 0 : index
    %60 = tpu.strided_load %arg7[%c28, %c0_48] {strides = array<i32: 2, 1>} : memref<784x6xf32, #tpu.memory_space<vmem>>, vector<14x6xf32>
    %c29 = arith.constant 29 : index
    %c0_49 = arith.constant 0 : index
    %61 = tpu.strided_load %arg7[%c29, %c0_49] {strides = array<i32: 2, 1>} : memref<784x6xf32, #tpu.memory_space<vmem>>, vector<14x6xf32>
    %62 = arith.maximumf %58, %59 : vector<14x6xf32>
    %63 = arith.maximumf %60, %61 : vector<14x6xf32>
    %64 = arith.maximumf %62, %63 : vector<14x6xf32>
    %c0_50 = arith.constant 0 : index
    %c0_51 = arith.constant 0 : index
    %65 = vector.load %arg8[%c0_50, %c0_51] : memref<208x6xf32, #tpu.memory_space<vmem>>, vector<14x6xf32>
    tpu.vector_store %arg8[%c0_50, %c0_51], %64 {strides = array<i32>} : memref<208x6xf32, #tpu.memory_space<vmem>>, vector<14x6xf32>,
    %c56 = arith.constant 56 : index
    %c0_52 = arith.constant 0 : index
    %66 = tpu.strided_load %arg7[%c56, %c0_52] {strides = array<i32: 2, 1>} : memref<784x6xf32, #tpu.memory_space<vmem>>, vector<14x6xf32>
    %c57 = arith.constant 57 : index
    %c0_53 = arith.constant 0 : index
    %67 = tpu.strided_load %arg7[%c57, %c0_53] {strides = array<i32: 2, 1>} : memref<784x6xf32, #tpu.memory_space<vmem>>, vector<14x6xf32>
    %c84 = arith.constant 84 : index
    %c0_54 = arith.constant 0 : index
    %68 = tpu.strided_load %arg7[%c84, %c0_54] {strides = array<i32: 2, 1>} : memref<784x6xf32, #tpu.memory_space<vmem>>, vector<14x6xf32>
    %c85 = arith.constant 85 : index
    %c0_55 = arith.constant 0 : index
    %69 = tpu.strided_load %arg7[%c85, %c0_55] {strides = array<i32: 2, 1>} : memref<784x6xf32, #tpu.memory_space<vmem>>, vector<14x6xf32>
    %70 = arith.maximumf %66, %67 : vector<14x6xf32>
    %71 = arith.maximumf %68, %69 : vector<14x6xf32>
    %72 = arith.maximumf %70, %71 : vector<14x6xf32>
    %c14 = arith.constant 14 : index
    %c0_56 = arith.constant 0 : index
    %73 = vector.load %arg8[%c14, %c0_56] : memref<208x6xf32, #tpu.memory_space<vmem>>, vector<14x6xf32>
    tpu.vector_store %arg8[%c14, %c0_56], %72 {strides = array<i32>} : memref<208x6xf32, #tpu.memory_space<vmem>>, vector<14x6xf32>,
    %c112_57 = arith.constant 112 : index
    %c0_58 = arith.constant 0 : index
    %74 = tpu.strided_load %arg7[%c112_57, %c0_58] {strides = array<i32: 2, 1>} : memref<784x6xf32, #tpu.memory_space<vmem>>, vector<14x6xf32>
    %c113 = arith.constant 113 : index
    %c0_59 = arith.constant 0 : index
    %75 = tpu.strided_load %arg7[%c113, %c0_59] {strides = array<i32: 2, 1>} : memref<784x6xf32, #tpu.memory_space<vmem>>, vector<14x6xf32>
    %c140 = arith.constant 140 : index
    %c0_60 = arith.constant 0 : index
    %76 = tpu.strided_load %arg7[%c140, %c0_60] {strides = array<i32: 2, 1>} : memref<784x6xf32, #tpu.memory_space<vmem>>, vector<14x6xf32>
    %c141 = arith.constant 141 : index
    %c0_61 = arith.constant 0 : index
    %77 = tpu.strided_load %arg7[%c141, %c0_61] {strides = array<i32: 2, 1>} : memref<784x6xf32, #tpu.memory_space<vmem>>, vector<14x6xf32>
    %78 = arith.maximumf %74, %75 : vector<14x6xf32>
    %79 = arith.maximumf %76, %77 : vector<14x6xf32>
    %80 = arith.maximumf %78, %79 : vector<14x6xf32>
    %c28_62 = arith.constant 28 : index
    %c0_63 = arith.constant 0 : index
    %81 = vector.load %arg8[%c28_62, %c0_63] : memref<208x6xf32, #tpu.memory_space<vmem>>, vector<14x6xf32>
    tpu.vector_store %arg8[%c28_62, %c0_63], %80 {strides = array<i32>} : memref<208x6xf32, #tpu.memory_space<vmem>>, vector<14x6xf32>,
    %c168 = arith.constant 168 : index
    %c0_64 = arith.constant 0 : index
    %82 = tpu.strided_load %arg7[%c168, %c0_64] {strides = array<i32: 2, 1>} : memref<784x6xf32, #tpu.memory_space<vmem>>, vector<14x6xf32>
    %c169 = arith.constant 169 : index
    %c0_65 = arith.constant 0 : index
    %83 = tpu.strided_load %arg7[%c169, %c0_65] {strides = array<i32: 2, 1>} : memref<784x6xf32, #tpu.memory_space<vmem>>, vector<14x6xf32>
    %c196 = arith.constant 196 : index
    %c0_66 = arith.constant 0 : index
    %84 = tpu.strided_load %arg7[%c196, %c0_66] {strides = array<i32: 2, 1>} : memref<784x6xf32, #tpu.memory_space<vmem>>, vector<14x6xf32>
    %c197 = arith.constant 197 : index
    %c0_67 = arith.constant 0 : index
    %85 = tpu.strided_load %arg7[%c197, %c0_67] {strides = array<i32: 2, 1>} : memref<784x6xf32, #tpu.memory_space<vmem>>, vector<14x6xf32>
    %86 = arith.maximumf %82, %83 : vector<14x6xf32>
    %87 = arith.maximumf %84, %85 : vector<14x6xf32>
    %88 = arith.maximumf %86, %87 : vector<14x6xf32>
    %c42 = arith.constant 42 : index
    %c0_68 = arith.constant 0 : index
    %89 = vector.load %arg8[%c42, %c0_68] : memref<208x6xf32, #tpu.memory_space<vmem>>, vector<14x6xf32>
    tpu.vector_store %arg8[%c42, %c0_68], %88 {strides = array<i32>} : memref<208x6xf32, #tpu.memory_space<vmem>>, vector<14x6xf32>,
    %c224_69 = arith.constant 224 : index
    %c0_70 = arith.constant 0 : index
    %90 = tpu.strided_load %arg7[%c224_69, %c0_70] {strides = array<i32: 2, 1>} : memref<784x6xf32, #tpu.memory_space<vmem>>, vector<14x6xf32>
    %c225 = arith.constant 225 : index
    %c0_71 = arith.constant 0 : index
    %91 = tpu.strided_load %arg7[%c225, %c0_71] {strides = array<i32: 2, 1>} : memref<784x6xf32, #tpu.memory_space<vmem>>, vector<14x6xf32>
    %c252 = arith.constant 252 : index
    %c0_72 = arith.constant 0 : index
    %92 = tpu.strided_load %arg7[%c252, %c0_72] {strides = array<i32: 2, 1>} : memref<784x6xf32, #tpu.memory_space<vmem>>, vector<14x6xf32>
    %c253 = arith.constant 253 : index
    %c0_73 = arith.constant 0 : index
    %93 = tpu.strided_load %arg7[%c253, %c0_73] {strides = array<i32: 2, 1>} : memref<784x6xf32, #tpu.memory_space<vmem>>, vector<14x6xf32>
    %94 = arith.maximumf %90, %91 : vector<14x6xf32>
    %95 = arith.maximumf %92, %93 : vector<14x6xf32>
    %96 = arith.maximumf %94, %95 : vector<14x6xf32>
    %c56_74 = arith.constant 56 : index
    %c0_75 = arith.constant 0 : index
    %97 = vector.load %arg8[%c56_74, %c0_75] : memref<208x6xf32, #tpu.memory_space<vmem>>, vector<14x6xf32>
    tpu.vector_store %arg8[%c56_74, %c0_75], %96 {strides = array<i32>} : memref<208x6xf32, #tpu.memory_space<vmem>>, vector<14x6xf32>,
    %c280 = arith.constant 280 : index
    %c0_76 = arith.constant 0 : index
    %98 = tpu.strided_load %arg7[%c280, %c0_76] {strides = array<i32: 2, 1>} : memref<784x6xf32, #tpu.memory_space<vmem>>, vector<14x6xf32>
    %c281 = arith.constant 281 : index
    %c0_77 = arith.constant 0 : index
    %99 = tpu.strided_load %arg7[%c281, %c0_77] {strides = array<i32: 2, 1>} : memref<784x6xf32, #tpu.memory_space<vmem>>, vector<14x6xf32>
    %c308 = arith.constant 308 : index
    %c0_78 = arith.constant 0 : index
    %100 = tpu.strided_load %arg7[%c308, %c0_78] {strides = array<i32: 2, 1>} : memref<784x6xf32, #tpu.memory_space<vmem>>, vector<14x6xf32>
    %c309 = arith.constant 309 : index
    %c0_79 = arith.constant 0 : index
    %101 = tpu.strided_load %arg7[%c309, %c0_79] {strides = array<i32: 2, 1>} : memref<784x6xf32, #tpu.memory_space<vmem>>, vector<14x6xf32>
    %102 = arith.maximumf %98, %99 : vector<14x6xf32>
    %103 = arith.maximumf %100, %101 : vector<14x6xf32>
    %104 = arith.maximumf %102, %103 : vector<14x6xf32>
    %c70 = arith.constant 70 : index
    %c0_80 = arith.constant 0 : index
    %105 = vector.load %arg8[%c70, %c0_80] : memref<208x6xf32, #tpu.memory_space<vmem>>, vector<14x6xf32>
    tpu.vector_store %arg8[%c70, %c0_80], %104 {strides = array<i32>} : memref<208x6xf32, #tpu.memory_space<vmem>>, vector<14x6xf32>,
    %c336_81 = arith.constant 336 : index
    %c0_82 = arith.constant 0 : index
    %106 = tpu.strided_load %arg7[%c336_81, %c0_82] {strides = array<i32: 2, 1>} : memref<784x6xf32, #tpu.memory_space<vmem>>, vector<14x6xf32>
    %c337 = arith.constant 337 : index
    %c0_83 = arith.constant 0 : index
    %107 = tpu.strided_load %arg7[%c337, %c0_83] {strides = array<i32: 2, 1>} : memref<784x6xf32, #tpu.memory_space<vmem>>, vector<14x6xf32>
    %c364 = arith.constant 364 : index
    %c0_84 = arith.constant 0 : index
    %108 = tpu.strided_load %arg7[%c364, %c0_84] {strides = array<i32: 2, 1>} : memref<784x6xf32, #tpu.memory_space<vmem>>, vector<14x6xf32>
    %c365 = arith.constant 365 : index
    %c0_85 = arith.constant 0 : index
    %109 = tpu.strided_load %arg7[%c365, %c0_85] {strides = array<i32: 2, 1>} : memref<784x6xf32, #tpu.memory_space<vmem>>, vector<14x6xf32>
    %110 = arith.maximumf %106, %107 : vector<14x6xf32>
    %111 = arith.maximumf %108, %109 : vector<14x6xf32>
    %112 = arith.maximumf %110, %111 : vector<14x6xf32>
    %c84_86 = arith.constant 84 : index
    %c0_87 = arith.constant 0 : index
    %113 = vector.load %arg8[%c84_86, %c0_87] : memref<208x6xf32, #tpu.memory_space<vmem>>, vector<14x6xf32>
    tpu.vector_store %arg8[%c84_86, %c0_87], %112 {strides = array<i32>} : memref<208x6xf32, #tpu.memory_space<vmem>>, vector<14x6xf32>,
    %c392 = arith.constant 392 : index
    %c0_88 = arith.constant 0 : index
    %114 = tpu.strided_load %arg7[%c392, %c0_88] {strides = array<i32: 2, 1>} : memref<784x6xf32, #tpu.memory_space<vmem>>, vector<14x6xf32>
    %c393 = arith.constant 393 : index
    %c0_89 = arith.constant 0 : index
    %115 = tpu.strided_load %arg7[%c393, %c0_89] {strides = array<i32: 2, 1>} : memref<784x6xf32, #tpu.memory_space<vmem>>, vector<14x6xf32>
    %c420 = arith.constant 420 : index
    %c0_90 = arith.constant 0 : index
    %116 = tpu.strided_load %arg7[%c420, %c0_90] {strides = array<i32: 2, 1>} : memref<784x6xf32, #tpu.memory_space<vmem>>, vector<14x6xf32>
    %c421 = arith.constant 421 : index
    %c0_91 = arith.constant 0 : index
    %117 = tpu.strided_load %arg7[%c421, %c0_91] {strides = array<i32: 2, 1>} : memref<784x6xf32, #tpu.memory_space<vmem>>, vector<14x6xf32>
    %118 = arith.maximumf %114, %115 : vector<14x6xf32>
    %119 = arith.maximumf %116, %117 : vector<14x6xf32>
    %120 = arith.maximumf %118, %119 : vector<14x6xf32>
    %c98 = arith.constant 98 : index
    %c0_92 = arith.constant 0 : index
    %121 = vector.load %arg8[%c98, %c0_92] : memref<208x6xf32, #tpu.memory_space<vmem>>, vector<14x6xf32>
    tpu.vector_store %arg8[%c98, %c0_92], %120 {strides = array<i32>} : memref<208x6xf32, #tpu.memory_space<vmem>>, vector<14x6xf32>,
    %c448_93 = arith.constant 448 : index
    %c0_94 = arith.constant 0 : index
    %122 = tpu.strided_load %arg7[%c448_93, %c0_94] {strides = array<i32: 2, 1>} : memref<784x6xf32, #tpu.memory_space<vmem>>, vector<14x6xf32>
    %c449 = arith.constant 449 : index
    %c0_95 = arith.constant 0 : index
    %123 = tpu.strided_load %arg7[%c449, %c0_95] {strides = array<i32: 2, 1>} : memref<784x6xf32, #tpu.memory_space<vmem>>, vector<14x6xf32>
    %c476 = arith.constant 476 : index
    %c0_96 = arith.constant 0 : index
    %124 = tpu.strided_load %arg7[%c476, %c0_96] {strides = array<i32: 2, 1>} : memref<784x6xf32, #tpu.memory_space<vmem>>, vector<14x6xf32>
    %c477 = arith.constant 477 : index
    %c0_97 = arith.constant 0 : index
    %125 = tpu.strided_load %arg7[%c477, %c0_97] {strides = array<i32: 2, 1>} : memref<784x6xf32, #tpu.memory_space<vmem>>, vector<14x6xf32>
    %126 = arith.maximumf %122, %123 : vector<14x6xf32>
    %127 = arith.maximumf %124, %125 : vector<14x6xf32>
    %128 = arith.maximumf %126, %127 : vector<14x6xf32>
    %c112_98 = arith.constant 112 : index
    %c0_99 = arith.constant 0 : index
    %129 = vector.load %arg8[%c112_98, %c0_99] : memref<208x6xf32, #tpu.memory_space<vmem>>, vector<14x6xf32>
    tpu.vector_store %arg8[%c112_98, %c0_99], %128 {strides = array<i32>} : memref<208x6xf32, #tpu.memory_space<vmem>>, vector<14x6xf32>,
    %c504 = arith.constant 504 : index
    %c0_100 = arith.constant 0 : index
    %130 = tpu.strided_load %arg7[%c504, %c0_100] {strides = array<i32: 2, 1>} : memref<784x6xf32, #tpu.memory_space<vmem>>, vector<14x6xf32>
    %c505 = arith.constant 505 : index
    %c0_101 = arith.constant 0 : index
    %131 = tpu.strided_load %arg7[%c505, %c0_101] {strides = array<i32: 2, 1>} : memref<784x6xf32, #tpu.memory_space<vmem>>, vector<14x6xf32>
    %c532 = arith.constant 532 : index
    %c0_102 = arith.constant 0 : index
    %132 = tpu.strided_load %arg7[%c532, %c0_102] {strides = array<i32: 2, 1>} : memref<784x6xf32, #tpu.memory_space<vmem>>, vector<14x6xf32>
    %c533 = arith.constant 533 : index
    %c0_103 = arith.constant 0 : index
    %133 = tpu.strided_load %arg7[%c533, %c0_103] {strides = array<i32: 2, 1>} : memref<784x6xf32, #tpu.memory_space<vmem>>, vector<14x6xf32>
    %134 = arith.maximumf %130, %131 : vector<14x6xf32>
    %135 = arith.maximumf %132, %133 : vector<14x6xf32>
    %136 = arith.maximumf %134, %135 : vector<14x6xf32>
    %c126 = arith.constant 126 : index
    %c0_104 = arith.constant 0 : index
    %137 = vector.load %arg8[%c126, %c0_104] : memref<208x6xf32, #tpu.memory_space<vmem>>, vector<14x6xf32>
    tpu.vector_store %arg8[%c126, %c0_104], %136 {strides = array<i32>} : memref<208x6xf32, #tpu.memory_space<vmem>>, vector<14x6xf32>,
    %c560_105 = arith.constant 560 : index
    %c0_106 = arith.constant 0 : index
    %138 = tpu.strided_load %arg7[%c560_105, %c0_106] {strides = array<i32: 2, 1>} : memref<784x6xf32, #tpu.memory_space<vmem>>, vector<14x6xf32>
    %c561 = arith.constant 561 : index
    %c0_107 = arith.constant 0 : index
    %139 = tpu.strided_load %arg7[%c561, %c0_107] {strides = array<i32: 2, 1>} : memref<784x6xf32, #tpu.memory_space<vmem>>, vector<14x6xf32>
    %c588 = arith.constant 588 : index
    %c0_108 = arith.constant 0 : index
    %140 = tpu.strided_load %arg7[%c588, %c0_108] {strides = array<i32: 2, 1>} : memref<784x6xf32, #tpu.memory_space<vmem>>, vector<14x6xf32>
    %c589 = arith.constant 589 : index
    %c0_109 = arith.constant 0 : index
    %141 = tpu.strided_load %arg7[%c589, %c0_109] {strides = array<i32: 2, 1>} : memref<784x6xf32, #tpu.memory_space<vmem>>, vector<14x6xf32>
    %142 = arith.maximumf %138, %139 : vector<14x6xf32>
    %143 = arith.maximumf %140, %141 : vector<14x6xf32>
    %144 = arith.maximumf %142, %143 : vector<14x6xf32>
    %c140_110 = arith.constant 140 : index
    %c0_111 = arith.constant 0 : index
    %145 = vector.load %arg8[%c140_110, %c0_111] : memref<208x6xf32, #tpu.memory_space<vmem>>, vector<14x6xf32>
    tpu.vector_store %arg8[%c140_110, %c0_111], %144 {strides = array<i32>} : memref<208x6xf32, #tpu.memory_space<vmem>>, vector<14x6xf32>,
    %c616 = arith.constant 616 : index
    %c0_112 = arith.constant 0 : index
    %146 = tpu.strided_load %arg7[%c616, %c0_112] {strides = array<i32: 2, 1>} : memref<784x6xf32, #tpu.memory_space<vmem>>, vector<14x6xf32>
    %c617 = arith.constant 617 : index
    %c0_113 = arith.constant 0 : index
    %147 = tpu.strided_load %arg7[%c617, %c0_113] {strides = array<i32: 2, 1>} : memref<784x6xf32, #tpu.memory_space<vmem>>, vector<14x6xf32>
    %c644 = arith.constant 644 : index
    %c0_114 = arith.constant 0 : index
    %148 = tpu.strided_load %arg7[%c644, %c0_114] {strides = array<i32: 2, 1>} : memref<784x6xf32, #tpu.memory_space<vmem>>, vector<14x6xf32>
    %c645 = arith.constant 645 : index
    %c0_115 = arith.constant 0 : index
    %149 = tpu.strided_load %arg7[%c645, %c0_115] {strides = array<i32: 2, 1>} : memref<784x6xf32, #tpu.memory_space<vmem>>, vector<14x6xf32>
    %150 = arith.maximumf %146, %147 : vector<14x6xf32>
    %151 = arith.maximumf %148, %149 : vector<14x6xf32>
    %152 = arith.maximumf %150, %151 : vector<14x6xf32>
    %c154 = arith.constant 154 : index
    %c0_116 = arith.constant 0 : index
    %153 = vector.load %arg8[%c154, %c0_116] : memref<208x6xf32, #tpu.memory_space<vmem>>, vector<14x6xf32>
    tpu.vector_store %arg8[%c154, %c0_116], %152 {strides = array<i32>} : memref<208x6xf32, #tpu.memory_space<vmem>>, vector<14x6xf32>,
    %c672_117 = arith.constant 672 : index
    %c0_118 = arith.constant 0 : index
    %154 = tpu.strided_load %arg7[%c672_117, %c0_118] {strides = array<i32: 2, 1>} : memref<784x6xf32, #tpu.memory_space<vmem>>, vector<14x6xf32>
    %c673 = arith.constant 673 : index
    %c0_119 = arith.constant 0 : index
    %155 = tpu.strided_load %arg7[%c673, %c0_119] {strides = array<i32: 2, 1>} : memref<784x6xf32, #tpu.memory_space<vmem>>, vector<14x6xf32>
    %c700 = arith.constant 700 : index
    %c0_120 = arith.constant 0 : index
    %156 = tpu.strided_load %arg7[%c700, %c0_120] {strides = array<i32: 2, 1>} : memref<784x6xf32, #tpu.memory_space<vmem>>, vector<14x6xf32>
    %c701 = arith.constant 701 : index
    %c0_121 = arith.constant 0 : index
    %157 = tpu.strided_load %arg7[%c701, %c0_121] {strides = array<i32: 2, 1>} : memref<784x6xf32, #tpu.memory_space<vmem>>, vector<14x6xf32>
    %158 = arith.maximumf %154, %155 : vector<14x6xf32>
    %159 = arith.maximumf %156, %157 : vector<14x6xf32>
    %160 = arith.maximumf %158, %159 : vector<14x6xf32>
    %c168_122 = arith.constant 168 : index
    %c0_123 = arith.constant 0 : index
    %161 = vector.load %arg8[%c168_122, %c0_123] : memref<208x6xf32, #tpu.memory_space<vmem>>, vector<14x6xf32>
    tpu.vector_store %arg8[%c168_122, %c0_123], %160 {strides = array<i32>} : memref<208x6xf32, #tpu.memory_space<vmem>>, vector<14x6xf32>,
    %c728 = arith.constant 728 : index
    %c0_124 = arith.constant 0 : index
    %162 = tpu.strided_load %arg7[%c728, %c0_124] {strides = array<i32: 2, 1>} : memref<784x6xf32, #tpu.memory_space<vmem>>, vector<14x6xf32>
    %c729 = arith.constant 729 : index
    %c0_125 = arith.constant 0 : index
    %163 = tpu.strided_load %arg7[%c729, %c0_125] {strides = array<i32: 2, 1>} : memref<784x6xf32, #tpu.memory_space<vmem>>, vector<14x6xf32>
    %c756 = arith.constant 756 : index
    %c0_126 = arith.constant 0 : index
    %164 = tpu.strided_load %arg7[%c756, %c0_126] {strides = array<i32: 2, 1>} : memref<784x6xf32, #tpu.memory_space<vmem>>, vector<14x6xf32>
    %c757 = arith.constant 757 : index
    %c0_127 = arith.constant 0 : index
    %165 = tpu.strided_load %arg7[%c757, %c0_127] {strides = array<i32: 2, 1>} : memref<784x6xf32, #tpu.memory_space<vmem>>, vector<14x6xf32>
    %166 = arith.maximumf %162, %163 : vector<14x6xf32>
    %167 = arith.maximumf %164, %165 : vector<14x6xf32>
    %168 = arith.maximumf %166, %167 : vector<14x6xf32>
    %c182 = arith.constant 182 : index
    %c0_128 = arith.constant 0 : index
    %169 = vector.load %arg8[%c182, %c0_128] : memref<208x6xf32, #tpu.memory_space<vmem>>, vector<14x6xf32>
    tpu.vector_store %arg8[%c182, %c0_128], %168 {strides = array<i32>} : memref<208x6xf32, #tpu.memory_space<vmem>>, vector<14x6xf32>,
    %cst_129 = arith.constant 0.000000e+00 : f32
    %170 = vector.broadcast %cst_129 : f32 to vector<12x6xf32>
    %c196_130 = arith.constant 196 : index
    %c0_131 = arith.constant 0 : index
    %171 = vector.load %arg8[%c196_130, %c0_131] : memref<208x6xf32, #tpu.memory_space<vmem>>, vector<12x6xf32>
    tpu.vector_store %arg8[%c196_130, %c0_131], %170 {strides = array<i32>} : memref<208x6xf32, #tpu.memory_space<vmem>>, vector<12x6xf32>,
    %c0_132 = arith.constant 0 : index
    %c0_133 = arith.constant 0 : index
    %172 = vector.load %arg5[%c0_132, %c0_133] : memref<1x16xf32, #tpu.memory_space<vmem>>, vector<1x16xf32>
    %cst_134 = arith.constant 0.000000e+00 : f32
    %173 = vector.broadcast %cst_134 : f32 to vector<140x16xf32>
    %c0_135 = arith.constant 0 : index
    %c0_136 = arith.constant 0 : index
    %174 = vector.load %arg8[%c0_135, %c0_136] : memref<208x6xf32, #tpu.memory_space<vmem>>, vector<140x6xf32>
    %175 = arith.truncf %174 : vector<140x6xf32> to vector<140x6xbf16>
    %c0_137 = arith.constant 0 : index
    %c0_138 = arith.constant 0 : index
    %c0_139 = arith.constant 0 : index
    %176 = vector.load %arg4[%c0_137, %c0_138, %c0_139] : memref<25x6x16xbf16, #tpu.memory_space<vmem>>, vector<1x6x16xbf16>
    %177 = vector.shape_cast %176 : vector<1x6x16xbf16> to vector<6x16xbf16>
    %cst_140 = arith.constant dense<0.000000e+00> : vector<140x16xf32>
    %178 = tpu.matmul %175, %177, %cst_140 {dimension_numbers = #tpu.dot_dimension_numbers<[1], [0], [0], [1], [0, 0, 1, 1], [], []>} : vector<140x6xbf16>, vector<6x16xbf16>, vector<140x16xf32> -> vector<140x16xf32>
    %179 = arith.addf %173, %178 : vector<140x16xf32>
    %c1_141 = arith.constant 1 : index
    %c0_142 = arith.constant 0 : index
    %180 = vector.load %arg8[%c1_141, %c0_142] : memref<208x6xf32, #tpu.memory_space<vmem>>, vector<140x6xf32>
    %181 = arith.truncf %180 : vector<140x6xf32> to vector<140x6xbf16>
    %c1_143 = arith.constant 1 : index
    %c0_144 = arith.constant 0 : index
    %c0_145 = arith.constant 0 : index
    %182 = vector.load %arg4[%c1_143, %c0_144, %c0_145] : memref<25x6x16xbf16, #tpu.memory_space<vmem>>, vector<1x6x16xbf16>
    %183 = vector.shape_cast %182 : vector<1x6x16xbf16> to vector<6x16xbf16>
    %cst_146 = arith.constant dense<0.000000e+00> : vector<140x16xf32>
    %184 = tpu.matmul %181, %183, %cst_146 {dimension_numbers = #tpu.dot_dimension_numbers<[1], [0], [0], [1], [0, 0, 1, 1], [], []>} : vector<140x6xbf16>, vector<6x16xbf16>, vector<140x16xf32> -> vector<140x16xf32>
    %185 = arith.addf %179, %184 : vector<140x16xf32>
    %c2 = arith.constant 2 : index
    %c0_147 = arith.constant 0 : index
    %186 = vector.load %arg8[%c2, %c0_147] : memref<208x6xf32, #tpu.memory_space<vmem>>, vector<140x6xf32>
    %187 = arith.truncf %186 : vector<140x6xf32> to vector<140x6xbf16>
    %c2_148 = arith.constant 2 : index
    %c0_149 = arith.constant 0 : index
    %c0_150 = arith.constant 0 : index
    %188 = vector.load %arg4[%c2_148, %c0_149, %c0_150] : memref<25x6x16xbf16, #tpu.memory_space<vmem>>, vector<1x6x16xbf16>
    %189 = vector.shape_cast %188 : vector<1x6x16xbf16> to vector<6x16xbf16>
    %cst_151 = arith.constant dense<0.000000e+00> : vector<140x16xf32>
    %190 = tpu.matmul %187, %189, %cst_151 {dimension_numbers = #tpu.dot_dimension_numbers<[1], [0], [0], [1], [0, 0, 1, 1], [], []>} : vector<140x6xbf16>, vector<6x16xbf16>, vector<140x16xf32> -> vector<140x16xf32>
    %191 = arith.addf %185, %190 : vector<140x16xf32>
    %c3 = arith.constant 3 : index
    %c0_152 = arith.constant 0 : index
    %192 = vector.load %arg8[%c3, %c0_152] : memref<208x6xf32, #tpu.memory_space<vmem>>, vector<140x6xf32>
    %193 = arith.truncf %192 : vector<140x6xf32> to vector<140x6xbf16>
    %c3_153 = arith.constant 3 : index
    %c0_154 = arith.constant 0 : index
    %c0_155 = arith.constant 0 : index
    %194 = vector.load %arg4[%c3_153, %c0_154, %c0_155] : memref<25x6x16xbf16, #tpu.memory_space<vmem>>, vector<1x6x16xbf16>
    %195 = vector.shape_cast %194 : vector<1x6x16xbf16> to vector<6x16xbf16>
    %cst_156 = arith.constant dense<0.000000e+00> : vector<140x16xf32>
    %196 = tpu.matmul %193, %195, %cst_156 {dimension_numbers = #tpu.dot_dimension_numbers<[1], [0], [0], [1], [0, 0, 1, 1], [], []>} : vector<140x6xbf16>, vector<6x16xbf16>, vector<140x16xf32> -> vector<140x16xf32>
    %197 = arith.addf %191, %196 : vector<140x16xf32>
    %c4 = arith.constant 4 : index
    %c0_157 = arith.constant 0 : index
    %198 = vector.load %arg8[%c4, %c0_157] : memref<208x6xf32, #tpu.memory_space<vmem>>, vector<140x6xf32>
    %199 = arith.truncf %198 : vector<140x6xf32> to vector<140x6xbf16>
    %c4_158 = arith.constant 4 : index
    %c0_159 = arith.constant 0 : index
    %c0_160 = arith.constant 0 : index
    %200 = vector.load %arg4[%c4_158, %c0_159, %c0_160] : memref<25x6x16xbf16, #tpu.memory_space<vmem>>, vector<1x6x16xbf16>
    %201 = vector.shape_cast %200 : vector<1x6x16xbf16> to vector<6x16xbf16>
    %cst_161 = arith.constant dense<0.000000e+00> : vector<140x16xf32>
    %202 = tpu.matmul %199, %201, %cst_161 {dimension_numbers = #tpu.dot_dimension_numbers<[1], [0], [0], [1], [0, 0, 1, 1], [], []>} : vector<140x6xbf16>, vector<6x16xbf16>, vector<140x16xf32> -> vector<140x16xf32>
    %203 = arith.addf %197, %202 : vector<140x16xf32>
    %c14_162 = arith.constant 14 : index
    %c0_163 = arith.constant 0 : index
    %204 = vector.load %arg8[%c14_162, %c0_163] : memref<208x6xf32, #tpu.memory_space<vmem>>, vector<140x6xf32>
    %205 = arith.truncf %204 : vector<140x6xf32> to vector<140x6xbf16>
    %c5 = arith.constant 5 : index
    %c0_164 = arith.constant 0 : index
    %c0_165 = arith.constant 0 : index
    %206 = vector.load %arg4[%c5, %c0_164, %c0_165] : memref<25x6x16xbf16, #tpu.memory_space<vmem>>, vector<1x6x16xbf16>
    %207 = vector.shape_cast %206 : vector<1x6x16xbf16> to vector<6x16xbf16>
    %cst_166 = arith.constant dense<0.000000e+00> : vector<140x16xf32>
    %208 = tpu.matmul %205, %207, %cst_166 {dimension_numbers = #tpu.dot_dimension_numbers<[1], [0], [0], [1], [0, 0, 1, 1], [], []>} : vector<140x6xbf16>, vector<6x16xbf16>, vector<140x16xf32> -> vector<140x16xf32>
    %209 = arith.addf %203, %208 : vector<140x16xf32>
    %c15 = arith.constant 15 : index
    %c0_167 = arith.constant 0 : index
    %210 = vector.load %arg8[%c15, %c0_167] : memref<208x6xf32, #tpu.memory_space<vmem>>, vector<140x6xf32>
    %211 = arith.truncf %210 : vector<140x6xf32> to vector<140x6xbf16>
    %c6 = arith.constant 6 : index
    %c0_168 = arith.constant 0 : index
    %c0_169 = arith.constant 0 : index
    %212 = vector.load %arg4[%c6, %c0_168, %c0_169] : memref<25x6x16xbf16, #tpu.memory_space<vmem>>, vector<1x6x16xbf16>
    %213 = vector.shape_cast %212 : vector<1x6x16xbf16> to vector<6x16xbf16>
    %cst_170 = arith.constant dense<0.000000e+00> : vector<140x16xf32>
    %214 = tpu.matmul %211, %213, %cst_170 {dimension_numbers = #tpu.dot_dimension_numbers<[1], [0], [0], [1], [0, 0, 1, 1], [], []>} : vector<140x6xbf16>, vector<6x16xbf16>, vector<140x16xf32> -> vector<140x16xf32>
    %215 = arith.addf %209, %214 : vector<140x16xf32>
    %c16 = arith.constant 16 : index
    %c0_171 = arith.constant 0 : index
    %216 = vector.load %arg8[%c16, %c0_171] : memref<208x6xf32, #tpu.memory_space<vmem>>, vector<140x6xf32>
    %217 = arith.truncf %216 : vector<140x6xf32> to vector<140x6xbf16>
    %c7 = arith.constant 7 : index
    %c0_172 = arith.constant 0 : index
    %c0_173 = arith.constant 0 : index
    %218 = vector.load %arg4[%c7, %c0_172, %c0_173] : memref<25x6x16xbf16, #tpu.memory_space<vmem>>, vector<1x6x16xbf16>
    %219 = vector.shape_cast %218 : vector<1x6x16xbf16> to vector<6x16xbf16>
    %cst_174 = arith.constant dense<0.000000e+00> : vector<140x16xf32>
    %220 = tpu.matmul %217, %219, %cst_174 {dimension_numbers = #tpu.dot_dimension_numbers<[1], [0], [0], [1], [0, 0, 1, 1], [], []>} : vector<140x6xbf16>, vector<6x16xbf16>, vector<140x16xf32> -> vector<140x16xf32>
    %221 = arith.addf %215, %220 : vector<140x16xf32>
    %c17 = arith.constant 17 : index
    %c0_175 = arith.constant 0 : index
    %222 = vector.load %arg8[%c17, %c0_175] : memref<208x6xf32, #tpu.memory_space<vmem>>, vector<140x6xf32>
    %223 = arith.truncf %222 : vector<140x6xf32> to vector<140x6xbf16>
    %c8 = arith.constant 8 : index
    %c0_176 = arith.constant 0 : index
    %c0_177 = arith.constant 0 : index
    %224 = vector.load %arg4[%c8, %c0_176, %c0_177] : memref<25x6x16xbf16, #tpu.memory_space<vmem>>, vector<1x6x16xbf16>
    %225 = vector.shape_cast %224 : vector<1x6x16xbf16> to vector<6x16xbf16>
    %cst_178 = arith.constant dense<0.000000e+00> : vector<140x16xf32>
    %226 = tpu.matmul %223, %225, %cst_178 {dimension_numbers = #tpu.dot_dimension_numbers<[1], [0], [0], [1], [0, 0, 1, 1], [], []>} : vector<140x6xbf16>, vector<6x16xbf16>, vector<140x16xf32> -> vector<140x16xf32>
    %227 = arith.addf %221, %226 : vector<140x16xf32>
    %c18 = arith.constant 18 : index
    %c0_179 = arith.constant 0 : index
    %228 = vector.load %arg8[%c18, %c0_179] : memref<208x6xf32, #tpu.memory_space<vmem>>, vector<140x6xf32>
    %229 = arith.truncf %228 : vector<140x6xf32> to vector<140x6xbf16>
    %c9 = arith.constant 9 : index
    %c0_180 = arith.constant 0 : index
    %c0_181 = arith.constant 0 : index
    %230 = vector.load %arg4[%c9, %c0_180, %c0_181] : memref<25x6x16xbf16, #tpu.memory_space<vmem>>, vector<1x6x16xbf16>
    %231 = vector.shape_cast %230 : vector<1x6x16xbf16> to vector<6x16xbf16>
    %cst_182 = arith.constant dense<0.000000e+00> : vector<140x16xf32>
    %232 = tpu.matmul %229, %231, %cst_182 {dimension_numbers = #tpu.dot_dimension_numbers<[1], [0], [0], [1], [0, 0, 1, 1], [], []>} : vector<140x6xbf16>, vector<6x16xbf16>, vector<140x16xf32> -> vector<140x16xf32>
    %233 = arith.addf %227, %232 : vector<140x16xf32>
    %c28_183 = arith.constant 28 : index
    %c0_184 = arith.constant 0 : index
    %234 = vector.load %arg8[%c28_183, %c0_184] : memref<208x6xf32, #tpu.memory_space<vmem>>, vector<140x6xf32>
    %235 = arith.truncf %234 : vector<140x6xf32> to vector<140x6xbf16>
    %c10 = arith.constant 10 : index
    %c0_185 = arith.constant 0 : index
    %c0_186 = arith.constant 0 : index
    %236 = vector.load %arg4[%c10, %c0_185, %c0_186] : memref<25x6x16xbf16, #tpu.memory_space<vmem>>, vector<1x6x16xbf16>
    %237 = vector.shape_cast %236 : vector<1x6x16xbf16> to vector<6x16xbf16>
    %cst_187 = arith.constant dense<0.000000e+00> : vector<140x16xf32>
    %238 = tpu.matmul %235, %237, %cst_187 {dimension_numbers = #tpu.dot_dimension_numbers<[1], [0], [0], [1], [0, 0, 1, 1], [], []>} : vector<140x6xbf16>, vector<6x16xbf16>, vector<140x16xf32> -> vector<140x16xf32>
    %239 = arith.addf %233, %238 : vector<140x16xf32>
    %c29_188 = arith.constant 29 : index
    %c0_189 = arith.constant 0 : index
    %240 = vector.load %arg8[%c29_188, %c0_189] : memref<208x6xf32, #tpu.memory_space<vmem>>, vector<140x6xf32>
    %241 = arith.truncf %240 : vector<140x6xf32> to vector<140x6xbf16>
    %c11 = arith.constant 11 : index
    %c0_190 = arith.constant 0 : index
    %c0_191 = arith.constant 0 : index
    %242 = vector.load %arg4[%c11, %c0_190, %c0_191] : memref<25x6x16xbf16, #tpu.memory_space<vmem>>, vector<1x6x16xbf16>
    %243 = vector.shape_cast %242 : vector<1x6x16xbf16> to vector<6x16xbf16>
    %cst_192 = arith.constant dense<0.000000e+00> : vector<140x16xf32>
    %244 = tpu.matmul %241, %243, %cst_192 {dimension_numbers = #tpu.dot_dimension_numbers<[1], [0], [0], [1], [0, 0, 1, 1], [], []>} : vector<140x6xbf16>, vector<6x16xbf16>, vector<140x16xf32> -> vector<140x16xf32>
    %245 = arith.addf %239, %244 : vector<140x16xf32>
    %c30 = arith.constant 30 : index
    %c0_193 = arith.constant 0 : index
    %246 = vector.load %arg8[%c30, %c0_193] : memref<208x6xf32, #tpu.memory_space<vmem>>, vector<140x6xf32>
    %247 = arith.truncf %246 : vector<140x6xf32> to vector<140x6xbf16>
    %c12 = arith.constant 12 : index
    %c0_194 = arith.constant 0 : index
    %c0_195 = arith.constant 0 : index
    %248 = vector.load %arg4[%c12, %c0_194, %c0_195] : memref<25x6x16xbf16, #tpu.memory_space<vmem>>, vector<1x6x16xbf16>
    %249 = vector.shape_cast %248 : vector<1x6x16xbf16> to vector<6x16xbf16>
    %cst_196 = arith.constant dense<0.000000e+00> : vector<140x16xf32>
    %250 = tpu.matmul %247, %249, %cst_196 {dimension_numbers = #tpu.dot_dimension_numbers<[1], [0], [0], [1], [0, 0, 1, 1], [], []>} : vector<140x6xbf16>, vector<6x16xbf16>, vector<140x16xf32> -> vector<140x16xf32>
    %251 = arith.addf %245, %250 : vector<140x16xf32>
    %c31 = arith.constant 31 : index
    %c0_197 = arith.constant 0 : index
    %252 = vector.load %arg8[%c31, %c0_197] : memref<208x6xf32, #tpu.memory_space<vmem>>, vector<140x6xf32>
    %253 = arith.truncf %252 : vector<140x6xf32> to vector<140x6xbf16>
    %c13 = arith.constant 13 : index
    %c0_198 = arith.constant 0 : index
    %c0_199 = arith.constant 0 : index
    %254 = vector.load %arg4[%c13, %c0_198, %c0_199] : memref<25x6x16xbf16, #tpu.memory_space<vmem>>, vector<1x6x16xbf16>
    %255 = vector.shape_cast %254 : vector<1x6x16xbf16> to vector<6x16xbf16>
    %cst_200 = arith.constant dense<0.000000e+00> : vector<140x16xf32>
    %256 = tpu.matmul %253, %255, %cst_200 {dimension_numbers = #tpu.dot_dimension_numbers<[1], [0], [0], [1], [0, 0, 1, 1], [], []>} : vector<140x6xbf16>, vector<6x16xbf16>, vector<140x16xf32> -> vector<140x16xf32>
    %257 = arith.addf %251, %256 : vector<140x16xf32>
    %c32 = arith.constant 32 : index
    %c0_201 = arith.constant 0 : index
    %258 = vector.load %arg8[%c32, %c0_201] : memref<208x6xf32, #tpu.memory_space<vmem>>, vector<140x6xf32>
    %259 = arith.truncf %258 : vector<140x6xf32> to vector<140x6xbf16>
    %c14_202 = arith.constant 14 : index
    %c0_203 = arith.constant 0 : index
    %c0_204 = arith.constant 0 : index
    %260 = vector.load %arg4[%c14_202, %c0_203, %c0_204] : memref<25x6x16xbf16, #tpu.memory_space<vmem>>, vector<1x6x16xbf16>
    %261 = vector.shape_cast %260 : vector<1x6x16xbf16> to vector<6x16xbf16>
    %cst_205 = arith.constant dense<0.000000e+00> : vector<140x16xf32>
    %262 = tpu.matmul %259, %261, %cst_205 {dimension_numbers = #tpu.dot_dimension_numbers<[1], [0], [0], [1], [0, 0, 1, 1], [], []>} : vector<140x6xbf16>, vector<6x16xbf16>, vector<140x16xf32> -> vector<140x16xf32>
    %263 = arith.addf %257, %262 : vector<140x16xf32>
    %c42_206 = arith.constant 42 : index
    %c0_207 = arith.constant 0 : index
    %264 = vector.load %arg8[%c42_206, %c0_207] : memref<208x6xf32, #tpu.memory_space<vmem>>, vector<140x6xf32>
    %265 = arith.truncf %264 : vector<140x6xf32> to vector<140x6xbf16>
    %c15_208 = arith.constant 15 : index
    %c0_209 = arith.constant 0 : index
    %c0_210 = arith.constant 0 : index
    %266 = vector.load %arg4[%c15_208, %c0_209, %c0_210] : memref<25x6x16xbf16, #tpu.memory_space<vmem>>, vector<1x6x16xbf16>
    %267 = vector.shape_cast %266 : vector<1x6x16xbf16> to vector<6x16xbf16>
    %cst_211 = arith.constant dense<0.000000e+00> : vector<140x16xf32>
    %268 = tpu.matmul %265, %267, %cst_211 {dimension_numbers = #tpu.dot_dimension_numbers<[1], [0], [0], [1], [0, 0, 1, 1], [], []>} : vector<140x6xbf16>, vector<6x16xbf16>, vector<140x16xf32> -> vector<140x16xf32>
    %269 = arith.addf %263, %268 : vector<140x16xf32>
    %c43 = arith.constant 43 : index
    %c0_212 = arith.constant 0 : index
    %270 = vector.load %arg8[%c43, %c0_212] : memref<208x6xf32, #tpu.memory_space<vmem>>, vector<140x6xf32>
    %271 = arith.truncf %270 : vector<140x6xf32> to vector<140x6xbf16>
    %c16_213 = arith.constant 16 : index
    %c0_214 = arith.constant 0 : index
    %c0_215 = arith.constant 0 : index
    %272 = vector.load %arg4[%c16_213, %c0_214, %c0_215] : memref<25x6x16xbf16, #tpu.memory_space<vmem>>, vector<1x6x16xbf16>
    %273 = vector.shape_cast %272 : vector<1x6x16xbf16> to vector<6x16xbf16>
    %cst_216 = arith.constant dense<0.000000e+00> : vector<140x16xf32>
    %274 = tpu.matmul %271, %273, %cst_216 {dimension_numbers = #tpu.dot_dimension_numbers<[1], [0], [0], [1], [0, 0, 1, 1], [], []>} : vector<140x6xbf16>, vector<6x16xbf16>, vector<140x16xf32> -> vector<140x16xf32>
    %275 = arith.addf %269, %274 : vector<140x16xf32>
    %c44 = arith.constant 44 : index
    %c0_217 = arith.constant 0 : index
    %276 = vector.load %arg8[%c44, %c0_217] : memref<208x6xf32, #tpu.memory_space<vmem>>, vector<140x6xf32>
    %277 = arith.truncf %276 : vector<140x6xf32> to vector<140x6xbf16>
    %c17_218 = arith.constant 17 : index
    %c0_219 = arith.constant 0 : index
    %c0_220 = arith.constant 0 : index
    %278 = vector.load %arg4[%c17_218, %c0_219, %c0_220] : memref<25x6x16xbf16, #tpu.memory_space<vmem>>, vector<1x6x16xbf16>
    %279 = vector.shape_cast %278 : vector<1x6x16xbf16> to vector<6x16xbf16>
    %cst_221 = arith.constant dense<0.000000e+00> : vector<140x16xf32>
    %280 = tpu.matmul %277, %279, %cst_221 {dimension_numbers = #tpu.dot_dimension_numbers<[1], [0], [0], [1], [0, 0, 1, 1], [], []>} : vector<140x6xbf16>, vector<6x16xbf16>, vector<140x16xf32> -> vector<140x16xf32>
    %281 = arith.addf %275, %280 : vector<140x16xf32>
    %c45 = arith.constant 45 : index
    %c0_222 = arith.constant 0 : index
    %282 = vector.load %arg8[%c45, %c0_222] : memref<208x6xf32, #tpu.memory_space<vmem>>, vector<140x6xf32>
    %283 = arith.truncf %282 : vector<140x6xf32> to vector<140x6xbf16>
    %c18_223 = arith.constant 18 : index
    %c0_224 = arith.constant 0 : index
    %c0_225 = arith.constant 0 : index
    %284 = vector.load %arg4[%c18_223, %c0_224, %c0_225] : memref<25x6x16xbf16, #tpu.memory_space<vmem>>, vector<1x6x16xbf16>
    %285 = vector.shape_cast %284 : vector<1x6x16xbf16> to vector<6x16xbf16>
    %cst_226 = arith.constant dense<0.000000e+00> : vector<140x16xf32>
    %286 = tpu.matmul %283, %285, %cst_226 {dimension_numbers = #tpu.dot_dimension_numbers<[1], [0], [0], [1], [0, 0, 1, 1], [], []>} : vector<140x6xbf16>, vector<6x16xbf16>, vector<140x16xf32> -> vector<140x16xf32>
    %287 = arith.addf %281, %286 : vector<140x16xf32>
    %c46 = arith.constant 46 : index
    %c0_227 = arith.constant 0 : index
    %288 = vector.load %arg8[%c46, %c0_227] : memref<208x6xf32, #tpu.memory_space<vmem>>, vector<140x6xf32>
    %289 = arith.truncf %288 : vector<140x6xf32> to vector<140x6xbf16>
    %c19 = arith.constant 19 : index
    %c0_228 = arith.constant 0 : index
    %c0_229 = arith.constant 0 : index
    %290 = vector.load %arg4[%c19, %c0_228, %c0_229] : memref<25x6x16xbf16, #tpu.memory_space<vmem>>, vector<1x6x16xbf16>
    %291 = vector.shape_cast %290 : vector<1x6x16xbf16> to vector<6x16xbf16>
    %cst_230 = arith.constant dense<0.000000e+00> : vector<140x16xf32>
    %292 = tpu.matmul %289, %291, %cst_230 {dimension_numbers = #tpu.dot_dimension_numbers<[1], [0], [0], [1], [0, 0, 1, 1], [], []>} : vector<140x6xbf16>, vector<6x16xbf16>, vector<140x16xf32> -> vector<140x16xf32>
    %293 = arith.addf %287, %292 : vector<140x16xf32>
    %c56_231 = arith.constant 56 : index
    %c0_232 = arith.constant 0 : index
    %294 = vector.load %arg8[%c56_231, %c0_232] : memref<208x6xf32, #tpu.memory_space<vmem>>, vector<140x6xf32>
    %295 = arith.truncf %294 : vector<140x6xf32> to vector<140x6xbf16>
    %c20 = arith.constant 20 : index
    %c0_233 = arith.constant 0 : index
    %c0_234 = arith.constant 0 : index
    %296 = vector.load %arg4[%c20, %c0_233, %c0_234] : memref<25x6x16xbf16, #tpu.memory_space<vmem>>, vector<1x6x16xbf16>
    %297 = vector.shape_cast %296 : vector<1x6x16xbf16> to vector<6x16xbf16>
    %cst_235 = arith.constant dense<0.000000e+00> : vector<140x16xf32>
    %298 = tpu.matmul %295, %297, %cst_235 {dimension_numbers = #tpu.dot_dimension_numbers<[1], [0], [0], [1], [0, 0, 1, 1], [], []>} : vector<140x6xbf16>, vector<6x16xbf16>, vector<140x16xf32> -> vector<140x16xf32>
    %299 = arith.addf %293, %298 : vector<140x16xf32>
    %c57_236 = arith.constant 57 : index
    %c0_237 = arith.constant 0 : index
    %300 = vector.load %arg8[%c57_236, %c0_237] : memref<208x6xf32, #tpu.memory_space<vmem>>, vector<140x6xf32>
    %301 = arith.truncf %300 : vector<140x6xf32> to vector<140x6xbf16>
    %c21 = arith.constant 21 : index
    %c0_238 = arith.constant 0 : index
    %c0_239 = arith.constant 0 : index
    %302 = vector.load %arg4[%c21, %c0_238, %c0_239] : memref<25x6x16xbf16, #tpu.memory_space<vmem>>, vector<1x6x16xbf16>
    %303 = vector.shape_cast %302 : vector<1x6x16xbf16> to vector<6x16xbf16>
    %cst_240 = arith.constant dense<0.000000e+00> : vector<140x16xf32>
    %304 = tpu.matmul %301, %303, %cst_240 {dimension_numbers = #tpu.dot_dimension_numbers<[1], [0], [0], [1], [0, 0, 1, 1], [], []>} : vector<140x6xbf16>, vector<6x16xbf16>, vector<140x16xf32> -> vector<140x16xf32>
    %305 = arith.addf %299, %304 : vector<140x16xf32>
    %c58 = arith.constant 58 : index
    %c0_241 = arith.constant 0 : index
    %306 = vector.load %arg8[%c58, %c0_241] : memref<208x6xf32, #tpu.memory_space<vmem>>, vector<140x6xf32>
    %307 = arith.truncf %306 : vector<140x6xf32> to vector<140x6xbf16>
    %c22 = arith.constant 22 : index
    %c0_242 = arith.constant 0 : index
    %c0_243 = arith.constant 0 : index
    %308 = vector.load %arg4[%c22, %c0_242, %c0_243] : memref<25x6x16xbf16, #tpu.memory_space<vmem>>, vector<1x6x16xbf16>
    %309 = vector.shape_cast %308 : vector<1x6x16xbf16> to vector<6x16xbf16>
    %cst_244 = arith.constant dense<0.000000e+00> : vector<140x16xf32>
    %310 = tpu.matmul %307, %309, %cst_244 {dimension_numbers = #tpu.dot_dimension_numbers<[1], [0], [0], [1], [0, 0, 1, 1], [], []>} : vector<140x6xbf16>, vector<6x16xbf16>, vector<140x16xf32> -> vector<140x16xf32>
    %311 = arith.addf %305, %310 : vector<140x16xf32>
    %c59 = arith.constant 59 : index
    %c0_245 = arith.constant 0 : index
    %312 = vector.load %arg8[%c59, %c0_245] : memref<208x6xf32, #tpu.memory_space<vmem>>, vector<140x6xf32>
    %313 = arith.truncf %312 : vector<140x6xf32> to vector<140x6xbf16>
    %c23 = arith.constant 23 : index
    %c0_246 = arith.constant 0 : index
    %c0_247 = arith.constant 0 : index
    %314 = vector.load %arg4[%c23, %c0_246, %c0_247] : memref<25x6x16xbf16, #tpu.memory_space<vmem>>, vector<1x6x16xbf16>
    %315 = vector.shape_cast %314 : vector<1x6x16xbf16> to vector<6x16xbf16>
    %cst_248 = arith.constant dense<0.000000e+00> : vector<140x16xf32>
    %316 = tpu.matmul %313, %315, %cst_248 {dimension_numbers = #tpu.dot_dimension_numbers<[1], [0], [0], [1], [0, 0, 1, 1], [], []>} : vector<140x6xbf16>, vector<6x16xbf16>, vector<140x16xf32> -> vector<140x16xf32>
    %317 = arith.addf %311, %316 : vector<140x16xf32>
    %c60 = arith.constant 60 : index
    %c0_249 = arith.constant 0 : index
    %318 = vector.load %arg8[%c60, %c0_249] : memref<208x6xf32, #tpu.memory_space<vmem>>, vector<140x6xf32>
    %319 = arith.truncf %318 : vector<140x6xf32> to vector<140x6xbf16>
    %c24 = arith.constant 24 : index
    %c0_250 = arith.constant 0 : index
    %c0_251 = arith.constant 0 : index
    %320 = vector.load %arg4[%c24, %c0_250, %c0_251] : memref<25x6x16xbf16, #tpu.memory_space<vmem>>, vector<1x6x16xbf16>
    %321 = vector.shape_cast %320 : vector<1x6x16xbf16> to vector<6x16xbf16>
    %cst_252 = arith.constant dense<0.000000e+00> : vector<140x16xf32>
    %322 = tpu.matmul %319, %321, %cst_252 {dimension_numbers = #tpu.dot_dimension_numbers<[1], [0], [0], [1], [0, 0, 1, 1], [], []>} : vector<140x6xbf16>, vector<6x16xbf16>, vector<140x16xf32> -> vector<140x16xf32>
    %323 = arith.addf %317, %322 : vector<140x16xf32>
    %324 = vector.broadcast %172 : vector<1x16xf32> to vector<140x16xf32>
    %325 = arith.addf %323, %324 : vector<140x16xf32>
    %cst_253 = arith.constant 0.000000e+00 : f32
    %326 = vector.broadcast %cst_253 : f32 to vector<140x16xf32>
    %327 = arith.maximumf %325, %326 : vector<140x16xf32>
    %c0_254 = arith.constant 0 : index
    %c0_255 = arith.constant 0 : index
    %328 = vector.load %arg9[%c0_254, %c0_255] : memref<140x16xf32, #tpu.memory_space<vmem>>, vector<140x16xf32>
    tpu.vector_store %arg9[%c0_254, %c0_255], %327 {strides = array<i32>} : memref<140x16xf32, #tpu.memory_space<vmem>>, vector<140x16xf32>,
    %c0_256 = arith.constant 0 : index
    %c0_257 = arith.constant 0 : index
    %329 = tpu.strided_load %arg9[%c0_256, %c0_257] {strides = array<i32: 2, 1>} : memref<140x16xf32, #tpu.memory_space<vmem>>, vector<5x16xf32>
    %c1_258 = arith.constant 1 : index
    %c0_259 = arith.constant 0 : index
    %330 = tpu.strided_load %arg9[%c1_258, %c0_259] {strides = array<i32: 2, 1>} : memref<140x16xf32, #tpu.memory_space<vmem>>, vector<5x16xf32>
    %c14_260 = arith.constant 14 : index
    %c0_261 = arith.constant 0 : index
    %331 = tpu.strided_load %arg9[%c14_260, %c0_261] {strides = array<i32: 2, 1>} : memref<140x16xf32, #tpu.memory_space<vmem>>, vector<5x16xf32>
    %c15_262 = arith.constant 15 : index
    %c0_263 = arith.constant 0 : index
    %332 = tpu.strided_load %arg9[%c15_262, %c0_263] {strides = array<i32: 2, 1>} : memref<140x16xf32, #tpu.memory_space<vmem>>, vector<5x16xf32>
    %333 = arith.maximumf %329, %330 : vector<5x16xf32>
    %334 = arith.maximumf %331, %332 : vector<5x16xf32>
    %335 = arith.maximumf %333, %334 : vector<5x16xf32>
    %336 = arith.truncf %335 : vector<5x16xf32> to vector<5x16xbf16>
    %c0_264 = arith.constant 0 : index
    %c0_265 = arith.constant 0 : index
    %c0_266 = arith.constant 0 : index
    %337 = vector.load %arg6[%c0_264, %c0_265, %c0_266] : memref<1x25x16xbf16, #tpu.memory_space<vmem>>, vector<1x5x16xbf16>
    %338 = vector.shape_cast %337 : vector<1x5x16xbf16> to vector<5x16xbf16>
    %339 = vector.shape_cast %336 : vector<5x16xbf16> to vector<1x5x16xbf16>
    tpu.vector_store %arg6[%c0_264, %c0_265, %c0_266], %339 {strides = array<i32>} : memref<1x25x16xbf16, #tpu.memory_space<vmem>>, vector<1x5x16xbf16>,
    %c28_267 = arith.constant 28 : index
    %c0_268 = arith.constant 0 : index
    %340 = tpu.strided_load %arg9[%c28_267, %c0_268] {strides = array<i32: 2, 1>} : memref<140x16xf32, #tpu.memory_space<vmem>>, vector<5x16xf32>
    %c29_269 = arith.constant 29 : index
    %c0_270 = arith.constant 0 : index
    %341 = tpu.strided_load %arg9[%c29_269, %c0_270] {strides = array<i32: 2, 1>} : memref<140x16xf32, #tpu.memory_space<vmem>>, vector<5x16xf32>
    %c42_271 = arith.constant 42 : index
    %c0_272 = arith.constant 0 : index
    %342 = tpu.strided_load %arg9[%c42_271, %c0_272] {strides = array<i32: 2, 1>} : memref<140x16xf32, #tpu.memory_space<vmem>>, vector<5x16xf32>
    %c43_273 = arith.constant 43 : index
    %c0_274 = arith.constant 0 : index
    %343 = tpu.strided_load %arg9[%c43_273, %c0_274] {strides = array<i32: 2, 1>} : memref<140x16xf32, #tpu.memory_space<vmem>>, vector<5x16xf32>
    %344 = arith.maximumf %340, %341 : vector<5x16xf32>
    %345 = arith.maximumf %342, %343 : vector<5x16xf32>
    %346 = arith.maximumf %344, %345 : vector<5x16xf32>
    %347 = arith.truncf %346 : vector<5x16xf32> to vector<5x16xbf16>
    %c0_275 = arith.constant 0 : index
    %c5_276 = arith.constant 5 : index
    %c0_277 = arith.constant 0 : index
    %348 = vector.load %arg6[%c0_275, %c5_276, %c0_277] : memref<1x25x16xbf16, #tpu.memory_space<vmem>>, vector<1x5x16xbf16>
    %349 = vector.shape_cast %348 : vector<1x5x16xbf16> to vector<5x16xbf16>
    %350 = vector.shape_cast %347 : vector<5x16xbf16> to vector<1x5x16xbf16>
    tpu.vector_store %arg6[%c0_275, %c5_276, %c0_277], %350 {strides = array<i32>} : memref<1x25x16xbf16, #tpu.memory_space<vmem>>, vector<1x5x16xbf16>,
    %c56_278 = arith.constant 56 : index
    %c0_279 = arith.constant 0 : index
    %351 = tpu.strided_load %arg9[%c56_278, %c0_279] {strides = array<i32: 2, 1>} : memref<140x16xf32, #tpu.memory_space<vmem>>, vector<5x16xf32>
    %c57_280 = arith.constant 57 : index
    %c0_281 = arith.constant 0 : index
    %352 = tpu.strided_load %arg9[%c57_280, %c0_281] {strides = array<i32: 2, 1>} : memref<140x16xf32, #tpu.memory_space<vmem>>, vector<5x16xf32>
    %c70_282 = arith.constant 70 : index
    %c0_283 = arith.constant 0 : index
    %353 = tpu.strided_load %arg9[%c70_282, %c0_283] {strides = array<i32: 2, 1>} : memref<140x16xf32, #tpu.memory_space<vmem>>, vector<5x16xf32>
    %c71 = arith.constant 71 : index
    %c0_284 = arith.constant 0 : index
    %354 = tpu.strided_load %arg9[%c71, %c0_284] {strides = array<i32: 2, 1>} : memref<140x16xf32, #tpu.memory_space<vmem>>, vector<5x16xf32>
    %355 = arith.maximumf %351, %352 : vector<5x16xf32>
    %356 = arith.maximumf %353, %354 : vector<5x16xf32>
    %357 = arith.maximumf %355, %356 : vector<5x16xf32>
    %358 = arith.truncf %357 : vector<5x16xf32> to vector<5x16xbf16>
    %c0_285 = arith.constant 0 : index
    %c10_286 = arith.constant 10 : index
    %c0_287 = arith.constant 0 : index
    %359 = vector.load %arg6[%c0_285, %c10_286, %c0_287] : memref<1x25x16xbf16, #tpu.memory_space<vmem>>, vector<1x5x16xbf16>
    %360 = vector.shape_cast %359 : vector<1x5x16xbf16> to vector<5x16xbf16>
    %361 = vector.shape_cast %358 : vector<5x16xbf16> to vector<1x5x16xbf16>
    tpu.vector_store %arg6[%c0_285, %c10_286, %c0_287], %361 {strides = array<i32>} : memref<1x25x16xbf16, #tpu.memory_space<vmem>>, vector<1x5x16xbf16>,
    %c84_288 = arith.constant 84 : index
    %c0_289 = arith.constant 0 : index
    %362 = tpu.strided_load %arg9[%c84_288, %c0_289] {strides = array<i32: 2, 1>} : memref<140x16xf32, #tpu.memory_space<vmem>>, vector<5x16xf32>
    %c85_290 = arith.constant 85 : index
    %c0_291 = arith.constant 0 : index
    %363 = tpu.strided_load %arg9[%c85_290, %c0_291] {strides = array<i32: 2, 1>} : memref<140x16xf32, #tpu.memory_space<vmem>>, vector<5x16xf32>
    %c98_292 = arith.constant 98 : index
    %c0_293 = arith.constant 0 : index
    %364 = tpu.strided_load %arg9[%c98_292, %c0_293] {strides = array<i32: 2, 1>} : memref<140x16xf32, #tpu.memory_space<vmem>>, vector<5x16xf32>
    %c99 = arith.constant 99 : index
    %c0_294 = arith.constant 0 : index
    %365 = tpu.strided_load %arg9[%c99, %c0_294] {strides = array<i32: 2, 1>} : memref<140x16xf32, #tpu.memory_space<vmem>>, vector<5x16xf32>
    %366 = arith.maximumf %362, %363 : vector<5x16xf32>
    %367 = arith.maximumf %364, %365 : vector<5x16xf32>
    %368 = arith.maximumf %366, %367 : vector<5x16xf32>
    %369 = arith.truncf %368 : vector<5x16xf32> to vector<5x16xbf16>
    %c0_295 = arith.constant 0 : index
    %c15_296 = arith.constant 15 : index
    %c0_297 = arith.constant 0 : index
    %370 = vector.load %arg6[%c0_295, %c15_296, %c0_297] : memref<1x25x16xbf16, #tpu.memory_space<vmem>>, vector<1x5x16xbf16>
    %371 = vector.shape_cast %370 : vector<1x5x16xbf16> to vector<5x16xbf16>
    %372 = vector.shape_cast %369 : vector<5x16xbf16> to vector<1x5x16xbf16>
    tpu.vector_store %arg6[%c0_295, %c15_296, %c0_297], %372 {strides = array<i32>} : memref<1x25x16xbf16, #tpu.memory_space<vmem>>, vector<1x5x16xbf16>,
    %c112_298 = arith.constant 112 : index
    %c0_299 = arith.constant 0 : index
    %373 = tpu.strided_load %arg9[%c112_298, %c0_299] {strides = array<i32: 2, 1>} : memref<140x16xf32, #tpu.memory_space<vmem>>, vector<5x16xf32>
    %c113_300 = arith.constant 113 : index
    %c0_301 = arith.constant 0 : index
    %374 = tpu.strided_load %arg9[%c113_300, %c0_301] {strides = array<i32: 2, 1>} : memref<140x16xf32, #tpu.memory_space<vmem>>, vector<5x16xf32>
    %c126_302 = arith.constant 126 : index
    %c0_303 = arith.constant 0 : index
    %375 = tpu.strided_load %arg9[%c126_302, %c0_303] {strides = array<i32: 2, 1>} : memref<140x16xf32, #tpu.memory_space<vmem>>, vector<5x16xf32>
    %c127 = arith.constant 127 : index
    %c0_304 = arith.constant 0 : index
    %376 = tpu.strided_load %arg9[%c127, %c0_304] {strides = array<i32: 2, 1>} : memref<140x16xf32, #tpu.memory_space<vmem>>, vector<5x16xf32>
    %377 = arith.maximumf %373, %374 : vector<5x16xf32>
    %378 = arith.maximumf %375, %376 : vector<5x16xf32>
    %379 = arith.maximumf %377, %378 : vector<5x16xf32>
    %380 = arith.truncf %379 : vector<5x16xf32> to vector<5x16xbf16>
    %c0_305 = arith.constant 0 : index
    %c20_306 = arith.constant 20 : index
    %c0_307 = arith.constant 0 : index
    %381 = vector.load %arg6[%c0_305, %c20_306, %c0_307] : memref<1x25x16xbf16, #tpu.memory_space<vmem>>, vector<1x5x16xbf16>
    %382 = vector.shape_cast %381 : vector<1x5x16xbf16> to vector<5x16xbf16>
    %383 = vector.shape_cast %380 : vector<5x16xbf16> to vector<1x5x16xbf16>
    tpu.vector_store %arg6[%c0_305, %c20_306, %c0_307], %383 {strides = array<i32>} : memref<1x25x16xbf16, #tpu.memory_space<vmem>>, vector<1x5x16xbf16>,
    return
  }
  func.func @transform_0(%arg0: i32) -> (i32, i32, i32) {
    %c0_i32 = arith.constant 0 : i32
    %c0_i32_0 = arith.constant 0 : i32
    %c0_i32_1 = arith.constant 0 : i32
    return %arg0, %c0_i32, %c0_i32_0 : i32, i32, i32
  }
  func.func @transform_1(%arg0: i32) -> (i32, i32) {
    %c0_i32 = arith.constant 0 : i32
    %c0_i32_0 = arith.constant 0 : i32
    %c0_i32_1 = arith.constant 0 : i32
    return %c0_i32, %c0_i32_0 : i32, i32
  }
  func.func @transform_2(%arg0: i32) -> (i32, i32) {
    %c0_i32 = arith.constant 0 : i32
    %c0_i32_0 = arith.constant 0 : i32
    %c0_i32_1 = arith.constant 0 : i32
    return %c0_i32, %c0_i32_0 : i32, i32
  }
  func.func @transform_3(%arg0: i32) -> (i32, i32, i32) {
    %c0_i32 = arith.constant 0 : i32
    %c0_i32_0 = arith.constant 0 : i32
    %c0_i32_1 = arith.constant 0 : i32
    %c0_i32_2 = arith.constant 0 : i32
    return %c0_i32, %c0_i32_0, %c0_i32_1 : i32, i32, i32
  }
  func.func @transform_4(%arg0: i32) -> (i32, i32) {
    %c0_i32 = arith.constant 0 : i32
    %c0_i32_0 = arith.constant 0 : i32
    %c0_i32_1 = arith.constant 0 : i32
    return %c0_i32, %c0_i32_0 : i32, i32
  }
  func.func @transform_5(%arg0: i32) -> (i32, i32, i32) {
    %c0_i32 = arith.constant 0 : i32
    %c0_i32_0 = arith.constant 0 : i32
    %c0_i32_1 = arith.constant 0 : i32
    return %arg0, %c0_i32, %c0_i32_0 : i32, i32, i32
  }
}

module attributes {stable_mosaic.version = 11 : i64} {
  func.func @_fc_kernel(%arg0: i32, %arg1: memref<2x400xbf16, #tpu.memory_space<vmem>>, %arg2: memref<400x128xbf16, #tpu.memory_space<vmem>>, %arg3: memref<1x128xf32, #tpu.memory_space<vmem>>, %arg4: memref<128x128xbf16, #tpu.memory_space<vmem>>, %arg5: memref<1x128xf32, #tpu.memory_space<vmem>>, %arg6: memref<128x128xbf16, #tpu.memory_space<vmem>>, %arg7: memref<1x128xf32, #tpu.memory_space<vmem>>, %arg8: memref<2x128xf32, #tpu.memory_space<vmem>>) attributes {dimension_semantics = [#tpu.dimension_semantics<parallel>], iteration_bounds = array<i64: 1>, scalar_prefetch = 0 : i64, scratch_operands = 0 : i64, tpu.core_type = #tpu.core_type<tc>, window_params = [{transform_indices = @transform_0, window_bounds = array<i64: 2, 400>}, {pipeline_mode = #tpu.pipeline_mode<synchronous>, transform_indices = @transform_1, window_bounds = array<i64: 400, 128>}, {pipeline_mode = #tpu.pipeline_mode<synchronous>, transform_indices = @transform_2, window_bounds = array<i64: 1, 128>}, {pipeline_mode = #tpu.pipeline_mode<synchronous>, transform_indices = @transform_3, window_bounds = array<i64: 128, 128>}, {pipeline_mode = #tpu.pipeline_mode<synchronous>, transform_indices = @transform_4, window_bounds = array<i64: 1, 128>}, {pipeline_mode = #tpu.pipeline_mode<synchronous>, transform_indices = @transform_5, window_bounds = array<i64: 128, 128>}, {pipeline_mode = #tpu.pipeline_mode<synchronous>, transform_indices = @transform_6, window_bounds = array<i64: 1, 128>}, {transform_indices = @transform_7, window_bounds = array<i64: 2, 128>}]} {
    %c0 = arith.constant 0 : index
    %c0_0 = arith.constant 0 : index
    %0 = vector.load %arg1[%c0, %c0_0] : memref<2x400xbf16, #tpu.memory_space<vmem>>, vector<2x400xbf16>
    %c0_1 = arith.constant 0 : index
    %c0_2 = arith.constant 0 : index
    %1 = vector.load %arg2[%c0_1, %c0_2] : memref<400x128xbf16, #tpu.memory_space<vmem>>, vector<400x128xbf16>
    %cst = arith.constant dense<0.000000e+00> : vector<2x128xf32>
    %2 = tpu.matmul %0, %1, %cst {dimension_numbers = #tpu.dot_dimension_numbers<[1], [0], [0], [1], [0, 0, 1, 1], [], []>} : vector<2x400xbf16>, vector<400x128xbf16>, vector<2x128xf32> -> vector<2x128xf32>
    %c0_3 = arith.constant 0 : index
    %c0_4 = arith.constant 0 : index
    %3 = vector.load %arg3[%c0_3, %c0_4] : memref<1x128xf32, #tpu.memory_space<vmem>>, vector<1x128xf32>
    %4 = vector.broadcast %3 : vector<1x128xf32> to vector<2x128xf32>
    %5 = arith.addf %2, %4 : vector<2x128xf32>
    %cst_5 = arith.constant 0.000000e+00 : f32
    %6 = vector.broadcast %cst_5 : f32 to vector<2x128xf32>
    %7 = arith.maximumf %5, %6 : vector<2x128xf32>
    %8 = arith.truncf %7 : vector<2x128xf32> to vector<2x128xbf16>
    %c0_6 = arith.constant 0 : index
    %c0_7 = arith.constant 0 : index
    %9 = vector.load %arg4[%c0_6, %c0_7] : memref<128x128xbf16, #tpu.memory_space<vmem>>, vector<128x128xbf16>
    %cst_8 = arith.constant dense<0.000000e+00> : vector<2x128xf32>
    %10 = tpu.matmul %8, %9, %cst_8 {dimension_numbers = #tpu.dot_dimension_numbers<[1], [0], [0], [1], [0, 0, 1, 1], [], []>} : vector<2x128xbf16>, vector<128x128xbf16>, vector<2x128xf32> -> vector<2x128xf32>
    %c0_9 = arith.constant 0 : index
    %c0_10 = arith.constant 0 : index
    %11 = vector.load %arg5[%c0_9, %c0_10] : memref<1x128xf32, #tpu.memory_space<vmem>>, vector<1x128xf32>
    %12 = vector.broadcast %11 : vector<1x128xf32> to vector<2x128xf32>
    %13 = arith.addf %10, %12 : vector<2x128xf32>
    %cst_11 = arith.constant 0.000000e+00 : f32
    %14 = vector.broadcast %cst_11 : f32 to vector<2x128xf32>
    %15 = arith.maximumf %13, %14 : vector<2x128xf32>
    %16 = arith.truncf %15 : vector<2x128xf32> to vector<2x128xbf16>
    %c0_12 = arith.constant 0 : index
    %c0_13 = arith.constant 0 : index
    %17 = vector.load %arg6[%c0_12, %c0_13] : memref<128x128xbf16, #tpu.memory_space<vmem>>, vector<128x128xbf16>
    %cst_14 = arith.constant dense<0.000000e+00> : vector<2x128xf32>
    %18 = tpu.matmul %16, %17, %cst_14 {dimension_numbers = #tpu.dot_dimension_numbers<[1], [0], [0], [1], [0, 0, 1, 1], [], []>} : vector<2x128xbf16>, vector<128x128xbf16>, vector<2x128xf32> -> vector<2x128xf32>
    %c0_15 = arith.constant 0 : index
    %c0_16 = arith.constant 0 : index
    %19 = vector.load %arg7[%c0_15, %c0_16] : memref<1x128xf32, #tpu.memory_space<vmem>>, vector<1x128xf32>
    %20 = vector.broadcast %19 : vector<1x128xf32> to vector<2x128xf32>
    %21 = arith.addf %18, %20 : vector<2x128xf32>
    %c0_17 = arith.constant 0 : index
    %c0_18 = arith.constant 0 : index
    %22 = vector.load %arg8[%c0_17, %c0_18] : memref<2x128xf32, #tpu.memory_space<vmem>>, vector<2x128xf32>
    tpu.vector_store %arg8[%c0_17, %c0_18], %21 {strides = array<i32>} : memref<2x128xf32, #tpu.memory_space<vmem>>, vector<2x128xf32>,
    return
  }
  func.func @transform_0(%arg0: i32) -> (i32, i32) {
    %c0_i32 = arith.constant 0 : i32
    %c0_i32_0 = arith.constant 0 : i32
    return %arg0, %c0_i32 : i32, i32
  }
  func.func @transform_1(%arg0: i32) -> (i32, i32) {
    %c0_i32 = arith.constant 0 : i32
    %c0_i32_0 = arith.constant 0 : i32
    %c0_i32_1 = arith.constant 0 : i32
    return %c0_i32, %c0_i32_0 : i32, i32
  }
  func.func @transform_2(%arg0: i32) -> (i32, i32) {
    %c0_i32 = arith.constant 0 : i32
    %c0_i32_0 = arith.constant 0 : i32
    %c0_i32_1 = arith.constant 0 : i32
    return %c0_i32, %c0_i32_0 : i32, i32
  }
  func.func @transform_3(%arg0: i32) -> (i32, i32) {
    %c0_i32 = arith.constant 0 : i32
    %c0_i32_0 = arith.constant 0 : i32
    %c0_i32_1 = arith.constant 0 : i32
    return %c0_i32, %c0_i32_0 : i32, i32
  }
  func.func @transform_4(%arg0: i32) -> (i32, i32) {
    %c0_i32 = arith.constant 0 : i32
    %c0_i32_0 = arith.constant 0 : i32
    %c0_i32_1 = arith.constant 0 : i32
    return %c0_i32, %c0_i32_0 : i32, i32
  }
  func.func @transform_5(%arg0: i32) -> (i32, i32) {
    %c0_i32 = arith.constant 0 : i32
    %c0_i32_0 = arith.constant 0 : i32
    %c0_i32_1 = arith.constant 0 : i32
    return %c0_i32, %c0_i32_0 : i32, i32
  }
  func.func @transform_6(%arg0: i32) -> (i32, i32) {
    %c0_i32 = arith.constant 0 : i32
    %c0_i32_0 = arith.constant 0 : i32
    %c0_i32_1 = arith.constant 0 : i32
    return %c0_i32, %c0_i32_0 : i32, i32
  }
  func.func @transform_7(%arg0: i32) -> (i32, i32) {
    %c0_i32 = arith.constant 0 : i32
    %c0_i32_0 = arith.constant 0 : i32
    return %arg0, %c0_i32 : i32, i32
  }
}

</mosaic_0001>

<llo_original>
// kernel: net_forward.2
$region0: #{net_forward.2}
  #allocation0 [shape = 'u32[]', space=smem, size = 0x4, offset = 0x4, fixed_abs, tag = 'smem constant byte address 0x4 - core index']
  #allocation1 [shape = 'u32[72,128]{1,0:T(1,128)}', space=vmem, size = 0x9000, scoped, tag = 'internal scratch']
  #allocation2 [shape = 'f32[784,6]{1,0:T(8,128)}', space=vmem, size = 0x62000, scoped, tag = 'scratch operand']
  #allocation3 [shape = 'f32[208,6]{1,0:T(8,128)}', space=vmem, size = 0x1a000, scoped, tag = 'scratch operand']
  #allocation4 [shape = 'f32[140,16]{1,0:T(8,128)}', space=vmem, size = 0x12000, scoped, tag = 'scratch operand']
  %s0 = inlined_call_operand.vmem [shape: bf16[2,784,75], index: 0, kind: input, shape index: {}]
  %s1 = inlined_call_operand.vmem [shape: bf16[75,6], index: 1, kind: input, shape index: {}]
  %s2 = inlined_call_operand.vmem [shape: f32[1,6], index: 2, kind: input, shape index: {}]
  %s3 = inlined_call_operand.vmem [shape: bf16[25,6,16], index: 3, kind: input, shape index: {}]
  %s4 = inlined_call_operand.vmem [shape: f32[1,16], index: 4, kind: input, shape index: {}]
  %s5 = inlined_call_operand.vmem [shape: bf16[2,25,16], index: 5, kind: output, shape index: {}]
  %s6 = sld [smem:[#allocation0]]
  $region53: #{net_forward.2} parent=0
    _
  %s8 = ssub.s32 1, %s6
  %s9 = scalar_select 0, %s8, %s6
  loop: start=0, step=1, limit=4
  $region2: #{net_forward.2} parent=0 // loop_pre_header
    _
  $region3: #{net_forward.2} parent=0 // loop_header
    %s11 = sphi 0, %s15
    %p12 = scmp.ge.s32.totalorder %s11, 4
    %s21 = sphi 0, %s23
    %s24 = sphi 0, %s21
    %s25 = sphi 0, %s24
    %s41 = sphi 0, %s25
    %s45 = sphi 0, %s45
    %s47 = sphi 0, %s45
    %s48 = sphi 0, %s47
    %s62 = sphi 0, %s48
    %s66 = sphi 0, %s66
    %s68 = sphi 0, %s66
    %s69 = sphi 0, %s68
    %s83 = sphi 0, %s69
    %s87 = sphi 0, %s87
    %s89 = sphi 0, %s87
    %s90 = sphi 0, %s89
    %s104 = sphi 0, %s90
    %s108 = sphi 0, %s108
    %s110 = sphi 0, %s108
    %s111 = sphi 0, %s110
    %s125 = sphi 0, %s111
    %s131 = sphi 0, %s133
    %s134 = sphi 0, %s131
    %s135 = sphi 0, %s134
    %s151 = sphi 0, %s135
  $region4: #{net_forward.2} parent=0 // loop_header_branch
    %14 = sbr.rel (%p12) target = $region8
  $region5: #{net_forward.2} parent=0 // loop_body
    %s16 = ssub.s32 %s11, 1
    %s17 = ssub.s32 %s11, 2
    %s18 = sadd.s32 %s11, 1
    %s19 = ssub.s32 %s11, %s18
    %p20 = scmp.eq.s32.totalorder %s19, 0
    %s22 = sadd.s32 %s21, 1
    %s23 = scalar_select %p20, %s21, %s22
    %p26 = pneg %p20
    %p27 = scmp.eq.s32.totalorder %s11, 1
    %p28 = por %p26, %p27
    %p29 = scmp.ne.s32.totalorder %s21, %s24
    %p30 = scmp.eq.s32.totalorder %s11, 0
    %p31 = por %p29, %p30
    %p32 = scmp.ne.s32.totalorder %s21, %s24
    %p33 = scmp.eq.s32.totalorder %s16, 1
    %p34 = por %p32, %p33
    %p35 = scmp.ne.s32.totalorder %s24, %s25
    %p36 = scmp.eq.s32.totalorder %s16, 0
    %p37 = por %p35, %p36
    %p38 = scmp.ne.s32.totalorder %s24, %s25
    %p39 = scmp.eq.s32.totalorder %s17, 1
    %p40 = por %p38, %p39
    %p42 = scmp.ne.s32.totalorder %s25, %s41
    %p43 = scmp.eq.s32.totalorder %s17, 0
    %p44 = por %p42, %p43
    %s46 = sadd.s32 %s45, 1
    %p49 = scmp.eq.s32.totalorder %s11, 1
    %p50 = scmp.ne.s32.totalorder %s45, %s47
    %p51 = scmp.eq.s32.totalorder %s11, 0
    %p52 = por %p50, %p51
    %p53 = scmp.ne.s32.totalorder %s45, %s47
    %p54 = scmp.eq.s32.totalorder %s16, 1
    %p55 = por %p53, %p54
    %p56 = scmp.ne.s32.totalorder %s47, %s48
    %p57 = scmp.eq.s32.totalorder %s16, 0
    %p58 = por %p56, %p57
    %p59 = scmp.ne.s32.totalorder %s47, %s48
    %p60 = scmp.eq.s32.totalorder %s17, 1
    %p61 = por %p59, %p60
    %p63 = scmp.ne.s32.totalorder %s48, %s62
    %p64 = scmp.eq.s32.totalorder %s17, 0
    %p65 = por %p63, %p64
    %s67 = sadd.s32 %s66, 1
    %p70 = scmp.eq.s32.totalorder %s11, 1
    %p71 = scmp.ne.s32.totalorder %s66, %s68
    %p72 = scmp.eq.s32.totalorder %s11, 0
    %p73 = por %p71, %p72
    %p74 = scmp.ne.s32.totalorder %s66, %s68
    %p75 = scmp.eq.s32.totalorder %s16, 1
    %p76 = por %p74, %p75
    %p77 = scmp.ne.s32.totalorder %s68, %s69
    %p78 = scmp.eq.s32.totalorder %s16, 0
    %p79 = por %p77, %p78
    %p80 = scmp.ne.s32.totalorder %s68, %s69
    %p81 = scmp.eq.s32.totalorder %s17, 1
    %p82 = por %p80, %p81
    %p84 = scmp.ne.s32.totalorder %s69, %s83
    %p85 = scmp.eq.s32.totalorder %s17, 0
    %p86 = por %p84, %p85
    %s88 = sadd.s32 %s87, 1
    %p91 = scmp.eq.s32.totalorder %s11, 1
    %p92 = scmp.ne.s32.totalorder %s87, %s89
    %p93 = scmp.eq.s32.totalorder %s11, 0
    %p94 = por %p92, %p93
    %p95 = scmp.ne.s32.totalorder %s87, %s89
    %p96 = scmp.eq.s32.totalorder %s16, 1
    %p97 = por %p95, %p96
    %p98 = scmp.ne.s32.totalorder %s89, %s90
    %p99 = scmp.eq.s32.totalorder %s16, 0
    %p100 = por %p98, %p99
    %p101 = scmp.ne.s32.totalorder %s89, %s90
    %p102 = scmp.eq.s32.totalorder %s17, 1
    %p103 = por %p101, %p102
    %p105 = scmp.ne.s32.totalorder %s90, %s104
    %p106 = scmp.eq.s32.totalorder %s17, 0
    %p107 = por %p105, %p106
    %s109 = sadd.s32 %s108, 1
    %p112 = scmp.eq.s32.totalorder %s11, 1
    %p113 = scmp.ne.s32.totalorder %s108, %s110
    %p114 = scmp.eq.s32.totalorder %s11, 0
    %p115 = por %p113, %p114
    %p116 = scmp.ne.s32.totalorder %s108, %s110
    %p117 = scmp.eq.s32.totalorder %s16, 1
    %p118 = por %p116, %p117
    %p119 = scmp.ne.s32.totalorder %s110, %s111
    %p120 = scmp.eq.s32.totalorder %s16, 0
    %p121 = por %p119, %p120
    %p122 = scmp.ne.s32.totalorder %s110, %s111
    %p123 = scmp.eq.s32.totalorder %s17, 1
    %p124 = por %p122, %p123
    %p126 = scmp.ne.s32.totalorder %s111, %s125
    %p127 = scmp.eq.s32.totalorder %s17, 0
    %p128 = por %p126, %p127
    %s129 = ssub.s32 %s11, %s18
    %p130 = scmp.eq.s32.totalorder %s129, 0
    %s132 = sadd.s32 %s131, 1
    %s133 = scalar_select %p130, %s131, %s132
    %p136 = pneg %p130
    %p137 = scmp.eq.s32.totalorder %s11, 1
    %p138 = por %p136, %p137
    %p139 = scmp.ne.s32.totalorder %s131, %s134
    %p140 = scmp.eq.s32.totalorder %s11, 0
    %p141 = por %p139, %p140
    %p142 = scmp.ne.s32.totalorder %s131, %s134
    %p143 = scmp.eq.s32.totalorder %s16, 1
    %p144 = por %p142, %p143
    %p145 = scmp.ne.s32.totalorder %s134, %s135
    %p146 = scmp.eq.s32.totalorder %s16, 0
    %p147 = por %p145, %p146
    %p148 = scmp.ne.s32.totalorder %s134, %s135
    %p149 = scmp.eq.s32.totalorder %s17, 1
    %p150 = por %p148, %p149
    %p152 = scmp.ne.s32.totalorder %s135, %s151
    %p153 = scmp.eq.s32.totalorder %s17, 0
    %p154 = por %p152, %p153
    %p155 = scmp.le.s32.totalorder 1, %s11
    %p156 = scmp.lt.s32.totalorder %s11, 3
    %p157 = pnand %p155, %p156
    %p158 = pneg %p157
    // Predicated region
    $region9: #{net_forward.2} parent=5 // pred_check
      _
    $region10: #{net_forward.2} parent=5 // pred_check_branch
      %160 = sbr.rel (%p157) target = $region12
    $region11: #{net_forward.2} parent=5 // pred_region
      %s161 = ssub.s32 %s11, 1
      // Predicated region
      $region13: #{net_forward.2} parent=11 // pred_check
        %p162 = pneg %p58
      $region14: #{net_forward.2} parent=11 // pred_check_branch
        %164 = sbr.rel (%p162) target = $region16
      $region15: #{net_forward.2} parent=11 // pred_region
        _
      $region16: #{net_forward.2} parent=11 // pred_fallthru
        _
      // Predicated region
      $region17: #{net_forward.2} parent=11 // pred_check
        %p165 = pneg %p79
      $region18: #{net_forward.2} parent=11 // pred_check_branch
        %167 = sbr.rel (%p165) target = $region20
      $region19: #{net_forward.2} parent=11 // pred_region
        _
      $region20: #{net_forward.2} parent=11 // pred_fallthru
        _
      // Predicated region
      $region21: #{net_forward.2} parent=11 // pred_check
        %p168 = pneg %p100
      $region22: #{net_forward.2} parent=11 // pred_check_branch
        %170 = sbr.rel (%p168) target = $region24
      $region23: #{net_forward.2} parent=11 // pred_region
        _
      $region24: #{net_forward.2} parent=11 // pred_fallthru
        _
      // Predicated region
      $region25: #{net_forward.2} parent=11 // pred_check
        %p171 = pneg %p121
      $region26: #{net_forward.2} parent=11 // pred_check_branch
        %173 = sbr.rel (%p171) target = $region28
      $region27: #{net_forward.2} parent=11 // pred_region
        _
      $region28: #{net_forward.2} parent=11 // pred_fallthru
        _
    $region12: #{net_forward.2} parent=5 // pred_fallthru
      _
    %p174 = scmp.lt.s32.totalorder %s11, 2
    // Predicated region
    $region29: #{net_forward.2} parent=5 // pred_check
      %p175 = pneg %p174
    $region30: #{net_forward.2} parent=5 // pred_check_branch
      %177 = sbr.rel (%p175) target = $region32
    $region31: #{net_forward.2} parent=5 // pred_region
      // Predicated region
      $region33: #{net_forward.2} parent=31 // pred_check
        %p178 = pneg %p31
      $region34: #{net_forward.2} parent=31 // pred_check_branch
        %180 = sbr.rel (%p178) target = $region36
      $region35: #{net_forward.2} parent=31 // pred_region
        %p181 = scmp.lt.s32.totalorder %s11, 1
        %s182 = scalar_select %p181, %s11, 1
        %s183 = smul.addr %s182, 98
        %s184 = smul.addr %s183, 4
        %s185 = scalar_lea.vmem %s0, %s184
      $region36: #{net_forward.2} parent=31 // pred_fallthru
        _
    $region32: #{net_forward.2} parent=5 // pred_fallthru
      _
    %p186 = scmp.le.s32.totalorder 1, %s11
    %p187 = scmp.lt.s32.totalorder %s11, 3
    %p188 = pnand %p186, %p187
    %p189 = pneg %p188
    // Predicated region
    $region37: #{net_forward.2} parent=5 // pred_check
      _
    $region38: #{net_forward.2} parent=5 // pred_check_branch
      %191 = sbr.rel (%p188) target = $region40
    $region39: #{net_forward.2} parent=5 // pred_region
      %s192 = ssub.s32 %s11, 1
      %p193 = scmp.lt.s32.totalorder %s16, 1
      %s194 = scalar_select %p193, %s16, 1
      %s195 = smul.addr %s194, 98
      %s196 = smul.addr %s195, 4
      %s197 = scalar_lea.vmem %s0, %s196
      %p198 = pneg %p37
      %p199 = pneg %p34
      %p200 = pneg %p58
      %p201 = pneg %p55
      %p202 = pneg %p79
      %p203 = pneg %p76
      %p204 = pneg %p100
      %p205 = pneg %p97
      %p206 = pneg %p121
      %p207 = pneg %p118
      %p208 = pneg %p147
      %p209 = pneg %p144
      %p210 = scmp.lt.s32.totalorder %s16, 1
      %s211 = scalar_select %p210, %s16, 1
      %s212 = smul.addr %s211, 4
      %s213 = smul.addr %s212, 4
      %s214 = scalar_lea.vmem %s5, %s213
      %p215 = scmp.lt.s32.totalorder %s16, 1
      %s216 = scalar_select %p215, %s16, 1
      %s217 = smul.addr %s216, 98
      %s218 = smul.addr %s217, 4
      %s219 = scalar_lea.vmem %s0, %s218
      %p220 = scmp.lt.s32.totalorder %s16, 1
      %s221 = scalar_select %p220, %s16, 1
      %s222 = smul.addr %s221, 4
      %s223 = smul.addr %s222, 4
      %s224 = scalar_lea.vmem %s5, %s223
      %v226 = vld [vmem:[%s1] sm:$0xf]
      %v227 = vld [vmem:[%s1 + $0x4] sm:$0xf]
      %v228 = vld [vmem:[%s1 + $0x8] sm:$0xf]
      %v229 = vld [vmem:[%s1 + $0xc] sm:$0xf]
      %v230 = vld [vmem:[%s1 + $0x10] sm:$0xf]
      %v231 = vld [vmem:[%s1 + $0x14] sm:$0xf]
      %v232 = vld [vmem:[%s1 + $0x18] sm:$0xf]
      %v233 = vld [vmem:[%s1 + $0x1c] sm:$0xf]
      %v234 = vld [vmem:[%s1 + $0x20] sm:$0xf]
      %v235 = vld [vmem:[%s1 + $0x24] sm:$0x3]
      %v236 = vld [vmem:[%s2] sm:$0x1]
      %v237 = vld [vmem:[%s219] sm:$0xf]
      %v238 = vld [vmem:[%s219 + $0x4] sm:$0xf]
      %v239 = vld [vmem:[%s219 + $0x8] sm:$0xf]
      %v240 = vld [vmem:[%s219 + $0xc] sm:$0xf]
      %v241 = vld [vmem:[%s219 + $0x10] sm:$0xf]
      %v242 = vld [vmem:[%s219 + $0x14] sm:$0xf]
      %v243 = vld [vmem:[%s219 + $0x18] sm:$0xf]
      %v244 = vld [vmem:[%s219 + $0x1c] sm:$0xf]
      %v245 = vld [vmem:[%s219 + $0x20] sm:$0xf]
      %v246 = vld [vmem:[%s219 + $0x24] sm:$0xf]
      %v247 = vld [vmem:[%s219 + $0x28] sm:$0xf]
      %v248 = vld [vmem:[%s219 + $0x2c] sm:$0xf]
      %v249 = vld [vmem:[%s219 + $0x30] sm:$0xf]
      %v250 = vld [vmem:[%s219 + $0x34] sm:$0xf]
      %v252 = vperm.slane %v236, 0
      %v268 = vunpack.c.l.b16 %v237
      %v269 = vunpack.c.l.b16 %v238
      %v270 = vunpack.c.l.b16 %v239
      %v271 = vunpack.c.l.b16 %v240
      %v272 = vunpack.c.l.b16 %v241
      %v273 = vunpack.c.l.b16 %v242
      %v274 = vunpack.c.l.b16 %v243
      %v275 = vunpack.c.l.b16 %v244
      %v276 = vunpack.c.l.b16 %v245
      %v277 = vunpack.c.l.b16 %v246
      %v278 = vunpack.c.l.b16 %v247
      %v279 = vunpack.c.l.b16 %v248
      %v280 = vunpack.c.l.b16 %v249
      %v281 = vunpack.c.l.b16 %v250
      %v282 = vpack.c.b16 %v269, %v268
      %v283 = vpack.c.b16 %v271, %v270
      %v284 = vpack.c.b16 %v273, %v272
      %v285 = vpack.c.b16 %v275, %v274
      %v286 = vpack.c.b16 %v277, %v276
      %v287 = vpack.c.b16 %v279, %v278
      %v288 = vpack.c.b16 %v281, %v280
      %v299 = vunpack.c.l.b16 %v226
      %v300 = vunpack.c.l.b16 %v227
      %v301 = vunpack.c.l.b16 %v228
      %v302 = vunpack.c.l.b16 %v229
      %v303 = vunpack.c.l.b16 %v230
      %v304 = vunpack.c.l.b16 %v231
      %v305 = vunpack.c.l.b16 %v232
      %v306 = vunpack.c.l.b16 %v233
      %v307 = vunpack.c.l.b16 %v234
      %v308 = vunpack.c.l.b16 %v235
      %v309 = vpack.c.b16 %v300, %v299
      %v310 = vpack.c.b16 %v302, %v301
      %v311 = vpack.c.b16 %v304, %v303
      %v312 = vpack.c.b16 %v306, %v305
      %v313 = vpack.c.b16 %v308, %v307
      %vm318 = vcmask 613376
      %v320 = vsel %vm318, %v282, 0
      %v323 = vsel %vm318, %v283, 0
      %v326 = vsel %vm318, %v284, 0
      %v329 = vsel %vm318, %v285, 0
      %v332 = vsel %vm318, %v286, 0
      %v335 = vsel %vm318, %v287, 0
      %v338 = vsel %vm318, %v288, 0
      %vm340 = vcmask 1044480
      %vm341 = vcmask 1045504
      %v342 = vsel %vm340, 4294967295, 65535
      %v343 = vsel %vm341, %v342, 0
      %v345 = vand.u32 %v313, %v343
      %347 = vmatpush.bf16.msra.mxu0 0
      %348 = vmatpush.bf16.msra.mxu0 0
      %349 = vmatpush.bf16.msra.mxu0 0
      %350 = vmatpush.bf16.msra.mxu0 %v345
      %351 = vmatpush.bf16.msra.mxu0 %v312
      %352 = vmatpush.bf16.msra.mxu0 %v311
      %353 = vmatpush.bf16.msra.mxu0 %v310
      %354 = vmatpush.bf16.msra.mxu0 %v309
      %355 = vmatmul.bf16.gmra.mxu0 %v320
      %v356 = vpop.f32.mrf.mxu0
      %v357 = vadd.f32 %v252, %v356
      %v358 = vpop.f32.mrf.mxu0
      %v359 = vadd.f32 %v252, %v358
      %360 = vmatmul.bf16.gmra.mxu0 %v323
      %v361 = vpop.f32.mrf.mxu0
      %v362 = vadd.f32 %v252, %v361
      %v363 = vpop.f32.mrf.mxu0
      %v364 = vadd.f32 %v252, %v363
      %365 = vmatmul.bf16.gmra.mxu0 %v326
      %v366 = vpop.f32.mrf.mxu0
      %v367 = vadd.f32 %v252, %v366
      %v368 = vpop.f32.mrf.mxu0
      %v369 = vadd.f32 %v252, %v368
      %370 = vmatmul.bf16.gmra.mxu0 %v329
      %v371 = vpop.f32.mrf.mxu0
      %v372 = vadd.f32 %v252, %v371
      %v373 = vpop.f32.mrf.mxu0
      %v374 = vadd.f32 %v252, %v373
      %375 = vmatmul.bf16.gmra.mxu0 %v332
      %v376 = vpop.f32.mrf.mxu0
      %v377 = vadd.f32 %v252, %v376
      %v378 = vpop.f32.mrf.mxu0
      %v379 = vadd.f32 %v252, %v378
      %380 = vmatmul.bf16.gmra.mxu0 %v335
      %v381 = vpop.f32.mrf.mxu0
      %v382 = vadd.f32 %v252, %v381
      %v383 = vpop.f32.mrf.mxu0
      %v384 = vadd.f32 %v252, %v383
      %385 = vmatmul.bf16.gmra.mxu0 %v338
      %v386 = vpop.f32.mrf.mxu0
      %v387 = vadd.f32 %v252, %v386
      %v388 = vpop.f32.mrf.mxu0
      %v389 = vadd.f32 %v252, %v388
      %390 = vdwg.mxu0
      %v391 = vmax.f32 %v357, 0.0
      %v392 = vmax.f32 %v359, 0.0
      %v393 = vmax.f32 %v362, 0.0
      %v394 = vmax.f32 %v364, 0.0
      %v395 = vmax.f32 %v367, 0.0
      %v396 = vmax.f32 %v369, 0.0
      %v397 = vmax.f32 %v372, 0.0
      %v398 = vmax.f32 %v374, 0.0
      %v399 = vmax.f32 %v377, 0.0
      %v400 = vmax.f32 %v379, 0.0
      %v401 = vmax.f32 %v382, 0.0
      %v402 = vmax.f32 %v384, 0.0
      %v403 = vmax.f32 %v387, 0.0
      %v404 = vmax.f32 %v389, 0.0
      %vm405 = vcmask 48128
      %406 = vst.msk [vmem:[#allocation2] sm:$0xff] %vm405, %v391
      %407 = vst.msk [vmem:[#allocation2 + $0x8] sm:$0xff] %vm405, %v392
      %408 = vst.msk [vmem:[#allocation2 + $0x10] sm:$0xff] %vm405, %v393
      %409 = vst.msk [vmem:[#allocation2 + $0x18] sm:$0xff] %vm405, %v394
      %410 = vst.msk [vmem:[#allocation2 + $0x20] sm:$0xff] %vm405, %v395
      %411 = vst.msk [vmem:[#allocation2 + $0x28] sm:$0xff] %vm405, %v396
      %412 = vst.msk [vmem:[#allocation2 + $0x30] sm:$0xff] %vm405, %v397
      %413 = vst.msk [vmem:[#allocation2 + $0x38] sm:$0xff] %vm405, %v398
      %414 = vst.msk [vmem:[#allocation2 + $0x40] sm:$0xff] %vm405, %v399
      %415 = vst.msk [vmem:[#allocation2 + $0x48] sm:$0xff] %vm405, %v400
      %416 = vst.msk [vmem:[#allocation2 + $0x50] sm:$0xff] %vm405, %v401
      %417 = vst.msk [vmem:[#allocation2 + $0x58] sm:$0xff] %vm405, %v402
      %418 = vst.msk [vmem:[#allocation2 + $0x60] sm:$0xff] %vm405, %v403
      %419 = vst.msk [vmem:[#allocation2 + $0x68] sm:$0xff] %vm405, %v404
      %v420 = vld [vmem:[%s219 + $0x38] sm:$0xf]
      %v421 = vld [vmem:[%s219 + $0x3c] sm:$0xf]
      %v422 = vld [vmem:[%s219 + $0x40] sm:$0xf]
      %v423 = vld [vmem:[%s219 + $0x44] sm:$0xf]
      %v424 = vld [vmem:[%s219 + $0x48] sm:$0xf]
      %v425 = vld [vmem:[%s219 + $0x4c] sm:$0xf]
      %v426 = vld [vmem:[%s219 + $0x50] sm:$0xf]
      %v427 = vld [vmem:[%s219 + $0x54] sm:$0xf]
      %v428 = vld [vmem:[%s219 + $0x58] sm:$0xf]
      %v429 = vld [vmem:[%s219 + $0x5c] sm:$0xf]
      %v430 = vld [vmem:[%s219 + $0x60] sm:$0xf]
      %v431 = vld [vmem:[%s219 + $0x64] sm:$0xf]
      %v432 = vld [vmem:[%s219 + $0x68] sm:$0xf]
      %v433 = vld [vmem:[%s219 + $0x6c] sm:$0xf]
      %v448 = vunpack.c.l.b16 %v420
      %v449 = vunpack.c.l.b16 %v421
      %v450 = vunpack.c.l.b16 %v422
      %v451 = vunpack.c.l.b16 %v423
      %v452 = vunpack.c.l.b16 %v424
      %v453 = vunpack.c.l.b16 %v425
      %v454 = vunpack.c.l.b16 %v426
      %v455 = vunpack.c.l.b16 %v427
      %v456 = vunpack.c.l.b16 %v428
      %v457 = vunpack.c.l.b16 %v429
      %v458 = vunpack.c.l.b16 %v430
      %v459 = vunpack.c.l.b16 %v431
      %v460 = vunpack.c.l.b16 %v432
      %v461 = vunpack.c.l.b16 %v433
      %v462 = vpack.c.b16 %v449, %v448
      %v463 = vpack.c.b16 %v451, %v450
      %v464 = vpack.c.b16 %v453, %v452
      %v465 = vpack.c.b16 %v455, %v454
      %v466 = vpack.c.b16 %v457, %v456
      %v467 = vpack.c.b16 %v459, %v458
      %v468 = vpack.c.b16 %v461, %v460
      %v470 = vsel %vm318, %v462, 0
      %v473 = vsel %vm318, %v463, 0
      %v476 = vsel %vm318, %v464, 0
      %v479 = vsel %vm318, %v465, 0
      %v482 = vsel %vm318, %v466, 0
      %v485 = vsel %vm318, %v467, 0
      %v488 = vsel %vm318, %v468, 0
      %490 = vmatpush.bf16.msra.mxu0 0
      %491 = vmatpush.bf16.msra.mxu0 0
      %492 = vmatpush.bf16.msra.mxu0 0
      %493 = vmatpush.bf16.msra.mxu0 %v345
      %494 = vmatpush.bf16.msra.mxu0 %v312
      %495 = vmatpush.bf16.msra.mxu0 %v311
      %496 = vmatpush.bf16.msra.mxu0 %v310
      %497 = vmatpush.bf16.msra.mxu0 %v309
      %498 = vmatmul.bf16.gmra.mxu0 %v470
      %v499 = vpop.f32.mrf.mxu0
      %v500 = vadd.f32 %v252, %v499
      %v501 = vpop.f32.mrf.mxu0
      %v502 = vadd.f32 %v252, %v501
      %503 = vmatmul.bf16.gmra.mxu0 %v473
      %v504 = vpop.f32.mrf.mxu0
      %v505 = vadd.f32 %v252, %v504
      %v506 = vpop.f32.mrf.mxu0
      %v507 = vadd.f32 %v252, %v506
      %508 = vmatmul.bf16.gmra.mxu0 %v476
      %v509 = vpop.f32.mrf.mxu0
      %v510 = vadd.f32 %v252, %v509
      %v511 = vpop.f32.mrf.mxu0
      %v512 = vadd.f32 %v252, %v511
      %513 = vmatmul.bf16.gmra.mxu0 %v479
      %v514 = vpop.f32.mrf.mxu0
      %v515 = vadd.f32 %v252, %v514
      %v516 = vpop.f32.mrf.mxu0
      %v517 = vadd.f32 %v252, %v516
      %518 = vmatmul.bf16.gmra.mxu0 %v482
      %v519 = vpop.f32.mrf.mxu0
      %v520 = vadd.f32 %v252, %v519
      %v521 = vpop.f32.mrf.mxu0
      %v522 = vadd.f32 %v252, %v521
      %523 = vmatmul.bf16.gmra.mxu0 %v485
      %v524 = vpop.f32.mrf.mxu0
      %v525 = vadd.f32 %v252, %v524
      %v526 = vpop.f32.mrf.mxu0
      %v527 = vadd.f32 %v252, %v526
      %528 = vmatmul.bf16.gmra.mxu0 %v488
      %v529 = vpop.f32.mrf.mxu0
      %v530 = vadd.f32 %v252, %v529
      %v531 = vpop.f32.mrf.mxu0
      %v532 = vadd.f32 %v252, %v531
      %533 = vdwg.mxu0
      %v534 = vmax.f32 %v500, 0.0
      %v535 = vmax.f32 %v502, 0.0
      %v536 = vmax.f32 %v505, 0.0
      %v537 = vmax.f32 %v507, 0.0
      %v538 = vmax.f32 %v510, 0.0
      %v539 = vmax.f32 %v512, 0.0
      %v540 = vmax.f32 %v515, 0.0
      %v541 = vmax.f32 %v517, 0.0
      %v542 = vmax.f32 %v520, 0.0
      %v543 = vmax.f32 %v522, 0.0
      %v544 = vmax.f32 %v525, 0.0
      %v545 = vmax.f32 %v527, 0.0
      %v546 = vmax.f32 %v530, 0.0
      %v547 = vmax.f32 %v532, 0.0
      %548 = vst.msk [vmem:[#allocation2 + $0x70] sm:$0xff] %vm405, %v534
      %549 = vst.msk [vmem:[#allocation2 + $0x78] sm:$0xff] %vm405, %v535
      %550 = vst.msk [vmem:[#allocation2 + $0x80] sm:$0xff] %vm405, %v536
      %551 = vst.msk [vmem:[#allocation2 + $0x88] sm:$0xff] %vm405, %v537
      %552 = vst.msk [vmem:[#allocation2 + $0x90] sm:$0xff] %vm405, %v538
      %553 = vst.msk [vmem:[#allocation2 + $0x98] sm:$0xff] %vm405, %v539
      %554 = vst.msk [vmem:[#allocation2 + $0xa0] sm:$0xff] %vm405, %v540
      %555 = vst.msk [vmem:[#allocation2 + $0xa8] sm:$0xff] %vm405, %v541
      %556 = vst.msk [vmem:[#allocation2 + $0xb0] sm:$0xff] %vm405, %v542
      %557 = vst.msk [vmem:[#allocation2 + $0xb8] sm:$0xff] %vm405, %v543
      %558 = vst.msk [vmem:[#allocation2 + $0xc0] sm:$0xff] %vm405, %v544
      %559 = vst.msk [vmem:[#allocation2 + $0xc8] sm:$0xff] %vm405, %v545
      %560 = vst.msk [vmem:[#allocation2 + $0xd0] sm:$0xff] %vm405, %v546
      %561 = vst.msk [vmem:[#allocation2 + $0xd8] sm:$0xff] %vm405, %v547
      %v562 = vld [vmem:[%s219 + $0x70] sm:$0xf]
      %v563 = vld [vmem:[%s219 + $0x74] sm:$0xf]
      %v564 = vld [vmem:[%s219 + $0x78] sm:$0xf]
      %v565 = vld [vmem:[%s219 + $0x7c] sm:$0xf]
      %v566 = vld [vmem:[%s219 + $0x80] sm:$0xf]
      %v567 = vld [vmem:[%s219 + $0x84] sm:$0xf]
      %v568 = vld [vmem:[%s219 + $0x88] sm:$0xf]
      %v569 = vld [vmem:[%s219 + $0x8c] sm:$0xf]
      %v570 = vld [vmem:[%s219 + $0x90] sm:$0xf]
      %v571 = vld [vmem:[%s219 + $0x94] sm:$0xf]
      %v572 = vld [vmem:[%s219 + $0x98] sm:$0xf]
      %v573 = vld [vmem:[%s219 + $0x9c] sm:$0xf]
      %v574 = vld [vmem:[%s219 + $0xa0] sm:$0xf]
      %v575 = vld [vmem:[%s219 + $0xa4] sm:$0xf]
      %v590 = vunpack.c.l.b16 %v562
      %v591 = vunpack.c.l.b16 %v563
      %v592 = vunpack.c.l.b16 %v564
      %v593 = vunpack.c.l.b16 %v565
      %v594 = vunpack.c.l.b16 %v566
      %v595 = vunpack.c.l.b16 %v567
      %v596 = vunpack.c.l.b16 %v568
      %v597 = vunpack.c.l.b16 %v569
      %v598 = vunpack.c.l.b16 %v570
      %v599 = vunpack.c.l.b16 %v571
      %v600 = vunpack.c.l.b16 %v572
      %v601 = vunpack.c.l.b16 %v573
      %v602 = vunpack.c.l.b16 %v574
      %v603 = vunpack.c.l.b16 %v575
      %v604 = vpack.c.b16 %v591, %v590
      %v605 = vpack.c.b16 %v593, %v592
      %v606 = vpack.c.b16 %v595, %v594
      %v607 = vpack.c.b16 %v597, %v596
      %v608 = vpack.c.b16 %v599, %v598
      %v609 = vpack.c.b16 %v601, %v600
      %v610 = vpack.c.b16 %v603, %v602
      %v612 = vsel %vm318, %v604, 0
      %v615 = vsel %vm318, %v605, 0
      %v618 = vsel %vm318, %v606, 0
      %v621 = vsel %vm318, %v607, 0
      %v624 = vsel %vm318, %v608, 0
      %v627 = vsel %vm318, %v609, 0
      %v630 = vsel %vm318, %v610, 0
      %632 = vmatpush.bf16.msra.mxu0 0
      %633 = vmatpush.bf16.msra.mxu0 0
      %634 = vmatpush.bf16.msra.mxu0 0
      %635 = vmatpush.bf16.msra.mxu0 %v345
      %636 = vmatpush.bf16.msra.mxu0 %v312
      %637 = vmatpush.bf16.msra.mxu0 %v311
      %638 = vmatpush.bf16.msra.mxu0 %v310
      %639 = vmatpush.bf16.msra.mxu0 %v309
      %640 = vmatmul.bf16.gmra.mxu0 %v612
      %v641 = vpop.f32.mrf.mxu0
      %v642 = vadd.f32 %v252, %v641
      %v643 = vpop.f32.mrf.mxu0
      %v644 = vadd.f32 %v252, %v643
      %645 = vmatmul.bf16.gmra.mxu0 %v615
      %v646 = vpop.f32.mrf.mxu0
      %v647 = vadd.f32 %v252, %v646
      %v648 = vpop.f32.mrf.mxu0
      %v649 = vadd.f32 %v252, %v648
      %650 = vmatmul.bf16.gmra.mxu0 %v618
      %v651 = vpop.f32.mrf.mxu0
      %v652 = vadd.f32 %v252, %v651
      %v653 = vpop.f32.mrf.mxu0
      %v654 = vadd.f32 %v252, %v653
      %655 = vmatmul.bf16.gmra.mxu0 %v621
      %v656 = vpop.f32.mrf.mxu0
      %v657 = vadd.f32 %v252, %v656
      %v658 = vpop.f32.mrf.mxu0
      %v659 = vadd.f32 %v252, %v658
      %660 = vmatmul.bf16.gmra.mxu0 %v624
      %v661 = vpop.f32.mrf.mxu0
      %v662 = vadd.f32 %v252, %v661
      %v663 = vpop.f32.mrf.mxu0
      %v664 = vadd.f32 %v252, %v663
      %665 = vmatmul.bf16.gmra.mxu0 %v627
      %v666 = vpop.f32.mrf.mxu0
      %v667 = vadd.f32 %v252, %v666
      %v668 = vpop.f32.mrf.mxu0
      %v669 = vadd.f32 %v252, %v668
      %670 = vmatmul.bf16.gmra.mxu0 %v630
      %v671 = vpop.f32.mrf.mxu0
      %v672 = vadd.f32 %v252, %v671
      %v673 = vpop.f32.mrf.mxu0
      %v674 = vadd.f32 %v252, %v673
      %675 = vdwg.mxu0
      %v676 = vmax.f32 %v642, 0.0
      %v677 = vmax.f32 %v644, 0.0
      %v678 = vmax.f32 %v647, 0.0
      %v679 = vmax.f32 %v649, 0.0
      %v680 = vmax.f32 %v652, 0.0
      %v681 = vmax.f32 %v654, 0.0
      %v682 = vmax.f32 %v657, 0.0
      %v683 = vmax.f32 %v659, 0.0
      %v684 = vmax.f32 %v662, 0.0
      %v685 = vmax.f32 %v664, 0.0
      %v686 = vmax.f32 %v667, 0.0
      %v687 = vmax.f32 %v669, 0.0
      %v688 = vmax.f32 %v672, 0.0
      %v689 = vmax.f32 %v674, 0.0
      %690 = vst.msk [vmem:[#allocation2 + $0xe0] sm:$0xff] %vm405, %v676
      %691 = vst.msk [vmem:[#allocation2 + $0xe8] sm:$0xff] %vm405, %v677
      %692 = vst.msk [vmem:[#allocation2 + $0xf0] sm:$0xff] %vm405, %v678
      %693 = vst.msk [vmem:[#allocation2 + $0xf8] sm:$0xff] %vm405, %v679
      %694 = vst.msk [vmem:[#allocation2 + $0x100] sm:$0xff] %vm405, %v680
      %695 = vst.msk [vmem:[#allocation2 + $0x108] sm:$0xff] %vm405, %v681
      %696 = vst.msk [vmem:[#allocation2 + $0x110] sm:$0xff] %vm405, %v682
      %697 = vst.msk [vmem:[#allocation2 + $0x118] sm:$0xff] %vm405, %v683
      %698 = vst.msk [vmem:[#allocation2 + $0x120] sm:$0xff] %vm405, %v684
      %699 = vst.msk [vmem:[#allocation2 + $0x128] sm:$0xff] %vm405, %v685
      %700 = vst.msk [vmem:[#allocation2 + $0x130] sm:$0xff] %vm405, %v686
      %701 = vst.msk [vmem:[#allocation2 + $0x138] sm:$0xff] %vm405, %v687
      %702 = vst.msk [vmem:[#allocation2 + $0x140] sm:$0xff] %vm405, %v688
      %703 = vst.msk [vmem:[#allocation2 + $0x148] sm:$0xff] %vm405, %v689
      %v704 = vld [vmem:[%s219 + $0xa8] sm:$0xf]
      %v705 = vld [vmem:[%s219 + $0xac] sm:$0xf]
      %v706 = vld [vmem:[%s219 + $0xb0] sm:$0xf]
      %v707 = vld [vmem:[%s219 + $0xb4] sm:$0xf]
      %v708 = vld [vmem:[%s219 + $0xb8] sm:$0xf]
      %v709 = vld [vmem:[%s219 + $0xbc] sm:$0xf]
      %v710 = vld [vmem:[%s219 + $0xc0] sm:$0xf]
      %v711 = vld [vmem:[%s219 + $0xc4] sm:$0xf]
      %v712 = vld [vmem:[%s219 + $0xc8] sm:$0xf]
      %v713 = vld [vmem:[%s219 + $0xcc] sm:$0xf]
      %v714 = vld [vmem:[%s219 + $0xd0] sm:$0xf]
      %v715 = vld [vmem:[%s219 + $0xd4] sm:$0xf]
      %v716 = vld [vmem:[%s219 + $0xd8] sm:$0xf]
      %v717 = vld [vmem:[%s219 + $0xdc] sm:$0xf]
      %v732 = vunpack.c.l.b16 %v704
      %v733 = vunpack.c.l.b16 %v705
      %v734 = vunpack.c.l.b16 %v706
      %v735 = vunpack.c.l.b16 %v707
      %v736 = vunpack.c.l.b16 %v708
      %v737 = vunpack.c.l.b16 %v709
      %v738 = vunpack.c.l.b16 %v710
      %v739 = vunpack.c.l.b16 %v711
      %v740 = vunpack.c.l.b16 %v712
      %v741 = vunpack.c.l.b16 %v713
      %v742 = vunpack.c.l.b16 %v714
      %v743 = vunpack.c.l.b16 %v715
      %v744 = vunpack.c.l.b16 %v716
      %v745 = vunpack.c.l.b16 %v717
      %v746 = vpack.c.b16 %v733, %v732
      %v747 = vpack.c.b16 %v735, %v734
      %v748 = vpack.c.b16 %v737, %v736
      %v749 = vpack.c.b16 %v739, %v738
      %v750 = vpack.c.b16 %v741, %v740
      %v751 = vpack.c.b16 %v743, %v742
      %v752 = vpack.c.b16 %v745, %v744
      %v754 = vsel %vm318, %v746, 0
      %v757 = vsel %vm318, %v747, 0
      %v760 = vsel %vm318, %v748, 0
      %v763 = vsel %vm318, %v749, 0
      %v766 = vsel %vm318, %v750, 0
      %v769 = vsel %vm318, %v751, 0
      %v772 = vsel %vm318, %v752, 0
      %774 = vmatpush.bf16.msra.mxu0 0
      %775 = vmatpush.bf16.msra.mxu0 0
      %776 = vmatpush.bf16.msra.mxu0 0
      %777 = vmatpush.bf16.msra.mxu0 %v345
      %778 = vmatpush.bf16.msra.mxu0 %v312
      %779 = vmatpush.bf16.msra.mxu0 %v311
      %780 = vmatpush.bf16.msra.mxu0 %v310
      %781 = vmatpush.bf16.msra.mxu0 %v309
      %782 = vmatmul.bf16.gmra.mxu0 %v754
      %v783 = vpop.f32.mrf.mxu0
      %v784 = vadd.f32 %v252, %v783
      %v785 = vpop.f32.mrf.mxu0
      %v786 = vadd.f32 %v252, %v785
      %787 = vmatmul.bf16.gmra.mxu0 %v757
      %v788 = vpop.f32.mrf.mxu0
      %v789 = vadd.f32 %v252, %v788
      %v790 = vpop.f32.mrf.mxu0
      %v791 = vadd.f32 %v252, %v790
      %792 = vmatmul.bf16.gmra.mxu0 %v760
      %v793 = vpop.f32.mrf.mxu0
      %v794 = vadd.f32 %v252, %v793
      %v795 = vpop.f32.mrf.mxu0
      %v796 = vadd.f32 %v252, %v795
      %797 = vmatmul.bf16.gmra.mxu0 %v763
      %v798 = vpop.f32.mrf.mxu0
      %v799 = vadd.f32 %v252, %v798
      %v800 = vpop.f32.mrf.mxu0
      %v801 = vadd.f32 %v252, %v800
      %802 = vmatmul.bf16.gmra.mxu0 %v766
      %v803 = vpop.f32.mrf.mxu0
      %v804 = vadd.f32 %v252, %v803
      %v805 = vpop.f32.mrf.mxu0
      %v806 = vadd.f32 %v252, %v805
      %807 = vmatmul.bf16.gmra.mxu0 %v769
      %v808 = vpop.f32.mrf.mxu0
      %v809 = vadd.f32 %v252, %v808
      %v810 = vpop.f32.mrf.mxu0
      %v811 = vadd.f32 %v252, %v810
      %812 = vmatmul.bf16.gmra.mxu0 %v772
      %v813 = vpop.f32.mrf.mxu0
      %v814 = vadd.f32 %v252, %v813
      %v815 = vpop.f32.mrf.mxu0
      %v816 = vadd.f32 %v252, %v815
      %817 = vdwg.mxu0
      %v818 = vmax.f32 %v784, 0.0
      %v819 = vmax.f32 %v786, 0.0
      %v820 = vmax.f32 %v789, 0.0
      %v821 = vmax.f32 %v791, 0.0
      %v822 = vmax.f32 %v794, 0.0
      %v823 = vmax.f32 %v796, 0.0
      %v824 = vmax.f32 %v799, 0.0
      %v825 = vmax.f32 %v801, 0.0
      %v826 = vmax.f32 %v804, 0.0
      %v827 = vmax.f32 %v806, 0.0
      %v828 = vmax.f32 %v809, 0.0
      %v829 = vmax.f32 %v811, 0.0
      %v830 = vmax.f32 %v814, 0.0
      %v831 = vmax.f32 %v816, 0.0
      %832 = vst.msk [vmem:[#allocation2 + $0x150] sm:$0xff] %vm405, %v818
      %833 = vst.msk [vmem:[#allocation2 + $0x158] sm:$0xff] %vm405, %v819
      %834 = vst.msk [vmem:[#allocation2 + $0x160] sm:$0xff] %vm405, %v820
      %835 = vst.msk [vmem:[#allocation2 + $0x168] sm:$0xff] %vm405, %v821
      %836 = vst.msk [vmem:[#allocation2 + $0x170] sm:$0xff] %vm405, %v822
      %837 = vst.msk [vmem:[#allocation2 + $0x178] sm:$0xff] %vm405, %v823
      %838 = vst.msk [vmem:[#allocation2 + $0x180] sm:$0xff] %vm405, %v824
      %839 = vst.msk [vmem:[#allocation2 + $0x188] sm:$0xff] %vm405, %v825
      %840 = vst.msk [vmem:[#allocation2 + $0x190] sm:$0xff] %vm405, %v826
      %841 = vst.msk [vmem:[#allocation2 + $0x198] sm:$0xff] %vm405, %v827
      %842 = vst.msk [vmem:[#allocation2 + $0x1a0] sm:$0xff] %vm405, %v828
      %843 = vst.msk [vmem:[#allocation2 + $0x1a8] sm:$0xff] %vm405, %v829
      %844 = vst.msk [vmem:[#allocation2 + $0x1b0] sm:$0xff] %vm405, %v830
      %845 = vst.msk [vmem:[#allocation2 + $0x1b8] sm:$0xff] %vm405, %v831
      %v846 = vld [vmem:[%s219 + $0xe0] sm:$0xf]
      %v847 = vld [vmem:[%s219 + $0xe4] sm:$0xf]
      %v848 = vld [vmem:[%s219 + $0xe8] sm:$0xf]
      %v849 = vld [vmem:[%s219 + $0xec] sm:$0xf]
      %v850 = vld [vmem:[%s219 + $0xf0] sm:$0xf]
      %v851 = vld [vmem:[%s219 + $0xf4] sm:$0xf]
      %v852 = vld [vmem:[%s219 + $0xf8] sm:$0xf]
      %v853 = vld [vmem:[%s219 + $0xfc] sm:$0xf]
      %v854 = vld [vmem:[%s219 + $0x100] sm:$0xf]
      %v855 = vld [vmem:[%s219 + $0x104] sm:$0xf]
      %v856 = vld [vmem:[%s219 + $0x108] sm:$0xf]
      %v857 = vld [vmem:[%s219 + $0x10c] sm:$0xf]
      %v858 = vld [vmem:[%s219 + $0x110] sm:$0xf]
      %v859 = vld [vmem:[%s219 + $0x114] sm:$0xf]
      %v874 = vunpack.c.l.b16 %v846
      %v875 = vunpack.c.l.b16 %v847
      %v876 = vunpack.c.l.b16 %v848
      %v877 = vunpack.c.l.b16 %v849
      %v878 = vunpack.c.l.b16 %v850
      %v879 = vunpack.c.l.b16 %v851
      %v880 = vunpack.c.l.b16 %v852
      %v881 = vunpack.c.l.b16 %v853
      %v882 = vunpack.c.l.b16 %v854
      %v883 = vunpack.c.l.b16 %v855
      %v884 = vunpack.c.l.b16 %v856
      %v885 = vunpack.c.l.b16 %v857
      %v886 = vunpack.c.l.b16 %v858
      %v887 = vunpack.c.l.b16 %v859
      %v888 = vpack.c.b16 %v875, %v874
      %v889 = vpack.c.b16 %v877, %v876
      %v890 = vpack.c.b16 %v879, %v878
      %v891 = vpack.c.b16 %v881, %v880
      %v892 = vpack.c.b16 %v883, %v882
      %v893 = vpack.c.b16 %v885, %v884
      %v894 = vpack.c.b16 %v887, %v886
      %v896 = vsel %vm318, %v888, 0
      %v899 = vsel %vm318, %v889, 0
      %v902 = vsel %vm318, %v890, 0
      %v905 = vsel %vm318, %v891, 0
      %v908 = vsel %vm318, %v892, 0
      %v911 = vsel %vm318, %v893, 0
      %v914 = vsel %vm318, %v894, 0
      %916 = vmatpush.bf16.msra.mxu0 0
      %917 = vmatpush.bf16.msra.mxu0 0
      %918 = vmatpush.bf16.msra.mxu0 0
      %919 = vmatpush.bf16.msra.mxu0 %v345
      %920 = vmatpush.bf16.msra.mxu0 %v312
      %921 = vmatpush.bf16.msra.mxu0 %v311
      %922 = vmatpush.bf16.msra.mxu0 %v310
      %923 = vmatpush.bf16.msra.mxu0 %v309
      %924 = vmatmul.bf16.gmra.mxu0 %v896
      %v925 = vpop.f32.mrf.mxu0
      %v926 = vadd.f32 %v252, %v925
      %v927 = vpop.f32.mrf.mxu0
      %v928 = vadd.f32 %v252, %v927
      %929 = vmatmul.bf16.gmra.mxu0 %v899
      %v930 = vpop.f32.mrf.mxu0
      %v931 = vadd.f32 %v252, %v930
      %v932 = vpop.f32.mrf.mxu0
      %v933 = vadd.f32 %v252, %v932
      %934 = vmatmul.bf16.gmra.mxu0 %v902
      %v935 = vpop.f32.mrf.mxu0
      %v936 = vadd.f32 %v252, %v935
      %v937 = vpop.f32.mrf.mxu0
      %v938 = vadd.f32 %v252, %v937
      %939 = vmatmul.bf16.gmra.mxu0 %v905
      %v940 = vpop.f32.mrf.mxu0
      %v941 = vadd.f32 %v252, %v940
      %v942 = vpop.f32.mrf.mxu0
      %v943 = vadd.f32 %v252, %v942
      %944 = vmatmul.bf16.gmra.mxu0 %v908
      %v945 = vpop.f32.mrf.mxu0
      %v946 = vadd.f32 %v252, %v945
      %v947 = vpop.f32.mrf.mxu0
      %v948 = vadd.f32 %v252, %v947
      %949 = vmatmul.bf16.gmra.mxu0 %v911
      %v950 = vpop.f32.mrf.mxu0
      %v951 = vadd.f32 %v252, %v950
      %v952 = vpop.f32.mrf.mxu0
      %v953 = vadd.f32 %v252, %v952
      %954 = vmatmul.bf16.gmra.mxu0 %v914
      %v955 = vpop.f32.mrf.mxu0
      %v956 = vadd.f32 %v252, %v955
      %v957 = vpop.f32.mrf.mxu0
      %v958 = vadd.f32 %v252, %v957
      %959 = vdwg.mxu0
      %v960 = vmax.f32 %v926, 0.0
      %v961 = vmax.f32 %v928, 0.0
      %v962 = vmax.f32 %v931, 0.0
      %v963 = vmax.f32 %v933, 0.0
      %v964 = vmax.f32 %v936, 0.0
      %v965 = vmax.f32 %v938, 0.0
      %v966 = vmax.f32 %v941, 0.0
      %v967 = vmax.f32 %v943, 0.0
      %v968 = vmax.f32 %v946, 0.0
      %v969 = vmax.f32 %v948, 0.0
      %v970 = vmax.f32 %v951, 0.0
      %v971 = vmax.f32 %v953, 0.0
      %v972 = vmax.f32 %v956, 0.0
      %v973 = vmax.f32 %v958, 0.0
      %974 = vst.msk [vmem:[#allocation2 + $0x1c0] sm:$0xff] %vm405, %v960
      %975 = vst.msk [vmem:[#allocation2 + $0x1c8] sm:$0xff] %vm405, %v961
      %976 = vst.msk [vmem:[#allocation2 + $0x1d0] sm:$0xff] %vm405, %v962
      %977 = vst.msk [vmem:[#allocation2 + $0x1d8] sm:$0xff] %vm405, %v963
      %978 = vst.msk [vmem:[#allocation2 + $0x1e0] sm:$0xff] %vm405, %v964
      %979 = vst.msk [vmem:[#allocation2 + $0x1e8] sm:$0xff] %vm405, %v965
      %980 = vst.msk [vmem:[#allocation2 + $0x1f0] sm:$0xff] %vm405, %v966
      %981 = vst.msk [vmem:[#allocation2 + $0x1f8] sm:$0xff] %vm405, %v967
      %982 = vst.msk [vmem:[#allocation2 + $0x200] sm:$0xff] %vm405, %v968
      %983 = vst.msk [vmem:[#allocation2 + $0x208] sm:$0xff] %vm405, %v969
      %984 = vst.msk [vmem:[#allocation2 + $0x210] sm:$0xff] %vm405, %v970
      %985 = vst.msk [vmem:[#allocation2 + $0x218] sm:$0xff] %vm405, %v971
      %986 = vst.msk [vmem:[#allocation2 + $0x220] sm:$0xff] %vm405, %v972
      %987 = vst.msk [vmem:[#allocation2 + $0x228] sm:$0xff] %vm405, %v973
      %v988 = vld [vmem:[%s219 + $0x118] sm:$0xf]
      %v989 = vld [vmem:[%s219 + $0x11c] sm:$0xf]
      %v990 = vld [vmem:[%s219 + $0x120] sm:$0xf]
      %v991 = vld [vmem:[%s219 + $0x124] sm:$0xf]
      %v992 = vld [vmem:[%s219 + $0x128] sm:$0xf]
      %v993 = vld [vmem:[%s219 + $0x12c] sm:$0xf]
      %v994 = vld [vmem:[%s219 + $0x130] sm:$0xf]
      %v995 = vld [vmem:[%s219 + $0x134] sm:$0xf]
      %v996 = vld [vmem:[%s219 + $0x138] sm:$0xf]
      %v997 = vld [vmem:[%s219 + $0x13c] sm:$0xf]
      %v998 = vld [vmem:[%s219 + $0x140] sm:$0xf]
      %v999 = vld [vmem:[%s219 + $0x144] sm:$0xf]
      %v1000 = vld [vmem:[%s219 + $0x148] sm:$0xf]
      %v1001 = vld [vmem:[%s219 + $0x14c] sm:$0xf]
      %v1016 = vunpack.c.l.b16 %v988
      %v1017 = vunpack.c.l.b16 %v989
      %v1018 = vunpack.c.l.b16 %v990
      %v1019 = vunpack.c.l.b16 %v991
      %v1020 = vunpack.c.l.b16 %v992
      %v1021 = vunpack.c.l.b16 %v993
      %v1022 = vunpack.c.l.b16 %v994
      %v1023 = vunpack.c.l.b16 %v995
      %v1024 = vunpack.c.l.b16 %v996
      %v1025 = vunpack.c.l.b16 %v997
      %v1026 = vunpack.c.l.b16 %v998
      %v1027 = vunpack.c.l.b16 %v999
      %v1028 = vunpack.c.l.b16 %v1000
      %v1029 = vunpack.c.l.b16 %v1001
      %v1030 = vpack.c.b16 %v1017, %v1016
      %v1031 = vpack.c.b16 %v1019, %v1018
      %v1032 = vpack.c.b16 %v1021, %v1020
      %v1033 = vpack.c.b16 %v1023, %v1022
      %v1034 = vpack.c.b16 %v1025, %v1024
      %v1035 = vpack.c.b16 %v1027, %v1026
      %v1036 = vpack.c.b16 %v1029, %v1028
      %v1038 = vsel %vm318, %v1030, 0
      %v1041 = vsel %vm318, %v1031, 0
      %v1044 = vsel %vm318, %v1032, 0
      %v1047 = vsel %vm318, %v1033, 0
      %v1050 = vsel %vm318, %v1034, 0
      %v1053 = vsel %vm318, %v1035, 0
      %v1056 = vsel %vm318, %v1036, 0
      %1058 = vmatpush.bf16.msra.mxu0 0
      %1059 = vmatpush.bf16.msra.mxu0 0
      %1060 = vmatpush.bf16.msra.mxu0 0
      %1061 = vmatpush.bf16.msra.mxu0 %v345
      %1062 = vmatpush.bf16.msra.mxu0 %v312
      %1063 = vmatpush.bf16.msra.mxu0 %v311
      %1064 = vmatpush.bf16.msra.mxu0 %v310
      %1065 = vmatpush.bf16.msra.mxu0 %v309
      %1066 = vmatmul.bf16.gmra.mxu0 %v1038
      %v1067 = vpop.f32.mrf.mxu0
      %v1068 = vadd.f32 %v252, %v1067
      %v1069 = vpop.f32.mrf.mxu0
      %v1070 = vadd.f32 %v252, %v1069
      %1071 = vmatmul.bf16.gmra.mxu0 %v1041
      %v1072 = vpop.f32.mrf.mxu0
      %v1073 = vadd.f32 %v252, %v1072
      %v1074 = vpop.f32.mrf.mxu0
      %v1075 = vadd.f32 %v252, %v1074
      %1076 = vmatmul.bf16.gmra.mxu0 %v1044
      %v1077 = vpop.f32.mrf.mxu0
      %v1078 = vadd.f32 %v252, %v1077
      %v1079 = vpop.f32.mrf.mxu0
      %v1080 = vadd.f32 %v252, %v1079
      %1081 = vmatmul.bf16.gmra.mxu0 %v1047
      %v1082 = vpop.f32.mrf.mxu0
      %v1083 = vadd.f32 %v252, %v1082
      %v1084 = vpop.f32.mrf.mxu0
      %v1085 = vadd.f32 %v252, %v1084
      %1086 = vmatmul.bf16.gmra.mxu0 %v1050
      %v1087 = vpop.f32.mrf.mxu0
      %v1088 = vadd.f32 %v252, %v1087
      %v1089 = vpop.f32.mrf.mxu0
      %v1090 = vadd.f32 %v252, %v1089
      %1091 = vmatmul.bf16.gmra.mxu0 %v1053
      %v1092 = vpop.f32.mrf.mxu0
      %v1093 = vadd.f32 %v252, %v1092
      %v1094 = vpop.f32.mrf.mxu0
      %v1095 = vadd.f32 %v252, %v1094
      %1096 = vmatmul.bf16.gmra.mxu0 %v1056
      %v1097 = vpop.f32.mrf.mxu0
      %v1098 = vadd.f32 %v252, %v1097
      %v1099 = vpop.f32.mrf.mxu0
      %v1100 = vadd.f32 %v252, %v1099
      %1101 = vdwg.mxu0
      %v1102 = vmax.f32 %v1068, 0.0
      %v1103 = vmax.f32 %v1070, 0.0
      %v1104 = vmax.f32 %v1073, 0.0
      %v1105 = vmax.f32 %v1075, 0.0
      %v1106 = vmax.f32 %v1078, 0.0
      %v1107 = vmax.f32 %v1080, 0.0
      %v1108 = vmax.f32 %v1083, 0.0
      %v1109 = vmax.f32 %v1085, 0.0
      %v1110 = vmax.f32 %v1088, 0.0
      %v1111 = vmax.f32 %v1090, 0.0
      %v1112 = vmax.f32 %v1093, 0.0
      %v1113 = vmax.f32 %v1095, 0.0
      %v1114 = vmax.f32 %v1098, 0.0
      %v1115 = vmax.f32 %v1100, 0.0
      %1116 = vst.msk [vmem:[#allocation2 + $0x230] sm:$0xff] %vm405, %v1102
      %1117 = vst.msk [vmem:[#allocation2 + $0x238] sm:$0xff] %vm405, %v1103
      %1118 = vst.msk [vmem:[#allocation2 + $0x240] sm:$0xff] %vm405, %v1104
      %1119 = vst.msk [vmem:[#allocation2 + $0x248] sm:$0xff] %vm405, %v1105
      %1120 = vst.msk [vmem:[#allocation2 + $0x250] sm:$0xff] %vm405, %v1106
      %1121 = vst.msk [vmem:[#allocation2 + $0x258] sm:$0xff] %vm405, %v1107
      %1122 = vst.msk [vmem:[#allocation2 + $0x260] sm:$0xff] %vm405, %v1108
      %1123 = vst.msk [vmem:[#allocation2 + $0x268] sm:$0xff] %vm405, %v1109
      %1124 = vst.msk [vmem:[#allocation2 + $0x270] sm:$0xff] %vm405, %v1110
      %1125 = vst.msk [vmem:[#allocation2 + $0x278] sm:$0xff] %vm405, %v1111
      %1126 = vst.msk [vmem:[#allocation2 + $0x280] sm:$0xff] %vm405, %v1112
      %1127 = vst.msk [vmem:[#allocation2 + $0x288] sm:$0xff] %vm405, %v1113
      %1128 = vst.msk [vmem:[#allocation2 + $0x290] sm:$0xff] %vm405, %v1114
      %1129 = vst.msk [vmem:[#allocation2 + $0x298] sm:$0xff] %vm405, %v1115
      %v1130 = vld [vmem:[%s219 + $0x150] sm:$0xf]
      %v1131 = vld [vmem:[%s219 + $0x154] sm:$0xf]
      %v1132 = vld [vmem:[%s219 + $0x158] sm:$0xf]
      %v1133 = vld [vmem:[%s219 + $0x15c] sm:$0xf]
      %v1134 = vld [vmem:[%s219 + $0x160] sm:$0xf]
      %v1135 = vld [vmem:[%s219 + $0x164] sm:$0xf]
      %v1136 = vld [vmem:[%s219 + $0x168] sm:$0xf]
      %v1137 = vld [vmem:[%s219 + $0x16c] sm:$0xf]
      %v1138 = vld [vmem:[%s219 + $0x170] sm:$0xf]
      %v1139 = vld [vmem:[%s219 + $0x174] sm:$0xf]
      %v1140 = vld [vmem:[%s219 + $0x178] sm:$0xf]
      %v1141 = vld [vmem:[%s219 + $0x17c] sm:$0xf]
      %v1142 = vld [vmem:[%s219 + $0x180] sm:$0xf]
      %v1143 = vld [vmem:[%s219 + $0x184] sm:$0xf]
      %v1158 = vunpack.c.l.b16 %v1130
      %v1159 = vunpack.c.l.b16 %v1131
      %v1160 = vunpack.c.l.b16 %v1132
      %v1161 = vunpack.c.l.b16 %v1133
      %v1162 = vunpack.c.l.b16 %v1134
      %v1163 = vunpack.c.l.b16 %v1135
      %v1164 = vunpack.c.l.b16 %v1136
      %v1165 = vunpack.c.l.b16 %v1137
      %v1166 = vunpack.c.l.b16 %v1138
      %v1167 = vunpack.c.l.b16 %v1139
      %v1168 = vunpack.c.l.b16 %v1140
      %v1169 = vunpack.c.l.b16 %v1141
      %v1170 = vunpack.c.l.b16 %v1142
      %v1171 = vunpack.c.l.b16 %v1143
      %v1172 = vpack.c.b16 %v1159, %v1158
      %v1173 = vpack.c.b16 %v1161, %v1160
      %v1174 = vpack.c.b16 %v1163, %v1162
      %v1175 = vpack.c.b16 %v1165, %v1164
      %v1176 = vpack.c.b16 %v1167, %v1166
      %v1177 = vpack.c.b16 %v1169, %v1168
      %v1178 = vpack.c.b16 %v1171, %v1170
      %v1180 = vsel %vm318, %v1172, 0
      %v1183 = vsel %vm318, %v1173, 0
      %v1186 = vsel %vm318, %v1174, 0
      %v1189 = vsel %vm318, %v1175, 0
      %v1192 = vsel %vm318, %v1176, 0
      %v1195 = vsel %vm318, %v1177, 0
      %v1198 = vsel %vm318, %v1178, 0
      %1200 = vmatpush.bf16.msra.mxu0 0
      %1201 = vmatpush.bf16.msra.mxu0 0
      %1202 = vmatpush.bf16.msra.mxu0 0
      %1203 = vmatpush.bf16.msra.mxu0 %v345
      %1204 = vmatpush.bf16.msra.mxu0 %v312
      %1205 = vmatpush.bf16.msra.mxu0 %v311
      %1206 = vmatpush.bf16.msra.mxu0 %v310
      %1207 = vmatpush.bf16.msra.mxu0 %v309
      %1208 = vmatmul.bf16.gmra.mxu0 %v1180
      %v1209 = vpop.f32.mrf.mxu0
      %v1210 = vadd.f32 %v252, %v1209
      %v1211 = vpop.f32.mrf.mxu0
      %v1212 = vadd.f32 %v252, %v1211
      %1213 = vmatmul.bf16.gmra.mxu0 %v1183
      %v1214 = vpop.f32.mrf.mxu0
      %v1215 = vadd.f32 %v252, %v1214
      %v1216 = vpop.f32.mrf.mxu0
      %v1217 = vadd.f32 %v252, %v1216
      %1218 = vmatmul.bf16.gmra.mxu0 %v1186
      %v1219 = vpop.f32.mrf.mxu0
      %v1220 = vadd.f32 %v252, %v1219
      %v1221 = vpop.f32.mrf.mxu0
      %v1222 = vadd.f32 %v252, %v1221
      %1223 = vmatmul.bf16.gmra.mxu0 %v1189
      %v1224 = vpop.f32.mrf.mxu0
      %v1225 = vadd.f32 %v252, %v1224
      %v1226 = vpop.f32.mrf.mxu0
      %v1227 = vadd.f32 %v252, %v1226
      %1228 = vmatmul.bf16.gmra.mxu0 %v1192
      %v1229 = vpop.f32.mrf.mxu0
      %v1230 = vadd.f32 %v252, %v1229
      %v1231 = vpop.f32.mrf.mxu0
      %v1232 = vadd.f32 %v252, %v1231
      %1233 = vmatmul.bf16.gmra.mxu0 %v1195
      %v1234 = vpop.f32.mrf.mxu0
      %v1235 = vadd.f32 %v252, %v1234
      %v1236 = vpop.f32.mrf.mxu0
      %v1237 = vadd.f32 %v252, %v1236
      %1238 = vmatmul.bf16.gmra.mxu0 %v1198
      %v1239 = vpop.f32.mrf.mxu0
      %v1240 = vadd.f32 %v252, %v1239
      %v1241 = vpop.f32.mrf.mxu0
      %v1242 = vadd.f32 %v252, %v1241
      %1243 = vdwg.mxu0
      %v1244 = vmax.f32 %v1210, 0.0
      %v1245 = vmax.f32 %v1212, 0.0
      %v1246 = vmax.f32 %v1215, 0.0
      %v1247 = vmax.f32 %v1217, 0.0
      %v1248 = vmax.f32 %v1220, 0.0
      %v1249 = vmax.f32 %v1222, 0.0
      %v1250 = vmax.f32 %v1225, 0.0
      %v1251 = vmax.f32 %v1227, 0.0
      %v1252 = vmax.f32 %v1230, 0.0
      %v1253 = vmax.f32 %v1232, 0.0
      %v1254 = vmax.f32 %v1235, 0.0
      %v1255 = vmax.f32 %v1237, 0.0
      %v1256 = vmax.f32 %v1240, 0.0
      %v1257 = vmax.f32 %v1242, 0.0
      %1258 = vst.msk [vmem:[#allocation2 + $0x2a0] sm:$0xff] %vm405, %v1244
      %1259 = vst.msk [vmem:[#allocation2 + $0x2a8] sm:$0xff] %vm405, %v1245
      %1260 = vst.msk [vmem:[#allocation2 + $0x2b0] sm:$0xff] %vm405, %v1246
      %1261 = vst.msk [vmem:[#allocation2 + $0x2b8] sm:$0xff] %vm405, %v1247
      %1262 = vst.msk [vmem:[#allocation2 + $0x2c0] sm:$0xff] %vm405, %v1248
      %1263 = vst.msk [vmem:[#allocation2 + $0x2c8] sm:$0xff] %vm405, %v1249
      %1264 = vst.msk [vmem:[#allocation2 + $0x2d0] sm:$0xff] %vm405, %v1250
      %1265 = vst.msk [vmem:[#allocation2 + $0x2d8] sm:$0xff] %vm405, %v1251
      %1266 = vst.msk [vmem:[#allocation2 + $0x2e0] sm:$0xff] %vm405, %v1252
      %1267 = vst.msk [vmem:[#allocation2 + $0x2e8] sm:$0xff] %vm405, %v1253
      %1268 = vst.msk [vmem:[#allocation2 + $0x2f0] sm:$0xff] %vm405, %v1254
      %1269 = vst.msk [vmem:[#allocation2 + $0x2f8] sm:$0xff] %vm405, %v1255
      %1270 = vst.msk [vmem:[#allocation2 + $0x300] sm:$0xff] %vm405, %v1256
      %1271 = vst.msk [vmem:[#allocation2 + $0x308] sm:$0xff] %vm405, %v1257
      %v1272 = vld [vmem:[#allocation2] ss:$2 sm:$0xff]
      %s1273 = scalar_lea.vmem [#allocation2], 16
      %v1274 = vld [vmem:[%s1273] ss:$2 sm:$0x3f]
      %s1275 = scalar_lea.vmem [#allocation2], 1
      %v1276 = vld [vmem:[%s1275] ss:$2 sm:$0xff]
      %s1277 = scalar_lea.vmem [#allocation2], 17
      %v1278 = vld [vmem:[%s1277] ss:$2 sm:$0x3f]
      %s1279 = scalar_lea.vmem [#allocation2], 28
      %v1280 = vld [vmem:[%s1279] ss:$2 sm:$0xff]
      %s1281 = scalar_lea.vmem [#allocation2], 44
      %v1282 = vld [vmem:[%s1281] ss:$2 sm:$0x3f]
      %s1283 = scalar_lea.vmem [#allocation2], 29
      %v1284 = vld [vmem:[%s1283] ss:$2 sm:$0xff]
      %s1285 = scalar_lea.vmem [#allocation2], 45
      %v1286 = vld [vmem:[%s1285] ss:$2 sm:$0x3f]
      %v1287 = vmax.f32 %v1272, %v1276
      %v1288 = vmax.f32 %v1274, %v1278
      %v1289 = vmax.f32 %v1280, %v1284
      %v1290 = vmax.f32 %v1282, %v1286
      %v1291 = vmax.f32 %v1287, %v1289
      %v1292 = vmax.f32 %v1288, %v1290
      %1293 = vst.msk [vmem:[#allocation3] sm:$0xff] %vm405, %v1291
      %vm1294 = vcmask 46080
      %1295 = vst.msk [vmem:[#allocation3 + $0x8] sm:$0x3f] %vm1294, %v1292
      %s1296 = scalar_lea.vmem [#allocation2], 56
      %v1297 = vld [vmem:[%s1296] ss:$2 sm:$0xff]
      %s1298 = scalar_lea.vmem [#allocation2], 72
      %v1299 = vld [vmem:[%s1298] ss:$2 sm:$0x3f]
      %s1300 = scalar_lea.vmem [#allocation2], 57
      %v1301 = vld [vmem:[%s1300] ss:$2 sm:$0xff]
      %s1302 = scalar_lea.vmem [#allocation2], 73
      %v1303 = vld [vmem:[%s1302] ss:$2 sm:$0x3f]
      %s1304 = scalar_lea.vmem [#allocation2], 84
      %v1305 = vld [vmem:[%s1304] ss:$2 sm:$0xff]
      %s1306 = scalar_lea.vmem [#allocation2], 100
      %v1307 = vld [vmem:[%s1306] ss:$2 sm:$0x3f]
      %s1308 = scalar_lea.vmem [#allocation2], 85
      %v1309 = vld [vmem:[%s1308] ss:$2 sm:$0xff]
      %s1310 = scalar_lea.vmem [#allocation2], 101
      %v1311 = vld [vmem:[%s1310] ss:$2 sm:$0x3f]
      %v1312 = vmax.f32 %v1297, %v1301
      %v1313 = vmax.f32 %v1299, %v1303
      %v1314 = vmax.f32 %v1305, %v1309
      %v1315 = vmax.f32 %v1307, %v1311
      %v1316 = vmax.f32 %v1312, %v1314
      %v1317 = vmax.f32 %v1313, %v1315
      %1318 = vst.msk [vmem:[#allocation3 + $0xe] sm:$0xff] %vm405, %v1316
      %1319 = vst.msk [vmem:[#allocation3 + $0x16] sm:$0x3f] %vm1294, %v1317
      %s1320 = scalar_lea.vmem [#allocation2], 112
      %v1321 = vld [vmem:[%s1320] ss:$2 sm:$0xff]
      %s1322 = scalar_lea.vmem [#allocation2], 128
      %v1323 = vld [vmem:[%s1322] ss:$2 sm:$0x3f]
      %s1324 = scalar_lea.vmem [#allocation2], 113
      %v1325 = vld [vmem:[%s1324] ss:$2 sm:$0xff]
      %s1326 = scalar_lea.vmem [#allocation2], 129
      %v1327 = vld [vmem:[%s1326] ss:$2 sm:$0x3f]
      %s1328 = scalar_lea.vmem [#allocation2], 140
      %v1329 = vld [vmem:[%s1328] ss:$2 sm:$0xff]
      %s1330 = scalar_lea.vmem [#allocation2], 156
      %v1331 = vld [vmem:[%s1330] ss:$2 sm:$0x3f]
      %s1332 = scalar_lea.vmem [#allocation2], 141
      %v1333 = vld [vmem:[%s1332] ss:$2 sm:$0xff]
      %s1334 = scalar_lea.vmem [#allocation2], 157
      %v1335 = vld [vmem:[%s1334] ss:$2 sm:$0x3f]
      %v1336 = vmax.f32 %v1321, %v1325
      %v1337 = vmax.f32 %v1323, %v1327
      %v1338 = vmax.f32 %v1329, %v1333
      %v1339 = vmax.f32 %v1331, %v1335
      %v1340 = vmax.f32 %v1336, %v1338
      %v1341 = vmax.f32 %v1337, %v1339
      %1342 = vst.msk [vmem:[#allocation3 + $0x1c] sm:$0xff] %vm405, %v1340
      %1343 = vst.msk [vmem:[#allocation3 + $0x24] sm:$0x3f] %vm1294, %v1341
      %s1344 = scalar_lea.vmem [#allocation2], 168
      %v1345 = vld [vmem:[%s1344] ss:$2 sm:$0xff]
      %s1346 = scalar_lea.vmem [#allocation2], 184
      %v1347 = vld [vmem:[%s1346] ss:$2 sm:$0x3f]
      %s1348 = scalar_lea.vmem [#allocation2], 169
      %v1349 = vld [vmem:[%s1348] ss:$2 sm:$0xff]
      %s1350 = scalar_lea.vmem [#allocation2], 185
      %v1351 = vld [vmem:[%s1350] ss:$2 sm:$0x3f]
      %s1352 = scalar_lea.vmem [#allocation2], 196
      %v1353 = vld [vmem:[%s1352] ss:$2 sm:$0xff]
      %s1354 = scalar_lea.vmem [#allocation2], 212
      %v1355 = vld [vmem:[%s1354] ss:$2 sm:$0x3f]
      %s1356 = scalar_lea.vmem [#allocation2], 197
      %v1357 = vld [vmem:[%s1356] ss:$2 sm:$0xff]
      %s1358 = scalar_lea.vmem [#allocation2], 213
      %v1359 = vld [vmem:[%s1358] ss:$2 sm:$0x3f]
      %v1360 = vmax.f32 %v1345, %v1349
      %v1361 = vmax.f32 %v1347, %v1351
      %v1362 = vmax.f32 %v1353, %v1357
      %v1363 = vmax.f32 %v1355, %v1359
      %v1364 = vmax.f32 %v1360, %v1362
      %v1365 = vmax.f32 %v1361, %v1363
      %1366 = vst.msk [vmem:[#allocation3 + $0x2a] sm:$0xff] %vm405, %v1364
      %1367 = vst.msk [vmem:[#allocation3 + $0x32] sm:$0x3f] %vm1294, %v1365
      %s1368 = scalar_lea.vmem [#allocation2], 224
      %v1369 = vld [vmem:[%s1368] ss:$2 sm:$0xff]
      %s1370 = scalar_lea.vmem [#allocation2], 240
      %v1371 = vld [vmem:[%s1370] ss:$2 sm:$0x3f]
      %s1372 = scalar_lea.vmem [#allocation2], 225
      %v1373 = vld [vmem:[%s1372] ss:$2 sm:$0xff]
      %s1374 = scalar_lea.vmem [#allocation2], 241
      %v1375 = vld [vmem:[%s1374] ss:$2 sm:$0x3f]
      %s1376 = scalar_lea.vmem [#allocation2], 252
      %v1377 = vld [vmem:[%s1376] ss:$2 sm:$0xff]
      %s1378 = scalar_lea.vmem [#allocation2], 268
      %v1379 = vld [vmem:[%s1378] ss:$2 sm:$0x3f]
      %s1380 = scalar_lea.vmem [#allocation2], 253
      %v1381 = vld [vmem:[%s1380] ss:$2 sm:$0xff]
      %s1382 = scalar_lea.vmem [#allocation2], 269
      %v1383 = vld [vmem:[%s1382] ss:$2 sm:$0x3f]
      %v1384 = vmax.f32 %v1369, %v1373
      %v1385 = vmax.f32 %v1371, %v1375
      %v1386 = vmax.f32 %v1377, %v1381
      %v1387 = vmax.f32 %v1379, %v1383
      %v1388 = vmax.f32 %v1384, %v1386
      %v1389 = vmax.f32 %v1385, %v1387
      %1390 = vst.msk [vmem:[#allocation3 + $0x38] sm:$0xff] %vm405, %v1388
      %1391 = vst.msk [vmem:[#allocation3 + $0x40] sm:$0x3f] %vm1294, %v1389
      %s1392 = scalar_lea.vmem [#allocation2], 280
      %v1393 = vld [vmem:[%s1392] ss:$2 sm:$0xff]
      %s1394 = scalar_lea.vmem [#allocation2], 296
      %v1395 = vld [vmem:[%s1394] ss:$2 sm:$0x3f]
      %s1396 = scalar_lea.vmem [#allocation2], 281
      %v1397 = vld [vmem:[%s1396] ss:$2 sm:$0xff]
      %s1398 = scalar_lea.vmem [#allocation2], 297
      %v1399 = vld [vmem:[%s1398] ss:$2 sm:$0x3f]
      %s1400 = scalar_lea.vmem [#allocation2], 308
      %v1401 = vld [vmem:[%s1400] ss:$2 sm:$0xff]
      %s1402 = scalar_lea.vmem [#allocation2], 324
      %v1403 = vld [vmem:[%s1402] ss:$2 sm:$0x3f]
      %s1404 = scalar_lea.vmem [#allocation2], 309
      %v1405 = vld [vmem:[%s1404] ss:$2 sm:$0xff]
      %s1406 = scalar_lea.vmem [#allocation2], 325
      %v1407 = vld [vmem:[%s1406] ss:$2 sm:$0x3f]
      %v1408 = vmax.f32 %v1393, %v1397
      %v1409 = vmax.f32 %v1395, %v1399
      %v1410 = vmax.f32 %v1401, %v1405
      %v1411 = vmax.f32 %v1403, %v1407
      %v1412 = vmax.f32 %v1408, %v1410
      %v1413 = vmax.f32 %v1409, %v1411
      %1414 = vst.msk [vmem:[#allocation3 + $0x46] sm:$0xff] %vm405, %v1412
      %1415 = vst.msk [vmem:[#allocation3 + $0x4e] sm:$0x3f] %vm1294, %v1413
      %s1416 = scalar_lea.vmem [#allocation2], 336
      %v1417 = vld [vmem:[%s1416] ss:$2 sm:$0xff]
      %s1418 = scalar_lea.vmem [#allocation2], 352
      %v1419 = vld [vmem:[%s1418] ss:$2 sm:$0x3f]
      %s1420 = scalar_lea.vmem [#allocation2], 337
      %v1421 = vld [vmem:[%s1420] ss:$2 sm:$0xff]
      %s1422 = scalar_lea.vmem [#allocation2], 353
      %v1423 = vld [vmem:[%s1422] ss:$2 sm:$0x3f]
      %s1424 = scalar_lea.vmem [#allocation2], 364
      %v1425 = vld [vmem:[%s1424] ss:$2 sm:$0xff]
      %s1426 = scalar_lea.vmem [#allocation2], 380
      %v1427 = vld [vmem:[%s1426] ss:$2 sm:$0x3f]
      %s1428 = scalar_lea.vmem [#allocation2], 365
      %v1429 = vld [vmem:[%s1428] ss:$2 sm:$0xff]
      %s1430 = scalar_lea.vmem [#allocation2], 381
      %v1431 = vld [vmem:[%s1430] ss:$2 sm:$0x3f]
      %v1432 = vmax.f32 %v1417, %v1421
      %v1433 = vmax.f32 %v1419, %v1423
      %v1434 = vmax.f32 %v1425, %v1429
      %v1435 = vmax.f32 %v1427, %v1431
      %v1436 = vmax.f32 %v1432, %v1434
      %v1437 = vmax.f32 %v1433, %v1435
      %1438 = vst.msk [vmem:[#allocation3 + $0x54] sm:$0xff] %vm405, %v1436
      %1439 = vst.msk [vmem:[#allocation3 + $0x5c] sm:$0x3f] %vm1294, %v1437
      %s1440 = scalar_lea.vmem [#allocation2], 392
      %v1441 = vld [vmem:[%s1440] ss:$2 sm:$0xff]
      %s1442 = scalar_lea.vmem [#allocation2], 408
      %v1443 = vld [vmem:[%s1442] ss:$2 sm:$0x3f]
      %s1444 = scalar_lea.vmem [#allocation2], 393
      %v1445 = vld [vmem:[%s1444] ss:$2 sm:$0xff]
      %s1446 = scalar_lea.vmem [#allocation2], 409
      %v1447 = vld [vmem:[%s1446] ss:$2 sm:$0x3f]
      %s1448 = scalar_lea.vmem [#allocation2], 420
      %v1449 = vld [vmem:[%s1448] ss:$2 sm:$0xff]
      %s1450 = scalar_lea.vmem [#allocation2], 436
      %v1451 = vld [vmem:[%s1450] ss:$2 sm:$0x3f]
      %s1452 = scalar_lea.vmem [#allocation2], 421
      %v1453 = vld [vmem:[%s1452] ss:$2 sm:$0xff]
      %s1454 = scalar_lea.vmem [#allocation2], 437
      %v1455 = vld [vmem:[%s1454] ss:$2 sm:$0x3f]
      %v1456 = vmax.f32 %v1441, %v1445
      %v1457 = vmax.f32 %v1443, %v1447
      %v1458 = vmax.f32 %v1449, %v1453
      %v1459 = vmax.f32 %v1451, %v1455
      %v1460 = vmax.f32 %v1456, %v1458
      %v1461 = vmax.f32 %v1457, %v1459
      %1462 = vst.msk [vmem:[#allocation3 + $0x62] sm:$0xff] %vm405, %v1460
      %1463 = vst.msk [vmem:[#allocation3 + $0x6a] sm:$0x3f] %vm1294, %v1461
      %s1464 = scalar_lea.vmem [#allocation2], 448
      %v1465 = vld [vmem:[%s1464] ss:$2 sm:$0xff]
      %s1466 = scalar_lea.vmem [#allocation2], 464
      %v1467 = vld [vmem:[%s1466] ss:$2 sm:$0x3f]
      %s1468 = scalar_lea.vmem [#allocation2], 449
      %v1469 = vld [vmem:[%s1468] ss:$2 sm:$0xff]
      %s1470 = scalar_lea.vmem [#allocation2], 465
      %v1471 = vld [vmem:[%s1470] ss:$2 sm:$0x3f]
      %s1472 = scalar_lea.vmem [#allocation2], 476
      %v1473 = vld [vmem:[%s1472] ss:$2 sm:$0xff]
      %s1474 = scalar_lea.vmem [#allocation2], 492
      %v1475 = vld [vmem:[%s1474] ss:$2 sm:$0x3f]
      %s1476 = scalar_lea.vmem [#allocation2], 477
      %v1477 = vld [vmem:[%s1476] ss:$2 sm:$0xff]
      %s1478 = scalar_lea.vmem [#allocation2], 493
      %v1479 = vld [vmem:[%s1478] ss:$2 sm:$0x3f]
      %v1480 = vmax.f32 %v1465, %v1469
      %v1481 = vmax.f32 %v1467, %v1471
      %v1482 = vmax.f32 %v1473, %v1477
      %v1483 = vmax.f32 %v1475, %v1479
      %v1484 = vmax.f32 %v1480, %v1482
      %v1485 = vmax.f32 %v1481, %v1483
      %1486 = vst.msk [vmem:[#allocation3 + $0x70] sm:$0xff] %vm405, %v1484
      %1487 = vst.msk [vmem:[#allocation3 + $0x78] sm:$0x3f] %vm1294, %v1485
      %s1488 = scalar_lea.vmem [#allocation2], 504
      %v1489 = vld [vmem:[%s1488] ss:$2 sm:$0xff]
      %s1490 = scalar_lea.vmem [#allocation2], 520
      %v1491 = vld [vmem:[%s1490] ss:$2 sm:$0x3f]
      %s1492 = scalar_lea.vmem [#allocation2], 505
      %v1493 = vld [vmem:[%s1492] ss:$2 sm:$0xff]
      %s1494 = scalar_lea.vmem [#allocation2], 521
      %v1495 = vld [vmem:[%s1494] ss:$2 sm:$0x3f]
      %s1496 = scalar_lea.vmem [#allocation2], 532
      %v1497 = vld [vmem:[%s1496] ss:$2 sm:$0xff]
      %s1498 = scalar_lea.vmem [#allocation2], 548
      %v1499 = vld [vmem:[%s1498] ss:$2 sm:$0x3f]
      %s1500 = scalar_lea.vmem [#allocation2], 533
      %v1501 = vld [vmem:[%s1500] ss:$2 sm:$0xff]
      %s1502 = scalar_lea.vmem [#allocation2], 549
      %v1503 = vld [vmem:[%s1502] ss:$2 sm:$0x3f]
      %v1504 = vmax.f32 %v1489, %v1493
      %v1505 = vmax.f32 %v1491, %v1495
      %v1506 = vmax.f32 %v1497, %v1501
      %v1507 = vmax.f32 %v1499, %v1503
      %v1508 = vmax.f32 %v1504, %v1506
      %v1509 = vmax.f32 %v1505, %v1507
      %1510 = vst.msk [vmem:[#allocation3 + $0x7e] sm:$0xff] %vm405, %v1508
      %1511 = vst.msk [vmem:[#allocation3 + $0x86] sm:$0x3f] %vm1294, %v1509
      %s1512 = scalar_lea.vmem [#allocation2], 560
      %v1513 = vld [vmem:[%s1512] ss:$2 sm:$0xff]
      %s1514 = scalar_lea.vmem [#allocation2], 576
      %v1515 = vld [vmem:[%s1514] ss:$2 sm:$0x3f]
      %s1516 = scalar_lea.vmem [#allocation2], 561
      %v1517 = vld [vmem:[%s1516] ss:$2 sm:$0xff]
      %s1518 = scalar_lea.vmem [#allocation2], 577
      %v1519 = vld [vmem:[%s1518] ss:$2 sm:$0x3f]
      %s1520 = scalar_lea.vmem [#allocation2], 588
      %v1521 = vld [vmem:[%s1520] ss:$2 sm:$0xff]
      %s1522 = scalar_lea.vmem [#allocation2], 604
      %v1523 = vld [vmem:[%s1522] ss:$2 sm:$0x3f]
      %s1524 = scalar_lea.vmem [#allocation2], 589
      %v1525 = vld [vmem:[%s1524] ss:$2 sm:$0xff]
      %s1526 = scalar_lea.vmem [#allocation2], 605
      %v1527 = vld [vmem:[%s1526] ss:$2 sm:$0x3f]
      %v1528 = vmax.f32 %v1513, %v1517
      %v1529 = vmax.f32 %v1515, %v1519
      %v1530 = vmax.f32 %v1521, %v1525
      %v1531 = vmax.f32 %v1523, %v1527
      %v1532 = vmax.f32 %v1528, %v1530
      %v1533 = vmax.f32 %v1529, %v1531
      %1534 = vst.msk [vmem:[#allocation3 + $0x8c] sm:$0xff] %vm405, %v1532
      %1535 = vst.msk [vmem:[#allocation3 + $0x94] sm:$0x3f] %vm1294, %v1533
      %s1536 = scalar_lea.vmem [#allocation2], 616
      %v1537 = vld [vmem:[%s1536] ss:$2 sm:$0xff]
      %s1538 = scalar_lea.vmem [#allocation2], 632
      %v1539 = vld [vmem:[%s1538] ss:$2 sm:$0x3f]
      %s1540 = scalar_lea.vmem [#allocation2], 617
      %v1541 = vld [vmem:[%s1540] ss:$2 sm:$0xff]
      %s1542 = scalar_lea.vmem [#allocation2], 633
      %v1543 = vld [vmem:[%s1542] ss:$2 sm:$0x3f]
      %s1544 = scalar_lea.vmem [#allocation2], 644
      %v1545 = vld [vmem:[%s1544] ss:$2 sm:$0xff]
      %s1546 = scalar_lea.vmem [#allocation2], 660
      %v1547 = vld [vmem:[%s1546] ss:$2 sm:$0x3f]
      %s1548 = scalar_lea.vmem [#allocation2], 645
      %v1549 = vld [vmem:[%s1548] ss:$2 sm:$0xff]
      %s1550 = scalar_lea.vmem [#allocation2], 661
      %v1551 = vld [vmem:[%s1550] ss:$2 sm:$0x3f]
      %v1552 = vmax.f32 %v1537, %v1541
      %v1553 = vmax.f32 %v1539, %v1543
      %v1554 = vmax.f32 %v1545, %v1549
      %v1555 = vmax.f32 %v1547, %v1551
      %v1556 = vmax.f32 %v1552, %v1554
      %v1557 = vmax.f32 %v1553, %v1555
      %1558 = vst.msk [vmem:[#allocation3 + $0x9a] sm:$0xff] %vm405, %v1556
      %1559 = vst.msk [vmem:[#allocation3 + $0xa2] sm:$0x3f] %vm1294, %v1557
      %s1560 = scalar_lea.vmem [#allocation2], 672
      %v1561 = vld [vmem:[%s1560] ss:$2 sm:$0xff]
      %s1562 = scalar_lea.vmem [#allocation2], 688
      %v1563 = vld [vmem:[%s1562] ss:$2 sm:$0x3f]
      %s1564 = scalar_lea.vmem [#allocation2], 673
      %v1565 = vld [vmem:[%s1564] ss:$2 sm:$0xff]
      %s1566 = scalar_lea.vmem [#allocation2], 689
      %v1567 = vld [vmem:[%s1566] ss:$2 sm:$0x3f]
      %s1568 = scalar_lea.vmem [#allocation2], 700
      %v1569 = vld [vmem:[%s1568] ss:$2 sm:$0xff]
      %s1570 = scalar_lea.vmem [#allocation2], 716
      %v1571 = vld [vmem:[%s1570] ss:$2 sm:$0x3f]
      %s1572 = scalar_lea.vmem [#allocation2], 701
      %v1573 = vld [vmem:[%s1572] ss:$2 sm:$0xff]
      %s1574 = scalar_lea.vmem [#allocation2], 717
      %v1575 = vld [vmem:[%s1574] ss:$2 sm:$0x3f]
      %v1576 = vmax.f32 %v1561, %v1565
      %v1577 = vmax.f32 %v1563, %v1567
      %v1578 = vmax.f32 %v1569, %v1573
      %v1579 = vmax.f32 %v1571, %v1575
      %v1580 = vmax.f32 %v1576, %v1578
      %v1581 = vmax.f32 %v1577, %v1579
      %1582 = vst.msk [vmem:[#allocation3 + $0xa8] sm:$0xff] %vm405, %v1580
      %1583 = vst.msk [vmem:[#allocation3 + $0xb0] sm:$0x3f] %vm1294, %v1581
      %s1584 = scalar_lea.vmem [#allocation2], 728
      %v1585 = vld [vmem:[%s1584] ss:$2 sm:$0xff]
      %s1586 = scalar_lea.vmem [#allocation2], 744
      %v1587 = vld [vmem:[%s1586] ss:$2 sm:$0x3f]
      %s1588 = scalar_lea.vmem [#allocation2], 729
      %v1589 = vld [vmem:[%s1588] ss:$2 sm:$0xff]
      %s1590 = scalar_lea.vmem [#allocation2], 745
      %v1591 = vld [vmem:[%s1590] ss:$2 sm:$0x3f]
      %s1592 = scalar_lea.vmem [#allocation2], 756
      %v1593 = vld [vmem:[%s1592] ss:$2 sm:$0xff]
      %s1594 = scalar_lea.vmem [#allocation2], 772
      %v1595 = vld [vmem:[%s1594] ss:$2 sm:$0x3f]
      %s1596 = scalar_lea.vmem [#allocation2], 757
      %v1597 = vld [vmem:[%s1596] ss:$2 sm:$0xff]
      %s1598 = scalar_lea.vmem [#allocation2], 773
      %v1599 = vld [vmem:[%s1598] ss:$2 sm:$0x3f]
      %v1600 = vmax.f32 %v1585, %v1589
      %v1601 = vmax.f32 %v1587, %v1591
      %v1602 = vmax.f32 %v1593, %v1597
      %v1603 = vmax.f32 %v1595, %v1599
      %v1604 = vmax.f32 %v1600, %v1602
      %v1605 = vmax.f32 %v1601, %v1603
      %1606 = vst.msk [vmem:[#allocation3 + $0xb6] sm:$0xff] %vm405, %v1604
      %1607 = vst.msk [vmem:[#allocation3 + $0xbe] sm:$0x3f] %vm1294, %v1605
      %1608 = vst.msk [vmem:[#allocation3 + $0xc4] sm:$0xff] %vm405, 0.0
      %vm1609 = vcmask 44032
      %1610 = vst.msk [vmem:[#allocation3 + $0xcc] sm:$0xf] %vm1609, 0.0
      %v1611 = vld [vmem:[%s4] sm:$0x1]
      %v1612 = vld [vmem:[#allocation3] sm:$0xff]
      %v1613 = vld [vmem:[#allocation3 + $0x8] sm:$0xff]
      %v1614 = vld [vmem:[#allocation3 + $0x10] sm:$0xff]
      %v1615 = vld [vmem:[#allocation3 + $0x18] sm:$0xff]
      %v1616 = vld [vmem:[#allocation3 + $0x20] sm:$0xff]
      %v1617 = vld [vmem:[#allocation3 + $0x28] sm:$0xff]
      %v1618 = vld [vmem:[#allocation3 + $0x30] sm:$0xff]
      %v1619 = vld [vmem:[#allocation3 + $0x38] sm:$0xff]
      %v1620 = vld [vmem:[#allocation3 + $0x40] sm:$0xff]
      %v1621 = vld [vmem:[#allocation3 + $0x48] sm:$0xff]
      %v1622 = vld [vmem:[#allocation3 + $0x50] sm:$0xff]
      %v1623 = vld [vmem:[#allocation3 + $0x58] sm:$0xff]
      %v1624 = vld [vmem:[#allocation3 + $0x60] sm:$0xff]
      %v1625 = vld [vmem:[#allocation3 + $0x68] sm:$0xff]
      %v1626 = vld [vmem:[#allocation3 + $0x70] sm:$0xff]
      %v1627 = vld [vmem:[#allocation3 + $0x78] sm:$0xff]
      %v1628 = vld [vmem:[#allocation3 + $0x80] sm:$0xff]
      %v1629 = vld [vmem:[#allocation3 + $0x88] sm:$0xf]
      %v1630 = vpack.c.bf16 %v1613, %v1612
      %v1631 = vpack.c.bf16 %v1615, %v1614
      %v1632 = vpack.c.bf16 %v1617, %v1616
      %v1633 = vpack.c.bf16 %v1619, %v1618
      %v1634 = vpack.c.bf16 %v1621, %v1620
      %v1635 = vpack.c.bf16 %v1623, %v1622
      %v1636 = vpack.c.bf16 %v1625, %v1624
      %v1637 = vpack.c.bf16 %v1627, %v1626
      %v1638 = vpack.c.bf16 %v1629, %v1628
      %v1639 = vld [vmem:[%s3] sm:$0x7]
      %v1640 = vld [vmem:[#allocation3 + $0x1] sm:$0xff]
      %v1641 = vld [vmem:[#allocation3 + $0x9] sm:$0xff]
      %v1642 = vld [vmem:[#allocation3 + $0x11] sm:$0xff]
      %v1643 = vld [vmem:[#allocation3 + $0x19] sm:$0xff]
      %v1644 = vld [vmem:[#allocation3 + $0x21] sm:$0xff]
      %v1645 = vld [vmem:[#allocation3 + $0x29] sm:$0xff]
      %v1646 = vld [vmem:[#allocation3 + $0x31] sm:$0xff]
      %v1647 = vld [vmem:[#allocation3 + $0x39] sm:$0xff]
      %v1648 = vld [vmem:[#allocation3 + $0x41] sm:$0xff]
      %v1649 = vld [vmem:[#allocation3 + $0x49] sm:$0xff]
      %v1650 = vld [vmem:[#allocation3 + $0x51] sm:$0xff]
      %v1651 = vld [vmem:[#allocation3 + $0x59] sm:$0xff]
      %v1652 = vld [vmem:[#allocation3 + $0x61] sm:$0xff]
      %v1653 = vld [vmem:[#allocation3 + $0x69] sm:$0xff]
      %v1654 = vld [vmem:[#allocation3 + $0x71] sm:$0xff]
      %v1655 = vld [vmem:[#allocation3 + $0x79] sm:$0xff]
      %v1656 = vld [vmem:[#allocation3 + $0x81] sm:$0xff]
      %v1657 = vld [vmem:[#allocation3 + $0x89] sm:$0xf]
      %v1658 = vpack.c.bf16 %v1641, %v1640
      %v1659 = vpack.c.bf16 %v1643, %v1642
      %v1660 = vpack.c.bf16 %v1645, %v1644
      %v1661 = vpack.c.bf16 %v1647, %v1646
      %v1662 = vpack.c.bf16 %v1649, %v1648
      %v1663 = vpack.c.bf16 %v1651, %v1650
      %v1664 = vpack.c.bf16 %v1653, %v1652
      %v1665 = vpack.c.bf16 %v1655, %v1654
      %v1666 = vpack.c.bf16 %v1657, %v1656
      %s1667 = scalar_lea.vmem %s3, 4
      %v1668 = vld [vmem:[%s1667] sm:$0x7]
      %v1670 = vsel %vm405, %v1658, 0
      %v1673 = vsel %vm405, %v1659, 0
      %v1676 = vsel %vm405, %v1660, 0
      %v1679 = vsel %vm405, %v1661, 0
      %v1682 = vsel %vm405, %v1662, 0
      %v1685 = vsel %vm405, %v1663, 0
      %v1688 = vsel %vm405, %v1664, 0
      %v1691 = vsel %vm405, %v1665, 0
      %v1694 = vsel %vm405, %v1666, 0
      %vm1696 = vcmask 1042432
      %v1698 = vsel %vm1696, %v1668, 0
      %1700 = vmatpush.bf16.msra.mxu0 0
      %1701 = vmatpush.bf16.msra.mxu0 0
      %1702 = vmatpush.bf16.msra.mxu0 0
      %1703 = vmatpush.bf16.msra.mxu0 0
      %1704 = vmatpush.bf16.msra.mxu0 0
      %1705 = vmatpush.bf16.msra.mxu0 0
      %1706 = vmatpush.bf16.msra.mxu0 0
      %1707 = vmatpush.bf16.msra.mxu0 %v1698
      %1708 = vmatmul.bf16.gmra.mxu0 %v1670
      %v1709 = vpop.f32.mrf.mxu0
      %v1710 = vadd.f32 0.0, %v1709
      %v1711 = vpop.f32.mrf.mxu0
      %v1712 = vadd.f32 0.0, %v1711
      %1713 = vmatmul.bf16.gmra.mxu0 %v1673
      %v1714 = vpop.f32.mrf.mxu0
      %v1715 = vadd.f32 0.0, %v1714
      %v1716 = vpop.f32.mrf.mxu0
      %v1717 = vadd.f32 0.0, %v1716
      %1718 = vmatmul.bf16.gmra.mxu0 %v1676
      %v1719 = vpop.f32.mrf.mxu0
      %v1720 = vadd.f32 0.0, %v1719
      %v1721 = vpop.f32.mrf.mxu0
      %v1722 = vadd.f32 0.0, %v1721
      %1723 = vmatmul.bf16.gmra.mxu0 %v1679
      %v1724 = vpop.f32.mrf.mxu0
      %v1725 = vadd.f32 0.0, %v1724
      %v1726 = vpop.f32.mrf.mxu0
      %v1727 = vadd.f32 0.0, %v1726
      %1728 = vmatmul.bf16.gmra.mxu0 %v1682
      %v1729 = vpop.f32.mrf.mxu0
      %v1730 = vadd.f32 0.0, %v1729
      %v1731 = vpop.f32.mrf.mxu0
      %v1732 = vadd.f32 0.0, %v1731
      %1733 = vmatmul.bf16.gmra.mxu0 %v1685
      %v1734 = vpop.f32.mrf.mxu0
      %v1735 = vadd.f32 0.0, %v1734
      %v1736 = vpop.f32.mrf.mxu0
      %v1737 = vadd.f32 0.0, %v1736
      %1738 = vmatmul.bf16.gmra.mxu0 %v1688
      %v1739 = vpop.f32.mrf.mxu0
      %v1740 = vadd.f32 0.0, %v1739
      %v1741 = vpop.f32.mrf.mxu0
      %v1742 = vadd.f32 0.0, %v1741
      %1743 = vmatmul.bf16.gmra.mxu0 %v1691
      %v1744 = vpop.f32.mrf.mxu0
      %v1745 = vadd.f32 0.0, %v1744
      %v1746 = vpop.f32.mrf.mxu0
      %v1747 = vadd.f32 0.0, %v1746
      %1748 = vmatmul.bf16.gmra.mxu0 %v1694
      %v1749 = vpop.f32.mrf.mxu0
      %v1750 = vadd.f32 0.0, %v1749
      %v1751 = vpop.f32.mrf.mxu0
      %v1752 = vadd.f32 0.0, %v1751
      %1753 = vdwg.mxu0
      %v1755 = vsel %vm405, %v1630, 0
      %v1758 = vsel %vm405, %v1631, 0
      %v1761 = vsel %vm405, %v1632, 0
      %v1764 = vsel %vm405, %v1633, 0
      %v1767 = vsel %vm405, %v1634, 0
      %v1770 = vsel %vm405, %v1635, 0
      %v1773 = vsel %vm405, %v1636, 0
      %v1776 = vsel %vm405, %v1637, 0
      %v1779 = vsel %vm405, %v1638, 0
      %v1782 = vsel %vm1696, %v1639, 0
      %1784 = vmatpush.bf16.msra.mxu0 0
      %1785 = vmatpush.bf16.msra.mxu0 0
      %1786 = vmatpush.bf16.msra.mxu0 0
      %1787 = vmatpush.bf16.msra.mxu0 0
      %1788 = vmatpush.bf16.msra.mxu0 0
      %1789 = vmatpush.bf16.msra.mxu0 0
      %1790 = vmatpush.bf16.msra.mxu0 0
      %1791 = vmatpush.bf16.msra.mxu0 %v1782
      %1792 = vmatmul.bf16.gmra.mxu0 %v1755
      %v1793 = vpop.f32.mrf.mxu0
      %v1794 = vadd.f32 %v1710, %v1793
      %v1795 = vpop.f32.mrf.mxu0
      %v1796 = vadd.f32 %v1712, %v1795
      %1797 = vmatmul.bf16.gmra.mxu0 %v1758
      %v1798 = vpop.f32.mrf.mxu0
      %v1799 = vadd.f32 %v1715, %v1798
      %v1800 = vpop.f32.mrf.mxu0
      %v1801 = vadd.f32 %v1717, %v1800
      %1802 = vmatmul.bf16.gmra.mxu0 %v1761
      %v1803 = vpop.f32.mrf.mxu0
      %v1804 = vadd.f32 %v1720, %v1803
      %v1805 = vpop.f32.mrf.mxu0
      %v1806 = vadd.f32 %v1722, %v1805
      %1807 = vmatmul.bf16.gmra.mxu0 %v1764
      %v1808 = vpop.f32.mrf.mxu0
      %v1809 = vadd.f32 %v1725, %v1808
      %v1810 = vpop.f32.mrf.mxu0
      %v1811 = vadd.f32 %v1727, %v1810
      %1812 = vmatmul.bf16.gmra.mxu0 %v1767
      %v1813 = vpop.f32.mrf.mxu0
      %v1814 = vadd.f32 %v1730, %v1813
      %v1815 = vpop.f32.mrf.mxu0
      %v1816 = vadd.f32 %v1732, %v1815
      %1817 = vmatmul.bf16.gmra.mxu0 %v1770
      %v1818 = vpop.f32.mrf.mxu0
      %v1819 = vadd.f32 %v1735, %v1818
      %v1820 = vpop.f32.mrf.mxu0
      %v1821 = vadd.f32 %v1737, %v1820
      %1822 = vmatmul.bf16.gmra.mxu0 %v1773
      %v1823 = vpop.f32.mrf.mxu0
      %v1824 = vadd.f32 %v1740, %v1823
      %v1825 = vpop.f32.mrf.mxu0
      %v1826 = vadd.f32 %v1742, %v1825
      %1827 = vmatmul.bf16.gmra.mxu0 %v1776
      %v1828 = vpop.f32.mrf.mxu0
      %v1829 = vadd.f32 %v1745, %v1828
      %v1830 = vpop.f32.mrf.mxu0
      %v1831 = vadd.f32 %v1747, %v1830
      %1832 = vmatmul.bf16.gmra.mxu0 %v1779
      %v1833 = vpop.f32.mrf.mxu0
      %v1834 = vadd.f32 %v1750, %v1833
      %v1835 = vpop.f32.mrf.mxu0
      %v1836 = vadd.f32 %v1752, %v1835
      %1837 = vdwg.mxu0
      %v1838 = vld [vmem:[#allocation3 + $0x2] sm:$0xff]
      %v1839 = vld [vmem:[#allocation3 + $0xa] sm:$0xff]
      %v1840 = vld [vmem:[#allocation3 + $0x12] sm:$0xff]
      %v1841 = vld [vmem:[#allocation3 + $0x1a] sm:$0xff]
      %v1842 = vld [vmem:[#allocation3 + $0x22] sm:$0xff]
      %v1843 = vld [vmem:[#allocation3 + $0x2a] sm:$0xff]
      %v1844 = vld [vmem:[#allocation3 + $0x32] sm:$0xff]
      %v1845 = vld [vmem:[#allocation3 + $0x3a] sm:$0xff]
      %v1846 = vld [vmem:[#allocation3 + $0x42] sm:$0xff]
      %v1847 = vld [vmem:[#allocation3 + $0x4a] sm:$0xff]
      %v1848 = vld [vmem:[#allocation3 + $0x52] sm:$0xff]
      %v1849 = vld [vmem:[#allocation3 + $0x5a] sm:$0xff]
      %v1850 = vld [vmem:[#allocation3 + $0x62] sm:$0xff]
      %v1851 = vld [vmem:[#allocation3 + $0x6a] sm:$0xff]
      %v1852 = vld [vmem:[#allocation3 + $0x72] sm:$0xff]
      %v1853 = vld [vmem:[#allocation3 + $0x7a] sm:$0xff]
      %v1854 = vld [vmem:[#allocation3 + $0x82] sm:$0xff]
      %v1855 = vld [vmem:[#allocation3 + $0x8a] sm:$0xf]
      %v1856 = vpack.c.bf16 %v1839, %v1838
      %v1857 = vpack.c.bf16 %v1841, %v1840
      %v1858 = vpack.c.bf16 %v1843, %v1842
      %v1859 = vpack.c.bf16 %v1845, %v1844
      %v1860 = vpack.c.bf16 %v1847, %v1846
      %v1861 = vpack.c.bf16 %v1849, %v1848
      %v1862 = vpack.c.bf16 %v1851, %v1850
      %v1863 = vpack.c.bf16 %v1853, %v1852
      %v1864 = vpack.c.bf16 %v1855, %v1854
      %s1865 = scalar_lea.vmem %s3, 8
      %v1866 = vld [vmem:[%s1865] sm:$0x7]
      %v1868 = vsel %vm405, %v1856, 0
      %v1871 = vsel %vm405, %v1857, 0
      %v1874 = vsel %vm405, %v1858, 0
      %v1877 = vsel %vm405, %v1859, 0
      %v1880 = vsel %vm405, %v1860, 0
      %v1883 = vsel %vm405, %v1861, 0
      %v1886 = vsel %vm405, %v1862, 0
      %v1889 = vsel %vm405, %v1863, 0
      %v1892 = vsel %vm405, %v1864, 0
      %v1895 = vsel %vm1696, %v1866, 0
      %1897 = vmatpush.bf16.msra.mxu0 0
      %1898 = vmatpush.bf16.msra.mxu0 0
      %1899 = vmatpush.bf16.msra.mxu0 0
      %1900 = vmatpush.bf16.msra.mxu0 0
      %1901 = vmatpush.bf16.msra.mxu0 0
      %1902 = vmatpush.bf16.msra.mxu0 0
      %1903 = vmatpush.bf16.msra.mxu0 0
      %1904 = vmatpush.bf16.msra.mxu0 %v1895
      %1905 = vmatmul.bf16.gmra.mxu0 %v1868
      %v1906 = vpop.f32.mrf.mxu0
      %v1907 = vadd.f32 0.0, %v1906
      %v1908 = vpop.f32.mrf.mxu0
      %v1909 = vadd.f32 0.0, %v1908
      %1910 = vmatmul.bf16.gmra.mxu0 %v1871
      %v1911 = vpop.f32.mrf.mxu0
      %v1912 = vadd.f32 0.0, %v1911
      %v1913 = vpop.f32.mrf.mxu0
      %v1914 = vadd.f32 0.0, %v1913
      %1915 = vmatmul.bf16.gmra.mxu0 %v1874
      %v1916 = vpop.f32.mrf.mxu0
      %v1917 = vadd.f32 0.0, %v1916
      %v1918 = vpop.f32.mrf.mxu0
      %v1919 = vadd.f32 0.0, %v1918
      %1920 = vmatmul.bf16.gmra.mxu0 %v1877
      %v1921 = vpop.f32.mrf.mxu0
      %v1922 = vadd.f32 0.0, %v1921
      %v1923 = vpop.f32.mrf.mxu0
      %v1924 = vadd.f32 0.0, %v1923
      %1925 = vmatmul.bf16.gmra.mxu0 %v1880
      %v1926 = vpop.f32.mrf.mxu0
      %v1927 = vadd.f32 0.0, %v1926
      %v1928 = vpop.f32.mrf.mxu0
      %v1929 = vadd.f32 0.0, %v1928
      %1930 = vmatmul.bf16.gmra.mxu0 %v1883
      %v1931 = vpop.f32.mrf.mxu0
      %v1932 = vadd.f32 0.0, %v1931
      %v1933 = vpop.f32.mrf.mxu0
      %v1934 = vadd.f32 0.0, %v1933
      %1935 = vmatmul.bf16.gmra.mxu0 %v1886
      %v1936 = vpop.f32.mrf.mxu0
      %v1937 = vadd.f32 0.0, %v1936
      %v1938 = vpop.f32.mrf.mxu0
      %v1939 = vadd.f32 0.0, %v1938
      %1940 = vmatmul.bf16.gmra.mxu0 %v1889
      %v1941 = vpop.f32.mrf.mxu0
      %v1942 = vadd.f32 0.0, %v1941
      %v1943 = vpop.f32.mrf.mxu0
      %v1944 = vadd.f32 0.0, %v1943
      %1945 = vmatmul.bf16.gmra.mxu0 %v1892
      %v1946 = vpop.f32.mrf.mxu0
      %v1947 = vadd.f32 0.0, %v1946
      %v1948 = vpop.f32.mrf.mxu0
      %v1949 = vadd.f32 0.0, %v1948
      %1950 = vdwg.mxu0
      %v1951 = vadd.f32 %v1794, %v1907
      %v1952 = vadd.f32 %v1796, %v1909
      %v1953 = vadd.f32 %v1799, %v1912
      %v1954 = vadd.f32 %v1801, %v1914
      %v1955 = vadd.f32 %v1804, %v1917
      %v1956 = vadd.f32 %v1806, %v1919
      %v1957 = vadd.f32 %v1809, %v1922
      %v1958 = vadd.f32 %v1811, %v1924
      %v1959 = vadd.f32 %v1814, %v1927
      %v1960 = vadd.f32 %v1816, %v1929
      %v1961 = vadd.f32 %v1819, %v1932
      %v1962 = vadd.f32 %v1821, %v1934
      %v1963 = vadd.f32 %v1824, %v1937
      %v1964 = vadd.f32 %v1826, %v1939
      %v1965 = vadd.f32 %v1829, %v1942
      %v1966 = vadd.f32 %v1831, %v1944
      %v1967 = vadd.f32 %v1834, %v1947
      %v1968 = vadd.f32 %v1836, %v1949
      %v1969 = vld [vmem:[#allocation3 + $0x3] sm:$0xff]
      %v1970 = vld [vmem:[#allocation3 + $0xb] sm:$0xff]
      %v1971 = vld [vmem:[#allocation3 + $0x13] sm:$0xff]
      %v1972 = vld [vmem:[#allocation3 + $0x1b] sm:$0xff]
      %v1973 = vld [vmem:[#allocation3 + $0x23] sm:$0xff]
      %v1974 = vld [vmem:[#allocation3 + $0x2b] sm:$0xff]
      %v1975 = vld [vmem:[#allocation3 + $0x33] sm:$0xff]
      %v1976 = vld [vmem:[#allocation3 + $0x3b] sm:$0xff]
      %v1977 = vld [vmem:[#allocation3 + $0x43] sm:$0xff]
      %v1978 = vld [vmem:[#allocation3 + $0x4b] sm:$0xff]
      %v1979 = vld [vmem:[#allocation3 + $0x53] sm:$0xff]
      %v1980 = vld [vmem:[#allocation3 + $0x5b] sm:$0xff]
      %v1981 = vld [vmem:[#allocation3 + $0x63] sm:$0xff]
      %v1982 = vld [vmem:[#allocation3 + $0x6b] sm:$0xff]
      %v1983 = vld [vmem:[#allocation3 + $0x73] sm:$0xff]
      %v1984 = vld [vmem:[#allocation3 + $0x7b] sm:$0xff]
      %v1985 = vld [vmem:[#allocation3 + $0x83] sm:$0xff]
      %v1986 = vld [vmem:[#allocation3 + $0x8b] sm:$0xf]
      %v1987 = vpack.c.bf16 %v1970, %v1969
      %v1988 = vpack.c.bf16 %v1972, %v1971
      %v1989 = vpack.c.bf16 %v1974, %v1973
      %v1990 = vpack.c.bf16 %v1976, %v1975
      %v1991 = vpack.c.bf16 %v1978, %v1977
      %v1992 = vpack.c.bf16 %v1980, %v1979
      %v1993 = vpack.c.bf16 %v1982, %v1981
      %v1994 = vpack.c.bf16 %v1984, %v1983
      %v1995 = vpack.c.bf16 %v1986, %v1985
      %s1996 = scalar_lea.vmem %s3, 12
      %v1997 = vld [vmem:[%s1996] sm:$0x7]
      %v1999 = vsel %vm405, %v1987, 0
      %v2002 = vsel %vm405, %v1988, 0
      %v2005 = vsel %vm405, %v1989, 0
      %v2008 = vsel %vm405, %v1990, 0
      %v2011 = vsel %vm405, %v1991, 0
      %v2014 = vsel %vm405, %v1992, 0
      %v2017 = vsel %vm405, %v1993, 0
      %v2020 = vsel %vm405, %v1994, 0
      %v2023 = vsel %vm405, %v1995, 0
      %v2026 = vsel %vm1696, %v1997, 0
      %2028 = vmatpush.bf16.msra.mxu0 0
      %2029 = vmatpush.bf16.msra.mxu0 0
      %2030 = vmatpush.bf16.msra.mxu0 0
      %2031 = vmatpush.bf16.msra.mxu0 0
      %2032 = vmatpush.bf16.msra.mxu0 0
      %2033 = vmatpush.bf16.msra.mxu0 0
      %2034 = vmatpush.bf16.msra.mxu0 0
      %2035 = vmatpush.bf16.msra.mxu0 %v2026
      %2036 = vmatmul.bf16.gmra.mxu0 %v1999
      %v2037 = vpop.f32.mrf.mxu0
      %v2038 = vadd.f32 0.0, %v2037
      %v2039 = vpop.f32.mrf.mxu0
      %v2040 = vadd.f32 0.0, %v2039
      %2041 = vmatmul.bf16.gmra.mxu0 %v2002
      %v2042 = vpop.f32.mrf.mxu0
      %v2043 = vadd.f32 0.0, %v2042
      %v2044 = vpop.f32.mrf.mxu0
      %v2045 = vadd.f32 0.0, %v2044
      %2046 = vmatmul.bf16.gmra.mxu0 %v2005
      %v2047 = vpop.f32.mrf.mxu0
      %v2048 = vadd.f32 0.0, %v2047
      %v2049 = vpop.f32.mrf.mxu0
      %v2050 = vadd.f32 0.0, %v2049
      %2051 = vmatmul.bf16.gmra.mxu0 %v2008
      %v2052 = vpop.f32.mrf.mxu0
      %v2053 = vadd.f32 0.0, %v2052
      %v2054 = vpop.f32.mrf.mxu0
      %v2055 = vadd.f32 0.0, %v2054
      %2056 = vmatmul.bf16.gmra.mxu0 %v2011
      %v2057 = vpop.f32.mrf.mxu0
      %v2058 = vadd.f32 0.0, %v2057
      %v2059 = vpop.f32.mrf.mxu0
      %v2060 = vadd.f32 0.0, %v2059
      %2061 = vmatmul.bf16.gmra.mxu0 %v2014
      %v2062 = vpop.f32.mrf.mxu0
      %v2063 = vadd.f32 0.0, %v2062
      %v2064 = vpop.f32.mrf.mxu0
      %v2065 = vadd.f32 0.0, %v2064
      %2066 = vmatmul.bf16.gmra.mxu0 %v2017
      %v2067 = vpop.f32.mrf.mxu0
      %v2068 = vadd.f32 0.0, %v2067
      %v2069 = vpop.f32.mrf.mxu0
      %v2070 = vadd.f32 0.0, %v2069
      %2071 = vmatmul.bf16.gmra.mxu0 %v2020
      %v2072 = vpop.f32.mrf.mxu0
      %v2073 = vadd.f32 0.0, %v2072
      %v2074 = vpop.f32.mrf.mxu0
      %v2075 = vadd.f32 0.0, %v2074
      %2076 = vmatmul.bf16.gmra.mxu0 %v2023
      %v2077 = vpop.f32.mrf.mxu0
      %v2078 = vadd.f32 0.0, %v2077
      %v2079 = vpop.f32.mrf.mxu0
      %v2080 = vadd.f32 0.0, %v2079
      %2081 = vdwg.mxu0
      %v2082 = vadd.f32 %v1951, %v2038
      %v2083 = vadd.f32 %v1952, %v2040
      %v2084 = vadd.f32 %v1953, %v2043
      %v2085 = vadd.f32 %v1954, %v2045
      %v2086 = vadd.f32 %v1955, %v2048
      %v2087 = vadd.f32 %v1956, %v2050
      %v2088 = vadd.f32 %v1957, %v2053
      %v2089 = vadd.f32 %v1958, %v2055
      %v2090 = vadd.f32 %v1959, %v2058
      %v2091 = vadd.f32 %v1960, %v2060
      %v2092 = vadd.f32 %v1961, %v2063
      %v2093 = vadd.f32 %v1962, %v2065
      %v2094 = vadd.f32 %v1963, %v2068
      %v2095 = vadd.f32 %v1964, %v2070
      %v2096 = vadd.f32 %v1965, %v2073
      %v2097 = vadd.f32 %v1966, %v2075
      %v2098 = vadd.f32 %v1967, %v2078
      %v2099 = vadd.f32 %v1968, %v2080
      %v2100 = vld [vmem:[#allocation3 + $0x4] sm:$0xff]
      %v2101 = vld [vmem:[#allocation3 + $0xc] sm:$0xff]
      %v2102 = vld [vmem:[#allocation3 + $0x14] sm:$0xff]
      %v2103 = vld [vmem:[#allocation3 + $0x1c] sm:$0xff]
      %v2104 = vld [vmem:[#allocation3 + $0x24] sm:$0xff]
      %v2105 = vld [vmem:[#allocation3 + $0x2c] sm:$0xff]
      %v2106 = vld [vmem:[#allocation3 + $0x34] sm:$0xff]
      %v2107 = vld [vmem:[#allocation3 + $0x3c] sm:$0xff]
      %v2108 = vld [vmem:[#allocation3 + $0x44] sm:$0xff]
      %v2109 = vld [vmem:[#allocation3 + $0x4c] sm:$0xff]
      %v2110 = vld [vmem:[#allocation3 + $0x54] sm:$0xff]
      %v2111 = vld [vmem:[#allocation3 + $0x5c] sm:$0xff]
      %v2112 = vld [vmem:[#allocation3 + $0x64] sm:$0xff]
      %v2113 = vld [vmem:[#allocation3 + $0x6c] sm:$0xff]
      %v2114 = vld [vmem:[#allocation3 + $0x74] sm:$0xff]
      %v2115 = vld [vmem:[#allocation3 + $0x7c] sm:$0xff]
      %v2116 = vld [vmem:[#allocation3 + $0x84] sm:$0xff]
      %v2117 = vld [vmem:[#allocation3 + $0x8c] sm:$0xf]
      %v2118 = vpack.c.bf16 %v2101, %v2100
      %v2119 = vpack.c.bf16 %v2103, %v2102
      %v2120 = vpack.c.bf16 %v2105, %v2104
      %v2121 = vpack.c.bf16 %v2107, %v2106
      %v2122 = vpack.c.bf16 %v2109, %v2108
      %v2123 = vpack.c.bf16 %v2111, %v2110
      %v2124 = vpack.c.bf16 %v2113, %v2112
      %v2125 = vpack.c.bf16 %v2115, %v2114
      %v2126 = vpack.c.bf16 %v2117, %v2116
      %s2127 = scalar_lea.vmem %s3, 16
      %v2128 = vld [vmem:[%s2127] sm:$0x7]
      %v2130 = vsel %vm405, %v2118, 0
      %v2133 = vsel %vm405, %v2119, 0
      %v2136 = vsel %vm405, %v2120, 0
      %v2139 = vsel %vm405, %v2121, 0
      %v2142 = vsel %vm405, %v2122, 0
      %v2145 = vsel %vm405, %v2123, 0
      %v2148 = vsel %vm405, %v2124, 0
      %v2151 = vsel %vm405, %v2125, 0
      %v2154 = vsel %vm405, %v2126, 0
      %v2157 = vsel %vm1696, %v2128, 0
      %2159 = vmatpush.bf16.msra.mxu0 0
      %2160 = vmatpush.bf16.msra.mxu0 0
      %2161 = vmatpush.bf16.msra.mxu0 0
      %2162 = vmatpush.bf16.msra.mxu0 0
      %2163 = vmatpush.bf16.msra.mxu0 0
      %2164 = vmatpush.bf16.msra.mxu0 0
      %2165 = vmatpush.bf16.msra.mxu0 0
      %2166 = vmatpush.bf16.msra.mxu0 %v2157
      %2167 = vmatmul.bf16.gmra.mxu0 %v2130
      %v2168 = vpop.f32.mrf.mxu0
      %v2169 = vadd.f32 0.0, %v2168
      %v2170 = vpop.f32.mrf.mxu0
      %v2171 = vadd.f32 0.0, %v2170
      %2172 = vmatmul.bf16.gmra.mxu0 %v2133
      %v2173 = vpop.f32.mrf.mxu0
      %v2174 = vadd.f32 0.0, %v2173
      %v2175 = vpop.f32.mrf.mxu0
      %v2176 = vadd.f32 0.0, %v2175
      %2177 = vmatmul.bf16.gmra.mxu0 %v2136
      %v2178 = vpop.f32.mrf.mxu0
      %v2179 = vadd.f32 0.0, %v2178
      %v2180 = vpop.f32.mrf.mxu0
      %v2181 = vadd.f32 0.0, %v2180
      %2182 = vmatmul.bf16.gmra.mxu0 %v2139
      %v2183 = vpop.f32.mrf.mxu0
      %v2184 = vadd.f32 0.0, %v2183
      %v2185 = vpop.f32.mrf.mxu0
      %v2186 = vadd.f32 0.0, %v2185
      %2187 = vmatmul.bf16.gmra.mxu0 %v2142
      %v2188 = vpop.f32.mrf.mxu0
      %v2189 = vadd.f32 0.0, %v2188
      %v2190 = vpop.f32.mrf.mxu0
      %v2191 = vadd.f32 0.0, %v2190
      %2192 = vmatmul.bf16.gmra.mxu0 %v2145
      %v2193 = vpop.f32.mrf.mxu0
      %v2194 = vadd.f32 0.0, %v2193
      %v2195 = vpop.f32.mrf.mxu0
      %v2196 = vadd.f32 0.0, %v2195
      %2197 = vmatmul.bf16.gmra.mxu0 %v2148
      %v2198 = vpop.f32.mrf.mxu0
      %v2199 = vadd.f32 0.0, %v2198
      %v2200 = vpop.f32.mrf.mxu0
      %v2201 = vadd.f32 0.0, %v2200
      %2202 = vmatmul.bf16.gmra.mxu0 %v2151
      %v2203 = vpop.f32.mrf.mxu0
      %v2204 = vadd.f32 0.0, %v2203
      %v2205 = vpop.f32.mrf.mxu0
      %v2206 = vadd.f32 0.0, %v2205
      %2207 = vmatmul.bf16.gmra.mxu0 %v2154
      %v2208 = vpop.f32.mrf.mxu0
      %v2209 = vadd.f32 0.0, %v2208
      %v2210 = vpop.f32.mrf.mxu0
      %v2211 = vadd.f32 0.0, %v2210
      %2212 = vdwg.mxu0
      %v2213 = vadd.f32 %v2082, %v2169
      %v2214 = vadd.f32 %v2083, %v2171
      %v2215 = vadd.f32 %v2084, %v2174
      %v2216 = vadd.f32 %v2085, %v2176
      %v2217 = vadd.f32 %v2086, %v2179
      %v2218 = vadd.f32 %v2087, %v2181
      %v2219 = vadd.f32 %v2088, %v2184
      %v2220 = vadd.f32 %v2089, %v2186
      %v2221 = vadd.f32 %v2090, %v2189
      %v2222 = vadd.f32 %v2091, %v2191
      %v2223 = vadd.f32 %v2092, %v2194
      %v2224 = vadd.f32 %v2093, %v2196
      %v2225 = vadd.f32 %v2094, %v2199
      %v2226 = vadd.f32 %v2095, %v2201
      %v2227 = vadd.f32 %v2096, %v2204
      %v2228 = vadd.f32 %v2097, %v2206
      %v2229 = vadd.f32 %v2098, %v2209
      %v2230 = vadd.f32 %v2099, %v2211
      %v2231 = vld [vmem:[#allocation3 + $0xe] sm:$0xff]
      %v2232 = vld [vmem:[#allocation3 + $0x16] sm:$0xff]
      %v2233 = vld [vmem:[#allocation3 + $0x1e] sm:$0xff]
      %v2234 = vld [vmem:[#allocation3 + $0x26] sm:$0xff]
      %v2235 = vld [vmem:[#allocation3 + $0x2e] sm:$0xff]
      %v2236 = vld [vmem:[#allocation3 + $0x36] sm:$0xff]
      %v2237 = vld [vmem:[#allocation3 + $0x3e] sm:$0xff]
      %v2238 = vld [vmem:[#allocation3 + $0x46] sm:$0xff]
      %v2239 = vld [vmem:[#allocation3 + $0x4e] sm:$0xff]
      %v2240 = vld [vmem:[#allocation3 + $0x56] sm:$0xff]
      %v2241 = vld [vmem:[#allocation3 + $0x5e] sm:$0xff]
      %v2242 = vld [vmem:[#allocation3 + $0x66] sm:$0xff]
      %v2243 = vld [vmem:[#allocation3 + $0x6e] sm:$0xff]
      %v2244 = vld [vmem:[#allocation3 + $0x76] sm:$0xff]
      %v2245 = vld [vmem:[#allocation3 + $0x7e] sm:$0xff]
      %v2246 = vld [vmem:[#allocation3 + $0x86] sm:$0xff]
      %v2247 = vld [vmem:[#allocation3 + $0x8e] sm:$0xff]
      %v2248 = vld [vmem:[#allocation3 + $0x96] sm:$0xf]
      %v2249 = vpack.c.bf16 %v2232, %v2231
      %v2250 = vpack.c.bf16 %v2234, %v2233
      %v2251 = vpack.c.bf16 %v2236, %v2235
      %v2252 = vpack.c.bf16 %v2238, %v2237
      %v2253 = vpack.c.bf16 %v2240, %v2239
      %v2254 = vpack.c.bf16 %v2242, %v2241
      %v2255 = vpack.c.bf16 %v2244, %v2243
      %v2256 = vpack.c.bf16 %v2246, %v2245
      %v2257 = vpack.c.bf16 %v2248, %v2247
      %s2258 = scalar_lea.vmem %s3, 20
      %v2259 = vld [vmem:[%s2258] sm:$0x7]
      %v2261 = vsel %vm405, %v2249, 0
      %v2264 = vsel %vm405, %v2250, 0
      %v2267 = vsel %vm405, %v2251, 0
      %v2270 = vsel %vm405, %v2252, 0
      %v2273 = vsel %vm405, %v2253, 0
      %v2276 = vsel %vm405, %v2254, 0
      %v2279 = vsel %vm405, %v2255, 0
      %v2282 = vsel %vm405, %v2256, 0
      %v2285 = vsel %vm405, %v2257, 0
      %v2288 = vsel %vm1696, %v2259, 0
      %2290 = vmatpush.bf16.msra.mxu0 0
      %2291 = vmatpush.bf16.msra.mxu0 0
      %2292 = vmatpush.bf16.msra.mxu0 0
      %2293 = vmatpush.bf16.msra.mxu0 0
      %2294 = vmatpush.bf16.msra.mxu0 0
      %2295 = vmatpush.bf16.msra.mxu0 0
      %2296 = vmatpush.bf16.msra.mxu0 0
      %2297 = vmatpush.bf16.msra.mxu0 %v2288
      %2298 = vmatmul.bf16.gmra.mxu0 %v2261
      %v2299 = vpop.f32.mrf.mxu0
      %v2300 = vadd.f32 0.0, %v2299
      %v2301 = vpop.f32.mrf.mxu0
      %v2302 = vadd.f32 0.0, %v2301
      %2303 = vmatmul.bf16.gmra.mxu0 %v2264
      %v2304 = vpop.f32.mrf.mxu0
      %v2305 = vadd.f32 0.0, %v2304
      %v2306 = vpop.f32.mrf.mxu0
      %v2307 = vadd.f32 0.0, %v2306
      %2308 = vmatmul.bf16.gmra.mxu0 %v2267
      %v2309 = vpop.f32.mrf.mxu0
      %v2310 = vadd.f32 0.0, %v2309
      %v2311 = vpop.f32.mrf.mxu0
      %v2312 = vadd.f32 0.0, %v2311
      %2313 = vmatmul.bf16.gmra.mxu0 %v2270
      %v2314 = vpop.f32.mrf.mxu0
      %v2315 = vadd.f32 0.0, %v2314
      %v2316 = vpop.f32.mrf.mxu0
      %v2317 = vadd.f32 0.0, %v2316
      %2318 = vmatmul.bf16.gmra.mxu0 %v2273
      %v2319 = vpop.f32.mrf.mxu0
      %v2320 = vadd.f32 0.0, %v2319
      %v2321 = vpop.f32.mrf.mxu0
      %v2322 = vadd.f32 0.0, %v2321
      %2323 = vmatmul.bf16.gmra.mxu0 %v2276
      %v2324 = vpop.f32.mrf.mxu0
      %v2325 = vadd.f32 0.0, %v2324
      %v2326 = vpop.f32.mrf.mxu0
      %v2327 = vadd.f32 0.0, %v2326
      %2328 = vmatmul.bf16.gmra.mxu0 %v2279
      %v2329 = vpop.f32.mrf.mxu0
      %v2330 = vadd.f32 0.0, %v2329
      %v2331 = vpop.f32.mrf.mxu0
      %v2332 = vadd.f32 0.0, %v2331
      %2333 = vmatmul.bf16.gmra.mxu0 %v2282
      %v2334 = vpop.f32.mrf.mxu0
      %v2335 = vadd.f32 0.0, %v2334
      %v2336 = vpop.f32.mrf.mxu0
      %v2337 = vadd.f32 0.0, %v2336
      %2338 = vmatmul.bf16.gmra.mxu0 %v2285
      %v2339 = vpop.f32.mrf.mxu0
      %v2340 = vadd.f32 0.0, %v2339
      %v2341 = vpop.f32.mrf.mxu0
      %v2342 = vadd.f32 0.0, %v2341
      %2343 = vdwg.mxu0
      %v2344 = vadd.f32 %v2213, %v2300
      %v2345 = vadd.f32 %v2214, %v2302
      %v2346 = vadd.f32 %v2215, %v2305
      %v2347 = vadd.f32 %v2216, %v2307
      %v2348 = vadd.f32 %v2217, %v2310
      %v2349 = vadd.f32 %v2218, %v2312
      %v2350 = vadd.f32 %v2219, %v2315
      %v2351 = vadd.f32 %v2220, %v2317
      %v2352 = vadd.f32 %v2221, %v2320
      %v2353 = vadd.f32 %v2222, %v2322
      %v2354 = vadd.f32 %v2223, %v2325
      %v2355 = vadd.f32 %v2224, %v2327
      %v2356 = vadd.f32 %v2225, %v2330
      %v2357 = vadd.f32 %v2226, %v2332
      %v2358 = vadd.f32 %v2227, %v2335
      %v2359 = vadd.f32 %v2228, %v2337
      %v2360 = vadd.f32 %v2229, %v2340
      %v2361 = vadd.f32 %v2230, %v2342
      %v2362 = vld [vmem:[#allocation3 + $0xf] sm:$0xff]
      %v2363 = vld [vmem:[#allocation3 + $0x17] sm:$0xff]
      %v2364 = vld [vmem:[#allocation3 + $0x1f] sm:$0xff]
      %v2365 = vld [vmem:[#allocation3 + $0x27] sm:$0xff]
      %v2366 = vld [vmem:[#allocation3 + $0x2f] sm:$0xff]
      %v2367 = vld [vmem:[#allocation3 + $0x37] sm:$0xff]
      %v2368 = vld [vmem:[#allocation3 + $0x3f] sm:$0xff]
      %v2369 = vld [vmem:[#allocation3 + $0x47] sm:$0xff]
      %v2370 = vld [vmem:[#allocation3 + $0x4f] sm:$0xff]
      %v2371 = vld [vmem:[#allocation3 + $0x57] sm:$0xff]
      %v2372 = vld [vmem:[#allocation3 + $0x5f] sm:$0xff]
      %v2373 = vld [vmem:[#allocation3 + $0x67] sm:$0xff]
      %v2374 = vld [vmem:[#allocation3 + $0x6f] sm:$0xff]
      %v2375 = vld [vmem:[#allocation3 + $0x77] sm:$0xff]
      %v2376 = vld [vmem:[#allocation3 + $0x7f] sm:$0xff]
      %v2377 = vld [vmem:[#allocation3 + $0x87] sm:$0xff]
      %v2378 = vld [vmem:[#allocation3 + $0x8f] sm:$0xff]
      %v2379 = vld [vmem:[#allocation3 + $0x97] sm:$0xf]
      %v2380 = vpack.c.bf16 %v2363, %v2362
      %v2381 = vpack.c.bf16 %v2365, %v2364
      %v2382 = vpack.c.bf16 %v2367, %v2366
      %v2383 = vpack.c.bf16 %v2369, %v2368
      %v2384 = vpack.c.bf16 %v2371, %v2370
      %v2385 = vpack.c.bf16 %v2373, %v2372
      %v2386 = vpack.c.bf16 %v2375, %v2374
      %v2387 = vpack.c.bf16 %v2377, %v2376
      %v2388 = vpack.c.bf16 %v2379, %v2378
      %s2389 = scalar_lea.vmem %s3, 24
      %v2390 = vld [vmem:[%s2389] sm:$0x7]
      %v2392 = vsel %vm405, %v2380, 0
      %v2395 = vsel %vm405, %v2381, 0
      %v2398 = vsel %vm405, %v2382, 0
      %v2401 = vsel %vm405, %v2383, 0
      %v2404 = vsel %vm405, %v2384, 0
      %v2407 = vsel %vm405, %v2385, 0
      %v2410 = vsel %vm405, %v2386, 0
      %v2413 = vsel %vm405, %v2387, 0
      %v2416 = vsel %vm405, %v2388, 0
      %v2419 = vsel %vm1696, %v2390, 0
      %2421 = vmatpush.bf16.msra.mxu0 0
      %2422 = vmatpush.bf16.msra.mxu0 0
      %2423 = vmatpush.bf16.msra.mxu0 0
      %2424 = vmatpush.bf16.msra.mxu0 0
      %2425 = vmatpush.bf16.msra.mxu0 0
      %2426 = vmatpush.bf16.msra.mxu0 0
      %2427 = vmatpush.bf16.msra.mxu0 0
      %2428 = vmatpush.bf16.msra.mxu0 %v2419
      %2429 = vmatmul.bf16.gmra.mxu0 %v2392
      %v2430 = vpop.f32.mrf.mxu0
      %v2431 = vadd.f32 0.0, %v2430
      %v2432 = vpop.f32.mrf.mxu0
      %v2433 = vadd.f32 0.0, %v2432
      %2434 = vmatmul.bf16.gmra.mxu0 %v2395
      %v2435 = vpop.f32.mrf.mxu0
      %v2436 = vadd.f32 0.0, %v2435
      %v2437 = vpop.f32.mrf.mxu0
      %v2438 = vadd.f32 0.0, %v2437
      %2439 = vmatmul.bf16.gmra.mxu0 %v2398
      %v2440 = vpop.f32.mrf.mxu0
      %v2441 = vadd.f32 0.0, %v2440
      %v2442 = vpop.f32.mrf.mxu0
      %v2443 = vadd.f32 0.0, %v2442
      %2444 = vmatmul.bf16.gmra.mxu0 %v2401
      %v2445 = vpop.f32.mrf.mxu0
      %v2446 = vadd.f32 0.0, %v2445
      %v2447 = vpop.f32.mrf.mxu0
      %v2448 = vadd.f32 0.0, %v2447
      %2449 = vmatmul.bf16.gmra.mxu0 %v2404
      %v2450 = vpop.f32.mrf.mxu0
      %v2451 = vadd.f32 0.0, %v2450
      %v2452 = vpop.f32.mrf.mxu0
      %v2453 = vadd.f32 0.0, %v2452
      %2454 = vmatmul.bf16.gmra.mxu0 %v2407
      %v2455 = vpop.f32.mrf.mxu0
      %v2456 = vadd.f32 0.0, %v2455
      %v2457 = vpop.f32.mrf.mxu0
      %v2458 = vadd.f32 0.0, %v2457
      %2459 = vmatmul.bf16.gmra.mxu0 %v2410
      %v2460 = vpop.f32.mrf.mxu0
      %v2461 = vadd.f32 0.0, %v2460
      %v2462 = vpop.f32.mrf.mxu0
      %v2463 = vadd.f32 0.0, %v2462
      %2464 = vmatmul.bf16.gmra.mxu0 %v2413
      %v2465 = vpop.f32.mrf.mxu0
      %v2466 = vadd.f32 0.0, %v2465
      %v2467 = vpop.f32.mrf.mxu0
      %v2468 = vadd.f32 0.0, %v2467
      %2469 = vmatmul.bf16.gmra.mxu0 %v2416
      %v2470 = vpop.f32.mrf.mxu0
      %v2471 = vadd.f32 0.0, %v2470
      %v2472 = vpop.f32.mrf.mxu0
      %v2473 = vadd.f32 0.0, %v2472
      %2474 = vdwg.mxu0
      %v2475 = vadd.f32 %v2344, %v2431
      %v2476 = vadd.f32 %v2345, %v2433
      %v2477 = vadd.f32 %v2346, %v2436
      %v2478 = vadd.f32 %v2347, %v2438
      %v2479 = vadd.f32 %v2348, %v2441
      %v2480 = vadd.f32 %v2349, %v2443
      %v2481 = vadd.f32 %v2350, %v2446
      %v2482 = vadd.f32 %v2351, %v2448
      %v2483 = vadd.f32 %v2352, %v2451
      %v2484 = vadd.f32 %v2353, %v2453
      %v2485 = vadd.f32 %v2354, %v2456
      %v2486 = vadd.f32 %v2355, %v2458
      %v2487 = vadd.f32 %v2356, %v2461
      %v2488 = vadd.f32 %v2357, %v2463
      %v2489 = vadd.f32 %v2358, %v2466
      %v2490 = vadd.f32 %v2359, %v2468
      %v2491 = vadd.f32 %v2360, %v2471
      %v2492 = vadd.f32 %v2361, %v2473
      %v2493 = vld [vmem:[#allocation3 + $0x10] sm:$0xff]
      %v2494 = vld [vmem:[#allocation3 + $0x18] sm:$0xff]
      %v2495 = vld [vmem:[#allocation3 + $0x20] sm:$0xff]
      %v2496 = vld [vmem:[#allocation3 + $0x28] sm:$0xff]
      %v2497 = vld [vmem:[#allocation3 + $0x30] sm:$0xff]
      %v2498 = vld [vmem:[#allocation3 + $0x38] sm:$0xff]
      %v2499 = vld [vmem:[#allocation3 + $0x40] sm:$0xff]
      %v2500 = vld [vmem:[#allocation3 + $0x48] sm:$0xff]
      %v2501 = vld [vmem:[#allocation3 + $0x50] sm:$0xff]
      %v2502 = vld [vmem:[#allocation3 + $0x58] sm:$0xff]
      %v2503 = vld [vmem:[#allocation3 + $0x60] sm:$0xff]
      %v2504 = vld [vmem:[#allocation3 + $0x68] sm:$0xff]
      %v2505 = vld [vmem:[#allocation3 + $0x70] sm:$0xff]
      %v2506 = vld [vmem:[#allocation3 + $0x78] sm:$0xff]
      %v2507 = vld [vmem:[#allocation3 + $0x80] sm:$0xff]
      %v2508 = vld [vmem:[#allocation3 + $0x88] sm:$0xff]
      %v2509 = vld [vmem:[#allocation3 + $0x90] sm:$0xff]
      %v2510 = vld [vmem:[#allocation3 + $0x98] sm:$0xf]
      %v2511 = vpack.c.bf16 %v2494, %v2493
      %v2512 = vpack.c.bf16 %v2496, %v2495
      %v2513 = vpack.c.bf16 %v2498, %v2497
      %v2514 = vpack.c.bf16 %v2500, %v2499
      %v2515 = vpack.c.bf16 %v2502, %v2501
      %v2516 = vpack.c.bf16 %v2504, %v2503
      %v2517 = vpack.c.bf16 %v2506, %v2505
      %v2518 = vpack.c.bf16 %v2508, %v2507
      %v2519 = vpack.c.bf16 %v2510, %v2509
      %s2520 = scalar_lea.vmem %s3, 28
      %v2521 = vld [vmem:[%s2520] sm:$0x7]
      %v2523 = vsel %vm405, %v2511, 0
      %v2526 = vsel %vm405, %v2512, 0
      %v2529 = vsel %vm405, %v2513, 0
      %v2532 = vsel %vm405, %v2514, 0
      %v2535 = vsel %vm405, %v2515, 0
      %v2538 = vsel %vm405, %v2516, 0
      %v2541 = vsel %vm405, %v2517, 0
      %v2544 = vsel %vm405, %v2518, 0
      %v2547 = vsel %vm405, %v2519, 0
      %v2550 = vsel %vm1696, %v2521, 0
      %2552 = vmatpush.bf16.msra.mxu0 0
      %2553 = vmatpush.bf16.msra.mxu0 0
      %2554 = vmatpush.bf16.msra.mxu0 0
      %2555 = vmatpush.bf16.msra.mxu0 0
      %2556 = vmatpush.bf16.msra.mxu0 0
      %2557 = vmatpush.bf16.msra.mxu0 0
      %2558 = vmatpush.bf16.msra.mxu0 0
      %2559 = vmatpush.bf16.msra.mxu0 %v2550
      %2560 = vmatmul.bf16.gmra.mxu0 %v2523
      %v2561 = vpop.f32.mrf.mxu0
      %v2562 = vadd.f32 0.0, %v2561
      %v2563 = vpop.f32.mrf.mxu0
      %v2564 = vadd.f32 0.0, %v2563
      %2565 = vmatmul.bf16.gmra.mxu0 %v2526
      %v2566 = vpop.f32.mrf.mxu0
      %v2567 = vadd.f32 0.0, %v2566
      %v2568 = vpop.f32.mrf.mxu0
      %v2569 = vadd.f32 0.0, %v2568
      %2570 = vmatmul.bf16.gmra.mxu0 %v2529
      %v2571 = vpop.f32.mrf.mxu0
      %v2572 = vadd.f32 0.0, %v2571
      %v2573 = vpop.f32.mrf.mxu0
      %v2574 = vadd.f32 0.0, %v2573
      %2575 = vmatmul.bf16.gmra.mxu0 %v2532
      %v2576 = vpop.f32.mrf.mxu0
      %v2577 = vadd.f32 0.0, %v2576
      %v2578 = vpop.f32.mrf.mxu0
      %v2579 = vadd.f32 0.0, %v2578
      %2580 = vmatmul.bf16.gmra.mxu0 %v2535
      %v2581 = vpop.f32.mrf.mxu0
      %v2582 = vadd.f32 0.0, %v2581
      %v2583 = vpop.f32.mrf.mxu0
      %v2584 = vadd.f32 0.0, %v2583
      %2585 = vmatmul.bf16.gmra.mxu0 %v2538
      %v2586 = vpop.f32.mrf.mxu0
      %v2587 = vadd.f32 0.0, %v2586
      %v2588 = vpop.f32.mrf.mxu0
      %v2589 = vadd.f32 0.0, %v2588
      %2590 = vmatmul.bf16.gmra.mxu0 %v2541
      %v2591 = vpop.f32.mrf.mxu0
      %v2592 = vadd.f32 0.0, %v2591
      %v2593 = vpop.f32.mrf.mxu0
      %v2594 = vadd.f32 0.0, %v2593
      %2595 = vmatmul.bf16.gmra.mxu0 %v2544
      %v2596 = vpop.f32.mrf.mxu0
      %v2597 = vadd.f32 0.0, %v2596
      %v2598 = vpop.f32.mrf.mxu0
      %v2599 = vadd.f32 0.0, %v2598
      %2600 = vmatmul.bf16.gmra.mxu0 %v2547
      %v2601 = vpop.f32.mrf.mxu0
      %v2602 = vadd.f32 0.0, %v2601
      %v2603 = vpop.f32.mrf.mxu0
      %v2604 = vadd.f32 0.0, %v2603
      %2605 = vdwg.mxu0
      %v2606 = vadd.f32 %v2475, %v2562
      %v2607 = vadd.f32 %v2476, %v2564
      %v2608 = vadd.f32 %v2477, %v2567
      %v2609 = vadd.f32 %v2478, %v2569
      %v2610 = vadd.f32 %v2479, %v2572
      %v2611 = vadd.f32 %v2480, %v2574
      %v2612 = vadd.f32 %v2481, %v2577
      %v2613 = vadd.f32 %v2482, %v2579
      %v2614 = vadd.f32 %v2483, %v2582
      %v2615 = vadd.f32 %v2484, %v2584
      %v2616 = vadd.f32 %v2485, %v2587
      %v2617 = vadd.f32 %v2486, %v2589
      %v2618 = vadd.f32 %v2487, %v2592
      %v2619 = vadd.f32 %v2488, %v2594
      %v2620 = vadd.f32 %v2489, %v2597
      %v2621 = vadd.f32 %v2490, %v2599
      %v2622 = vadd.f32 %v2491, %v2602
      %v2623 = vadd.f32 %v2492, %v2604
      %v2624 = vld [vmem:[#allocation3 + $0x11] sm:$0xff]
      %v2625 = vld [vmem:[#allocation3 + $0x19] sm:$0xff]
      %v2626 = vld [vmem:[#allocation3 + $0x21] sm:$0xff]
      %v2627 = vld [vmem:[#allocation3 + $0x29] sm:$0xff]
      %v2628 = vld [vmem:[#allocation3 + $0x31] sm:$0xff]
      %v2629 = vld [vmem:[#allocation3 + $0x39] sm:$0xff]
      %v2630 = vld [vmem:[#allocation3 + $0x41] sm:$0xff]
      %v2631 = vld [vmem:[#allocation3 + $0x49] sm:$0xff]
      %v2632 = vld [vmem:[#allocation3 + $0x51] sm:$0xff]
      %v2633 = vld [vmem:[#allocation3 + $0x59] sm:$0xff]
      %v2634 = vld [vmem:[#allocation3 + $0x61] sm:$0xff]
      %v2635 = vld [vmem:[#allocation3 + $0x69] sm:$0xff]
      %v2636 = vld [vmem:[#allocation3 + $0x71] sm:$0xff]
      %v2637 = vld [vmem:[#allocation3 + $0x79] sm:$0xff]
      %v2638 = vld [vmem:[#allocation3 + $0x81] sm:$0xff]
      %v2639 = vld [vmem:[#allocation3 + $0x89] sm:$0xff]
      %v2640 = vld [vmem:[#allocation3 + $0x91] sm:$0xff]
      %v2641 = vld [vmem:[#allocation3 + $0x99] sm:$0xf]
      %v2642 = vpack.c.bf16 %v2625, %v2624
      %v2643 = vpack.c.bf16 %v2627, %v2626
      %v2644 = vpack.c.bf16 %v2629, %v2628
      %v2645 = vpack.c.bf16 %v2631, %v2630
      %v2646 = vpack.c.bf16 %v2633, %v2632
      %v2647 = vpack.c.bf16 %v2635, %v2634
      %v2648 = vpack.c.bf16 %v2637, %v2636
      %v2649 = vpack.c.bf16 %v2639, %v2638
      %v2650 = vpack.c.bf16 %v2641, %v2640
      %s2651 = scalar_lea.vmem %s3, 32
      %v2652 = vld [vmem:[%s2651] sm:$0x7]
      %v2654 = vsel %vm405, %v2642, 0
      %v2657 = vsel %vm405, %v2643, 0
      %v2660 = vsel %vm405, %v2644, 0
      %v2663 = vsel %vm405, %v2645, 0
      %v2666 = vsel %vm405, %v2646, 0
      %v2669 = vsel %vm405, %v2647, 0
      %v2672 = vsel %vm405, %v2648, 0
      %v2675 = vsel %vm405, %v2649, 0
      %v2678 = vsel %vm405, %v2650, 0
      %v2681 = vsel %vm1696, %v2652, 0
      %2683 = vmatpush.bf16.msra.mxu0 0
      %2684 = vmatpush.bf16.msra.mxu0 0
      %2685 = vmatpush.bf16.msra.mxu0 0
      %2686 = vmatpush.bf16.msra.mxu0 0
      %2687 = vmatpush.bf16.msra.mxu0 0
      %2688 = vmatpush.bf16.msra.mxu0 0
      %2689 = vmatpush.bf16.msra.mxu0 0
      %2690 = vmatpush.bf16.msra.mxu0 %v2681
      %2691 = vmatmul.bf16.gmra.mxu0 %v2654
      %v2692 = vpop.f32.mrf.mxu0
      %v2693 = vadd.f32 0.0, %v2692
      %v2694 = vpop.f32.mrf.mxu0
      %v2695 = vadd.f32 0.0, %v2694
      %2696 = vmatmul.bf16.gmra.mxu0 %v2657
      %v2697 = vpop.f32.mrf.mxu0
      %v2698 = vadd.f32 0.0, %v2697
      %v2699 = vpop.f32.mrf.mxu0
      %v2700 = vadd.f32 0.0, %v2699
      %2701 = vmatmul.bf16.gmra.mxu0 %v2660
      %v2702 = vpop.f32.mrf.mxu0
      %v2703 = vadd.f32 0.0, %v2702
      %v2704 = vpop.f32.mrf.mxu0
      %v2705 = vadd.f32 0.0, %v2704
      %2706 = vmatmul.bf16.gmra.mxu0 %v2663
      %v2707 = vpop.f32.mrf.mxu0
      %v2708 = vadd.f32 0.0, %v2707
      %v2709 = vpop.f32.mrf.mxu0
      %v2710 = vadd.f32 0.0, %v2709
      %2711 = vmatmul.bf16.gmra.mxu0 %v2666
      %v2712 = vpop.f32.mrf.mxu0
      %v2713 = vadd.f32 0.0, %v2712
      %v2714 = vpop.f32.mrf.mxu0
      %v2715 = vadd.f32 0.0, %v2714
      %2716 = vmatmul.bf16.gmra.mxu0 %v2669
      %v2717 = vpop.f32.mrf.mxu0
      %v2718 = vadd.f32 0.0, %v2717
      %v2719 = vpop.f32.mrf.mxu0
      %v2720 = vadd.f32 0.0, %v2719
      %2721 = vmatmul.bf16.gmra.mxu0 %v2672
      %v2722 = vpop.f32.mrf.mxu0
      %v2723 = vadd.f32 0.0, %v2722
      %v2724 = vpop.f32.mrf.mxu0
      %v2725 = vadd.f32 0.0, %v2724
      %2726 = vmatmul.bf16.gmra.mxu0 %v2675
      %v2727 = vpop.f32.mrf.mxu0
      %v2728 = vadd.f32 0.0, %v2727
      %v2729 = vpop.f32.mrf.mxu0
      %v2730 = vadd.f32 0.0, %v2729
      %2731 = vmatmul.bf16.gmra.mxu0 %v2678
      %v2732 = vpop.f32.mrf.mxu0
      %v2733 = vadd.f32 0.0, %v2732
      %v2734 = vpop.f32.mrf.mxu0
      %v2735 = vadd.f32 0.0, %v2734
      %2736 = vdwg.mxu0
      %v2737 = vadd.f32 %v2606, %v2693
      %v2738 = vadd.f32 %v2607, %v2695
      %v2739 = vadd.f32 %v2608, %v2698
      %v2740 = vadd.f32 %v2609, %v2700
      %v2741 = vadd.f32 %v2610, %v2703
      %v2742 = vadd.f32 %v2611, %v2705
      %v2743 = vadd.f32 %v2612, %v2708
      %v2744 = vadd.f32 %v2613, %v2710
      %v2745 = vadd.f32 %v2614, %v2713
      %v2746 = vadd.f32 %v2615, %v2715
      %v2747 = vadd.f32 %v2616, %v2718
      %v2748 = vadd.f32 %v2617, %v2720
      %v2749 = vadd.f32 %v2618, %v2723
      %v2750 = vadd.f32 %v2619, %v2725
      %v2751 = vadd.f32 %v2620, %v2728
      %v2752 = vadd.f32 %v2621, %v2730
      %v2753 = vadd.f32 %v2622, %v2733
      %v2754 = vadd.f32 %v2623, %v2735
      %v2755 = vld [vmem:[#allocation3 + $0x12] sm:$0xff]
      %v2756 = vld [vmem:[#allocation3 + $0x1a] sm:$0xff]
      %v2757 = vld [vmem:[#allocation3 + $0x22] sm:$0xff]
      %v2758 = vld [vmem:[#allocation3 + $0x2a] sm:$0xff]
      %v2759 = vld [vmem:[#allocation3 + $0x32] sm:$0xff]
      %v2760 = vld [vmem:[#allocation3 + $0x3a] sm:$0xff]
      %v2761 = vld [vmem:[#allocation3 + $0x42] sm:$0xff]
      %v2762 = vld [vmem:[#allocation3 + $0x4a] sm:$0xff]
      %v2763 = vld [vmem:[#allocation3 + $0x52] sm:$0xff]
      %v2764 = vld [vmem:[#allocation3 + $0x5a] sm:$0xff]
      %v2765 = vld [vmem:[#allocation3 + $0x62] sm:$0xff]
      %v2766 = vld [vmem:[#allocation3 + $0x6a] sm:$0xff]
      %v2767 = vld [vmem:[#allocation3 + $0x72] sm:$0xff]
      %v2768 = vld [vmem:[#allocation3 + $0x7a] sm:$0xff]
      %v2769 = vld [vmem:[#allocation3 + $0x82] sm:$0xff]
      %v2770 = vld [vmem:[#allocation3 + $0x8a] sm:$0xff]
      %v2771 = vld [vmem:[#allocation3 + $0x92] sm:$0xff]
      %v2772 = vld [vmem:[#allocation3 + $0x9a] sm:$0xf]
      %v2773 = vpack.c.bf16 %v2756, %v2755
      %v2774 = vpack.c.bf16 %v2758, %v2757
      %v2775 = vpack.c.bf16 %v2760, %v2759
      %v2776 = vpack.c.bf16 %v2762, %v2761
      %v2777 = vpack.c.bf16 %v2764, %v2763
      %v2778 = vpack.c.bf16 %v2766, %v2765
      %v2779 = vpack.c.bf16 %v2768, %v2767
      %v2780 = vpack.c.bf16 %v2770, %v2769
      %v2781 = vpack.c.bf16 %v2772, %v2771
      %s2782 = scalar_lea.vmem %s3, 36
      %v2783 = vld [vmem:[%s2782] sm:$0x7]
      %v2785 = vsel %vm405, %v2773, 0
      %v2788 = vsel %vm405, %v2774, 0
      %v2791 = vsel %vm405, %v2775, 0
      %v2794 = vsel %vm405, %v2776, 0
      %v2797 = vsel %vm405, %v2777, 0
      %v2800 = vsel %vm405, %v2778, 0
      %v2803 = vsel %vm405, %v2779, 0
      %v2806 = vsel %vm405, %v2780, 0
      %v2809 = vsel %vm405, %v2781, 0
      %v2812 = vsel %vm1696, %v2783, 0
      %2814 = vmatpush.bf16.msra.mxu0 0
      %2815 = vmatpush.bf16.msra.mxu0 0
      %2816 = vmatpush.bf16.msra.mxu0 0
      %2817 = vmatpush.bf16.msra.mxu0 0
      %2818 = vmatpush.bf16.msra.mxu0 0
      %2819 = vmatpush.bf16.msra.mxu0 0
      %2820 = vmatpush.bf16.msra.mxu0 0
      %2821 = vmatpush.bf16.msra.mxu0 %v2812
      %2822 = vmatmul.bf16.gmra.mxu0 %v2785
      %v2823 = vpop.f32.mrf.mxu0
      %v2824 = vadd.f32 0.0, %v2823
      %v2825 = vpop.f32.mrf.mxu0
      %v2826 = vadd.f32 0.0, %v2825
      %2827 = vmatmul.bf16.gmra.mxu0 %v2788
      %v2828 = vpop.f32.mrf.mxu0
      %v2829 = vadd.f32 0.0, %v2828
      %v2830 = vpop.f32.mrf.mxu0
      %v2831 = vadd.f32 0.0, %v2830
      %2832 = vmatmul.bf16.gmra.mxu0 %v2791
      %v2833 = vpop.f32.mrf.mxu0
      %v2834 = vadd.f32 0.0, %v2833
      %v2835 = vpop.f32.mrf.mxu0
      %v2836 = vadd.f32 0.0, %v2835
      %2837 = vmatmul.bf16.gmra.mxu0 %v2794
      %v2838 = vpop.f32.mrf.mxu0
      %v2839 = vadd.f32 0.0, %v2838
      %v2840 = vpop.f32.mrf.mxu0
      %v2841 = vadd.f32 0.0, %v2840
      %2842 = vmatmul.bf16.gmra.mxu0 %v2797
      %v2843 = vpop.f32.mrf.mxu0
      %v2844 = vadd.f32 0.0, %v2843
      %v2845 = vpop.f32.mrf.mxu0
      %v2846 = vadd.f32 0.0, %v2845
      %2847 = vmatmul.bf16.gmra.mxu0 %v2800
      %v2848 = vpop.f32.mrf.mxu0
      %v2849 = vadd.f32 0.0, %v2848
      %v2850 = vpop.f32.mrf.mxu0
      %v2851 = vadd.f32 0.0, %v2850
      %2852 = vmatmul.bf16.gmra.mxu0 %v2803
      %v2853 = vpop.f32.mrf.mxu0
      %v2854 = vadd.f32 0.0, %v2853
      %v2855 = vpop.f32.mrf.mxu0
      %v2856 = vadd.f32 0.0, %v2855
      %2857 = vmatmul.bf16.gmra.mxu0 %v2806
      %v2858 = vpop.f32.mrf.mxu0
      %v2859 = vadd.f32 0.0, %v2858
      %v2860 = vpop.f32.mrf.mxu0
      %v2861 = vadd.f32 0.0, %v2860
      %2862 = vmatmul.bf16.gmra.mxu0 %v2809
      %v2863 = vpop.f32.mrf.mxu0
      %v2864 = vadd.f32 0.0, %v2863
      %v2865 = vpop.f32.mrf.mxu0
      %v2866 = vadd.f32 0.0, %v2865
      %2867 = vdwg.mxu0
      %v2868 = vadd.f32 %v2737, %v2824
      %v2869 = vadd.f32 %v2738, %v2826
      %v2870 = vadd.f32 %v2739, %v2829
      %v2871 = vadd.f32 %v2740, %v2831
      %v2872 = vadd.f32 %v2741, %v2834
      %v2873 = vadd.f32 %v2742, %v2836
      %v2874 = vadd.f32 %v2743, %v2839
      %v2875 = vadd.f32 %v2744, %v2841
      %v2876 = vadd.f32 %v2745, %v2844
      %v2877 = vadd.f32 %v2746, %v2846
      %v2878 = vadd.f32 %v2747, %v2849
      %v2879 = vadd.f32 %v2748, %v2851
      %v2880 = vadd.f32 %v2749, %v2854
      %v2881 = vadd.f32 %v2750, %v2856
      %v2882 = vadd.f32 %v2751, %v2859
      %v2883 = vadd.f32 %v2752, %v2861
      %v2884 = vadd.f32 %v2753, %v2864
      %v2885 = vadd.f32 %v2754, %v2866
      %v2886 = vld [vmem:[#allocation3 + $0x1c] sm:$0xff]
      %v2887 = vld [vmem:[#allocation3 + $0x24] sm:$0xff]
      %v2888 = vld [vmem:[#allocation3 + $0x2c] sm:$0xff]
      %v2889 = vld [vmem:[#allocation3 + $0x34] sm:$0xff]
      %v2890 = vld [vmem:[#allocation3 + $0x3c] sm:$0xff]
      %v2891 = vld [vmem:[#allocation3 + $0x44] sm:$0xff]
      %v2892 = vld [vmem:[#allocation3 + $0x4c] sm:$0xff]
      %v2893 = vld [vmem:[#allocation3 + $0x54] sm:$0xff]
      %v2894 = vld [vmem:[#allocation3 + $0x5c] sm:$0xff]
      %v2895 = vld [vmem:[#allocation3 + $0x64] sm:$0xff]
      %v2896 = vld [vmem:[#allocation3 + $0x6c] sm:$0xff]
      %v2897 = vld [vmem:[#allocation3 + $0x74] sm:$0xff]
      %v2898 = vld [vmem:[#allocation3 + $0x7c] sm:$0xff]
      %v2899 = vld [vmem:[#allocation3 + $0x84] sm:$0xff]
      %v2900 = vld [vmem:[#allocation3 + $0x8c] sm:$0xff]
      %v2901 = vld [vmem:[#allocation3 + $0x94] sm:$0xff]
      %v2902 = vld [vmem:[#allocation3 + $0x9c] sm:$0xff]
      %v2903 = vld [vmem:[#allocation3 + $0xa4] sm:$0xf]
      %v2904 = vpack.c.bf16 %v2887, %v2886
      %v2905 = vpack.c.bf16 %v2889, %v2888
      %v2906 = vpack.c.bf16 %v2891, %v2890
      %v2907 = vpack.c.bf16 %v2893, %v2892
      %v2908 = vpack.c.bf16 %v2895, %v2894
      %v2909 = vpack.c.bf16 %v2897, %v2896
      %v2910 = vpack.c.bf16 %v2899, %v2898
      %v2911 = vpack.c.bf16 %v2901, %v2900
      %v2912 = vpack.c.bf16 %v2903, %v2902
      %s2913 = scalar_lea.vmem %s3, 40
      %v2914 = vld [vmem:[%s2913] sm:$0x7]
      %v2916 = vsel %vm405, %v2904, 0
      %v2919 = vsel %vm405, %v2905, 0
      %v2922 = vsel %vm405, %v2906, 0
      %v2925 = vsel %vm405, %v2907, 0
      %v2928 = vsel %vm405, %v2908, 0
      %v2931 = vsel %vm405, %v2909, 0
      %v2934 = vsel %vm405, %v2910, 0
      %v2937 = vsel %vm405, %v2911, 0
      %v2940 = vsel %vm405, %v2912, 0
      %v2943 = vsel %vm1696, %v2914, 0
      %2945 = vmatpush.bf16.msra.mxu0 0
      %2946 = vmatpush.bf16.msra.mxu0 0
      %2947 = vmatpush.bf16.msra.mxu0 0
      %2948 = vmatpush.bf16.msra.mxu0 0
      %2949 = vmatpush.bf16.msra.mxu0 0
      %2950 = vmatpush.bf16.msra.mxu0 0
      %2951 = vmatpush.bf16.msra.mxu0 0
      %2952 = vmatpush.bf16.msra.mxu0 %v2943
      %2953 = vmatmul.bf16.gmra.mxu0 %v2916
      %v2954 = vpop.f32.mrf.mxu0
      %v2955 = vadd.f32 0.0, %v2954
      %v2956 = vpop.f32.mrf.mxu0
      %v2957 = vadd.f32 0.0, %v2956
      %2958 = vmatmul.bf16.gmra.mxu0 %v2919
      %v2959 = vpop.f32.mrf.mxu0
      %v2960 = vadd.f32 0.0, %v2959
      %v2961 = vpop.f32.mrf.mxu0
      %v2962 = vadd.f32 0.0, %v2961
      %2963 = vmatmul.bf16.gmra.mxu0 %v2922
      %v2964 = vpop.f32.mrf.mxu0
      %v2965 = vadd.f32 0.0, %v2964
      %v2966 = vpop.f32.mrf.mxu0
      %v2967 = vadd.f32 0.0, %v2966
      %2968 = vmatmul.bf16.gmra.mxu0 %v2925
      %v2969 = vpop.f32.mrf.mxu0
      %v2970 = vadd.f32 0.0, %v2969
      %v2971 = vpop.f32.mrf.mxu0
      %v2972 = vadd.f32 0.0, %v2971
      %2973 = vmatmul.bf16.gmra.mxu0 %v2928
      %v2974 = vpop.f32.mrf.mxu0
      %v2975 = vadd.f32 0.0, %v2974
      %v2976 = vpop.f32.mrf.mxu0
      %v2977 = vadd.f32 0.0, %v2976
      %2978 = vmatmul.bf16.gmra.mxu0 %v2931
      %v2979 = vpop.f32.mrf.mxu0
      %v2980 = vadd.f32 0.0, %v2979
      %v2981 = vpop.f32.mrf.mxu0
      %v2982 = vadd.f32 0.0, %v2981
      %2983 = vmatmul.bf16.gmra.mxu0 %v2934
      %v2984 = vpop.f32.mrf.mxu0
      %v2985 = vadd.f32 0.0, %v2984
      %v2986 = vpop.f32.mrf.mxu0
      %v2987 = vadd.f32 0.0, %v2986
      %2988 = vmatmul.bf16.gmra.mxu0 %v2937
      %v2989 = vpop.f32.mrf.mxu0
      %v2990 = vadd.f32 0.0, %v2989
      %v2991 = vpop.f32.mrf.mxu0
      %v2992 = vadd.f32 0.0, %v2991
      %2993 = vmatmul.bf16.gmra.mxu0 %v2940
      %v2994 = vpop.f32.mrf.mxu0
      %v2995 = vadd.f32 0.0, %v2994
      %v2996 = vpop.f32.mrf.mxu0
      %v2997 = vadd.f32 0.0, %v2996
      %2998 = vdwg.mxu0
      %v2999 = vadd.f32 %v2868, %v2955
      %v3000 = vadd.f32 %v2869, %v2957
      %v3001 = vadd.f32 %v2870, %v2960
      %v3002 = vadd.f32 %v2871, %v2962
      %v3003 = vadd.f32 %v2872, %v2965
      %v3004 = vadd.f32 %v2873, %v2967
      %v3005 = vadd.f32 %v2874, %v2970
      %v3006 = vadd.f32 %v2875, %v2972
      %v3007 = vadd.f32 %v2876, %v2975
      %v3008 = vadd.f32 %v2877, %v2977
      %v3009 = vadd.f32 %v2878, %v2980
      %v3010 = vadd.f32 %v2879, %v2982
      %v3011 = vadd.f32 %v2880, %v2985
      %v3012 = vadd.f32 %v2881, %v2987
      %v3013 = vadd.f32 %v2882, %v2990
      %v3014 = vadd.f32 %v2883, %v2992
      %v3015 = vadd.f32 %v2884, %v2995
      %v3016 = vadd.f32 %v2885, %v2997
      %v3017 = vld [vmem:[#allocation3 + $0x1d] sm:$0xff]
      %v3018 = vld [vmem:[#allocation3 + $0x25] sm:$0xff]
      %v3019 = vld [vmem:[#allocation3 + $0x2d] sm:$0xff]
      %v3020 = vld [vmem:[#allocation3 + $0x35] sm:$0xff]
      %v3021 = vld [vmem:[#allocation3 + $0x3d] sm:$0xff]
      %v3022 = vld [vmem:[#allocation3 + $0x45] sm:$0xff]
      %v3023 = vld [vmem:[#allocation3 + $0x4d] sm:$0xff]
      %v3024 = vld [vmem:[#allocation3 + $0x55] sm:$0xff]
      %v3025 = vld [vmem:[#allocation3 + $0x5d] sm:$0xff]
      %v3026 = vld [vmem:[#allocation3 + $0x65] sm:$0xff]
      %v3027 = vld [vmem:[#allocation3 + $0x6d] sm:$0xff]
      %v3028 = vld [vmem:[#allocation3 + $0x75] sm:$0xff]
      %v3029 = vld [vmem:[#allocation3 + $0x7d] sm:$0xff]
      %v3030 = vld [vmem:[#allocation3 + $0x85] sm:$0xff]
      %v3031 = vld [vmem:[#allocation3 + $0x8d] sm:$0xff]
      %v3032 = vld [vmem:[#allocation3 + $0x95] sm:$0xff]
      %v3033 = vld [vmem:[#allocation3 + $0x9d] sm:$0xff]
      %v3034 = vld [vmem:[#allocation3 + $0xa5] sm:$0xf]
      %v3035 = vpack.c.bf16 %v3018, %v3017
      %v3036 = vpack.c.bf16 %v3020, %v3019
      %v3037 = vpack.c.bf16 %v3022, %v3021
      %v3038 = vpack.c.bf16 %v3024, %v3023
      %v3039 = vpack.c.bf16 %v3026, %v3025
      %v3040 = vpack.c.bf16 %v3028, %v3027
      %v3041 = vpack.c.bf16 %v3030, %v3029
      %v3042 = vpack.c.bf16 %v3032, %v3031
      %v3043 = vpack.c.bf16 %v3034, %v3033
      %s3044 = scalar_lea.vmem %s3, 44
      %v3045 = vld [vmem:[%s3044] sm:$0x7]
      %v3047 = vsel %vm405, %v3035, 0
      %v3050 = vsel %vm405, %v3036, 0
      %v3053 = vsel %vm405, %v3037, 0
      %v3056 = vsel %vm405, %v3038, 0
      %v3059 = vsel %vm405, %v3039, 0
      %v3062 = vsel %vm405, %v3040, 0
      %v3065 = vsel %vm405, %v3041, 0
      %v3068 = vsel %vm405, %v3042, 0
      %v3071 = vsel %vm405, %v3043, 0
      %v3074 = vsel %vm1696, %v3045, 0
      %3076 = vmatpush.bf16.msra.mxu0 0
      %3077 = vmatpush.bf16.msra.mxu0 0
      %3078 = vmatpush.bf16.msra.mxu0 0
      %3079 = vmatpush.bf16.msra.mxu0 0
      %3080 = vmatpush.bf16.msra.mxu0 0
      %3081 = vmatpush.bf16.msra.mxu0 0
      %3082 = vmatpush.bf16.msra.mxu0 0
      %3083 = vmatpush.bf16.msra.mxu0 %v3074
      %3084 = vmatmul.bf16.gmra.mxu0 %v3047
      %v3085 = vpop.f32.mrf.mxu0
      %v3086 = vadd.f32 0.0, %v3085
      %v3087 = vpop.f32.mrf.mxu0
      %v3088 = vadd.f32 0.0, %v3087
      %3089 = vmatmul.bf16.gmra.mxu0 %v3050
      %v3090 = vpop.f32.mrf.mxu0
      %v3091 = vadd.f32 0.0, %v3090
      %v3092 = vpop.f32.mrf.mxu0
      %v3093 = vadd.f32 0.0, %v3092
      %3094 = vmatmul.bf16.gmra.mxu0 %v3053
      %v3095 = vpop.f32.mrf.mxu0
      %v3096 = vadd.f32 0.0, %v3095
      %v3097 = vpop.f32.mrf.mxu0
      %v3098 = vadd.f32 0.0, %v3097
      %3099 = vmatmul.bf16.gmra.mxu0 %v3056
      %v3100 = vpop.f32.mrf.mxu0
      %v3101 = vadd.f32 0.0, %v3100
      %v3102 = vpop.f32.mrf.mxu0
      %v3103 = vadd.f32 0.0, %v3102
      %3104 = vmatmul.bf16.gmra.mxu0 %v3059
      %v3105 = vpop.f32.mrf.mxu0
      %v3106 = vadd.f32 0.0, %v3105
      %v3107 = vpop.f32.mrf.mxu0
      %v3108 = vadd.f32 0.0, %v3107
      %3109 = vmatmul.bf16.gmra.mxu0 %v3062
      %v3110 = vpop.f32.mrf.mxu0
      %v3111 = vadd.f32 0.0, %v3110
      %v3112 = vpop.f32.mrf.mxu0
      %v3113 = vadd.f32 0.0, %v3112
      %3114 = vmatmul.bf16.gmra.mxu0 %v3065
      %v3115 = vpop.f32.mrf.mxu0
      %v3116 = vadd.f32 0.0, %v3115
      %v3117 = vpop.f32.mrf.mxu0
      %v3118 = vadd.f32 0.0, %v3117
      %3119 = vmatmul.bf16.gmra.mxu0 %v3068
      %v3120 = vpop.f32.mrf.mxu0
      %v3121 = vadd.f32 0.0, %v3120
      %v3122 = vpop.f32.mrf.mxu0
      %v3123 = vadd.f32 0.0, %v3122
      %3124 = vmatmul.bf16.gmra.mxu0 %v3071
      %v3125 = vpop.f32.mrf.mxu0
      %v3126 = vadd.f32 0.0, %v3125
      %v3127 = vpop.f32.mrf.mxu0
      %v3128 = vadd.f32 0.0, %v3127
      %3129 = vdwg.mxu0
      %v3130 = vadd.f32 %v2999, %v3086
      %v3131 = vadd.f32 %v3000, %v3088
      %v3132 = vadd.f32 %v3001, %v3091
      %v3133 = vadd.f32 %v3002, %v3093
      %v3134 = vadd.f32 %v3003, %v3096
      %v3135 = vadd.f32 %v3004, %v3098
      %v3136 = vadd.f32 %v3005, %v3101
      %v3137 = vadd.f32 %v3006, %v3103
      %v3138 = vadd.f32 %v3007, %v3106
      %v3139 = vadd.f32 %v3008, %v3108
      %v3140 = vadd.f32 %v3009, %v3111
      %v3141 = vadd.f32 %v3010, %v3113
      %v3142 = vadd.f32 %v3011, %v3116
      %v3143 = vadd.f32 %v3012, %v3118
      %v3144 = vadd.f32 %v3013, %v3121
      %v3145 = vadd.f32 %v3014, %v3123
      %v3146 = vadd.f32 %v3015, %v3126
      %v3147 = vadd.f32 %v3016, %v3128
      %v3148 = vld [vmem:[#allocation3 + $0x1e] sm:$0xff]
      %v3149 = vld [vmem:[#allocation3 + $0x26] sm:$0xff]
      %v3150 = vld [vmem:[#allocation3 + $0x2e] sm:$0xff]
      %v3151 = vld [vmem:[#allocation3 + $0x36] sm:$0xff]
      %v3152 = vld [vmem:[#allocation3 + $0x3e] sm:$0xff]
      %v3153 = vld [vmem:[#allocation3 + $0x46] sm:$0xff]
      %v3154 = vld [vmem:[#allocation3 + $0x4e] sm:$0xff]
      %v3155 = vld [vmem:[#allocation3 + $0x56] sm:$0xff]
      %v3156 = vld [vmem:[#allocation3 + $0x5e] sm:$0xff]
      %v3157 = vld [vmem:[#allocation3 + $0x66] sm:$0xff]
      %v3158 = vld [vmem:[#allocation3 + $0x6e] sm:$0xff]
      %v3159 = vld [vmem:[#allocation3 + $0x76] sm:$0xff]
      %v3160 = vld [vmem:[#allocation3 + $0x7e] sm:$0xff]
      %v3161 = vld [vmem:[#allocation3 + $0x86] sm:$0xff]
      %v3162 = vld [vmem:[#allocation3 + $0x8e] sm:$0xff]
      %v3163 = vld [vmem:[#allocation3 + $0x96] sm:$0xff]
      %v3164 = vld [vmem:[#allocation3 + $0x9e] sm:$0xff]
      %v3165 = vld [vmem:[#allocation3 + $0xa6] sm:$0xf]
      %v3166 = vpack.c.bf16 %v3149, %v3148
      %v3167 = vpack.c.bf16 %v3151, %v3150
      %v3168 = vpack.c.bf16 %v3153, %v3152
      %v3169 = vpack.c.bf16 %v3155, %v3154
      %v3170 = vpack.c.bf16 %v3157, %v3156
      %v3171 = vpack.c.bf16 %v3159, %v3158
      %v3172 = vpack.c.bf16 %v3161, %v3160
      %v3173 = vpack.c.bf16 %v3163, %v3162
      %v3174 = vpack.c.bf16 %v3165, %v3164
      %s3175 = scalar_lea.vmem %s3, 48
      %v3176 = vld [vmem:[%s3175] sm:$0x7]
      %v3178 = vsel %vm405, %v3166, 0
      %v3181 = vsel %vm405, %v3167, 0
      %v3184 = vsel %vm405, %v3168, 0
      %v3187 = vsel %vm405, %v3169, 0
      %v3190 = vsel %vm405, %v3170, 0
      %v3193 = vsel %vm405, %v3171, 0
      %v3196 = vsel %vm405, %v3172, 0
      %v3199 = vsel %vm405, %v3173, 0
      %v3202 = vsel %vm405, %v3174, 0
      %v3205 = vsel %vm1696, %v3176, 0
      %3207 = vmatpush.bf16.msra.mxu0 0
      %3208 = vmatpush.bf16.msra.mxu0 0
      %3209 = vmatpush.bf16.msra.mxu0 0
      %3210 = vmatpush.bf16.msra.mxu0 0
      %3211 = vmatpush.bf16.msra.mxu0 0
      %3212 = vmatpush.bf16.msra.mxu0 0
      %3213 = vmatpush.bf16.msra.mxu0 0
      %3214 = vmatpush.bf16.msra.mxu0 %v3205
      %3215 = vmatmul.bf16.gmra.mxu0 %v3178
      %v3216 = vpop.f32.mrf.mxu0
      %v3217 = vadd.f32 0.0, %v3216
      %v3218 = vpop.f32.mrf.mxu0
      %v3219 = vadd.f32 0.0, %v3218
      %3220 = vmatmul.bf16.gmra.mxu0 %v3181
      %v3221 = vpop.f32.mrf.mxu0
      %v3222 = vadd.f32 0.0, %v3221
      %v3223 = vpop.f32.mrf.mxu0
      %v3224 = vadd.f32 0.0, %v3223
      %3225 = vmatmul.bf16.gmra.mxu0 %v3184
      %v3226 = vpop.f32.mrf.mxu0
      %v3227 = vadd.f32 0.0, %v3226
      %v3228 = vpop.f32.mrf.mxu0
      %v3229 = vadd.f32 0.0, %v3228
      %3230 = vmatmul.bf16.gmra.mxu0 %v3187
      %v3231 = vpop.f32.mrf.mxu0
      %v3232 = vadd.f32 0.0, %v3231
      %v3233 = vpop.f32.mrf.mxu0
      %v3234 = vadd.f32 0.0, %v3233
      %3235 = vmatmul.bf16.gmra.mxu0 %v3190
      %v3236 = vpop.f32.mrf.mxu0
      %v3237 = vadd.f32 0.0, %v3236
      %v3238 = vpop.f32.mrf.mxu0
      %v3239 = vadd.f32 0.0, %v3238
      %3240 = vmatmul.bf16.gmra.mxu0 %v3193
      %v3241 = vpop.f32.mrf.mxu0
      %v3242 = vadd.f32 0.0, %v3241
      %v3243 = vpop.f32.mrf.mxu0
      %v3244 = vadd.f32 0.0, %v3243
      %3245 = vmatmul.bf16.gmra.mxu0 %v3196
      %v3246 = vpop.f32.mrf.mxu0
      %v3247 = vadd.f32 0.0, %v3246
      %v3248 = vpop.f32.mrf.mxu0
      %v3249 = vadd.f32 0.0, %v3248
      %3250 = vmatmul.bf16.gmra.mxu0 %v3199
      %v3251 = vpop.f32.mrf.mxu0
      %v3252 = vadd.f32 0.0, %v3251
      %v3253 = vpop.f32.mrf.mxu0
      %v3254 = vadd.f32 0.0, %v3253
      %3255 = vmatmul.bf16.gmra.mxu0 %v3202
      %v3256 = vpop.f32.mrf.mxu0
      %v3257 = vadd.f32 0.0, %v3256
      %v3258 = vpop.f32.mrf.mxu0
      %v3259 = vadd.f32 0.0, %v3258
      %3260 = vdwg.mxu0
      %v3261 = vadd.f32 %v3130, %v3217
      %v3262 = vadd.f32 %v3131, %v3219
      %v3263 = vadd.f32 %v3132, %v3222
      %v3264 = vadd.f32 %v3133, %v3224
      %v3265 = vadd.f32 %v3134, %v3227
      %v3266 = vadd.f32 %v3135, %v3229
      %v3267 = vadd.f32 %v3136, %v3232
      %v3268 = vadd.f32 %v3137, %v3234
      %v3269 = vadd.f32 %v3138, %v3237
      %v3270 = vadd.f32 %v3139, %v3239
      %v3271 = vadd.f32 %v3140, %v3242
      %v3272 = vadd.f32 %v3141, %v3244
      %v3273 = vadd.f32 %v3142, %v3247
      %v3274 = vadd.f32 %v3143, %v3249
      %v3275 = vadd.f32 %v3144, %v3252
      %v3276 = vadd.f32 %v3145, %v3254
      %v3277 = vadd.f32 %v3146, %v3257
      %v3278 = vadd.f32 %v3147, %v3259
      %v3279 = vld [vmem:[#allocation3 + $0x1f] sm:$0xff]
      %v3280 = vld [vmem:[#allocation3 + $0x27] sm:$0xff]
      %v3281 = vld [vmem:[#allocation3 + $0x2f] sm:$0xff]
      %v3282 = vld [vmem:[#allocation3 + $0x37] sm:$0xff]
      %v3283 = vld [vmem:[#allocation3 + $0x3f] sm:$0xff]
      %v3284 = vld [vmem:[#allocation3 + $0x47] sm:$0xff]
      %v3285 = vld [vmem:[#allocation3 + $0x4f] sm:$0xff]
      %v3286 = vld [vmem:[#allocation3 + $0x57] sm:$0xff]
      %v3287 = vld [vmem:[#allocation3 + $0x5f] sm:$0xff]
      %v3288 = vld [vmem:[#allocation3 + $0x67] sm:$0xff]
      %v3289 = vld [vmem:[#allocation3 + $0x6f] sm:$0xff]
      %v3290 = vld [vmem:[#allocation3 + $0x77] sm:$0xff]
      %v3291 = vld [vmem:[#allocation3 + $0x7f] sm:$0xff]
      %v3292 = vld [vmem:[#allocation3 + $0x87] sm:$0xff]
      %v3293 = vld [vmem:[#allocation3 + $0x8f] sm:$0xff]
      %v3294 = vld [vmem:[#allocation3 + $0x97] sm:$0xff]
      %v3295 = vld [vmem:[#allocation3 + $0x9f] sm:$0xff]
      %v3296 = vld [vmem:[#allocation3 + $0xa7] sm:$0xf]
      %v3297 = vpack.c.bf16 %v3280, %v3279
      %v3298 = vpack.c.bf16 %v3282, %v3281
      %v3299 = vpack.c.bf16 %v3284, %v3283
      %v3300 = vpack.c.bf16 %v3286, %v3285
      %v3301 = vpack.c.bf16 %v3288, %v3287
      %v3302 = vpack.c.bf16 %v3290, %v3289
      %v3303 = vpack.c.bf16 %v3292, %v3291
      %v3304 = vpack.c.bf16 %v3294, %v3293
      %v3305 = vpack.c.bf16 %v3296, %v3295
      %s3306 = scalar_lea.vmem %s3, 52
      %v3307 = vld [vmem:[%s3306] sm:$0x7]
      %v3309 = vsel %vm405, %v3297, 0
      %v3312 = vsel %vm405, %v3298, 0
      %v3315 = vsel %vm405, %v3299, 0
      %v3318 = vsel %vm405, %v3300, 0
      %v3321 = vsel %vm405, %v3301, 0
      %v3324 = vsel %vm405, %v3302, 0
      %v3327 = vsel %vm405, %v3303, 0
      %v3330 = vsel %vm405, %v3304, 0
      %v3333 = vsel %vm405, %v3305, 0
      %v3336 = vsel %vm1696, %v3307, 0
      %3338 = vmatpush.bf16.msra.mxu0 0
      %3339 = vmatpush.bf16.msra.mxu0 0
      %3340 = vmatpush.bf16.msra.mxu0 0
      %3341 = vmatpush.bf16.msra.mxu0 0
      %3342 = vmatpush.bf16.msra.mxu0 0
      %3343 = vmatpush.bf16.msra.mxu0 0
      %3344 = vmatpush.bf16.msra.mxu0 0
      %3345 = vmatpush.bf16.msra.mxu0 %v3336
      %3346 = vmatmul.bf16.gmra.mxu0 %v3309
      %v3347 = vpop.f32.mrf.mxu0
      %v3348 = vadd.f32 0.0, %v3347
      %v3349 = vpop.f32.mrf.mxu0
      %v3350 = vadd.f32 0.0, %v3349
      %3351 = vmatmul.bf16.gmra.mxu0 %v3312
      %v3352 = vpop.f32.mrf.mxu0
      %v3353 = vadd.f32 0.0, %v3352
      %v3354 = vpop.f32.mrf.mxu0
      %v3355 = vadd.f32 0.0, %v3354
      %3356 = vmatmul.bf16.gmra.mxu0 %v3315
      %v3357 = vpop.f32.mrf.mxu0
      %v3358 = vadd.f32 0.0, %v3357
      %v3359 = vpop.f32.mrf.mxu0
      %v3360 = vadd.f32 0.0, %v3359
      %3361 = vmatmul.bf16.gmra.mxu0 %v3318
      %v3362 = vpop.f32.mrf.mxu0
      %v3363 = vadd.f32 0.0, %v3362
      %v3364 = vpop.f32.mrf.mxu0
      %v3365 = vadd.f32 0.0, %v3364
      %3366 = vmatmul.bf16.gmra.mxu0 %v3321
      %v3367 = vpop.f32.mrf.mxu0
      %v3368 = vadd.f32 0.0, %v3367
      %v3369 = vpop.f32.mrf.mxu0
      %v3370 = vadd.f32 0.0, %v3369
      %3371 = vmatmul.bf16.gmra.mxu0 %v3324
      %v3372 = vpop.f32.mrf.mxu0
      %v3373 = vadd.f32 0.0, %v3372
      %v3374 = vpop.f32.mrf.mxu0
      %v3375 = vadd.f32 0.0, %v3374
      %3376 = vmatmul.bf16.gmra.mxu0 %v3327
      %v3377 = vpop.f32.mrf.mxu0
      %v3378 = vadd.f32 0.0, %v3377
      %v3379 = vpop.f32.mrf.mxu0
      %v3380 = vadd.f32 0.0, %v3379
      %3381 = vmatmul.bf16.gmra.mxu0 %v3330
      %v3382 = vpop.f32.mrf.mxu0
      %v3383 = vadd.f32 0.0, %v3382
      %v3384 = vpop.f32.mrf.mxu0
      %v3385 = vadd.f32 0.0, %v3384
      %3386 = vmatmul.bf16.gmra.mxu0 %v3333
      %v3387 = vpop.f32.mrf.mxu0
      %v3388 = vadd.f32 0.0, %v3387
      %v3389 = vpop.f32.mrf.mxu0
      %v3390 = vadd.f32 0.0, %v3389
      %3391 = vdwg.mxu0
      %v3392 = vadd.f32 %v3261, %v3348
      %v3393 = vadd.f32 %v3262, %v3350
      %v3394 = vadd.f32 %v3263, %v3353
      %v3395 = vadd.f32 %v3264, %v3355
      %v3396 = vadd.f32 %v3265, %v3358
      %v3397 = vadd.f32 %v3266, %v3360
      %v3398 = vadd.f32 %v3267, %v3363
      %v3399 = vadd.f32 %v3268, %v3365
      %v3400 = vadd.f32 %v3269, %v3368
      %v3401 = vadd.f32 %v3270, %v3370
      %v3402 = vadd.f32 %v3271, %v3373
      %v3403 = vadd.f32 %v3272, %v3375
      %v3404 = vadd.f32 %v3273, %v3378
      %v3405 = vadd.f32 %v3274, %v3380
      %v3406 = vadd.f32 %v3275, %v3383
      %v3407 = vadd.f32 %v3276, %v3385
      %v3408 = vadd.f32 %v3277, %v3388
      %v3409 = vadd.f32 %v3278, %v3390
      %v3410 = vld [vmem:[#allocation3 + $0x20] sm:$0xff]
      %v3411 = vld [vmem:[#allocation3 + $0x28] sm:$0xff]
      %v3412 = vld [vmem:[#allocation3 + $0x30] sm:$0xff]
      %v3413 = vld [vmem:[#allocation3 + $0x38] sm:$0xff]
      %v3414 = vld [vmem:[#allocation3 + $0x40] sm:$0xff]
      %v3415 = vld [vmem:[#allocation3 + $0x48] sm:$0xff]
      %v3416 = vld [vmem:[#allocation3 + $0x50] sm:$0xff]
      %v3417 = vld [vmem:[#allocation3 + $0x58] sm:$0xff]
      %v3418 = vld [vmem:[#allocation3 + $0x60] sm:$0xff]
      %v3419 = vld [vmem:[#allocation3 + $0x68] sm:$0xff]
      %v3420 = vld [vmem:[#allocation3 + $0x70] sm:$0xff]
      %v3421 = vld [vmem:[#allocation3 + $0x78] sm:$0xff]
      %v3422 = vld [vmem:[#allocation3 + $0x80] sm:$0xff]
      %v3423 = vld [vmem:[#allocation3 + $0x88] sm:$0xff]
      %v3424 = vld [vmem:[#allocation3 + $0x90] sm:$0xff]
      %v3425 = vld [vmem:[#allocation3 + $0x98] sm:$0xff]
      %v3426 = vld [vmem:[#allocation3 + $0xa0] sm:$0xff]
      %v3427 = vld [vmem:[#allocation3 + $0xa8] sm:$0xf]
      %v3428 = vpack.c.bf16 %v3411, %v3410
      %v3429 = vpack.c.bf16 %v3413, %v3412
      %v3430 = vpack.c.bf16 %v3415, %v3414
      %v3431 = vpack.c.bf16 %v3417, %v3416
      %v3432 = vpack.c.bf16 %v3419, %v3418
      %v3433 = vpack.c.bf16 %v3421, %v3420
      %v3434 = vpack.c.bf16 %v3423, %v3422
      %v3435 = vpack.c.bf16 %v3425, %v3424
      %v3436 = vpack.c.bf16 %v3427, %v3426
      %s3437 = scalar_lea.vmem %s3, 56
      %v3438 = vld [vmem:[%s3437] sm:$0x7]
      %v3440 = vsel %vm405, %v3428, 0
      %v3443 = vsel %vm405, %v3429, 0
      %v3446 = vsel %vm405, %v3430, 0
      %v3449 = vsel %vm405, %v3431, 0
      %v3452 = vsel %vm405, %v3432, 0
      %v3455 = vsel %vm405, %v3433, 0
      %v3458 = vsel %vm405, %v3434, 0
      %v3461 = vsel %vm405, %v3435, 0
      %v3464 = vsel %vm405, %v3436, 0
      %v3467 = vsel %vm1696, %v3438, 0
      %3469 = vmatpush.bf16.msra.mxu0 0
      %3470 = vmatpush.bf16.msra.mxu0 0
      %3471 = vmatpush.bf16.msra.mxu0 0
      %3472 = vmatpush.bf16.msra.mxu0 0
      %3473 = vmatpush.bf16.msra.mxu0 0
      %3474 = vmatpush.bf16.msra.mxu0 0
      %3475 = vmatpush.bf16.msra.mxu0 0
      %3476 = vmatpush.bf16.msra.mxu0 %v3467
      %3477 = vmatmul.bf16.gmra.mxu0 %v3440
      %v3478 = vpop.f32.mrf.mxu0
      %v3479 = vadd.f32 0.0, %v3478
      %v3480 = vpop.f32.mrf.mxu0
      %v3481 = vadd.f32 0.0, %v3480
      %3482 = vmatmul.bf16.gmra.mxu0 %v3443
      %v3483 = vpop.f32.mrf.mxu0
      %v3484 = vadd.f32 0.0, %v3483
      %v3485 = vpop.f32.mrf.mxu0
      %v3486 = vadd.f32 0.0, %v3485
      %3487 = vmatmul.bf16.gmra.mxu0 %v3446
      %v3488 = vpop.f32.mrf.mxu0
      %v3489 = vadd.f32 0.0, %v3488
      %v3490 = vpop.f32.mrf.mxu0
      %v3491 = vadd.f32 0.0, %v3490
      %3492 = vmatmul.bf16.gmra.mxu0 %v3449
      %v3493 = vpop.f32.mrf.mxu0
      %v3494 = vadd.f32 0.0, %v3493
      %v3495 = vpop.f32.mrf.mxu0
      %v3496 = vadd.f32 0.0, %v3495
      %3497 = vmatmul.bf16.gmra.mxu0 %v3452
      %v3498 = vpop.f32.mrf.mxu0
      %v3499 = vadd.f32 0.0, %v3498
      %v3500 = vpop.f32.mrf.mxu0
      %v3501 = vadd.f32 0.0, %v3500
      %3502 = vmatmul.bf16.gmra.mxu0 %v3455
      %v3503 = vpop.f32.mrf.mxu0
      %v3504 = vadd.f32 0.0, %v3503
      %v3505 = vpop.f32.mrf.mxu0
      %v3506 = vadd.f32 0.0, %v3505
      %3507 = vmatmul.bf16.gmra.mxu0 %v3458
      %v3508 = vpop.f32.mrf.mxu0
      %v3509 = vadd.f32 0.0, %v3508
      %v3510 = vpop.f32.mrf.mxu0
      %v3511 = vadd.f32 0.0, %v3510
      %3512 = vmatmul.bf16.gmra.mxu0 %v3461
      %v3513 = vpop.f32.mrf.mxu0
      %v3514 = vadd.f32 0.0, %v3513
      %v3515 = vpop.f32.mrf.mxu0
      %v3516 = vadd.f32 0.0, %v3515
      %3517 = vmatmul.bf16.gmra.mxu0 %v3464
      %v3518 = vpop.f32.mrf.mxu0
      %v3519 = vadd.f32 0.0, %v3518
      %v3520 = vpop.f32.mrf.mxu0
      %v3521 = vadd.f32 0.0, %v3520
      %3522 = vdwg.mxu0
      %v3523 = vadd.f32 %v3392, %v3479
      %v3524 = vadd.f32 %v3393, %v3481
      %v3525 = vadd.f32 %v3394, %v3484
      %v3526 = vadd.f32 %v3395, %v3486
      %v3527 = vadd.f32 %v3396, %v3489
      %v3528 = vadd.f32 %v3397, %v3491
      %v3529 = vadd.f32 %v3398, %v3494
      %v3530 = vadd.f32 %v3399, %v3496
      %v3531 = vadd.f32 %v3400, %v3499
      %v3532 = vadd.f32 %v3401, %v3501
      %v3533 = vadd.f32 %v3402, %v3504
      %v3534 = vadd.f32 %v3403, %v3506
      %v3535 = vadd.f32 %v3404, %v3509
      %v3536 = vadd.f32 %v3405, %v3511
      %v3537 = vadd.f32 %v3406, %v3514
      %v3538 = vadd.f32 %v3407, %v3516
      %v3539 = vadd.f32 %v3408, %v3519
      %v3540 = vadd.f32 %v3409, %v3521
      %v3541 = vld [vmem:[#allocation3 + $0x2a] sm:$0xff]
      %v3542 = vld [vmem:[#allocation3 + $0x32] sm:$0xff]
      %v3543 = vld [vmem:[#allocation3 + $0x3a] sm:$0xff]
      %v3544 = vld [vmem:[#allocation3 + $0x42] sm:$0xff]
      %v3545 = vld [vmem:[#allocation3 + $0x4a] sm:$0xff]
      %v3546 = vld [vmem:[#allocation3 + $0x52] sm:$0xff]
      %v3547 = vld [vmem:[#allocation3 + $0x5a] sm:$0xff]
      %v3548 = vld [vmem:[#allocation3 + $0x62] sm:$0xff]
      %v3549 = vld [vmem:[#allocation3 + $0x6a] sm:$0xff]
      %v3550 = vld [vmem:[#allocation3 + $0x72] sm:$0xff]
      %v3551 = vld [vmem:[#allocation3 + $0x7a] sm:$0xff]
      %v3552 = vld [vmem:[#allocation3 + $0x82] sm:$0xff]
      %v3553 = vld [vmem:[#allocation3 + $0x8a] sm:$0xff]
      %v3554 = vld [vmem:[#allocation3 + $0x92] sm:$0xff]
      %v3555 = vld [vmem:[#allocation3 + $0x9a] sm:$0xff]
      %v3556 = vld [vmem:[#allocation3 + $0xa2] sm:$0xff]
      %v3557 = vld [vmem:[#allocation3 + $0xaa] sm:$0xff]
      %v3558 = vld [vmem:[#allocation3 + $0xb2] sm:$0xf]
      %v3559 = vpack.c.bf16 %v3542, %v3541
      %v3560 = vpack.c.bf16 %v3544, %v3543
      %v3561 = vpack.c.bf16 %v3546, %v3545
      %v3562 = vpack.c.bf16 %v3548, %v3547
      %v3563 = vpack.c.bf16 %v3550, %v3549
      %v3564 = vpack.c.bf16 %v3552, %v3551
      %v3565 = vpack.c.bf16 %v3554, %v3553
      %v3566 = vpack.c.bf16 %v3556, %v3555
      %v3567 = vpack.c.bf16 %v3558, %v3557
      %s3568 = scalar_lea.vmem %s3, 60
      %v3569 = vld [vmem:[%s3568] sm:$0x7]
      %v3571 = vsel %vm405, %v3559, 0
      %v3574 = vsel %vm405, %v3560, 0
      %v3577 = vsel %vm405, %v3561, 0
      %v3580 = vsel %vm405, %v3562, 0
      %v3583 = vsel %vm405, %v3563, 0
      %v3586 = vsel %vm405, %v3564, 0
      %v3589 = vsel %vm405, %v3565, 0
      %v3592 = vsel %vm405, %v3566, 0
      %v3595 = vsel %vm405, %v3567, 0
      %v3598 = vsel %vm1696, %v3569, 0
      %3600 = vmatpush.bf16.msra.mxu0 0
      %3601 = vmatpush.bf16.msra.mxu0 0
      %3602 = vmatpush.bf16.msra.mxu0 0
      %3603 = vmatpush.bf16.msra.mxu0 0
      %3604 = vmatpush.bf16.msra.mxu0 0
      %3605 = vmatpush.bf16.msra.mxu0 0
      %3606 = vmatpush.bf16.msra.mxu0 0
      %3607 = vmatpush.bf16.msra.mxu0 %v3598
      %3608 = vmatmul.bf16.gmra.mxu0 %v3571
      %v3609 = vpop.f32.mrf.mxu0
      %v3610 = vadd.f32 0.0, %v3609
      %v3611 = vpop.f32.mrf.mxu0
      %v3612 = vadd.f32 0.0, %v3611
      %3613 = vmatmul.bf16.gmra.mxu0 %v3574
      %v3614 = vpop.f32.mrf.mxu0
      %v3615 = vadd.f32 0.0, %v3614
      %v3616 = vpop.f32.mrf.mxu0
      %v3617 = vadd.f32 0.0, %v3616
      %3618 = vmatmul.bf16.gmra.mxu0 %v3577
      %v3619 = vpop.f32.mrf.mxu0
      %v3620 = vadd.f32 0.0, %v3619
      %v3621 = vpop.f32.mrf.mxu0
      %v3622 = vadd.f32 0.0, %v3621
      %3623 = vmatmul.bf16.gmra.mxu0 %v3580
      %v3624 = vpop.f32.mrf.mxu0
      %v3625 = vadd.f32 0.0, %v3624
      %v3626 = vpop.f32.mrf.mxu0
      %v3627 = vadd.f32 0.0, %v3626
      %3628 = vmatmul.bf16.gmra.mxu0 %v3583
      %v3629 = vpop.f32.mrf.mxu0
      %v3630 = vadd.f32 0.0, %v3629
      %v3631 = vpop.f32.mrf.mxu0
      %v3632 = vadd.f32 0.0, %v3631
      %3633 = vmatmul.bf16.gmra.mxu0 %v3586
      %v3634 = vpop.f32.mrf.mxu0
      %v3635 = vadd.f32 0.0, %v3634
      %v3636 = vpop.f32.mrf.mxu0
      %v3637 = vadd.f32 0.0, %v3636
      %3638 = vmatmul.bf16.gmra.mxu0 %v3589
      %v3639 = vpop.f32.mrf.mxu0
      %v3640 = vadd.f32 0.0, %v3639
      %v3641 = vpop.f32.mrf.mxu0
      %v3642 = vadd.f32 0.0, %v3641
      %3643 = vmatmul.bf16.gmra.mxu0 %v3592
      %v3644 = vpop.f32.mrf.mxu0
      %v3645 = vadd.f32 0.0, %v3644
      %v3646 = vpop.f32.mrf.mxu0
      %v3647 = vadd.f32 0.0, %v3646
      %3648 = vmatmul.bf16.gmra.mxu0 %v3595
      %v3649 = vpop.f32.mrf.mxu0
      %v3650 = vadd.f32 0.0, %v3649
      %v3651 = vpop.f32.mrf.mxu0
      %v3652 = vadd.f32 0.0, %v3651
      %3653 = vdwg.mxu0
      %v3654 = vadd.f32 %v3523, %v3610
      %v3655 = vadd.f32 %v3524, %v3612
      %v3656 = vadd.f32 %v3525, %v3615
      %v3657 = vadd.f32 %v3526, %v3617
      %v3658 = vadd.f32 %v3527, %v3620
      %v3659 = vadd.f32 %v3528, %v3622
      %v3660 = vadd.f32 %v3529, %v3625
      %v3661 = vadd.f32 %v3530, %v3627
      %v3662 = vadd.f32 %v3531, %v3630
      %v3663 = vadd.f32 %v3532, %v3632
      %v3664 = vadd.f32 %v3533, %v3635
      %v3665 = vadd.f32 %v3534, %v3637
      %v3666 = vadd.f32 %v3535, %v3640
      %v3667 = vadd.f32 %v3536, %v3642
      %v3668 = vadd.f32 %v3537, %v3645
      %v3669 = vadd.f32 %v3538, %v3647
      %v3670 = vadd.f32 %v3539, %v3650
      %v3671 = vadd.f32 %v3540, %v3652
      %v3672 = vld [vmem:[#allocation3 + $0x2b] sm:$0xff]
      %v3673 = vld [vmem:[#allocation3 + $0x33] sm:$0xff]
      %v3674 = vld [vmem:[#allocation3 + $0x3b] sm:$0xff]
      %v3675 = vld [vmem:[#allocation3 + $0x43] sm:$0xff]
      %v3676 = vld [vmem:[#allocation3 + $0x4b] sm:$0xff]
      %v3677 = vld [vmem:[#allocation3 + $0x53] sm:$0xff]
      %v3678 = vld [vmem:[#allocation3 + $0x5b] sm:$0xff]
      %v3679 = vld [vmem:[#allocation3 + $0x63] sm:$0xff]
      %v3680 = vld [vmem:[#allocation3 + $0x6b] sm:$0xff]
      %v3681 = vld [vmem:[#allocation3 + $0x73] sm:$0xff]
      %v3682 = vld [vmem:[#allocation3 + $0x7b] sm:$0xff]
      %v3683 = vld [vmem:[#allocation3 + $0x83] sm:$0xff]
      %v3684 = vld [vmem:[#allocation3 + $0x8b] sm:$0xff]
      %v3685 = vld [vmem:[#allocation3 + $0x93] sm:$0xff]
      %v3686 = vld [vmem:[#allocation3 + $0x9b] sm:$0xff]
      %v3687 = vld [vmem:[#allocation3 + $0xa3] sm:$0xff]
      %v3688 = vld [vmem:[#allocation3 + $0xab] sm:$0xff]
      %v3689 = vld [vmem:[#allocation3 + $0xb3] sm:$0xf]
      %v3690 = vpack.c.bf16 %v3673, %v3672
      %v3691 = vpack.c.bf16 %v3675, %v3674
      %v3692 = vpack.c.bf16 %v3677, %v3676
      %v3693 = vpack.c.bf16 %v3679, %v3678
      %v3694 = vpack.c.bf16 %v3681, %v3680
      %v3695 = vpack.c.bf16 %v3683, %v3682
      %v3696 = vpack.c.bf16 %v3685, %v3684
      %v3697 = vpack.c.bf16 %v3687, %v3686
      %v3698 = vpack.c.bf16 %v3689, %v3688
      %s3699 = scalar_lea.vmem %s3, 64
      %v3700 = vld [vmem:[%s3699] sm:$0x7]
      %v3702 = vsel %vm405, %v3690, 0
      %v3705 = vsel %vm405, %v3691, 0
      %v3708 = vsel %vm405, %v3692, 0
      %v3711 = vsel %vm405, %v3693, 0
      %v3714 = vsel %vm405, %v3694, 0
      %v3717 = vsel %vm405, %v3695, 0
      %v3720 = vsel %vm405, %v3696, 0
      %v3723 = vsel %vm405, %v3697, 0
      %v3726 = vsel %vm405, %v3698, 0
      %v3729 = vsel %vm1696, %v3700, 0
      %3731 = vmatpush.bf16.msra.mxu0 0
      %3732 = vmatpush.bf16.msra.mxu0 0
      %3733 = vmatpush.bf16.msra.mxu0 0
      %3734 = vmatpush.bf16.msra.mxu0 0
      %3735 = vmatpush.bf16.msra.mxu0 0
      %3736 = vmatpush.bf16.msra.mxu0 0
      %3737 = vmatpush.bf16.msra.mxu0 0
      %3738 = vmatpush.bf16.msra.mxu0 %v3729
      %3739 = vmatmul.bf16.gmra.mxu0 %v3702
      %v3740 = vpop.f32.mrf.mxu0
      %v3741 = vadd.f32 0.0, %v3740
      %v3742 = vpop.f32.mrf.mxu0
      %v3743 = vadd.f32 0.0, %v3742
      %3744 = vmatmul.bf16.gmra.mxu0 %v3705
      %v3745 = vpop.f32.mrf.mxu0
      %v3746 = vadd.f32 0.0, %v3745
      %v3747 = vpop.f32.mrf.mxu0
      %v3748 = vadd.f32 0.0, %v3747
      %3749 = vmatmul.bf16.gmra.mxu0 %v3708
      %v3750 = vpop.f32.mrf.mxu0
      %v3751 = vadd.f32 0.0, %v3750
      %v3752 = vpop.f32.mrf.mxu0
      %v3753 = vadd.f32 0.0, %v3752
      %3754 = vmatmul.bf16.gmra.mxu0 %v3711
      %v3755 = vpop.f32.mrf.mxu0
      %v3756 = vadd.f32 0.0, %v3755
      %v3757 = vpop.f32.mrf.mxu0
      %v3758 = vadd.f32 0.0, %v3757
      %3759 = vmatmul.bf16.gmra.mxu0 %v3714
      %v3760 = vpop.f32.mrf.mxu0
      %v3761 = vadd.f32 0.0, %v3760
      %v3762 = vpop.f32.mrf.mxu0
      %v3763 = vadd.f32 0.0, %v3762
      %3764 = vmatmul.bf16.gmra.mxu0 %v3717
      %v3765 = vpop.f32.mrf.mxu0
      %v3766 = vadd.f32 0.0, %v3765
      %v3767 = vpop.f32.mrf.mxu0
      %v3768 = vadd.f32 0.0, %v3767
      %3769 = vmatmul.bf16.gmra.mxu0 %v3720
      %v3770 = vpop.f32.mrf.mxu0
      %v3771 = vadd.f32 0.0, %v3770
      %v3772 = vpop.f32.mrf.mxu0
      %v3773 = vadd.f32 0.0, %v3772
      %3774 = vmatmul.bf16.gmra.mxu0 %v3723
      %v3775 = vpop.f32.mrf.mxu0
      %v3776 = vadd.f32 0.0, %v3775
      %v3777 = vpop.f32.mrf.mxu0
      %v3778 = vadd.f32 0.0, %v3777
      %3779 = vmatmul.bf16.gmra.mxu0 %v3726
      %v3780 = vpop.f32.mrf.mxu0
      %v3781 = vadd.f32 0.0, %v3780
      %v3782 = vpop.f32.mrf.mxu0
      %v3783 = vadd.f32 0.0, %v3782
      %3784 = vdwg.mxu0
      %v3785 = vadd.f32 %v3654, %v3741
      %v3786 = vadd.f32 %v3655, %v3743
      %v3787 = vadd.f32 %v3656, %v3746
      %v3788 = vadd.f32 %v3657, %v3748
      %v3789 = vadd.f32 %v3658, %v3751
      %v3790 = vadd.f32 %v3659, %v3753
      %v3791 = vadd.f32 %v3660, %v3756
      %v3792 = vadd.f32 %v3661, %v3758
      %v3793 = vadd.f32 %v3662, %v3761
      %v3794 = vadd.f32 %v3663, %v3763
      %v3795 = vadd.f32 %v3664, %v3766
      %v3796 = vadd.f32 %v3665, %v3768
      %v3797 = vadd.f32 %v3666, %v3771
      %v3798 = vadd.f32 %v3667, %v3773
      %v3799 = vadd.f32 %v3668, %v3776
      %v3800 = vadd.f32 %v3669, %v3778
      %v3801 = vadd.f32 %v3670, %v3781
      %v3802 = vadd.f32 %v3671, %v3783
      %v3803 = vld [vmem:[#allocation3 + $0x2c] sm:$0xff]
      %v3804 = vld [vmem:[#allocation3 + $0x34] sm:$0xff]
      %v3805 = vld [vmem:[#allocation3 + $0x3c] sm:$0xff]
      %v3806 = vld [vmem:[#allocation3 + $0x44] sm:$0xff]
      %v3807 = vld [vmem:[#allocation3 + $0x4c] sm:$0xff]
      %v3808 = vld [vmem:[#allocation3 + $0x54] sm:$0xff]
      %v3809 = vld [vmem:[#allocation3 + $0x5c] sm:$0xff]
      %v3810 = vld [vmem:[#allocation3 + $0x64] sm:$0xff]
      %v3811 = vld [vmem:[#allocation3 + $0x6c] sm:$0xff]
      %v3812 = vld [vmem:[#allocation3 + $0x74] sm:$0xff]
      %v3813 = vld [vmem:[#allocation3 + $0x7c] sm:$0xff]
      %v3814 = vld [vmem:[#allocation3 + $0x84] sm:$0xff]
      %v3815 = vld [vmem:[#allocation3 + $0x8c] sm:$0xff]
      %v3816 = vld [vmem:[#allocation3 + $0x94] sm:$0xff]
      %v3817 = vld [vmem:[#allocation3 + $0x9c] sm:$0xff]
      %v3818 = vld [vmem:[#allocation3 + $0xa4] sm:$0xff]
      %v3819 = vld [vmem:[#allocation3 + $0xac] sm:$0xff]
      %v3820 = vld [vmem:[#allocation3 + $0xb4] sm:$0xf]
      %v3821 = vpack.c.bf16 %v3804, %v3803
      %v3822 = vpack.c.bf16 %v3806, %v3805
      %v3823 = vpack.c.bf16 %v3808, %v3807
      %v3824 = vpack.c.bf16 %v3810, %v3809
      %v3825 = vpack.c.bf16 %v3812, %v3811
      %v3826 = vpack.c.bf16 %v3814, %v3813
      %v3827 = vpack.c.bf16 %v3816, %v3815
      %v3828 = vpack.c.bf16 %v3818, %v3817
      %v3829 = vpack.c.bf16 %v3820, %v3819
      %s3830 = scalar_lea.vmem %s3, 68
      %v3831 = vld [vmem:[%s3830] sm:$0x7]
      %v3833 = vsel %vm405, %v3821, 0
      %v3836 = vsel %vm405, %v3822, 0
      %v3839 = vsel %vm405, %v3823, 0
      %v3842 = vsel %vm405, %v3824, 0
      %v3845 = vsel %vm405, %v3825, 0
      %v3848 = vsel %vm405, %v3826, 0
      %v3851 = vsel %vm405, %v3827, 0
      %v3854 = vsel %vm405, %v3828, 0
      %v3857 = vsel %vm405, %v3829, 0
      %v3860 = vsel %vm1696, %v3831, 0
      %3862 = vmatpush.bf16.msra.mxu0 0
      %3863 = vmatpush.bf16.msra.mxu0 0
      %3864 = vmatpush.bf16.msra.mxu0 0
      %3865 = vmatpush.bf16.msra.mxu0 0
      %3866 = vmatpush.bf16.msra.mxu0 0
      %3867 = vmatpush.bf16.msra.mxu0 0
      %3868 = vmatpush.bf16.msra.mxu0 0
      %3869 = vmatpush.bf16.msra.mxu0 %v3860
      %3870 = vmatmul.bf16.gmra.mxu0 %v3833
      %v3871 = vpop.f32.mrf.mxu0
      %v3872 = vadd.f32 0.0, %v3871
      %v3873 = vpop.f32.mrf.mxu0
      %v3874 = vadd.f32 0.0, %v3873
      %3875 = vmatmul.bf16.gmra.mxu0 %v3836
      %v3876 = vpop.f32.mrf.mxu0
      %v3877 = vadd.f32 0.0, %v3876
      %v3878 = vpop.f32.mrf.mxu0
      %v3879 = vadd.f32 0.0, %v3878
      %3880 = vmatmul.bf16.gmra.mxu0 %v3839
      %v3881 = vpop.f32.mrf.mxu0
      %v3882 = vadd.f32 0.0, %v3881
      %v3883 = vpop.f32.mrf.mxu0
      %v3884 = vadd.f32 0.0, %v3883
      %3885 = vmatmul.bf16.gmra.mxu0 %v3842
      %v3886 = vpop.f32.mrf.mxu0
      %v3887 = vadd.f32 0.0, %v3886
      %v3888 = vpop.f32.mrf.mxu0
      %v3889 = vadd.f32 0.0, %v3888
      %3890 = vmatmul.bf16.gmra.mxu0 %v3845
      %v3891 = vpop.f32.mrf.mxu0
      %v3892 = vadd.f32 0.0, %v3891
      %v3893 = vpop.f32.mrf.mxu0
      %v3894 = vadd.f32 0.0, %v3893
      %3895 = vmatmul.bf16.gmra.mxu0 %v3848
      %v3896 = vpop.f32.mrf.mxu0
      %v3897 = vadd.f32 0.0, %v3896
      %v3898 = vpop.f32.mrf.mxu0
      %v3899 = vadd.f32 0.0, %v3898
      %3900 = vmatmul.bf16.gmra.mxu0 %v3851
      %v3901 = vpop.f32.mrf.mxu0
      %v3902 = vadd.f32 0.0, %v3901
      %v3903 = vpop.f32.mrf.mxu0
      %v3904 = vadd.f32 0.0, %v3903
      %3905 = vmatmul.bf16.gmra.mxu0 %v3854
      %v3906 = vpop.f32.mrf.mxu0
      %v3907 = vadd.f32 0.0, %v3906
      %v3908 = vpop.f32.mrf.mxu0
      %v3909 = vadd.f32 0.0, %v3908
      %3910 = vmatmul.bf16.gmra.mxu0 %v3857
      %v3911 = vpop.f32.mrf.mxu0
      %v3912 = vadd.f32 0.0, %v3911
      %v3913 = vpop.f32.mrf.mxu0
      %v3914 = vadd.f32 0.0, %v3913
      %3915 = vdwg.mxu0
      %v3916 = vadd.f32 %v3785, %v3872
      %v3917 = vadd.f32 %v3786, %v3874
      %v3918 = vadd.f32 %v3787, %v3877
      %v3919 = vadd.f32 %v3788, %v3879
      %v3920 = vadd.f32 %v3789, %v3882
      %v3921 = vadd.f32 %v3790, %v3884
      %v3922 = vadd.f32 %v3791, %v3887
      %v3923 = vadd.f32 %v3792, %v3889
      %v3924 = vadd.f32 %v3793, %v3892
      %v3925 = vadd.f32 %v3794, %v3894
      %v3926 = vadd.f32 %v3795, %v3897
      %v3927 = vadd.f32 %v3796, %v3899
      %v3928 = vadd.f32 %v3797, %v3902
      %v3929 = vadd.f32 %v3798, %v3904
      %v3930 = vadd.f32 %v3799, %v3907
      %v3931 = vadd.f32 %v3800, %v3909
      %v3932 = vadd.f32 %v3801, %v3912
      %v3933 = vadd.f32 %v3802, %v3914
      %v3934 = vld [vmem:[#allocation3 + $0x2d] sm:$0xff]
      %v3935 = vld [vmem:[#allocation3 + $0x35] sm:$0xff]
      %v3936 = vld [vmem:[#allocation3 + $0x3d] sm:$0xff]
      %v3937 = vld [vmem:[#allocation3 + $0x45] sm:$0xff]
      %v3938 = vld [vmem:[#allocation3 + $0x4d] sm:$0xff]
      %v3939 = vld [vmem:[#allocation3 + $0x55] sm:$0xff]
      %v3940 = vld [vmem:[#allocation3 + $0x5d] sm:$0xff]
      %v3941 = vld [vmem:[#allocation3 + $0x65] sm:$0xff]
      %v3942 = vld [vmem:[#allocation3 + $0x6d] sm:$0xff]
      %v3943 = vld [vmem:[#allocation3 + $0x75] sm:$0xff]
      %v3944 = vld [vmem:[#allocation3 + $0x7d] sm:$0xff]
      %v3945 = vld [vmem:[#allocation3 + $0x85] sm:$0xff]
      %v3946 = vld [vmem:[#allocation3 + $0x8d] sm:$0xff]
      %v3947 = vld [vmem:[#allocation3 + $0x95] sm:$0xff]
      %v3948 = vld [vmem:[#allocation3 + $0x9d] sm:$0xff]
      %v3949 = vld [vmem:[#allocation3 + $0xa5] sm:$0xff]
      %v3950 = vld [vmem:[#allocation3 + $0xad] sm:$0xff]
      %v3951 = vld [vmem:[#allocation3 + $0xb5] sm:$0xf]
      %v3952 = vpack.c.bf16 %v3935, %v3934
      %v3953 = vpack.c.bf16 %v3937, %v3936
      %v3954 = vpack.c.bf16 %v3939, %v3938
      %v3955 = vpack.c.bf16 %v3941, %v3940
      %v3956 = vpack.c.bf16 %v3943, %v3942
      %v3957 = vpack.c.bf16 %v3945, %v3944
      %v3958 = vpack.c.bf16 %v3947, %v3946
      %v3959 = vpack.c.bf16 %v3949, %v3948
      %v3960 = vpack.c.bf16 %v3951, %v3950
      %s3961 = scalar_lea.vmem %s3, 72
      %v3962 = vld [vmem:[%s3961] sm:$0x7]
      %v3964 = vsel %vm405, %v3952, 0
      %v3967 = vsel %vm405, %v3953, 0
      %v3970 = vsel %vm405, %v3954, 0
      %v3973 = vsel %vm405, %v3955, 0
      %v3976 = vsel %vm405, %v3956, 0
      %v3979 = vsel %vm405, %v3957, 0
      %v3982 = vsel %vm405, %v3958, 0
      %v3985 = vsel %vm405, %v3959, 0
      %v3988 = vsel %vm405, %v3960, 0
      %v3991 = vsel %vm1696, %v3962, 0
      %3993 = vmatpush.bf16.msra.mxu0 0
      %3994 = vmatpush.bf16.msra.mxu0 0
      %3995 = vmatpush.bf16.msra.mxu0 0
      %3996 = vmatpush.bf16.msra.mxu0 0
      %3997 = vmatpush.bf16.msra.mxu0 0
      %3998 = vmatpush.bf16.msra.mxu0 0
      %3999 = vmatpush.bf16.msra.mxu0 0
      %4000 = vmatpush.bf16.msra.mxu0 %v3991
      %4001 = vmatmul.bf16.gmra.mxu0 %v3964
      %v4002 = vpop.f32.mrf.mxu0
      %v4003 = vadd.f32 0.0, %v4002
      %v4004 = vpop.f32.mrf.mxu0
      %v4005 = vadd.f32 0.0, %v4004
      %4006 = vmatmul.bf16.gmra.mxu0 %v3967
      %v4007 = vpop.f32.mrf.mxu0
      %v4008 = vadd.f32 0.0, %v4007
      %v4009 = vpop.f32.mrf.mxu0
      %v4010 = vadd.f32 0.0, %v4009
      %4011 = vmatmul.bf16.gmra.mxu0 %v3970
      %v4012 = vpop.f32.mrf.mxu0
      %v4013 = vadd.f32 0.0, %v4012
      %v4014 = vpop.f32.mrf.mxu0
      %v4015 = vadd.f32 0.0, %v4014
      %4016 = vmatmul.bf16.gmra.mxu0 %v3973
      %v4017 = vpop.f32.mrf.mxu0
      %v4018 = vadd.f32 0.0, %v4017
      %v4019 = vpop.f32.mrf.mxu0
      %v4020 = vadd.f32 0.0, %v4019
      %4021 = vmatmul.bf16.gmra.mxu0 %v3976
      %v4022 = vpop.f32.mrf.mxu0
      %v4023 = vadd.f32 0.0, %v4022
      %v4024 = vpop.f32.mrf.mxu0
      %v4025 = vadd.f32 0.0, %v4024
      %4026 = vmatmul.bf16.gmra.mxu0 %v3979
      %v4027 = vpop.f32.mrf.mxu0
      %v4028 = vadd.f32 0.0, %v4027
      %v4029 = vpop.f32.mrf.mxu0
      %v4030 = vadd.f32 0.0, %v4029
      %4031 = vmatmul.bf16.gmra.mxu0 %v3982
      %v4032 = vpop.f32.mrf.mxu0
      %v4033 = vadd.f32 0.0, %v4032
      %v4034 = vpop.f32.mrf.mxu0
      %v4035 = vadd.f32 0.0, %v4034
      %4036 = vmatmul.bf16.gmra.mxu0 %v3985
      %v4037 = vpop.f32.mrf.mxu0
      %v4038 = vadd.f32 0.0, %v4037
      %v4039 = vpop.f32.mrf.mxu0
      %v4040 = vadd.f32 0.0, %v4039
      %4041 = vmatmul.bf16.gmra.mxu0 %v3988
      %v4042 = vpop.f32.mrf.mxu0
      %v4043 = vadd.f32 0.0, %v4042
      %v4044 = vpop.f32.mrf.mxu0
      %v4045 = vadd.f32 0.0, %v4044
      %4046 = vdwg.mxu0
      %v4047 = vadd.f32 %v3916, %v4003
      %v4048 = vadd.f32 %v3917, %v4005
      %v4049 = vadd.f32 %v3918, %v4008
      %v4050 = vadd.f32 %v3919, %v4010
      %v4051 = vadd.f32 %v3920, %v4013
      %v4052 = vadd.f32 %v3921, %v4015
      %v4053 = vadd.f32 %v3922, %v4018
      %v4054 = vadd.f32 %v3923, %v4020
      %v4055 = vadd.f32 %v3924, %v4023
      %v4056 = vadd.f32 %v3925, %v4025
      %v4057 = vadd.f32 %v3926, %v4028
      %v4058 = vadd.f32 %v3927, %v4030
      %v4059 = vadd.f32 %v3928, %v4033
      %v4060 = vadd.f32 %v3929, %v4035
      %v4061 = vadd.f32 %v3930, %v4038
      %v4062 = vadd.f32 %v3931, %v4040
      %v4063 = vadd.f32 %v3932, %v4043
      %v4064 = vadd.f32 %v3933, %v4045
      %v4065 = vld [vmem:[#allocation3 + $0x2e] sm:$0xff]
      %v4066 = vld [vmem:[#allocation3 + $0x36] sm:$0xff]
      %v4067 = vld [vmem:[#allocation3 + $0x3e] sm:$0xff]
      %v4068 = vld [vmem:[#allocation3 + $0x46] sm:$0xff]
      %v4069 = vld [vmem:[#allocation3 + $0x4e] sm:$0xff]
      %v4070 = vld [vmem:[#allocation3 + $0x56] sm:$0xff]
      %v4071 = vld [vmem:[#allocation3 + $0x5e] sm:$0xff]
      %v4072 = vld [vmem:[#allocation3 + $0x66] sm:$0xff]
      %v4073 = vld [vmem:[#allocation3 + $0x6e] sm:$0xff]
      %v4074 = vld [vmem:[#allocation3 + $0x76] sm:$0xff]
      %v4075 = vld [vmem:[#allocation3 + $0x7e] sm:$0xff]
      %v4076 = vld [vmem:[#allocation3 + $0x86] sm:$0xff]
      %v4077 = vld [vmem:[#allocation3 + $0x8e] sm:$0xff]
      %v4078 = vld [vmem:[#allocation3 + $0x96] sm:$0xff]
      %v4079 = vld [vmem:[#allocation3 + $0x9e] sm:$0xff]
      %v4080 = vld [vmem:[#allocation3 + $0xa6] sm:$0xff]
      %v4081 = vld [vmem:[#allocation3 + $0xae] sm:$0xff]
      %v4082 = vld [vmem:[#allocation3 + $0xb6] sm:$0xf]
      %v4083 = vpack.c.bf16 %v4066, %v4065
      %v4084 = vpack.c.bf16 %v4068, %v4067
      %v4085 = vpack.c.bf16 %v4070, %v4069
      %v4086 = vpack.c.bf16 %v4072, %v4071
      %v4087 = vpack.c.bf16 %v4074, %v4073
      %v4088 = vpack.c.bf16 %v4076, %v4075
      %v4089 = vpack.c.bf16 %v4078, %v4077
      %v4090 = vpack.c.bf16 %v4080, %v4079
      %v4091 = vpack.c.bf16 %v4082, %v4081
      %s4092 = scalar_lea.vmem %s3, 76
      %v4093 = vld [vmem:[%s4092] sm:$0x7]
      %v4095 = vsel %vm405, %v4083, 0
      %v4098 = vsel %vm405, %v4084, 0
      %v4101 = vsel %vm405, %v4085, 0
      %v4104 = vsel %vm405, %v4086, 0
      %v4107 = vsel %vm405, %v4087, 0
      %v4110 = vsel %vm405, %v4088, 0
      %v4113 = vsel %vm405, %v4089, 0
      %v4116 = vsel %vm405, %v4090, 0
      %v4119 = vsel %vm405, %v4091, 0
      %v4122 = vsel %vm1696, %v4093, 0
      %4124 = vmatpush.bf16.msra.mxu0 0
      %4125 = vmatpush.bf16.msra.mxu0 0
      %4126 = vmatpush.bf16.msra.mxu0 0
      %4127 = vmatpush.bf16.msra.mxu0 0
      %4128 = vmatpush.bf16.msra.mxu0 0
      %4129 = vmatpush.bf16.msra.mxu0 0
      %4130 = vmatpush.bf16.msra.mxu0 0
      %4131 = vmatpush.bf16.msra.mxu0 %v4122
      %4132 = vmatmul.bf16.gmra.mxu0 %v4095
      %v4133 = vpop.f32.mrf.mxu0
      %v4134 = vadd.f32 0.0, %v4133
      %v4135 = vpop.f32.mrf.mxu0
      %v4136 = vadd.f32 0.0, %v4135
      %4137 = vmatmul.bf16.gmra.mxu0 %v4098
      %v4138 = vpop.f32.mrf.mxu0
      %v4139 = vadd.f32 0.0, %v4138
      %v4140 = vpop.f32.mrf.mxu0
      %v4141 = vadd.f32 0.0, %v4140
      %4142 = vmatmul.bf16.gmra.mxu0 %v4101
      %v4143 = vpop.f32.mrf.mxu0
      %v4144 = vadd.f32 0.0, %v4143
      %v4145 = vpop.f32.mrf.mxu0
      %v4146 = vadd.f32 0.0, %v4145
      %4147 = vmatmul.bf16.gmra.mxu0 %v4104
      %v4148 = vpop.f32.mrf.mxu0
      %v4149 = vadd.f32 0.0, %v4148
      %v4150 = vpop.f32.mrf.mxu0
      %v4151 = vadd.f32 0.0, %v4150
      %4152 = vmatmul.bf16.gmra.mxu0 %v4107
      %v4153 = vpop.f32.mrf.mxu0
      %v4154 = vadd.f32 0.0, %v4153
      %v4155 = vpop.f32.mrf.mxu0
      %v4156 = vadd.f32 0.0, %v4155
      %4157 = vmatmul.bf16.gmra.mxu0 %v4110
      %v4158 = vpop.f32.mrf.mxu0
      %v4159 = vadd.f32 0.0, %v4158
      %v4160 = vpop.f32.mrf.mxu0
      %v4161 = vadd.f32 0.0, %v4160
      %4162 = vmatmul.bf16.gmra.mxu0 %v4113
      %v4163 = vpop.f32.mrf.mxu0
      %v4164 = vadd.f32 0.0, %v4163
      %v4165 = vpop.f32.mrf.mxu0
      %v4166 = vadd.f32 0.0, %v4165
      %4167 = vmatmul.bf16.gmra.mxu0 %v4116
      %v4168 = vpop.f32.mrf.mxu0
      %v4169 = vadd.f32 0.0, %v4168
      %v4170 = vpop.f32.mrf.mxu0
      %v4171 = vadd.f32 0.0, %v4170
      %4172 = vmatmul.bf16.gmra.mxu0 %v4119
      %v4173 = vpop.f32.mrf.mxu0
      %v4174 = vadd.f32 0.0, %v4173
      %v4175 = vpop.f32.mrf.mxu0
      %v4176 = vadd.f32 0.0, %v4175
      %4177 = vdwg.mxu0
      %v4178 = vadd.f32 %v4047, %v4134
      %v4179 = vadd.f32 %v4048, %v4136
      %v4180 = vadd.f32 %v4049, %v4139
      %v4181 = vadd.f32 %v4050, %v4141
      %v4182 = vadd.f32 %v4051, %v4144
      %v4183 = vadd.f32 %v4052, %v4146
      %v4184 = vadd.f32 %v4053, %v4149
      %v4185 = vadd.f32 %v4054, %v4151
      %v4186 = vadd.f32 %v4055, %v4154
      %v4187 = vadd.f32 %v4056, %v4156
      %v4188 = vadd.f32 %v4057, %v4159
      %v4189 = vadd.f32 %v4058, %v4161
      %v4190 = vadd.f32 %v4059, %v4164
      %v4191 = vadd.f32 %v4060, %v4166
      %v4192 = vadd.f32 %v4061, %v4169
      %v4193 = vadd.f32 %v4062, %v4171
      %v4194 = vadd.f32 %v4063, %v4174
      %v4195 = vadd.f32 %v4064, %v4176
      %v4196 = vld [vmem:[#allocation3 + $0x38] sm:$0xff]
      %v4197 = vld [vmem:[#allocation3 + $0x40] sm:$0xff]
      %v4198 = vld [vmem:[#allocation3 + $0x48] sm:$0xff]
      %v4199 = vld [vmem:[#allocation3 + $0x50] sm:$0xff]
      %v4200 = vld [vmem:[#allocation3 + $0x58] sm:$0xff]
      %v4201 = vld [vmem:[#allocation3 + $0x60] sm:$0xff]
      %v4202 = vld [vmem:[#allocation3 + $0x68] sm:$0xff]
      %v4203 = vld [vmem:[#allocation3 + $0x70] sm:$0xff]
      %v4204 = vld [vmem:[#allocation3 + $0x78] sm:$0xff]
      %v4205 = vld [vmem:[#allocation3 + $0x80] sm:$0xff]
      %v4206 = vld [vmem:[#allocation3 + $0x88] sm:$0xff]
      %v4207 = vld [vmem:[#allocation3 + $0x90] sm:$0xff]
      %v4208 = vld [vmem:[#allocation3 + $0x98] sm:$0xff]
      %v4209 = vld [vmem:[#allocation3 + $0xa0] sm:$0xff]
      %v4210 = vld [vmem:[#allocation3 + $0xa8] sm:$0xff]
      %v4211 = vld [vmem:[#allocation3 + $0xb0] sm:$0xff]
      %v4212 = vld [vmem:[#allocation3 + $0xb8] sm:$0xff]
      %v4213 = vld [vmem:[#allocation3 + $0xc0] sm:$0xf]
      %v4214 = vpack.c.bf16 %v4197, %v4196
      %v4215 = vpack.c.bf16 %v4199, %v4198
      %v4216 = vpack.c.bf16 %v4201, %v4200
      %v4217 = vpack.c.bf16 %v4203, %v4202
      %v4218 = vpack.c.bf16 %v4205, %v4204
      %v4219 = vpack.c.bf16 %v4207, %v4206
      %v4220 = vpack.c.bf16 %v4209, %v4208
      %v4221 = vpack.c.bf16 %v4211, %v4210
      %v4222 = vpack.c.bf16 %v4213, %v4212
      %s4223 = scalar_lea.vmem %s3, 80
      %v4224 = vld [vmem:[%s4223] sm:$0x7]
      %v4226 = vsel %vm405, %v4214, 0
      %v4229 = vsel %vm405, %v4215, 0
      %v4232 = vsel %vm405, %v4216, 0
      %v4235 = vsel %vm405, %v4217, 0
      %v4238 = vsel %vm405, %v4218, 0
      %v4241 = vsel %vm405, %v4219, 0
      %v4244 = vsel %vm405, %v4220, 0
      %v4247 = vsel %vm405, %v4221, 0
      %v4250 = vsel %vm405, %v4222, 0
      %v4253 = vsel %vm1696, %v4224, 0
      %4255 = vmatpush.bf16.msra.mxu0 0
      %4256 = vmatpush.bf16.msra.mxu0 0
      %4257 = vmatpush.bf16.msra.mxu0 0
      %4258 = vmatpush.bf16.msra.mxu0 0
      %4259 = vmatpush.bf16.msra.mxu0 0
      %4260 = vmatpush.bf16.msra.mxu0 0
      %4261 = vmatpush.bf16.msra.mxu0 0
      %4262 = vmatpush.bf16.msra.mxu0 %v4253
      %4263 = vmatmul.bf16.gmra.mxu0 %v4226
      %v4264 = vpop.f32.mrf.mxu0
      %v4265 = vadd.f32 0.0, %v4264
      %v4266 = vpop.f32.mrf.mxu0
      %v4267 = vadd.f32 0.0, %v4266
      %4268 = vmatmul.bf16.gmra.mxu0 %v4229
      %v4269 = vpop.f32.mrf.mxu0
      %v4270 = vadd.f32 0.0, %v4269
      %v4271 = vpop.f32.mrf.mxu0
      %v4272 = vadd.f32 0.0, %v4271
      %4273 = vmatmul.bf16.gmra.mxu0 %v4232
      %v4274 = vpop.f32.mrf.mxu0
      %v4275 = vadd.f32 0.0, %v4274
      %v4276 = vpop.f32.mrf.mxu0
      %v4277 = vadd.f32 0.0, %v4276
      %4278 = vmatmul.bf16.gmra.mxu0 %v4235
      %v4279 = vpop.f32.mrf.mxu0
      %v4280 = vadd.f32 0.0, %v4279
      %v4281 = vpop.f32.mrf.mxu0
      %v4282 = vadd.f32 0.0, %v4281
      %4283 = vmatmul.bf16.gmra.mxu0 %v4238
      %v4284 = vpop.f32.mrf.mxu0
      %v4285 = vadd.f32 0.0, %v4284
      %v4286 = vpop.f32.mrf.mxu0
      %v4287 = vadd.f32 0.0, %v4286
      %4288 = vmatmul.bf16.gmra.mxu0 %v4241
      %v4289 = vpop.f32.mrf.mxu0
      %v4290 = vadd.f32 0.0, %v4289
      %v4291 = vpop.f32.mrf.mxu0
      %v4292 = vadd.f32 0.0, %v4291
      %4293 = vmatmul.bf16.gmra.mxu0 %v4244
      %v4294 = vpop.f32.mrf.mxu0
      %v4295 = vadd.f32 0.0, %v4294
      %v4296 = vpop.f32.mrf.mxu0
      %v4297 = vadd.f32 0.0, %v4296
      %4298 = vmatmul.bf16.gmra.mxu0 %v4247
      %v4299 = vpop.f32.mrf.mxu0
      %v4300 = vadd.f32 0.0, %v4299
      %v4301 = vpop.f32.mrf.mxu0
      %v4302 = vadd.f32 0.0, %v4301
      %4303 = vmatmul.bf16.gmra.mxu0 %v4250
      %v4304 = vpop.f32.mrf.mxu0
      %v4305 = vadd.f32 0.0, %v4304
      %v4306 = vpop.f32.mrf.mxu0
      %v4307 = vadd.f32 0.0, %v4306
      %4308 = vdwg.mxu0
      %v4309 = vadd.f32 %v4178, %v4265
      %v4310 = vadd.f32 %v4179, %v4267
      %v4311 = vadd.f32 %v4180, %v4270
      %v4312 = vadd.f32 %v4181, %v4272
      %v4313 = vadd.f32 %v4182, %v4275
      %v4314 = vadd.f32 %v4183, %v4277
      %v4315 = vadd.f32 %v4184, %v4280
      %v4316 = vadd.f32 %v4185, %v4282
      %v4317 = vadd.f32 %v4186, %v4285
      %v4318 = vadd.f32 %v4187, %v4287
      %v4319 = vadd.f32 %v4188, %v4290
      %v4320 = vadd.f32 %v4189, %v4292
      %v4321 = vadd.f32 %v4190, %v4295
      %v4322 = vadd.f32 %v4191, %v4297
      %v4323 = vadd.f32 %v4192, %v4300
      %v4324 = vadd.f32 %v4193, %v4302
      %v4325 = vadd.f32 %v4194, %v4305
      %v4326 = vadd.f32 %v4195, %v4307
      %v4327 = vld [vmem:[#allocation3 + $0x39] sm:$0xff]
      %v4328 = vld [vmem:[#allocation3 + $0x41] sm:$0xff]
      %v4329 = vld [vmem:[#allocation3 + $0x49] sm:$0xff]
      %v4330 = vld [vmem:[#allocation3 + $0x51] sm:$0xff]
      %v4331 = vld [vmem:[#allocation3 + $0x59] sm:$0xff]
      %v4332 = vld [vmem:[#allocation3 + $0x61] sm:$0xff]
      %v4333 = vld [vmem:[#allocation3 + $0x69] sm:$0xff]
      %v4334 = vld [vmem:[#allocation3 + $0x71] sm:$0xff]
      %v4335 = vld [vmem:[#allocation3 + $0x79] sm:$0xff]
      %v4336 = vld [vmem:[#allocation3 + $0x81] sm:$0xff]
      %v4337 = vld [vmem:[#allocation3 + $0x89] sm:$0xff]
      %v4338 = vld [vmem:[#allocation3 + $0x91] sm:$0xff]
      %v4339 = vld [vmem:[#allocation3 + $0x99] sm:$0xff]
      %v4340 = vld [vmem:[#allocation3 + $0xa1] sm:$0xff]
      %v4341 = vld [vmem:[#allocation3 + $0xa9] sm:$0xff]
      %v4342 = vld [vmem:[#allocation3 + $0xb1] sm:$0xff]
      %v4343 = vld [vmem:[#allocation3 + $0xb9] sm:$0xff]
      %v4344 = vld [vmem:[#allocation3 + $0xc1] sm:$0xf]
      %v4345 = vpack.c.bf16 %v4328, %v4327
      %v4346 = vpack.c.bf16 %v4330, %v4329
      %v4347 = vpack.c.bf16 %v4332, %v4331
      %v4348 = vpack.c.bf16 %v4334, %v4333
      %v4349 = vpack.c.bf16 %v4336, %v4335
      %v4350 = vpack.c.bf16 %v4338, %v4337
      %v4351 = vpack.c.bf16 %v4340, %v4339
      %v4352 = vpack.c.bf16 %v4342, %v4341
      %v4353 = vpack.c.bf16 %v4344, %v4343
      %s4354 = scalar_lea.vmem %s3, 84
      %v4355 = vld [vmem:[%s4354] sm:$0x7]
      %v4357 = vsel %vm405, %v4345, 0
      %v4360 = vsel %vm405, %v4346, 0
      %v4363 = vsel %vm405, %v4347, 0
      %v4366 = vsel %vm405, %v4348, 0
      %v4369 = vsel %vm405, %v4349, 0
      %v4372 = vsel %vm405, %v4350, 0
      %v4375 = vsel %vm405, %v4351, 0
      %v4378 = vsel %vm405, %v4352, 0
      %v4381 = vsel %vm405, %v4353, 0
      %v4384 = vsel %vm1696, %v4355, 0
      %4386 = vmatpush.bf16.msra.mxu0 0
      %4387 = vmatpush.bf16.msra.mxu0 0
      %4388 = vmatpush.bf16.msra.mxu0 0
      %4389 = vmatpush.bf16.msra.mxu0 0
      %4390 = vmatpush.bf16.msra.mxu0 0
      %4391 = vmatpush.bf16.msra.mxu0 0
      %4392 = vmatpush.bf16.msra.mxu0 0
      %4393 = vmatpush.bf16.msra.mxu0 %v4384
      %4394 = vmatmul.bf16.gmra.mxu0 %v4357
      %v4395 = vpop.f32.mrf.mxu0
      %v4396 = vadd.f32 0.0, %v4395
      %v4397 = vpop.f32.mrf.mxu0
      %v4398 = vadd.f32 0.0, %v4397
      %4399 = vmatmul.bf16.gmra.mxu0 %v4360
      %v4400 = vpop.f32.mrf.mxu0
      %v4401 = vadd.f32 0.0, %v4400
      %v4402 = vpop.f32.mrf.mxu0
      %v4403 = vadd.f32 0.0, %v4402
      %4404 = vmatmul.bf16.gmra.mxu0 %v4363
      %v4405 = vpop.f32.mrf.mxu0
      %v4406 = vadd.f32 0.0, %v4405
      %v4407 = vpop.f32.mrf.mxu0
      %v4408 = vadd.f32 0.0, %v4407
      %4409 = vmatmul.bf16.gmra.mxu0 %v4366
      %v4410 = vpop.f32.mrf.mxu0
      %v4411 = vadd.f32 0.0, %v4410
      %v4412 = vpop.f32.mrf.mxu0
      %v4413 = vadd.f32 0.0, %v4412
      %4414 = vmatmul.bf16.gmra.mxu0 %v4369
      %v4415 = vpop.f32.mrf.mxu0
      %v4416 = vadd.f32 0.0, %v4415
      %v4417 = vpop.f32.mrf.mxu0
      %v4418 = vadd.f32 0.0, %v4417
      %4419 = vmatmul.bf16.gmra.mxu0 %v4372
      %v4420 = vpop.f32.mrf.mxu0
      %v4421 = vadd.f32 0.0, %v4420
      %v4422 = vpop.f32.mrf.mxu0
      %v4423 = vadd.f32 0.0, %v4422
      %4424 = vmatmul.bf16.gmra.mxu0 %v4375
      %v4425 = vpop.f32.mrf.mxu0
      %v4426 = vadd.f32 0.0, %v4425
      %v4427 = vpop.f32.mrf.mxu0
      %v4428 = vadd.f32 0.0, %v4427
      %4429 = vmatmul.bf16.gmra.mxu0 %v4378
      %v4430 = vpop.f32.mrf.mxu0
      %v4431 = vadd.f32 0.0, %v4430
      %v4432 = vpop.f32.mrf.mxu0
      %v4433 = vadd.f32 0.0, %v4432
      %4434 = vmatmul.bf16.gmra.mxu0 %v4381
      %v4435 = vpop.f32.mrf.mxu0
      %v4436 = vadd.f32 0.0, %v4435
      %v4437 = vpop.f32.mrf.mxu0
      %v4438 = vadd.f32 0.0, %v4437
      %4439 = vdwg.mxu0
      %v4440 = vadd.f32 %v4309, %v4396
      %v4441 = vadd.f32 %v4310, %v4398
      %v4442 = vadd.f32 %v4311, %v4401
      %v4443 = vadd.f32 %v4312, %v4403
      %v4444 = vadd.f32 %v4313, %v4406
      %v4445 = vadd.f32 %v4314, %v4408
      %v4446 = vadd.f32 %v4315, %v4411
      %v4447 = vadd.f32 %v4316, %v4413
      %v4448 = vadd.f32 %v4317, %v4416
      %v4449 = vadd.f32 %v4318, %v4418
      %v4450 = vadd.f32 %v4319, %v4421
      %v4451 = vadd.f32 %v4320, %v4423
      %v4452 = vadd.f32 %v4321, %v4426
      %v4453 = vadd.f32 %v4322, %v4428
      %v4454 = vadd.f32 %v4323, %v4431
      %v4455 = vadd.f32 %v4324, %v4433
      %v4456 = vadd.f32 %v4325, %v4436
      %v4457 = vadd.f32 %v4326, %v4438
      %v4458 = vld [vmem:[#allocation3 + $0x3a] sm:$0xff]
      %v4459 = vld [vmem:[#allocation3 + $0x42] sm:$0xff]
      %v4460 = vld [vmem:[#allocation3 + $0x4a] sm:$0xff]
      %v4461 = vld [vmem:[#allocation3 + $0x52] sm:$0xff]
      %v4462 = vld [vmem:[#allocation3 + $0x5a] sm:$0xff]
      %v4463 = vld [vmem:[#allocation3 + $0x62] sm:$0xff]
      %v4464 = vld [vmem:[#allocation3 + $0x6a] sm:$0xff]
      %v4465 = vld [vmem:[#allocation3 + $0x72] sm:$0xff]
      %v4466 = vld [vmem:[#allocation3 + $0x7a] sm:$0xff]
      %v4467 = vld [vmem:[#allocation3 + $0x82] sm:$0xff]
      %v4468 = vld [vmem:[#allocation3 + $0x8a] sm:$0xff]
      %v4469 = vld [vmem:[#allocation3 + $0x92] sm:$0xff]
      %v4470 = vld [vmem:[#allocation3 + $0x9a] sm:$0xff]
      %v4471 = vld [vmem:[#allocation3 + $0xa2] sm:$0xff]
      %v4472 = vld [vmem:[#allocation3 + $0xaa] sm:$0xff]
      %v4473 = vld [vmem:[#allocation3 + $0xb2] sm:$0xff]
      %v4474 = vld [vmem:[#allocation3 + $0xba] sm:$0xff]
      %v4475 = vld [vmem:[#allocation3 + $0xc2] sm:$0xf]
      %v4476 = vpack.c.bf16 %v4459, %v4458
      %v4477 = vpack.c.bf16 %v4461, %v4460
      %v4478 = vpack.c.bf16 %v4463, %v4462
      %v4479 = vpack.c.bf16 %v4465, %v4464
      %v4480 = vpack.c.bf16 %v4467, %v4466
      %v4481 = vpack.c.bf16 %v4469, %v4468
      %v4482 = vpack.c.bf16 %v4471, %v4470
      %v4483 = vpack.c.bf16 %v4473, %v4472
      %v4484 = vpack.c.bf16 %v4475, %v4474
      %s4485 = scalar_lea.vmem %s3, 88
      %v4486 = vld [vmem:[%s4485] sm:$0x7]
      %v4488 = vsel %vm405, %v4476, 0
      %v4491 = vsel %vm405, %v4477, 0
      %v4494 = vsel %vm405, %v4478, 0
      %v4497 = vsel %vm405, %v4479, 0
      %v4500 = vsel %vm405, %v4480, 0
      %v4503 = vsel %vm405, %v4481, 0
      %v4506 = vsel %vm405, %v4482, 0
      %v4509 = vsel %vm405, %v4483, 0
      %v4512 = vsel %vm405, %v4484, 0
      %v4515 = vsel %vm1696, %v4486, 0
      %4517 = vmatpush.bf16.msra.mxu0 0
      %4518 = vmatpush.bf16.msra.mxu0 0
      %4519 = vmatpush.bf16.msra.mxu0 0
      %4520 = vmatpush.bf16.msra.mxu0 0
      %4521 = vmatpush.bf16.msra.mxu0 0
      %4522 = vmatpush.bf16.msra.mxu0 0
      %4523 = vmatpush.bf16.msra.mxu0 0
      %4524 = vmatpush.bf16.msra.mxu0 %v4515
      %4525 = vmatmul.bf16.gmra.mxu0 %v4488
      %v4526 = vpop.f32.mrf.mxu0
      %v4527 = vadd.f32 0.0, %v4526
      %v4528 = vpop.f32.mrf.mxu0
      %v4529 = vadd.f32 0.0, %v4528
      %4530 = vmatmul.bf16.gmra.mxu0 %v4491
      %v4531 = vpop.f32.mrf.mxu0
      %v4532 = vadd.f32 0.0, %v4531
      %v4533 = vpop.f32.mrf.mxu0
      %v4534 = vadd.f32 0.0, %v4533
      %4535 = vmatmul.bf16.gmra.mxu0 %v4494
      %v4536 = vpop.f32.mrf.mxu0
      %v4537 = vadd.f32 0.0, %v4536
      %v4538 = vpop.f32.mrf.mxu0
      %v4539 = vadd.f32 0.0, %v4538
      %4540 = vmatmul.bf16.gmra.mxu0 %v4497
      %v4541 = vpop.f32.mrf.mxu0
      %v4542 = vadd.f32 0.0, %v4541
      %v4543 = vpop.f32.mrf.mxu0
      %v4544 = vadd.f32 0.0, %v4543
      %4545 = vmatmul.bf16.gmra.mxu0 %v4500
      %v4546 = vpop.f32.mrf.mxu0
      %v4547 = vadd.f32 0.0, %v4546
      %v4548 = vpop.f32.mrf.mxu0
      %v4549 = vadd.f32 0.0, %v4548
      %4550 = vmatmul.bf16.gmra.mxu0 %v4503
      %v4551 = vpop.f32.mrf.mxu0
      %v4552 = vadd.f32 0.0, %v4551
      %v4553 = vpop.f32.mrf.mxu0
      %v4554 = vadd.f32 0.0, %v4553
      %4555 = vmatmul.bf16.gmra.mxu0 %v4506
      %v4556 = vpop.f32.mrf.mxu0
      %v4557 = vadd.f32 0.0, %v4556
      %v4558 = vpop.f32.mrf.mxu0
      %v4559 = vadd.f32 0.0, %v4558
      %4560 = vmatmul.bf16.gmra.mxu0 %v4509
      %v4561 = vpop.f32.mrf.mxu0
      %v4562 = vadd.f32 0.0, %v4561
      %v4563 = vpop.f32.mrf.mxu0
      %v4564 = vadd.f32 0.0, %v4563
      %4565 = vmatmul.bf16.gmra.mxu0 %v4512
      %v4566 = vpop.f32.mrf.mxu0
      %v4567 = vadd.f32 0.0, %v4566
      %v4568 = vpop.f32.mrf.mxu0
      %v4569 = vadd.f32 0.0, %v4568
      %4570 = vdwg.mxu0
      %v4571 = vadd.f32 %v4440, %v4527
      %v4572 = vadd.f32 %v4441, %v4529
      %v4573 = vadd.f32 %v4442, %v4532
      %v4574 = vadd.f32 %v4443, %v4534
      %v4575 = vadd.f32 %v4444, %v4537
      %v4576 = vadd.f32 %v4445, %v4539
      %v4577 = vadd.f32 %v4446, %v4542
      %v4578 = vadd.f32 %v4447, %v4544
      %v4579 = vadd.f32 %v4448, %v4547
      %v4580 = vadd.f32 %v4449, %v4549
      %v4581 = vadd.f32 %v4450, %v4552
      %v4582 = vadd.f32 %v4451, %v4554
      %v4583 = vadd.f32 %v4452, %v4557
      %v4584 = vadd.f32 %v4453, %v4559
      %v4585 = vadd.f32 %v4454, %v4562
      %v4586 = vadd.f32 %v4455, %v4564
      %v4587 = vadd.f32 %v4456, %v4567
      %v4588 = vadd.f32 %v4457, %v4569
      %v4589 = vld [vmem:[#allocation3 + $0x3b] sm:$0xff]
      %v4590 = vld [vmem:[#allocation3 + $0x43] sm:$0xff]
      %v4591 = vld [vmem:[#allocation3 + $0x4b] sm:$0xff]
      %v4592 = vld [vmem:[#allocation3 + $0x53] sm:$0xff]
      %v4593 = vld [vmem:[#allocation3 + $0x5b] sm:$0xff]
      %v4594 = vld [vmem:[#allocation3 + $0x63] sm:$0xff]
      %v4595 = vld [vmem:[#allocation3 + $0x6b] sm:$0xff]
      %v4596 = vld [vmem:[#allocation3 + $0x73] sm:$0xff]
      %v4597 = vld [vmem:[#allocation3 + $0x7b] sm:$0xff]
      %v4598 = vld [vmem:[#allocation3 + $0x83] sm:$0xff]
      %v4599 = vld [vmem:[#allocation3 + $0x8b] sm:$0xff]
      %v4600 = vld [vmem:[#allocation3 + $0x93] sm:$0xff]
      %v4601 = vld [vmem:[#allocation3 + $0x9b] sm:$0xff]
      %v4602 = vld [vmem:[#allocation3 + $0xa3] sm:$0xff]
      %v4603 = vld [vmem:[#allocation3 + $0xab] sm:$0xff]
      %v4604 = vld [vmem:[#allocation3 + $0xb3] sm:$0xff]
      %v4605 = vld [vmem:[#allocation3 + $0xbb] sm:$0xff]
      %v4606 = vld [vmem:[#allocation3 + $0xc3] sm:$0xf]
      %v4607 = vpack.c.bf16 %v4590, %v4589
      %v4608 = vpack.c.bf16 %v4592, %v4591
      %v4609 = vpack.c.bf16 %v4594, %v4593
      %v4610 = vpack.c.bf16 %v4596, %v4595
      %v4611 = vpack.c.bf16 %v4598, %v4597
      %v4612 = vpack.c.bf16 %v4600, %v4599
      %v4613 = vpack.c.bf16 %v4602, %v4601
      %v4614 = vpack.c.bf16 %v4604, %v4603
      %v4615 = vpack.c.bf16 %v4606, %v4605
      %s4616 = scalar_lea.vmem %s3, 92
      %v4617 = vld [vmem:[%s4616] sm:$0x7]
      %v4619 = vsel %vm405, %v4607, 0
      %v4622 = vsel %vm405, %v4608, 0
      %v4625 = vsel %vm405, %v4609, 0
      %v4628 = vsel %vm405, %v4610, 0
      %v4631 = vsel %vm405, %v4611, 0
      %v4634 = vsel %vm405, %v4612, 0
      %v4637 = vsel %vm405, %v4613, 0
      %v4640 = vsel %vm405, %v4614, 0
      %v4643 = vsel %vm405, %v4615, 0
      %v4646 = vsel %vm1696, %v4617, 0
      %4648 = vmatpush.bf16.msra.mxu0 0
      %4649 = vmatpush.bf16.msra.mxu0 0
      %4650 = vmatpush.bf16.msra.mxu0 0
      %4651 = vmatpush.bf16.msra.mxu0 0
      %4652 = vmatpush.bf16.msra.mxu0 0
      %4653 = vmatpush.bf16.msra.mxu0 0
      %4654 = vmatpush.bf16.msra.mxu0 0
      %4655 = vmatpush.bf16.msra.mxu0 %v4646
      %4656 = vmatmul.bf16.gmra.mxu0 %v4619
      %v4657 = vpop.f32.mrf.mxu0
      %v4658 = vadd.f32 0.0, %v4657
      %v4659 = vpop.f32.mrf.mxu0
      %v4660 = vadd.f32 0.0, %v4659
      %4661 = vmatmul.bf16.gmra.mxu0 %v4622
      %v4662 = vpop.f32.mrf.mxu0
      %v4663 = vadd.f32 0.0, %v4662
      %v4664 = vpop.f32.mrf.mxu0
      %v4665 = vadd.f32 0.0, %v4664
      %4666 = vmatmul.bf16.gmra.mxu0 %v4625
      %v4667 = vpop.f32.mrf.mxu0
      %v4668 = vadd.f32 0.0, %v4667
      %v4669 = vpop.f32.mrf.mxu0
      %v4670 = vadd.f32 0.0, %v4669
      %4671 = vmatmul.bf16.gmra.mxu0 %v4628
      %v4672 = vpop.f32.mrf.mxu0
      %v4673 = vadd.f32 0.0, %v4672
      %v4674 = vpop.f32.mrf.mxu0
      %v4675 = vadd.f32 0.0, %v4674
      %4676 = vmatmul.bf16.gmra.mxu0 %v4631
      %v4677 = vpop.f32.mrf.mxu0
      %v4678 = vadd.f32 0.0, %v4677
      %v4679 = vpop.f32.mrf.mxu0
      %v4680 = vadd.f32 0.0, %v4679
      %4681 = vmatmul.bf16.gmra.mxu0 %v4634
      %v4682 = vpop.f32.mrf.mxu0
      %v4683 = vadd.f32 0.0, %v4682
      %v4684 = vpop.f32.mrf.mxu0
      %v4685 = vadd.f32 0.0, %v4684
      %4686 = vmatmul.bf16.gmra.mxu0 %v4637
      %v4687 = vpop.f32.mrf.mxu0
      %v4688 = vadd.f32 0.0, %v4687
      %v4689 = vpop.f32.mrf.mxu0
      %v4690 = vadd.f32 0.0, %v4689
      %4691 = vmatmul.bf16.gmra.mxu0 %v4640
      %v4692 = vpop.f32.mrf.mxu0
      %v4693 = vadd.f32 0.0, %v4692
      %v4694 = vpop.f32.mrf.mxu0
      %v4695 = vadd.f32 0.0, %v4694
      %4696 = vmatmul.bf16.gmra.mxu0 %v4643
      %v4697 = vpop.f32.mrf.mxu0
      %v4698 = vadd.f32 0.0, %v4697
      %v4699 = vpop.f32.mrf.mxu0
      %v4700 = vadd.f32 0.0, %v4699
      %4701 = vdwg.mxu0
      %v4702 = vadd.f32 %v4571, %v4658
      %v4703 = vadd.f32 %v4572, %v4660
      %v4704 = vadd.f32 %v4573, %v4663
      %v4705 = vadd.f32 %v4574, %v4665
      %v4706 = vadd.f32 %v4575, %v4668
      %v4707 = vadd.f32 %v4576, %v4670
      %v4708 = vadd.f32 %v4577, %v4673
      %v4709 = vadd.f32 %v4578, %v4675
      %v4710 = vadd.f32 %v4579, %v4678
      %v4711 = vadd.f32 %v4580, %v4680
      %v4712 = vadd.f32 %v4581, %v4683
      %v4713 = vadd.f32 %v4582, %v4685
      %v4714 = vadd.f32 %v4583, %v4688
      %v4715 = vadd.f32 %v4584, %v4690
      %v4716 = vadd.f32 %v4585, %v4693
      %v4717 = vadd.f32 %v4586, %v4695
      %v4718 = vadd.f32 %v4587, %v4698
      %v4719 = vadd.f32 %v4588, %v4700
      %v4720 = vld [vmem:[#allocation3 + $0x3c] sm:$0xff]
      %v4721 = vld [vmem:[#allocation3 + $0x44] sm:$0xff]
      %v4722 = vld [vmem:[#allocation3 + $0x4c] sm:$0xff]
      %v4723 = vld [vmem:[#allocation3 + $0x54] sm:$0xff]
      %v4724 = vld [vmem:[#allocation3 + $0x5c] sm:$0xff]
      %v4725 = vld [vmem:[#allocation3 + $0x64] sm:$0xff]
      %v4726 = vld [vmem:[#allocation3 + $0x6c] sm:$0xff]
      %v4727 = vld [vmem:[#allocation3 + $0x74] sm:$0xff]
      %v4728 = vld [vmem:[#allocation3 + $0x7c] sm:$0xff]
      %v4729 = vld [vmem:[#allocation3 + $0x84] sm:$0xff]
      %v4730 = vld [vmem:[#allocation3 + $0x8c] sm:$0xff]
      %v4731 = vld [vmem:[#allocation3 + $0x94] sm:$0xff]
      %v4732 = vld [vmem:[#allocation3 + $0x9c] sm:$0xff]
      %v4733 = vld [vmem:[#allocation3 + $0xa4] sm:$0xff]
      %v4734 = vld [vmem:[#allocation3 + $0xac] sm:$0xff]
      %v4735 = vld [vmem:[#allocation3 + $0xb4] sm:$0xff]
      %v4736 = vld [vmem:[#allocation3 + $0xbc] sm:$0xff]
      %v4737 = vld [vmem:[#allocation3 + $0xc4] sm:$0xf]
      %v4738 = vpack.c.bf16 %v4721, %v4720
      %v4739 = vpack.c.bf16 %v4723, %v4722
      %v4740 = vpack.c.bf16 %v4725, %v4724
      %v4741 = vpack.c.bf16 %v4727, %v4726
      %v4742 = vpack.c.bf16 %v4729, %v4728
      %v4743 = vpack.c.bf16 %v4731, %v4730
      %v4744 = vpack.c.bf16 %v4733, %v4732
      %v4745 = vpack.c.bf16 %v4735, %v4734
      %v4746 = vpack.c.bf16 %v4737, %v4736
      %s4747 = scalar_lea.vmem %s3, 96
      %v4748 = vld [vmem:[%s4747] sm:$0x7]
      %v4750 = vsel %vm405, %v4738, 0
      %v4753 = vsel %vm405, %v4739, 0
      %v4756 = vsel %vm405, %v4740, 0
      %v4759 = vsel %vm405, %v4741, 0
      %v4762 = vsel %vm405, %v4742, 0
      %v4765 = vsel %vm405, %v4743, 0
      %v4768 = vsel %vm405, %v4744, 0
      %v4771 = vsel %vm405, %v4745, 0
      %v4774 = vsel %vm405, %v4746, 0
      %v4777 = vsel %vm1696, %v4748, 0
      %4779 = vmatpush.bf16.msra.mxu0 0
      %4780 = vmatpush.bf16.msra.mxu0 0
      %4781 = vmatpush.bf16.msra.mxu0 0
      %4782 = vmatpush.bf16.msra.mxu0 0
      %4783 = vmatpush.bf16.msra.mxu0 0
      %4784 = vmatpush.bf16.msra.mxu0 0
      %4785 = vmatpush.bf16.msra.mxu0 0
      %4786 = vmatpush.bf16.msra.mxu0 %v4777
      %4787 = vmatmul.bf16.gmra.mxu0 %v4750
      %v4788 = vpop.f32.mrf.mxu0
      %v4789 = vadd.f32 0.0, %v4788
      %v4790 = vpop.f32.mrf.mxu0
      %v4791 = vadd.f32 0.0, %v4790
      %4792 = vmatmul.bf16.gmra.mxu0 %v4753
      %v4793 = vpop.f32.mrf.mxu0
      %v4794 = vadd.f32 0.0, %v4793
      %v4795 = vpop.f32.mrf.mxu0
      %v4796 = vadd.f32 0.0, %v4795
      %4797 = vmatmul.bf16.gmra.mxu0 %v4756
      %v4798 = vpop.f32.mrf.mxu0
      %v4799 = vadd.f32 0.0, %v4798
      %v4800 = vpop.f32.mrf.mxu0
      %v4801 = vadd.f32 0.0, %v4800
      %4802 = vmatmul.bf16.gmra.mxu0 %v4759
      %v4803 = vpop.f32.mrf.mxu0
      %v4804 = vadd.f32 0.0, %v4803
      %v4805 = vpop.f32.mrf.mxu0
      %v4806 = vadd.f32 0.0, %v4805
      %4807 = vmatmul.bf16.gmra.mxu0 %v4762
      %v4808 = vpop.f32.mrf.mxu0
      %v4809 = vadd.f32 0.0, %v4808
      %v4810 = vpop.f32.mrf.mxu0
      %v4811 = vadd.f32 0.0, %v4810
      %4812 = vmatmul.bf16.gmra.mxu0 %v4765
      %v4813 = vpop.f32.mrf.mxu0
      %v4814 = vadd.f32 0.0, %v4813
      %v4815 = vpop.f32.mrf.mxu0
      %v4816 = vadd.f32 0.0, %v4815
      %4817 = vmatmul.bf16.gmra.mxu0 %v4768
      %v4818 = vpop.f32.mrf.mxu0
      %v4819 = vadd.f32 0.0, %v4818
      %v4820 = vpop.f32.mrf.mxu0
      %v4821 = vadd.f32 0.0, %v4820
      %4822 = vmatmul.bf16.gmra.mxu0 %v4771
      %v4823 = vpop.f32.mrf.mxu0
      %v4824 = vadd.f32 0.0, %v4823
      %v4825 = vpop.f32.mrf.mxu0
      %v4826 = vadd.f32 0.0, %v4825
      %4827 = vmatmul.bf16.gmra.mxu0 %v4774
      %v4828 = vpop.f32.mrf.mxu0
      %v4829 = vadd.f32 0.0, %v4828
      %v4830 = vpop.f32.mrf.mxu0
      %v4831 = vadd.f32 0.0, %v4830
      %4832 = vdwg.mxu0
      %v4833 = vadd.f32 %v4702, %v4789
      %v4834 = vadd.f32 %v4703, %v4791
      %v4835 = vadd.f32 %v4704, %v4794
      %v4836 = vadd.f32 %v4705, %v4796
      %v4837 = vadd.f32 %v4706, %v4799
      %v4838 = vadd.f32 %v4707, %v4801
      %v4839 = vadd.f32 %v4708, %v4804
      %v4840 = vadd.f32 %v4709, %v4806
      %v4841 = vadd.f32 %v4710, %v4809
      %v4842 = vadd.f32 %v4711, %v4811
      %v4843 = vadd.f32 %v4712, %v4814
      %v4844 = vadd.f32 %v4713, %v4816
      %v4845 = vadd.f32 %v4714, %v4819
      %v4846 = vadd.f32 %v4715, %v4821
      %v4847 = vadd.f32 %v4716, %v4824
      %v4848 = vadd.f32 %v4717, %v4826
      %v4849 = vadd.f32 %v4718, %v4829
      %v4850 = vadd.f32 %v4719, %v4831
      %v4852 = vperm.slane %v1611, 0
      %v4854 = vadd.f32 %v4833, %v4852
      %v4855 = vadd.f32 %v4834, %v4852
      %v4856 = vadd.f32 %v4835, %v4852
      %v4857 = vadd.f32 %v4836, %v4852
      %v4858 = vadd.f32 %v4837, %v4852
      %v4859 = vadd.f32 %v4838, %v4852
      %v4860 = vadd.f32 %v4839, %v4852
      %v4861 = vadd.f32 %v4840, %v4852
      %v4862 = vadd.f32 %v4841, %v4852
      %v4863 = vadd.f32 %v4842, %v4852
      %v4864 = vadd.f32 %v4843, %v4852
      %v4865 = vadd.f32 %v4844, %v4852
      %v4866 = vadd.f32 %v4845, %v4852
      %v4867 = vadd.f32 %v4846, %v4852
      %v4868 = vadd.f32 %v4847, %v4852
      %v4869 = vadd.f32 %v4848, %v4852
      %v4870 = vadd.f32 %v4849, %v4852
      %v4871 = vadd.f32 %v4850, %v4852
      %v4872 = vmax.f32 %v4854, 0.0
      %v4873 = vmax.f32 %v4855, 0.0
      %v4874 = vmax.f32 %v4856, 0.0
      %v4875 = vmax.f32 %v4857, 0.0
      %v4876 = vmax.f32 %v4858, 0.0
      %v4877 = vmax.f32 %v4859, 0.0
      %v4878 = vmax.f32 %v4860, 0.0
      %v4879 = vmax.f32 %v4861, 0.0
      %v4880 = vmax.f32 %v4862, 0.0
      %v4881 = vmax.f32 %v4863, 0.0
      %v4882 = vmax.f32 %v4864, 0.0
      %v4883 = vmax.f32 %v4865, 0.0
      %v4884 = vmax.f32 %v4866, 0.0
      %v4885 = vmax.f32 %v4867, 0.0
      %v4886 = vmax.f32 %v4868, 0.0
      %v4887 = vmax.f32 %v4869, 0.0
      %v4888 = vmax.f32 %v4870, 0.0
      %v4889 = vmax.f32 %v4871, 0.0
      %vm4890 = vcmask 130048
      %4891 = vst.msk [vmem:[#allocation4] sm:$0xff] %vm4890, %v4872
      %4892 = vst.msk [vmem:[#allocation4 + $0x8] sm:$0xff] %vm4890, %v4873
      %4893 = vst.msk [vmem:[#allocation4 + $0x10] sm:$0xff] %vm4890, %v4874
      %4894 = vst.msk [vmem:[#allocation4 + $0x18] sm:$0xff] %vm4890, %v4875
      %4895 = vst.msk [vmem:[#allocation4 + $0x20] sm:$0xff] %vm4890, %v4876
      %4896 = vst.msk [vmem:[#allocation4 + $0x28] sm:$0xff] %vm4890, %v4877
      %4897 = vst.msk [vmem:[#allocation4 + $0x30] sm:$0xff] %vm4890, %v4878
      %4898 = vst.msk [vmem:[#allocation4 + $0x38] sm:$0xff] %vm4890, %v4879
      %4899 = vst.msk [vmem:[#allocation4 + $0x40] sm:$0xff] %vm4890, %v4880
      %4900 = vst.msk [vmem:[#allocation4 + $0x48] sm:$0xff] %vm4890, %v4881
      %4901 = vst.msk [vmem:[#allocation4 + $0x50] sm:$0xff] %vm4890, %v4882
      %4902 = vst.msk [vmem:[#allocation4 + $0x58] sm:$0xff] %vm4890, %v4883
      %4903 = vst.msk [vmem:[#allocation4 + $0x60] sm:$0xff] %vm4890, %v4884
      %4904 = vst.msk [vmem:[#allocation4 + $0x68] sm:$0xff] %vm4890, %v4885
      %4905 = vst.msk [vmem:[#allocation4 + $0x70] sm:$0xff] %vm4890, %v4886
      %4906 = vst.msk [vmem:[#allocation4 + $0x78] sm:$0xff] %vm4890, %v4887
      %4907 = vst.msk [vmem:[#allocation4 + $0x80] sm:$0xff] %vm4890, %v4888
      %vm4908 = vcmask 125952
      %4909 = vst.msk [vmem:[#allocation4 + $0x88] sm:$0xf] %vm4908, %v4889
      %v4910 = vld [vmem:[#allocation4] ss:$2 sm:$0x1f]
      %s4911 = scalar_lea.vmem [#allocation4], 1
      %v4912 = vld [vmem:[%s4911] ss:$2 sm:$0x1f]
      %s4913 = scalar_lea.vmem [#allocation4], 14
      %v4914 = vld [vmem:[%s4913] ss:$2 sm:$0x1f]
      %s4915 = scalar_lea.vmem [#allocation4], 15
      %v4916 = vld [vmem:[%s4915] ss:$2 sm:$0x1f]
      %v4917 = vmax.f32 %v4910, %v4912
      %v4918 = vmax.f32 %v4914, %v4916
      %v4919 = vmax.f32 %v4917, %v4918
      %v4920 = vpack.c.bf16 %v4919, %v4919
      %vm4921 = vcmask 124928
      %vm4922 = vsmask.f32 2304
      %vm4923 = vmand %vm4921, %vm4922
      %v4924 = vld [vmem:[%s224] sm:$0x7]
      %v4925 = vsel %vm4923, %v4920, %v4924
      %4926 = vst [vmem:[%s224] sm:$0x7] %v4925
      %s4927 = scalar_lea.vmem [#allocation4], 28
      %v4928 = vld [vmem:[%s4927] ss:$2 sm:$0x1f]
      %s4929 = scalar_lea.vmem [#allocation4], 29
      %v4930 = vld [vmem:[%s4929] ss:$2 sm:$0x1f]
      %s4931 = scalar_lea.vmem [#allocation4], 42
      %v4932 = vld [vmem:[%s4931] ss:$2 sm:$0x1f]
      %s4933 = scalar_lea.vmem [#allocation4], 43
      %v4934 = vld [vmem:[%s4933] ss:$2 sm:$0x1f]
      %v4935 = vmax.f32 %v4928, %v4930
      %v4936 = vmax.f32 %v4932, %v4934
      %v4937 = vmax.f32 %v4935, %v4936
      %v4938 = vpack.c.bf16 %v4937, %v4937
      %v4940 = vshrl.u32 %v4938, 16
      %v4942 = vrot.slane %v4940, 5
      %v4943 = vshll.u32 %v4938, 16
      %v4945 = vrot.slane %v4943, 6
      %v4946 = vor.u32 %v4942, %v4945
      %v4947 = vrot.slane %v4946, 4
      %vm4950 = vcmask 125954
      %vm4951 = vsmask.f32 7946
      %vm4952 = vmand %vm4950, %vm4951
      %v4953 = vld [vmem:[%s224] sm:$0xc]
      %v4954 = vsel %vm4952, %v4946, %v4953
      %4955 = vst [vmem:[%s224] sm:$0xc] %v4954
      %vm4956 = vcmask 122880
      %4957 = vst.msk [vmem:[%s224 + $0x4] sm:$0x1] %vm4956, %v4947
      %s4958 = scalar_lea.vmem [#allocation4], 56
      %v4959 = vld [vmem:[%s4958] ss:$2 sm:$0x1f]
      %s4960 = scalar_lea.vmem [#allocation4], 57
      %v4961 = vld [vmem:[%s4960] ss:$2 sm:$0x1f]
      %s4962 = scalar_lea.vmem [#allocation4], 70
      %v4963 = vld [vmem:[%s4962] ss:$2 sm:$0x1f]
      %s4964 = scalar_lea.vmem [#allocation4], 71
      %v4965 = vld [vmem:[%s4964] ss:$2 sm:$0x1f]
      %v4966 = vmax.f32 %v4959, %v4961
      %v4967 = vmax.f32 %v4963, %v4965
      %v4968 = vmax.f32 %v4966, %v4967
      %v4969 = vpack.c.bf16 %v4968, %v4968
      %v4971 = vrot.slane %v4969, 7
      %vm4973 = vcmask 125953
      %vm4974 = vsmask.f32 3328
      %vm4975 = vmand %vm4973, %vm4974
      %v4976 = vld [vmem:[%s224 + $0x4] sm:$0xe]
      %v4977 = vsel %vm4975, %v4971, %v4976
      %4978 = vst [vmem:[%s224 + $0x4] sm:$0xe] %v4977
      %s4979 = scalar_lea.vmem [#allocation4], 84
      %v4980 = vld [vmem:[%s4979] ss:$2 sm:$0x1f]
      %s4981 = scalar_lea.vmem [#allocation4], 85
      %v4982 = vld [vmem:[%s4981] ss:$2 sm:$0x1f]
      %s4983 = scalar_lea.vmem [#allocation4], 98
      %v4984 = vld [vmem:[%s4983] ss:$2 sm:$0x1f]
      %s4985 = scalar_lea.vmem [#allocation4], 99
      %v4986 = vld [vmem:[%s4985] ss:$2 sm:$0x1f]
      %v4987 = vmax.f32 %v4980, %v4982
      %v4988 = vmax.f32 %v4984, %v4986
      %v4989 = vmax.f32 %v4987, %v4988
      %v4990 = vpack.c.bf16 %v4989, %v4989
      %v4992 = vshll.u32 %v4990, 16
      %v4994 = vrot.slane %v4992, 5
      %v4995 = vshrl.u32 %v4990, 16
      %v4997 = vrot.slane %v4995, 4
      %v4998 = vor.u32 %v4997, %v4994
      %v4999 = vrot.slane %v4998, 4
      %vm5002 = vcmask 125955
      %vm5003 = vsmask.f32 7950
      %vm5004 = vmand %vm5002, %vm5003
      %v5005 = vld [vmem:[%s224 + $0x4] sm:$0x8]
      %v5006 = vsel %vm5004, %v4994, %v5005
      %5007 = vst [vmem:[%s224 + $0x4] sm:$0x8] %v5006
      %vm5008 = vcmask 123904
      %5009 = vst.msk [vmem:[%s224 + $0x8] sm:$0x3] %vm5008, %v4999
      %s5010 = scalar_lea.vmem [#allocation4], 112
      %v5011 = vld [vmem:[%s5010] ss:$2 sm:$0x1f]
      %s5012 = scalar_lea.vmem [#allocation4], 113
      %v5013 = vld [vmem:[%s5012] ss:$2 sm:$0x1f]
      %s5014 = scalar_lea.vmem [#allocation4], 126
      %v5015 = vld [vmem:[%s5014] ss:$2 sm:$0x1f]
      %s5016 = scalar_lea.vmem [#allocation4], 127
      %v5017 = vld [vmem:[%s5016] ss:$2 sm:$0x1f]
      %v5018 = vmax.f32 %v5011, %v5013
      %v5019 = vmax.f32 %v5015, %v5017
      %v5020 = vmax.f32 %v5018, %v5019
      %v5021 = vpack.c.bf16 %v5020, %v5020
      %v5023 = vrot.slane %v5021, 6
      %v5024 = vrot.slane %v5023, 4
      %vm5027 = vcmask 125954
      %5028 = vst.msk [vmem:[%s224 + $0x8] sm:$0xc] %vm5027, %v5023
      %vm5029 = vcmask 122880
      %vm5030 = vsmask.f32 256
      %vm5031 = vmand %vm5029, %vm5030
      %v5032 = vld [vmem:[%s224 + $0xc] sm:$0x1]
      %v5033 = vsel %vm5031, %v5024, %v5032
      %5034 = vst [vmem:[%s224 + $0xc] sm:$0x1] %v5033
      %p5035 = scmp.lt.s32.totalorder %s16, 1
      %s5036 = scalar_select %p5035, %s16, 1
      %s5037 = smul.addr %s5036, 4
      %s5038 = smul.addr %s5037, 4
      %s5039 = scalar_lea.vmem %s5, %s5038
      // Predicated region
      $region41: #{net_forward.2} parent=39 // pred_check
        %p5040 = pneg %p144
      $region42: #{net_forward.2} parent=39 // pred_check_branch
        %5042 = sbr.rel (%p5040) target = $region44
      $region43: #{net_forward.2} parent=39 // pred_region
        _
      $region44: #{net_forward.2} parent=39 // pred_fallthru
        _
    $region40: #{net_forward.2} parent=5 // pred_fallthru
      _
    %p5043 = scmp.le.s32.totalorder 2, %s11
    // Predicated region
    $region45: #{net_forward.2} parent=5 // pred_check
      %p5044 = pneg %p5043
    $region46: #{net_forward.2} parent=5 // pred_check_branch
      %5046 = sbr.rel (%p5044) target = $region48
    $region47: #{net_forward.2} parent=5 // pred_region
      %s5047 = ssub.s32 %s11, 2
      // Predicated region
      $region49: #{net_forward.2} parent=47 // pred_check
        %p5048 = pneg %p150
      $region50: #{net_forward.2} parent=47 // pred_check_branch
        %5050 = sbr.rel (%p5048) target = $region52
      $region51: #{net_forward.2} parent=47 // pred_region
        %p5051 = scmp.lt.s32.totalorder %s17, 1
        %s5052 = scalar_select %p5051, %s17, 1
        %s5053 = smul.addr %s5052, 4
        %s5054 = smul.addr %s5053, 4
        %s5055 = scalar_lea.vmem %s5, %s5054
      $region52: #{net_forward.2} parent=47 // pred_fallthru
        _
    $region48: #{net_forward.2} parent=5 // pred_fallthru
      _
  $region6: #{net_forward.2} parent=0 // loop_footer
    %s15 = sadd.s32 1, %s11
  $region7: #{net_forward.2} parent=0 // loop_footer_branch
    %10 = sbr.rel target = $region3
  $region8: #{net_forward.2} parent=0 // loop_exit
    _

// kernel: net_forward.3
$region0: #{net_forward.3}
  #allocation0 [shape = 'u32[]', space=smem, size = 0x4, offset = 0x4, fixed_abs, tag = 'smem constant byte address 0x4 - core index']
  #allocation1 [shape = 'u32[72,128]{1,0:T(1,128)}', space=vmem, size = 0x9000, scoped, tag = 'internal scratch']
  %s0 = inlined_call_operand.vmem [shape: bf16[2,400], index: 0, kind: input, shape index: {}]
  %s1 = inlined_call_operand.vmem [shape: bf16[400,128], index: 1, kind: input, shape index: {}]
  %s2 = inlined_call_operand.vmem [shape: f32[1,128], index: 2, kind: input, shape index: {}]
  %s3 = inlined_call_operand.vmem [shape: bf16[128,128], index: 3, kind: input, shape index: {}]
  %s4 = inlined_call_operand.vmem [shape: f32[1,128], index: 4, kind: input, shape index: {}]
  %s5 = inlined_call_operand.vmem [shape: bf16[128,128], index: 5, kind: input, shape index: {}]
  %s6 = inlined_call_operand.vmem [shape: f32[1,128], index: 6, kind: input, shape index: {}]
  %s7 = inlined_call_operand.hbm [shape: f32[2,128], index: 7, kind: output, shape index: {}]
  %s8 = sld [smem:[#allocation0]]
  $region38: #{net_forward.3} parent=0
    _
  %s10 = ssub.s32 1, %s8
  %s11 = scalar_select 0, %s10, %s8
  $region1: #{net_forward.3} parent=0
    #allocation2 [shape = 'u8[1024]{0}', space=vmem, size = 0x400, scoped, tag = 'output window, operand 0, single buffered']
    #allocation3 [shape = 's32[1]{0}', space=sflag, size = 0x4, scoped, tag = 'scoped memory for net_forward.3']
    %12 = vsyncpa [#allocation3], 0
    // Predicated region
    $region2: #{net_forward.3} parent=1 // pred_check
      _
    $region3: #{net_forward.3} parent=1 // pred_check_branch
      %14 = sbr.rel (0) target = $region5
    $region4: #{net_forward.3} parent=1 // pred_region
      _
    $region5: #{net_forward.3} parent=1 // pred_fallthru
      _
    // Predicated region
    $region6: #{net_forward.3} parent=1 // pred_check
      _
    $region7: #{net_forward.3} parent=1 // pred_check_branch
      %16 = sbr.rel (0) target = $region9
    $region8: #{net_forward.3} parent=1 // pred_region
      _
    $region9: #{net_forward.3} parent=1 // pred_fallthru
      _
    // Predicated region
    $region10: #{net_forward.3} parent=1 // pred_check
      _
    $region11: #{net_forward.3} parent=1 // pred_check_branch
      %18 = sbr.rel (0) target = $region13
    $region12: #{net_forward.3} parent=1 // pred_region
      _
    $region13: #{net_forward.3} parent=1 // pred_fallthru
      _
    // Predicated region
    $region14: #{net_forward.3} parent=1 // pred_check
      _
    $region15: #{net_forward.3} parent=1 // pred_check_branch
      %20 = sbr.rel (0) target = $region17
    $region16: #{net_forward.3} parent=1 // pred_region
      _
    $region17: #{net_forward.3} parent=1 // pred_fallthru
      _
    // Predicated region
    $region18: #{net_forward.3} parent=1 // pred_check
      _
    $region19: #{net_forward.3} parent=1 // pred_check_branch
      %22 = sbr.rel (0) target = $region21
    $region20: #{net_forward.3} parent=1 // pred_region
      _
    $region21: #{net_forward.3} parent=1 // pred_fallthru
      _
    // Predicated region
    $region22: #{net_forward.3} parent=1 // pred_check
      _
    $region23: #{net_forward.3} parent=1 // pred_check_branch
      %24 = sbr.rel (0) target = $region25
    $region24: #{net_forward.3} parent=1 // pred_region
      _
    $region25: #{net_forward.3} parent=1 // pred_fallthru
      _
    // Predicated region
    $region26: #{net_forward.3} parent=1 // pred_check
      _
    $region27: #{net_forward.3} parent=1 // pred_check_branch
      %26 = sbr.rel (0) target = $region29
    $region28: #{net_forward.3} parent=1 // pred_region
      _
    $region29: #{net_forward.3} parent=1 // pred_fallthru
      _
    %v28 = vld [vmem:[%s0] sm:$0xf]
    %v29 = vld [vmem:[%s1] sm:$0xf]
    %v30 = vld [vmem:[%s1 + $0x4] sm:$0xf]
    %v31 = vld [vmem:[%s1 + $0x8] sm:$0xf]
    %v32 = vld [vmem:[%s1 + $0xc] sm:$0xf]
    %v33 = vld [vmem:[%s1 + $0x10] sm:$0xf]
    %v34 = vld [vmem:[%s1 + $0x14] sm:$0xf]
    %v35 = vld [vmem:[%s1 + $0x18] sm:$0xf]
    %v36 = vld [vmem:[%s1 + $0x1c] sm:$0xf]
    %v37 = vld [vmem:[%s1 + $0x20] sm:$0xf]
    %v38 = vld [vmem:[%s1 + $0x24] sm:$0xf]
    %v39 = vld [vmem:[%s1 + $0x28] sm:$0xf]
    %v40 = vld [vmem:[%s1 + $0x2c] sm:$0xf]
    %v41 = vld [vmem:[%s1 + $0x30] sm:$0xf]
    %v42 = vld [vmem:[%s1 + $0x34] sm:$0xf]
    %v43 = vld [vmem:[%s1 + $0x38] sm:$0xf]
    %v44 = vld [vmem:[%s1 + $0x3c] sm:$0xf]
    %v45 = vld [vmem:[%s1 + $0x40] sm:$0xf]
    %v46 = vld [vmem:[%s1 + $0x44] sm:$0xf]
    %v47 = vld [vmem:[%s1 + $0x48] sm:$0xf]
    %v48 = vld [vmem:[%s1 + $0x4c] sm:$0xf]
    %v49 = vld [vmem:[%s1 + $0x50] sm:$0xf]
    %v50 = vld [vmem:[%s1 + $0x54] sm:$0xf]
    %v51 = vld [vmem:[%s1 + $0x58] sm:$0xf]
    %v52 = vld [vmem:[%s1 + $0x5c] sm:$0xf]
    %v53 = vld [vmem:[%s1 + $0x60] sm:$0xf]
    %v54 = vld [vmem:[%s1 + $0x64] sm:$0xf]
    %v55 = vld [vmem:[%s1 + $0x68] sm:$0xf]
    %v56 = vld [vmem:[%s1 + $0x6c] sm:$0xf]
    %v57 = vld [vmem:[%s1 + $0x70] sm:$0xf]
    %v58 = vld [vmem:[%s1 + $0x74] sm:$0xf]
    %v59 = vld [vmem:[%s1 + $0x78] sm:$0xf]
    %v60 = vld [vmem:[%s1 + $0x7c] sm:$0xf]
    %v61 = vld [vmem:[%s1 + $0x80] sm:$0xf]
    %v62 = vld [vmem:[%s1 + $0x84] sm:$0xf]
    %v63 = vld [vmem:[%s1 + $0x88] sm:$0xf]
    %v64 = vld [vmem:[%s1 + $0x8c] sm:$0xf]
    %v65 = vld [vmem:[%s1 + $0x90] sm:$0xf]
    %v66 = vld [vmem:[%s1 + $0x94] sm:$0xf]
    %v67 = vld [vmem:[%s1 + $0x98] sm:$0xf]
    %v68 = vld [vmem:[%s1 + $0x9c] sm:$0xf]
    %v69 = vld [vmem:[%s1 + $0xa0] sm:$0xf]
    %v70 = vld [vmem:[%s1 + $0xa4] sm:$0xf]
    %v71 = vld [vmem:[%s1 + $0xa8] sm:$0xf]
    %v72 = vld [vmem:[%s1 + $0xac] sm:$0xf]
    %v73 = vld [vmem:[%s1 + $0xb0] sm:$0xf]
    %v74 = vld [vmem:[%s1 + $0xb4] sm:$0xf]
    %v75 = vld [vmem:[%s1 + $0xb8] sm:$0xf]
    %v76 = vld [vmem:[%s1 + $0xbc] sm:$0xf]
    %v77 = vld [vmem:[%s1 + $0xc0] sm:$0xf]
    %v78 = vld [vmem:[%s1 + $0xc4] sm:$0xf]
    %v79 = vld [vmem:[%s2] sm:$0x1]
    %v81 = vperm.slane %v79, 0
    %84 = vst [vmem:[#allocation1] ss:$9 sm:$0xff] %v28
    %v85 = vld [vmem:[#allocation1] sm:$0xff]
    %v86 = vld [vmem:[#allocation1 + $0x9] sm:$0xff]
    %v87 = vld [vmem:[#allocation1 + $0x12] sm:$0xff]
    %v88 = vld [vmem:[#allocation1 + $0x1b] sm:$0xff]
    %v142 = vunpack.c.l.b16 %v29
    %v143 = vunpack.c.l.b16 %v30
    %v144 = vunpack.c.l.b16 %v31
    %v145 = vunpack.c.l.b16 %v32
    %v146 = vunpack.c.l.b16 %v33
    %v147 = vunpack.c.l.b16 %v34
    %v148 = vunpack.c.l.b16 %v35
    %v149 = vunpack.c.l.b16 %v36
    %v150 = vunpack.c.l.b16 %v37
    %v151 = vunpack.c.l.b16 %v38
    %v152 = vunpack.c.l.b16 %v39
    %v153 = vunpack.c.l.b16 %v40
    %v154 = vunpack.c.l.b16 %v41
    %v155 = vunpack.c.l.b16 %v42
    %v156 = vunpack.c.l.b16 %v43
    %v157 = vunpack.c.l.b16 %v44
    %v158 = vunpack.c.l.b16 %v45
    %v159 = vunpack.c.l.b16 %v46
    %v160 = vunpack.c.l.b16 %v47
    %v161 = vunpack.c.l.b16 %v48
    %v162 = vunpack.c.l.b16 %v49
    %v163 = vunpack.c.l.b16 %v50
    %v164 = vunpack.c.l.b16 %v51
    %v165 = vunpack.c.l.b16 %v52
    %v166 = vunpack.c.l.b16 %v53
    %v167 = vunpack.c.l.b16 %v54
    %v168 = vunpack.c.l.b16 %v55
    %v169 = vunpack.c.l.b16 %v56
    %v170 = vunpack.c.l.b16 %v57
    %v171 = vunpack.c.l.b16 %v58
    %v172 = vunpack.c.l.b16 %v59
    %v173 = vunpack.c.l.b16 %v60
    %v174 = vunpack.c.l.b16 %v61
    %v175 = vunpack.c.l.b16 %v62
    %v176 = vunpack.c.l.b16 %v63
    %v177 = vunpack.c.l.b16 %v64
    %v178 = vunpack.c.l.b16 %v65
    %v179 = vunpack.c.l.b16 %v66
    %v180 = vunpack.c.l.b16 %v67
    %v181 = vunpack.c.l.b16 %v68
    %v182 = vunpack.c.l.b16 %v69
    %v183 = vunpack.c.l.b16 %v70
    %v184 = vunpack.c.l.b16 %v71
    %v185 = vunpack.c.l.b16 %v72
    %v186 = vunpack.c.l.b16 %v73
    %v187 = vunpack.c.l.b16 %v74
    %v188 = vunpack.c.l.b16 %v75
    %v189 = vunpack.c.l.b16 %v76
    %v190 = vunpack.c.l.b16 %v77
    %v191 = vunpack.c.l.b16 %v78
    %v192 = vpack.c.b16 %v143, %v142
    %v193 = vpack.c.b16 %v145, %v144
    %v194 = vpack.c.b16 %v147, %v146
    %v195 = vpack.c.b16 %v149, %v148
    %v196 = vpack.c.b16 %v151, %v150
    %v197 = vpack.c.b16 %v153, %v152
    %v198 = vpack.c.b16 %v155, %v154
    %v199 = vpack.c.b16 %v157, %v156
    %v200 = vpack.c.b16 %v159, %v158
    %v201 = vpack.c.b16 %v161, %v160
    %v202 = vpack.c.b16 %v163, %v162
    %v203 = vpack.c.b16 %v165, %v164
    %v204 = vpack.c.b16 %v167, %v166
    %v205 = vpack.c.b16 %v169, %v168
    %v206 = vpack.c.b16 %v171, %v170
    %v207 = vpack.c.b16 %v173, %v172
    %v208 = vpack.c.b16 %v175, %v174
    %v209 = vpack.c.b16 %v177, %v176
    %v210 = vpack.c.b16 %v179, %v178
    %v211 = vpack.c.b16 %v181, %v180
    %v212 = vpack.c.b16 %v183, %v182
    %v213 = vpack.c.b16 %v185, %v184
    %v214 = vpack.c.b16 %v187, %v186
    %v215 = vpack.c.b16 %v189, %v188
    %v216 = vpack.c.b16 %v191, %v190
    %vm242 = vcmask 130048
    %v243 = vsel %vm242, %v88, 0
    %245 = vmatpush.bf16.msra.mxu0 %v199
    %246 = vmatpush.bf16.msra.mxu0 %v198
    %247 = vmatpush.bf16.msra.mxu0 %v197
    %248 = vmatpush.bf16.msra.mxu0 %v196
    %249 = vmatpush.bf16.msra.mxu0 %v195
    %250 = vmatpush.bf16.msra.mxu0 %v194
    %251 = vmatpush.bf16.msra.mxu0 %v193
    %252 = vmatpush.bf16.msra.mxu0 %v192
    %253 = vmatmul.bf16.gmra.mxu0 %v85
    %v254 = vpop.f32.mrf.mxu0
    %v255 = vadd.f32 %v81, %v254
    %v256 = vpop.f32.mrf.mxu0
    %257 = vdwg.mxu0
    %258 = vmatpush.bf16.msra.mxu0 %v207
    %259 = vmatpush.bf16.msra.mxu0 %v206
    %260 = vmatpush.bf16.msra.mxu0 %v205
    %261 = vmatpush.bf16.msra.mxu0 %v204
    %262 = vmatpush.bf16.msra.mxu0 %v203
    %263 = vmatpush.bf16.msra.mxu0 %v202
    %264 = vmatpush.bf16.msra.mxu0 %v201
    %265 = vmatpush.bf16.msra.mxu0 %v200
    %266 = vmatmul.bf16.gmra.mxu0 %v86
    %v267 = vpop.f32.mrf.mxu0
    %v268 = vadd.f32 %v255, %v267
    %v269 = vpop.f32.mrf.mxu0
    %270 = vdwg.mxu0
    %271 = vmatpush.bf16.msra.mxu0 %v215
    %272 = vmatpush.bf16.msra.mxu0 %v214
    %273 = vmatpush.bf16.msra.mxu0 %v213
    %274 = vmatpush.bf16.msra.mxu0 %v212
    %275 = vmatpush.bf16.msra.mxu0 %v211
    %276 = vmatpush.bf16.msra.mxu0 %v210
    %277 = vmatpush.bf16.msra.mxu0 %v209
    %278 = vmatpush.bf16.msra.mxu0 %v208
    %279 = vmatmul.bf16.gmra.mxu0 %v87
    %v280 = vpop.f32.mrf.mxu0
    %v281 = vadd.f32 %v268, %v280
    %v282 = vpop.f32.mrf.mxu0
    %283 = vdwg.mxu0
    %284 = vmatpush.bf16.msra.mxu0 0
    %285 = vmatpush.bf16.msra.mxu0 0
    %286 = vmatpush.bf16.msra.mxu0 0
    %287 = vmatpush.bf16.msra.mxu0 0
    %288 = vmatpush.bf16.msra.mxu0 0
    %289 = vmatpush.bf16.msra.mxu0 0
    %290 = vmatpush.bf16.msra.mxu0 0
    %291 = vmatpush.bf16.msra.mxu0 %v216
    %292 = vmatmul.bf16.gmra.mxu0 %v243
    %v293 = vpop.f32.mrf.mxu0
    %v294 = vadd.f32 %v281, %v293
    %v295 = vpop.f32.mrf.mxu0
    %296 = vdwg.mxu0
    %v297 = vmax.f32 %v294, 0.0
    %v298 = vpack.c.bf16 %v297, %v297
    %v299 = vld [vmem:[%s3] sm:$0xf]
    %v300 = vld [vmem:[%s3 + $0x4] sm:$0xf]
    %v301 = vld [vmem:[%s3 + $0x8] sm:$0xf]
    %v302 = vld [vmem:[%s3 + $0xc] sm:$0xf]
    %v303 = vld [vmem:[%s3 + $0x10] sm:$0xf]
    %v304 = vld [vmem:[%s3 + $0x14] sm:$0xf]
    %v305 = vld [vmem:[%s3 + $0x18] sm:$0xf]
    %v306 = vld [vmem:[%s3 + $0x1c] sm:$0xf]
    %v307 = vld [vmem:[%s3 + $0x20] sm:$0xf]
    %v308 = vld [vmem:[%s3 + $0x24] sm:$0xf]
    %v309 = vld [vmem:[%s3 + $0x28] sm:$0xf]
    %v310 = vld [vmem:[%s3 + $0x2c] sm:$0xf]
    %v311 = vld [vmem:[%s3 + $0x30] sm:$0xf]
    %v312 = vld [vmem:[%s3 + $0x34] sm:$0xf]
    %v313 = vld [vmem:[%s3 + $0x38] sm:$0xf]
    %v314 = vld [vmem:[%s3 + $0x3c] sm:$0xf]
    %v315 = vld [vmem:[%s4] sm:$0x1]
    %v317 = vperm.slane %v315, 0
    %v335 = vunpack.c.l.b16 %v299
    %v336 = vunpack.c.l.b16 %v300
    %v337 = vunpack.c.l.b16 %v301
    %v338 = vunpack.c.l.b16 %v302
    %v339 = vunpack.c.l.b16 %v303
    %v340 = vunpack.c.l.b16 %v304
    %v341 = vunpack.c.l.b16 %v305
    %v342 = vunpack.c.l.b16 %v306
    %v343 = vunpack.c.l.b16 %v307
    %v344 = vunpack.c.l.b16 %v308
    %v345 = vunpack.c.l.b16 %v309
    %v346 = vunpack.c.l.b16 %v310
    %v347 = vunpack.c.l.b16 %v311
    %v348 = vunpack.c.l.b16 %v312
    %v349 = vunpack.c.l.b16 %v313
    %v350 = vunpack.c.l.b16 %v314
    %v351 = vpack.c.b16 %v336, %v335
    %v352 = vpack.c.b16 %v338, %v337
    %v353 = vpack.c.b16 %v340, %v339
    %v354 = vpack.c.b16 %v342, %v341
    %v355 = vpack.c.b16 %v344, %v343
    %v356 = vpack.c.b16 %v346, %v345
    %v357 = vpack.c.b16 %v348, %v347
    %v358 = vpack.c.b16 %v350, %v349
    %367 = vmatpush.bf16.msra.mxu0 %v358
    %368 = vmatpush.bf16.msra.mxu0 %v357
    %369 = vmatpush.bf16.msra.mxu0 %v356
    %370 = vmatpush.bf16.msra.mxu0 %v355
    %371 = vmatpush.bf16.msra.mxu0 %v354
    %372 = vmatpush.bf16.msra.mxu0 %v353
    %373 = vmatpush.bf16.msra.mxu0 %v352
    %374 = vmatpush.bf16.msra.mxu0 %v351
    %375 = vmatmul.bf16.gmra.mxu0 %v298
    %v376 = vpop.f32.mrf.mxu0
    %v377 = vadd.f32 %v317, %v376
    %v378 = vpop.f32.mrf.mxu0
    %379 = vdwg.mxu0
    %v380 = vmax.f32 %v377, 0.0
    %v381 = vpack.c.bf16 %v380, %v380
    %v382 = vld [vmem:[%s5] sm:$0xf]
    %v383 = vld [vmem:[%s5 + $0x4] sm:$0xf]
    %v384 = vld [vmem:[%s5 + $0x8] sm:$0xf]
    %v385 = vld [vmem:[%s5 + $0xc] sm:$0xf]
    %v386 = vld [vmem:[%s5 + $0x10] sm:$0xf]
    %v387 = vld [vmem:[%s5 + $0x14] sm:$0xf]
    %v388 = vld [vmem:[%s5 + $0x18] sm:$0xf]
    %v389 = vld [vmem:[%s5 + $0x1c] sm:$0xf]
    %v390 = vld [vmem:[%s5 + $0x20] sm:$0xf]
    %v391 = vld [vmem:[%s5 + $0x24] sm:$0xf]
    %v392 = vld [vmem:[%s5 + $0x28] sm:$0xf]
    %v393 = vld [vmem:[%s5 + $0x2c] sm:$0xf]
    %v394 = vld [vmem:[%s5 + $0x30] sm:$0xf]
    %v395 = vld [vmem:[%s5 + $0x34] sm:$0xf]
    %v396 = vld [vmem:[%s5 + $0x38] sm:$0xf]
    %v397 = vld [vmem:[%s5 + $0x3c] sm:$0xf]
    %v398 = vld [vmem:[%s6] sm:$0x1]
    %v400 = vperm.slane %v398, 0
    %v418 = vunpack.c.l.b16 %v382
    %v419 = vunpack.c.l.b16 %v383
    %v420 = vunpack.c.l.b16 %v384
    %v421 = vunpack.c.l.b16 %v385
    %v422 = vunpack.c.l.b16 %v386
    %v423 = vunpack.c.l.b16 %v387
    %v424 = vunpack.c.l.b16 %v388
    %v425 = vunpack.c.l.b16 %v389
    %v426 = vunpack.c.l.b16 %v390
    %v427 = vunpack.c.l.b16 %v391
    %v428 = vunpack.c.l.b16 %v392
    %v429 = vunpack.c.l.b16 %v393
    %v430 = vunpack.c.l.b16 %v394
    %v431 = vunpack.c.l.b16 %v395
    %v432 = vunpack.c.l.b16 %v396
    %v433 = vunpack.c.l.b16 %v397
    %v434 = vpack.c.b16 %v419, %v418
    %v435 = vpack.c.b16 %v421, %v420
    %v436 = vpack.c.b16 %v423, %v422
    %v437 = vpack.c.b16 %v425, %v424
    %v438 = vpack.c.b16 %v427, %v426
    %v439 = vpack.c.b16 %v429, %v428
    %v440 = vpack.c.b16 %v431, %v430
    %v441 = vpack.c.b16 %v433, %v432
    %450 = vmatpush.bf16.msra.mxu0 %v441
    %451 = vmatpush.bf16.msra.mxu0 %v440
    %452 = vmatpush.bf16.msra.mxu0 %v439
    %453 = vmatpush.bf16.msra.mxu0 %v438
    %454 = vmatpush.bf16.msra.mxu0 %v437
    %455 = vmatpush.bf16.msra.mxu0 %v436
    %456 = vmatpush.bf16.msra.mxu0 %v435
    %457 = vmatpush.bf16.msra.mxu0 %v434
    %458 = vmatmul.bf16.gmra.mxu0 %v381
    %v459 = vpop.f32.mrf.mxu0
    %v460 = vadd.f32 %v400, %v459
    %v461 = vpop.f32.mrf.mxu0
    %462 = vdwg.mxu0
    %463 = vst [vmem:[#allocation2] sm:$0x3] %v460
    // Predicated region
    $region30: #{net_forward.3} parent=1 // pred_check
      _
    $region31: #{net_forward.3} parent=1 // pred_check_branch
      %465 = sbr.rel (0) target = $region33
    $region32: #{net_forward.3} parent=1 // pred_region
      %467 = vsyncadd [#allocation3], 0
      %s469 = sshll.u32 [#allocation2], 4
      %s470 = int_to_ptr.vmem [resolvable:$true] %s469
      %s471 = sshll.u32 %s7, 4
      %s472 = int_to_ptr.hbm [resolvable:$true] %s471
      %474 = dma.vmem_to_hbm [thread:$0]  %s470, 32, %s472, [#allocation3]
    $region33: #{net_forward.3} parent=1 // pred_fallthru
      _
    // Predicated region
    $region34: #{net_forward.3} parent=1 // pred_check
      _
    $region35: #{net_forward.3} parent=1 // pred_check_branch
      %476 = sbr.rel (0) target = $region37
    $region36: #{net_forward.3} parent=1 // pred_region
      %478 = dma.done [#allocation3], 32
    $region37: #{net_forward.3} parent=1 // pred_fallthru
      _
    %479 = vsyncpa [#allocation3], 1

</llo_original>
